<compile_context>
chip_gen: v7x
topology: tpu7x:2x2x1
jax: 0.10.0
libtpu: 0.0.40
codegen_flags: <defaults>
</compile_context>

<pallas_src>
import jax
import jax.numpy as jnp
from jax.experimental import pallas as pl
from jax.experimental.pallas import tpu as pltpu


# ---------------------------------------------------------------------------
# Static helpers
# ---------------------------------------------------------------------------
def _round_up(n, m):
    return ((n + m - 1) // m) * m


def _largest_divisor_at_most(n, cap):
    cap = max(1, min(n, cap))
    for c in range(cap, 0, -1):
        if n % c == 0:
            return c
    return 1


def _pick_time_chunk(T, Bp, Hp, target=16, budget_bytes=40 * 1024 * 1024):
    # Per-timestep VMEM (f32, double-buffered): 2 gi blocks (3Hp) + 2 out blocks (Hp).
    per_t = 64 * Bp * Hp
    # Resident block-diagonal W_hh (assume double-buffered) + slack.
    fixed = 96 * Hp * Hp + (2 << 20)
    avail = max(budget_bytes - fixed, per_t)
    return int(max(1, min(target, avail // per_t, T)))


# ---------------------------------------------------------------------------
# Dense kernel: y = sum_k x_k @ w_k + b   (row + column tiled, lane-dense G)
# ---------------------------------------------------------------------------
def _make_dense_kernel(n_in):
    def kernel(*refs):
        xs = refs[:n_in]
        ws = refs[n_in:2 * n_in]
        b_ref = refs[2 * n_in]
        o_ref = refs[2 * n_in + 1]
        acc = jnp.dot(xs[0][...], ws[0][...], preferred_element_type=jnp.float32)
        for k in range(1, n_in):
            acc = acc + jnp.dot(xs[k][...], ws[k][...],
                                preferred_element_type=jnp.float32)
        o_ref[...] = (acc + b_ref[...]).astype(o_ref.dtype)
    return kernel


def dense(xs, ws, b, row_tile=512):
    """xs[k]:(N,Fk), ws[k]:(Fk,G) [G % 128 == 0], b:(G,) -> (N,G)."""
    n_in = len(xs)
    N = xs[0].shape[0]
    G = ws[0].shape[1]
    assert G % 128 == 0
    tn = min(row_tile, N)
    # Column tile so each double-buffered weight block stays a few MB.
    per_col128 = sum(int(w.shape[0]) for w in ws) * 4 * 128
    col_cap = max(1, (4 * 1024 * 1024) // per_col128)
    tg = 128 * _largest_divisor_at_most(G // 128, col_cap)

    in_specs = [pl.BlockSpec((tn, int(x.shape[1])), lambda i, j: (i, 0)) for x in xs]
    in_specs += [pl.BlockSpec((int(w.shape[0]), tg), lambda i, j: (0, j)) for w in ws]
    in_specs.append(pl.BlockSpec((1, tg), lambda i, j: (0, j)))

    return pl.pallas_call(
        _make_dense_kernel(n_in),
        out_shape=jax.ShapeDtypeStruct((N, G), xs[0].dtype),
        grid=(pl.cdiv(N, tn), G // tg),
        in_specs=in_specs,
        out_specs=pl.BlockSpec((tn, tg), lambda i, j: (i, j)),
        compiler_params=pltpu.CompilerParams(
            dimension_semantics=("parallel", "parallel"),
            vmem_limit_bytes=32 * 1024 * 1024,
        ),
    )(*xs, *ws, b.reshape(1, G))


# ---------------------------------------------------------------------------
# Fused bidirectional GRU recurrence (both directions per grid step)
# ---------------------------------------------------------------------------
def _make_bigru_kernel(Tc, Hp, T_real, T_pad, nc):
    need_mask = (T_pad != T_real)

    def kernel(gi_f_ref, gi_b_ref, wbd_ref, bhn_ref, out_f_ref, out_b_ref, h_ref):
        c = pl.program_id(0)

        @pl.when(c == 0)
        def _():
            h_ref[...] = jnp.zeros_like(h_ref)

        wbd = wbd_ref[...]            # (2Hp, 6Hp) block-diagonal transposed W_hh
        bhn_f = bhn_ref[:, :Hp]       # (1, Hp) n-gate hidden bias, fwd
        bhn_b = bhn_ref[:, Hp:]       # (1, Hp) n-gate hidden bias, bwd

        h = h_ref[...]                # (Bp, 2Hp): [h_fwd | h_bwd]
        for i in range(Tc):           # static indices on purpose
            gi_f = gi_f_ref[i]                 # (Bp, 3Hp) fwd, local time i
            gi_b = gi_b_ref[Tc - 1 - i]        # (Bp, 3Hp) bwd, chunk walked in reverse
            # One fused recurrent matmul: all 6 gates of both directions.
            gh = jnp.dot(h, wbd, preferred_element_type=jnp.float32)   # (Bp, 6Hp)

            r_f = jax.nn.sigmoid(gi_f[:, :Hp] + gh[:, :Hp])
            z_f = jax.nn.sigmoid(gi_f[:, Hp:2 * Hp] + gh[:, Hp:2 * Hp])
            n_f = jnp.tanh(gi_f[:, 2 * Hp:] + r_f * (gh[:, 2 * Hp:3 * Hp] + bhn_f))

            r_b = jax.nn.sigmoid(gi_b[:, :Hp] + gh[:, 3 * Hp:4 * Hp])
            z_b = jax.nn.sigmoid(gi_b[:, Hp:2 * Hp] + gh[:, 4 * Hp:5 * Hp])
            n_b = jnp.tanh(gi_b[:, 2 * Hp:] + r_b * (gh[:, 5 * Hp:] + bhn_b))

            if need_mask:
                # Padded timesteps (t >= T_real) are exact identity updates (z = 1),
                # so the backward chain (which meets them first) is unaffected.
                valid_f = (c * Tc + i) < T_real
                valid_b = ((nc - 1 - c) * Tc + (Tc - 1 - i)) < T_real
                z_f = jnp.where(valid_f, z_f, 1.0)
                z_b = jnp.where(valid_b, z_b, 1.0)

            h_f = (1.0 - z_f) * n_f + z_f * h[:, :Hp]
            h_b = (1.0 - z_b) * n_b + z_b * h[:, Hp:]
            out_f_ref[i] = h_f.astype(out_f_ref.dtype)
            out_b_ref[Tc - 1 - i] = h_b.astype(out_b_ref.dtype)
            h = jnp.concatenate([h_f, h_b], axis=-1)

        h_ref[...] = h

    return kernel


def bigru_layer(gi, wbd, bhn, T_real, Tc):
    """gi:(T_pad,Bp,6Hp), wbd:(2Hp,6Hp), bhn:(1,2Hp) -> (out_fwd, out_bwd) each (T_pad,Bp,Hp)."""
    T_pad, Bp, G6 = gi.shape
    Hp = G6 // 6
    nc = T_pad // Tc

    vmem_need = 64 * Bp * Hp * Tc + 96 * Hp * Hp + (4 << 20)
    vmem_limit = int(min(max(vmem_need, 32 << 20), 48 << 20))   # v7x-safe cap

    grid_spec = pltpu.PrefetchScalarGridSpec(
        num_scalar_prefetch=0,
        grid=(nc,),
        in_specs=[
            pl.BlockSpec((Tc, Bp, 3 * Hp), lambda c: (c, 0, 0)),           # fwd gi chunk
            pl.BlockSpec((Tc, Bp, 3 * Hp), lambda c: (nc - 1 - c, 0, 1)),  # bwd gi chunk
            pl.BlockSpec((2 * Hp, 6 * Hp), lambda c: (0, 0)),
            pl.BlockSpec((1, 2 * Hp), lambda c: (0, 0)),
        ],
        out_specs=[
            pl.BlockSpec((Tc, Bp, Hp), lambda c: (c, 0, 0)),
            pl.BlockSpec((Tc, Bp, Hp), lambda c: (nc - 1 - c, 0, 0)),
        ],
        scratch_shapes=[pltpu.VMEM((Bp, 2 * Hp), jnp.float32)],
    )
    return pl.pallas_call(
        _make_bigru_kernel(Tc, Hp, T_real, T_pad, nc),
        out_shape=(jax.ShapeDtypeStruct((T_pad, Bp, Hp), gi.dtype),
                   jax.ShapeDtypeStruct((T_pad, Bp, Hp), gi.dtype)),
        grid_spec=grid_spec,
        compiler_params=pltpu.CompilerParams(
            dimension_semantics=("arbitrary",),
            vmem_limit_bytes=vmem_limit,
        ),
    )(gi, gi, wbd, bhn)


# ---------------------------------------------------------------------------
# Full forward pass
# ---------------------------------------------------------------------------
def bidirectional_gru_2_forward(x, kp, output_size, time_chunk=16):
    """x: (T, B, input_size) f32 -> (T, B, output_size) f32."""
    T, B, Din = x.shape
    Hp = kp["layers"][0]["wbd"].shape[0] // 2
    Op = kp["emb_b"].shape[0]
    Bp = _round_up(B, 8)
    Tc = _pick_time_chunk(T, Bp, Hp, target=time_chunk)
    T_pad = _round_up(T, Tc)

    xp = jnp.pad(x, ((0, T_pad - T), (0, Bp - B), (0, 0)))
    inputs = (xp.reshape(T_pad * Bp, Din),)
    for lp in kp["layers"]:
        gi = dense(inputs, lp["wih"], lp["bih"])                        # (T_pad*Bp, 6Hp)
        out_f, out_b = bigru_layer(gi.reshape(T_pad, Bp, 6 * Hp),
                                   lp["wbd"], lp["bhn"], T, Tc)
        inputs = (out_f.reshape(T_pad * Bp, Hp), out_b.reshape(T_pad * Bp, Hp))
    y = dense(inputs, kp["emb_w"], kp["emb_b"])                         # (T_pad*Bp, Op)
    return y.reshape(T_pad, Bp, Op)[:T, :B, :output_size]


# ---------------------------------------------------------------------------
# Parameters: PyTorch-shaped init + one-time conversion to kernel layout
# ---------------------------------------------------------------------------
def init_params(key, input_size, hidden_size, output_size):
    H = hidden_size
    k_gru = 1.0 / jnp.sqrt(jnp.float32(H))
    k_lin = 1.0 / jnp.sqrt(jnp.float32(2 * H))

    def uni(key, shape, k):
        return jax.random.uniform(key, shape, jnp.float32, minval=-k, maxval=k)

    keys = jax.random.split(key, 20)
    ki = iter(keys)

    def gru_dir_params(din):
        return (
            uni(next(ki), (3 * H, din), k_gru),   # w_ih
            uni(next(ki), (3 * H, H), k_gru),     # w_hh
            uni(next(ki), (3 * H,), k_gru),       # b_ih
            uni(next(ki), (3 * H,), k_gru),       # b_hh
        )

    return {
        "l0_fwd": gru_dir_params(input_size),
        "l0_bwd": gru_dir_params(input_size),
        "l1_fwd": gru_dir_params(2 * H),
        "l1_bwd": gru_dir_params(2 * H),
        "emb_w": uni(next(ki), (output_size, 2 * H), k_lin),
        "emb_b": uni(next(ki), (output_size,), k_lin),
    }


def prepare_params(params, hidden_size):
    """One-time conversion to kernel layout (lane-padded, pre-transposed, biases folded)."""
    H = hidden_size
    Hp = _round_up(H, 128)
    O = params["emb_w"].shape[0]
    Op = _round_up(O, 128)

    def dir_input_proj(w_ih, b_ih, b_hh):
        # (3H, Din) -> (Din, 3Hp) gate-padded columns; fold b_hh of r,z gates into bias.
        w_t = w_ih.T
        Din = w_t.shape[0]
        w = jnp.zeros((Din, 3 * Hp), jnp.float32)
        b = jnp.zeros((3 * Hp,), jnp.float32)
        for g in range(3):
            w = w.at[:, g * Hp:g * Hp + H].set(w_t[:, g * H:(g + 1) * H])
            bg = b_ih[g * H:(g + 1) * H]
            if g < 2:
                bg = bg + b_hh[g * H:(g + 1) * H]
            b = b.at[g * Hp:g * Hp + H].set(bg)
        return w, b

    def dir_hidden(w_hh, b_hh):
        w = jnp.zeros((Hp, 3 * Hp), jnp.float32)
        for g in range(3):
            w = w.at[:H, g * Hp:g * Hp + H].set(w_hh[g * H:(g + 1) * H, :].T)
        bn = jnp.zeros((Hp,), jnp.float32).at[:H].set(b_hh[2 * H:3 * H])
        return w, bn

    def layer(fwd, bwd, split_input):
        wf_i, bf_i = dir_input_proj(fwd[0], fwd[2], fwd[3])
        wb_i, bb_i = dir_input_proj(bwd[0], bwd[2], bwd[3])
        wih_full = jnp.concatenate([wf_i, wb_i], axis=1)         # (Din, 6Hp)
        bih = jnp.concatenate([bf_i, bb_i], axis=0)              # (6Hp,)
        wf_h, bnf = dir_hidden(fwd[1], fwd[3])
        wb_h, bnb = dir_hidden(bwd[1], bwd[3])
        wbd = jnp.zeros((2 * Hp, 6 * Hp), jnp.float32)
        wbd = wbd.at[:Hp, :3 * Hp].set(wf_h)
        wbd = wbd.at[Hp:, 3 * Hp:].set(wb_h)
        bhn = jnp.concatenate([bnf, bnb]).reshape(1, 2 * Hp)
        if split_input:
            # Din = 2H: rows [0:H] multiply the fwd half of the previous layer's output,
            # rows [H:2H] the bwd half (fed as two separate lane-padded inputs).
            w_from_f = jnp.zeros((Hp, 6 * Hp), jnp.float32).at[:H].set(wih_full[:H])
            w_from_b = jnp.zeros((Hp, 6 * Hp), jnp.float32).at[:H].set(wih_full[H:2 * H])
            wih = (w_from_f, w_from_b)
        else:
            wih = (wih_full,)
        return {"wih": wih, "bih": bih, "wbd": wbd, "bhn": bhn}

    ewt = params["emb_w"].T                                      # (2H, O)
    emb_from_f = jnp.zeros((Hp, Op), jnp.float32).at[:H, :O].set(ewt[:H])
    emb_from_b = jnp.zeros((Hp, Op), jnp.float32).at[:H, :O].set(ewt[H:2 * H])
    emb_b = jnp.zeros((Op,), jnp.float32).at[:O].set(params["emb_b"])

    return {
        "layers": [
            layer(params["l0_fwd"], params["l0_bwd"], split_input=False),
            layer(params["l1_fwd"], params["l1_bwd"], split_input=True),
        ],
        "emb_w": (emb_from_f, emb_from_b),
        "emb_b": emb_b,
    }


# ---------------------------------------------------------------------------
# Pure-JAX reference (PyTorch GRU semantics) for a runtime sanity check
# ---------------------------------------------------------------------------
def _gru_cell_ref(x_t, h, w_ih, w_hh, b_ih, b_hh):
    H = h.shape[-1]
    gi = x_t @ w_ih.T + b_ih
    gh = h @ w_hh.T + b_hh
    r = jax.nn.sigmoid(gi[:, :H] + gh[:, :H])
    z = jax.nn.sigmoid(gi[:, H:2 * H] + gh[:, H:2 * H])
    n = jnp.tanh(gi[:, 2 * H:] + r * gh[:, 2 * H:])
    return (1.0 - z) * n + z * h


def _gru_dir_ref(x, p, reverse):
    w_ih, w_hh, b_ih, b_hh = p
    _, B, _ = x.shape
    H = w_hh.shape[1]
    xs = jnp.flip(x, 0) if reverse else x

    def step(h, x_t):
        h = _gru_cell_ref(x_t, h, w_ih, w_hh, b_ih, b_hh)
        return h, h

    _, ys = jax.lax.scan(step, jnp.zeros((B, H), jnp.float32), xs)
    return jnp.flip(ys, 0) if reverse else ys


def reference_forward(x, params):
    h = x
    for l in ("l0", "l1"):
        f = _gru_dir_ref(h, params[f"{l}_fwd"], False)
        b = _gru_dir_ref(h, params[f"{l}_bwd"], True)
        h = jnp.concatenate([f, b], axis=-1)
    return h @ params["emb_w"].T + params["emb_b"]


# ---------------------------------------------------------------------------
if __name__ == "__main__":
    T, B = 8, 2
    input_size, hidden_size, output_size = 16, 32, 12

    key = jax.random.PRNGKey(0)
    k_x, k_p = jax.random.split(key)
    x = jax.random.normal(k_x, (T, B, input_size), dtype=jnp.float32)
    params = init_params(k_p, input_size, hidden_size, output_size)
    kparams = prepare_params(params, hidden_size)

    fwd = jax.jit(bidirectional_gru_2_forward,
                  static_argnames=("output_size", "time_chunk"))
    out = fwd(x, kparams, output_size=output_size)
    out = jax.block_until_ready(out)

    assert out.shape == (T, B, output_size), out.shape
    assert out.dtype == jnp.float32
    assert bool(jnp.all(jnp.isfinite(out)))

    ref = reference_forward(x, params)
    assert bool(jnp.allclose(out, ref, atol=2e-3, rtol=2e-3)), float(
        jnp.max(jnp.abs(out - ref)))

    print("KERNEL_OK")
</pallas_src>

<mosaic_0001>
module attributes {stable_mosaic.version = 11 : i64} {
  func.func @kernel(%arg0: i32, %arg1: i32, %arg2: memref<64x16xf32, #tpu.memory_space<vmem>>, %arg3: memref<16x768xf32, #tpu.memory_space<vmem>>, %arg4: memref<1x768xf32, #tpu.memory_space<vmem>>, %arg5: memref<64x768xf32, #tpu.memory_space<vmem>>) attributes {dimension_semantics = [#tpu.dimension_semantics<parallel>, #tpu.dimension_semantics<parallel>], iteration_bounds = array<i64: 1, 1>, scalar_prefetch = 0 : i64, scratch_operands = 0 : i64, tpu.core_type = #tpu.core_type<tc>, window_params = [{transform_indices = @transform_0, window_bounds = array<i64: 64, 16>}, {transform_indices = @transform_1, window_bounds = array<i64: 16, 768>}, {transform_indices = @transform_2, window_bounds = array<i64: 1, 768>}, {transform_indices = @transform_3, window_bounds = array<i64: 64, 768>}]} {
    %c0 = arith.constant 0 : index
    %c0_0 = arith.constant 0 : index
    %0 = vector.load %arg2[%c0, %c0_0] : memref<64x16xf32, #tpu.memory_space<vmem>>, vector<64x16xf32>
    %c0_1 = arith.constant 0 : index
    %c0_2 = arith.constant 0 : index
    %1 = vector.load %arg3[%c0_1, %c0_2] : memref<16x768xf32, #tpu.memory_space<vmem>>, vector<16x768xf32>
    %cst = arith.constant dense<0.000000e+00> : vector<64x768xf32>
    %2 = tpu.matmul %0, %1, %cst {dimension_numbers = #tpu.dot_dimension_numbers<[1], [0], [0], [1], [0, 0, 1, 1], [], []>} : vector<64x16xf32>, vector<16x768xf32>, vector<64x768xf32> -> vector<64x768xf32>
    %c0_3 = arith.constant 0 : index
    %c0_4 = arith.constant 0 : index
    %3 = vector.load %arg4[%c0_3, %c0_4] : memref<1x768xf32, #tpu.memory_space<vmem>>, vector<1x768xf32>
    %4 = vector.broadcast %3 : vector<1x768xf32> to vector<64x768xf32>
    %5 = arith.addf %2, %4 : vector<64x768xf32>
    %c0_5 = arith.constant 0 : index
    %c0_6 = arith.constant 0 : index
    %6 = vector.load %arg5[%c0_5, %c0_6] : memref<64x768xf32, #tpu.memory_space<vmem>>, vector<64x768xf32>
    tpu.vector_store %arg5[%c0_5, %c0_6], %5 {strides = array<i32>} : memref<64x768xf32, #tpu.memory_space<vmem>>, vector<64x768xf32>,
    return
  }
  func.func @transform_0(%arg0: i32, %arg1: i32) -> (i32, i32) {
    %c0_i32 = arith.constant 0 : i32
    %c0_i32_0 = arith.constant 0 : i32
    return %arg0, %c0_i32 : i32, i32
  }
  func.func @transform_1(%arg0: i32, %arg1: i32) -> (i32, i32) {
    %c0_i32 = arith.constant 0 : i32
    %c0_i32_0 = arith.constant 0 : i32
    return %c0_i32, %arg1 : i32, i32
  }
  func.func @transform_2(%arg0: i32, %arg1: i32) -> (i32, i32) {
    %c0_i32 = arith.constant 0 : i32
    %c0_i32_0 = arith.constant 0 : i32
    return %c0_i32, %arg1 : i32, i32
  }
  func.func @transform_3(%arg0: i32, %arg1: i32) -> (i32, i32) {
    %c0_i32 = arith.constant 0 : i32
    return %arg0, %arg1 : i32, i32
  }
}

module attributes {stable_mosaic.version = 11 : i64} {
  func.func @kernel(%arg0: i32, %arg1: memref<8x8x384xf32, #tpu.memory_space<vmem>>, %arg2: memref<8x8x384xf32, #tpu.memory_space<vmem>>, %arg3: memref<256x768xf32, #tpu.memory_space<vmem>>, %arg4: memref<1x256xf32, #tpu.memory_space<vmem>>, %arg5: memref<8x8x128xf32, #tpu.memory_space<vmem>>, %arg6: memref<8x8x128xf32, #tpu.memory_space<vmem>>, %arg7: memref<8x256xf32, #tpu.memory_space<vmem>>) attributes {dimension_semantics = [#tpu.dimension_semantics<arbitrary>], iteration_bounds = array<i64: 1>, scalar_prefetch = 0 : i64, scratch_operands = 1 : i64, tpu.core_type = #tpu.core_type<tc>, window_params = [{transform_indices = @transform_0, window_bounds = array<i64: 8, 8, 384>}, {transform_indices = @transform_1, window_bounds = array<i64: 8, 8, 384>}, {pipeline_mode = #tpu.pipeline_mode<synchronous>, transform_indices = @transform_2, window_bounds = array<i64: 256, 768>}, {pipeline_mode = #tpu.pipeline_mode<synchronous>, transform_indices = @transform_3, window_bounds = array<i64: 1, 256>}, {transform_indices = @transform_4, window_bounds = array<i64: 8, 8, 128>}, {transform_indices = @transform_5, window_bounds = array<i64: 8, 8, 128>}]} {
    %c0_i32 = arith.constant 0 : i32
    %0 = arith.cmpi eq, %arg0, %c0_i32 : i32
    %1 = arith.extui %0 : i1 to i32
    %c0_i32_0 = arith.constant 0 : i32
    %2 = arith.cmpi ne, %1, %c0_i32_0 : i32
    scf.if %2 {
      %cst_153 = arith.constant 0.000000e+00 : f32
      %568 = vector.broadcast %cst_153 : f32 to vector<8x256xf32>
      %c0_154 = arith.constant 0 : index
      %c0_155 = arith.constant 0 : index
      %569 = vector.load %arg7[%c0_154, %c0_155] : memref<8x256xf32, #tpu.memory_space<vmem>>, vector<8x256xf32>
      tpu.vector_store %arg7[%c0_154, %c0_155], %568 {strides = array<i32>} : memref<8x256xf32, #tpu.memory_space<vmem>>, vector<8x256xf32>,
    } else {
    }
    %c0 = arith.constant 0 : index
    %c0_1 = arith.constant 0 : index
    %3 = vector.load %arg3[%c0, %c0_1] : memref<256x768xf32, #tpu.memory_space<vmem>>, vector<256x768xf32>
    %c0_2 = arith.constant 0 : index
    %c0_3 = arith.constant 0 : index
    %4 = vector.load %arg4[%c0_2, %c0_3] : memref<1x256xf32, #tpu.memory_space<vmem>>, vector<1x128xf32>
    %c0_4 = arith.constant 0 : index
    %c128 = arith.constant 128 : index
    %5 = vector.load %arg4[%c0_4, %c128] : memref<1x256xf32, #tpu.memory_space<vmem>>, vector<1x128xf32>
    %c0_5 = arith.constant 0 : index
    %c0_6 = arith.constant 0 : index
    %6 = vector.load %arg7[%c0_5, %c0_6] : memref<8x256xf32, #tpu.memory_space<vmem>>, vector<8x256xf32>
    %c0_7 = arith.constant 0 : index
    %c0_8 = arith.constant 0 : index
    %c0_9 = arith.constant 0 : index
    %7 = vector.load %arg1[%c0_7, %c0_8, %c0_9] : memref<8x8x384xf32, #tpu.memory_space<vmem>>, vector<1x8x384xf32>
    %8 = vector.shape_cast %7 : vector<1x8x384xf32> to vector<8x384xf32>
    %c7 = arith.constant 7 : index
    %c0_10 = arith.constant 0 : index
    %c0_11 = arith.constant 0 : index
    %9 = vector.load %arg2[%c7, %c0_10, %c0_11] : memref<8x8x384xf32, #tpu.memory_space<vmem>>, vector<1x8x384xf32>
    %10 = vector.shape_cast %9 : vector<1x8x384xf32> to vector<8x384xf32>
    %cst = arith.constant dense<0.000000e+00> : vector<8x768xf32>
    %11 = tpu.matmul %6, %3, %cst {dimension_numbers = #tpu.dot_dimension_numbers<[1], [0], [0], [1], [0, 0, 1, 1], [], []>} : vector<8x256xf32>, vector<256x768xf32>, vector<8x768xf32> -> vector<8x768xf32>
    %12 = vector.extract_strided_slice %8 {offsets = [0, 0], sizes = [8, 128], strides = [1, 1]} : vector<8x384xf32> to vector<8x128xf32>
    %13 = vector.extract_strided_slice %11 {offsets = [0, 0], sizes = [8, 128], strides = [1, 1]} : vector<8x768xf32> to vector<8x128xf32>
    %14 = arith.addf %12, %13 : vector<8x128xf32>
    %15 = arith.negf %14 : vector<8x128xf32>
    %16 = math.exp %15 : vector<8x128xf32>
    %cst_12 = arith.constant 1.000000e+00 : f32
    %17 = vector.broadcast %cst_12 : f32 to vector<8x128xf32>
    %18 = arith.addf %17, %16 : vector<8x128xf32>
    %19 = arith.divf %17, %18 : vector<8x128xf32>
    %20 = vector.extract_strided_slice %8 {offsets = [0, 128], sizes = [8, 128], strides = [1, 1]} : vector<8x384xf32> to vector<8x128xf32>
    %21 = vector.extract_strided_slice %11 {offsets = [0, 128], sizes = [8, 128], strides = [1, 1]} : vector<8x768xf32> to vector<8x128xf32>
    %22 = arith.addf %20, %21 : vector<8x128xf32>
    %23 = arith.negf %22 : vector<8x128xf32>
    %24 = math.exp %23 : vector<8x128xf32>
    %cst_13 = arith.constant 1.000000e+00 : f32
    %25 = vector.broadcast %cst_13 : f32 to vector<8x128xf32>
    %26 = arith.addf %25, %24 : vector<8x128xf32>
    %27 = arith.divf %25, %26 : vector<8x128xf32>
    %28 = vector.extract_strided_slice %8 {offsets = [0, 256], sizes = [8, 128], strides = [1, 1]} : vector<8x384xf32> to vector<8x128xf32>
    %29 = vector.extract_strided_slice %11 {offsets = [0, 256], sizes = [8, 128], strides = [1, 1]} : vector<8x768xf32> to vector<8x128xf32>
    %30 = vector.broadcast %4 : vector<1x128xf32> to vector<8x128xf32>
    %31 = arith.addf %29, %30 : vector<8x128xf32>
    %32 = arith.mulf %19, %31 : vector<8x128xf32>
    %33 = arith.addf %28, %32 : vector<8x128xf32>
    %34 = math.tanh %33 : vector<8x128xf32>
    %35 = vector.extract_strided_slice %10 {offsets = [0, 0], sizes = [8, 128], strides = [1, 1]} : vector<8x384xf32> to vector<8x128xf32>
    %36 = vector.extract_strided_slice %11 {offsets = [0, 384], sizes = [8, 128], strides = [1, 1]} : vector<8x768xf32> to vector<8x128xf32>
    %37 = arith.addf %35, %36 : vector<8x128xf32>
    %38 = arith.negf %37 : vector<8x128xf32>
    %39 = math.exp %38 : vector<8x128xf32>
    %cst_14 = arith.constant 1.000000e+00 : f32
    %40 = vector.broadcast %cst_14 : f32 to vector<8x128xf32>
    %41 = arith.addf %40, %39 : vector<8x128xf32>
    %42 = arith.divf %40, %41 : vector<8x128xf32>
    %43 = vector.extract_strided_slice %10 {offsets = [0, 128], sizes = [8, 128], strides = [1, 1]} : vector<8x384xf32> to vector<8x128xf32>
    %44 = vector.extract_strided_slice %11 {offsets = [0, 512], sizes = [8, 128], strides = [1, 1]} : vector<8x768xf32> to vector<8x128xf32>
    %45 = arith.addf %43, %44 : vector<8x128xf32>
    %46 = arith.negf %45 : vector<8x128xf32>
    %47 = math.exp %46 : vector<8x128xf32>
    %cst_15 = arith.constant 1.000000e+00 : f32
    %48 = vector.broadcast %cst_15 : f32 to vector<8x128xf32>
    %49 = arith.addf %48, %47 : vector<8x128xf32>
    %50 = arith.divf %48, %49 : vector<8x128xf32>
    %51 = vector.extract_strided_slice %10 {offsets = [0, 256], sizes = [8, 128], strides = [1, 1]} : vector<8x384xf32> to vector<8x128xf32>
    %52 = vector.extract_strided_slice %11 {offsets = [0, 640], sizes = [8, 128], strides = [1, 1]} : vector<8x768xf32> to vector<8x128xf32>
    %53 = vector.broadcast %5 : vector<1x128xf32> to vector<8x128xf32>
    %54 = arith.addf %52, %53 : vector<8x128xf32>
    %55 = arith.mulf %42, %54 : vector<8x128xf32>
    %56 = arith.addf %51, %55 : vector<8x128xf32>
    %57 = math.tanh %56 : vector<8x128xf32>
    %cst_16 = arith.constant 1.000000e+00 : f32
    %58 = vector.broadcast %cst_16 : f32 to vector<8x128xf32>
    %59 = arith.subf %58, %27 : vector<8x128xf32>
    %60 = arith.mulf %59, %34 : vector<8x128xf32>
    %61 = vector.extract_strided_slice %6 {offsets = [0, 0], sizes = [8, 128], strides = [1, 1]} : vector<8x256xf32> to vector<8x128xf32>
    %62 = arith.mulf %27, %61 : vector<8x128xf32>
    %63 = arith.addf %60, %62 : vector<8x128xf32>
    %cst_17 = arith.constant 1.000000e+00 : f32
    %64 = vector.broadcast %cst_17 : f32 to vector<8x128xf32>
    %65 = arith.subf %64, %50 : vector<8x128xf32>
    %66 = arith.mulf %65, %57 : vector<8x128xf32>
    %67 = vector.extract_strided_slice %6 {offsets = [0, 128], sizes = [8, 128], strides = [1, 1]} : vector<8x256xf32> to vector<8x128xf32>
    %68 = arith.mulf %50, %67 : vector<8x128xf32>
    %69 = arith.addf %66, %68 : vector<8x128xf32>
    %c0_18 = arith.constant 0 : index
    %c0_19 = arith.constant 0 : index
    %c0_20 = arith.constant 0 : index
    %70 = vector.load %arg5[%c0_18, %c0_19, %c0_20] : memref<8x8x128xf32, #tpu.memory_space<vmem>>, vector<1x8x128xf32>
    %71 = vector.shape_cast %70 : vector<1x8x128xf32> to vector<8x128xf32>
    %72 = vector.shape_cast %63 : vector<8x128xf32> to vector<1x8x128xf32>
    tpu.vector_store %arg5[%c0_18, %c0_19, %c0_20], %72 {strides = array<i32>} : memref<8x8x128xf32, #tpu.memory_space<vmem>>, vector<1x8x128xf32>,
    %c7_21 = arith.constant 7 : index
    %c0_22 = arith.constant 0 : index
    %c0_23 = arith.constant 0 : index
    %73 = vector.load %arg6[%c7_21, %c0_22, %c0_23] : memref<8x8x128xf32, #tpu.memory_space<vmem>>, vector<1x8x128xf32>
    %74 = vector.shape_cast %73 : vector<1x8x128xf32> to vector<8x128xf32>
    %75 = vector.shape_cast %69 : vector<8x128xf32> to vector<1x8x128xf32>
    tpu.vector_store %arg6[%c7_21, %c0_22, %c0_23], %75 {strides = array<i32>} : memref<8x8x128xf32, #tpu.memory_space<vmem>>, vector<1x8x128xf32>,
    %76 = tpu.concatenate %63, %69 in 1 : vector<8x128xf32>, vector<8x128xf32> -> vector<8x256xf32>
    %c1 = arith.constant 1 : index
    %c0_24 = arith.constant 0 : index
    %c0_25 = arith.constant 0 : index
    %77 = vector.load %arg1[%c1, %c0_24, %c0_25] : memref<8x8x384xf32, #tpu.memory_space<vmem>>, vector<1x8x384xf32>
    %78 = vector.shape_cast %77 : vector<1x8x384xf32> to vector<8x384xf32>
    %c6 = arith.constant 6 : index
    %c0_26 = arith.constant 0 : index
    %c0_27 = arith.constant 0 : index
    %79 = vector.load %arg2[%c6, %c0_26, %c0_27] : memref<8x8x384xf32, #tpu.memory_space<vmem>>, vector<1x8x384xf32>
    %80 = vector.shape_cast %79 : vector<1x8x384xf32> to vector<8x384xf32>
    %cst_28 = arith.constant dense<0.000000e+00> : vector<8x768xf32>
    %81 = tpu.matmul %76, %3, %cst_28 {dimension_numbers = #tpu.dot_dimension_numbers<[1], [0], [0], [1], [0, 0, 1, 1], [], []>} : vector<8x256xf32>, vector<256x768xf32>, vector<8x768xf32> -> vector<8x768xf32>
    %82 = vector.extract_strided_slice %78 {offsets = [0, 0], sizes = [8, 128], strides = [1, 1]} : vector<8x384xf32> to vector<8x128xf32>
    %83 = vector.extract_strided_slice %81 {offsets = [0, 0], sizes = [8, 128], strides = [1, 1]} : vector<8x768xf32> to vector<8x128xf32>
    %84 = arith.addf %82, %83 : vector<8x128xf32>
    %85 = arith.negf %84 : vector<8x128xf32>
    %86 = math.exp %85 : vector<8x128xf32>
    %cst_29 = arith.constant 1.000000e+00 : f32
    %87 = vector.broadcast %cst_29 : f32 to vector<8x128xf32>
    %88 = arith.addf %87, %86 : vector<8x128xf32>
    %89 = arith.divf %87, %88 : vector<8x128xf32>
    %90 = vector.extract_strided_slice %78 {offsets = [0, 128], sizes = [8, 128], strides = [1, 1]} : vector<8x384xf32> to vector<8x128xf32>
    %91 = vector.extract_strided_slice %81 {offsets = [0, 128], sizes = [8, 128], strides = [1, 1]} : vector<8x768xf32> to vector<8x128xf32>
    %92 = arith.addf %90, %91 : vector<8x128xf32>
    %93 = arith.negf %92 : vector<8x128xf32>
    %94 = math.exp %93 : vector<8x128xf32>
    %cst_30 = arith.constant 1.000000e+00 : f32
    %95 = vector.broadcast %cst_30 : f32 to vector<8x128xf32>
    %96 = arith.addf %95, %94 : vector<8x128xf32>
    %97 = arith.divf %95, %96 : vector<8x128xf32>
    %98 = vector.extract_strided_slice %78 {offsets = [0, 256], sizes = [8, 128], strides = [1, 1]} : vector<8x384xf32> to vector<8x128xf32>
    %99 = vector.extract_strided_slice %81 {offsets = [0, 256], sizes = [8, 128], strides = [1, 1]} : vector<8x768xf32> to vector<8x128xf32>
    %100 = vector.broadcast %4 : vector<1x128xf32> to vector<8x128xf32>
    %101 = arith.addf %99, %100 : vector<8x128xf32>
    %102 = arith.mulf %89, %101 : vector<8x128xf32>
    %103 = arith.addf %98, %102 : vector<8x128xf32>
    %104 = math.tanh %103 : vector<8x128xf32>
    %105 = vector.extract_strided_slice %80 {offsets = [0, 0], sizes = [8, 128], strides = [1, 1]} : vector<8x384xf32> to vector<8x128xf32>
    %106 = vector.extract_strided_slice %81 {offsets = [0, 384], sizes = [8, 128], strides = [1, 1]} : vector<8x768xf32> to vector<8x128xf32>
    %107 = arith.addf %105, %106 : vector<8x128xf32>
    %108 = arith.negf %107 : vector<8x128xf32>
    %109 = math.exp %108 : vector<8x128xf32>
    %cst_31 = arith.constant 1.000000e+00 : f32
    %110 = vector.broadcast %cst_31 : f32 to vector<8x128xf32>
    %111 = arith.addf %110, %109 : vector<8x128xf32>
    %112 = arith.divf %110, %111 : vector<8x128xf32>
    %113 = vector.extract_strided_slice %80 {offsets = [0, 128], sizes = [8, 128], strides = [1, 1]} : vector<8x384xf32> to vector<8x128xf32>
    %114 = vector.extract_strided_slice %81 {offsets = [0, 512], sizes = [8, 128], strides = [1, 1]} : vector<8x768xf32> to vector<8x128xf32>
    %115 = arith.addf %113, %114 : vector<8x128xf32>
    %116 = arith.negf %115 : vector<8x128xf32>
    %117 = math.exp %116 : vector<8x128xf32>
    %cst_32 = arith.constant 1.000000e+00 : f32
    %118 = vector.broadcast %cst_32 : f32 to vector<8x128xf32>
    %119 = arith.addf %118, %117 : vector<8x128xf32>
    %120 = arith.divf %118, %119 : vector<8x128xf32>
    %121 = vector.extract_strided_slice %80 {offsets = [0, 256], sizes = [8, 128], strides = [1, 1]} : vector<8x384xf32> to vector<8x128xf32>
    %122 = vector.extract_strided_slice %81 {offsets = [0, 640], sizes = [8, 128], strides = [1, 1]} : vector<8x768xf32> to vector<8x128xf32>
    %123 = vector.broadcast %5 : vector<1x128xf32> to vector<8x128xf32>
    %124 = arith.addf %122, %123 : vector<8x128xf32>
    %125 = arith.mulf %112, %124 : vector<8x128xf32>
    %126 = arith.addf %121, %125 : vector<8x128xf32>
    %127 = math.tanh %126 : vector<8x128xf32>
    %cst_33 = arith.constant 1.000000e+00 : f32
    %128 = vector.broadcast %cst_33 : f32 to vector<8x128xf32>
    %129 = arith.subf %128, %97 : vector<8x128xf32>
    %130 = arith.mulf %129, %104 : vector<8x128xf32>
    %131 = vector.extract_strided_slice %76 {offsets = [0, 0], sizes = [8, 128], strides = [1, 1]} : vector<8x256xf32> to vector<8x128xf32>
    %132 = arith.mulf %97, %131 : vector<8x128xf32>
    %133 = arith.addf %130, %132 : vector<8x128xf32>
    %cst_34 = arith.constant 1.000000e+00 : f32
    %134 = vector.broadcast %cst_34 : f32 to vector<8x128xf32>
    %135 = arith.subf %134, %120 : vector<8x128xf32>
    %136 = arith.mulf %135, %127 : vector<8x128xf32>
    %137 = vector.extract_strided_slice %76 {offsets = [0, 128], sizes = [8, 128], strides = [1, 1]} : vector<8x256xf32> to vector<8x128xf32>
    %138 = arith.mulf %120, %137 : vector<8x128xf32>
    %139 = arith.addf %136, %138 : vector<8x128xf32>
    %c1_35 = arith.constant 1 : index
    %c0_36 = arith.constant 0 : index
    %c0_37 = arith.constant 0 : index
    %140 = vector.load %arg5[%c1_35, %c0_36, %c0_37] : memref<8x8x128xf32, #tpu.memory_space<vmem>>, vector<1x8x128xf32>
    %141 = vector.shape_cast %140 : vector<1x8x128xf32> to vector<8x128xf32>
    %142 = vector.shape_cast %133 : vector<8x128xf32> to vector<1x8x128xf32>
    tpu.vector_store %arg5[%c1_35, %c0_36, %c0_37], %142 {strides = array<i32>} : memref<8x8x128xf32, #tpu.memory_space<vmem>>, vector<1x8x128xf32>,
    %c6_38 = arith.constant 6 : index
    %c0_39 = arith.constant 0 : index
    %c0_40 = arith.constant 0 : index
    %143 = vector.load %arg6[%c6_38, %c0_39, %c0_40] : memref<8x8x128xf32, #tpu.memory_space<vmem>>, vector<1x8x128xf32>
    %144 = vector.shape_cast %143 : vector<1x8x128xf32> to vector<8x128xf32>
    %145 = vector.shape_cast %139 : vector<8x128xf32> to vector<1x8x128xf32>
    tpu.vector_store %arg6[%c6_38, %c0_39, %c0_40], %145 {strides = array<i32>} : memref<8x8x128xf32, #tpu.memory_space<vmem>>, vector<1x8x128xf32>,
    %146 = tpu.concatenate %133, %139 in 1 : vector<8x128xf32>, vector<8x128xf32> -> vector<8x256xf32>
    %c2 = arith.constant 2 : index
    %c0_41 = arith.constant 0 : index
    %c0_42 = arith.constant 0 : index
    %147 = vector.load %arg1[%c2, %c0_41, %c0_42] : memref<8x8x384xf32, #tpu.memory_space<vmem>>, vector<1x8x384xf32>
    %148 = vector.shape_cast %147 : vector<1x8x384xf32> to vector<8x384xf32>
    %c5 = arith.constant 5 : index
    %c0_43 = arith.constant 0 : index
    %c0_44 = arith.constant 0 : index
    %149 = vector.load %arg2[%c5, %c0_43, %c0_44] : memref<8x8x384xf32, #tpu.memory_space<vmem>>, vector<1x8x384xf32>
    %150 = vector.shape_cast %149 : vector<1x8x384xf32> to vector<8x384xf32>
    %cst_45 = arith.constant dense<0.000000e+00> : vector<8x768xf32>
    %151 = tpu.matmul %146, %3, %cst_45 {dimension_numbers = #tpu.dot_dimension_numbers<[1], [0], [0], [1], [0, 0, 1, 1], [], []>} : vector<8x256xf32>, vector<256x768xf32>, vector<8x768xf32> -> vector<8x768xf32>
    %152 = vector.extract_strided_slice %148 {offsets = [0, 0], sizes = [8, 128], strides = [1, 1]} : vector<8x384xf32> to vector<8x128xf32>
    %153 = vector.extract_strided_slice %151 {offsets = [0, 0], sizes = [8, 128], strides = [1, 1]} : vector<8x768xf32> to vector<8x128xf32>
    %154 = arith.addf %152, %153 : vector<8x128xf32>
    %155 = arith.negf %154 : vector<8x128xf32>
    %156 = math.exp %155 : vector<8x128xf32>
    %cst_46 = arith.constant 1.000000e+00 : f32
    %157 = vector.broadcast %cst_46 : f32 to vector<8x128xf32>
    %158 = arith.addf %157, %156 : vector<8x128xf32>
    %159 = arith.divf %157, %158 : vector<8x128xf32>
    %160 = vector.extract_strided_slice %148 {offsets = [0, 128], sizes = [8, 128], strides = [1, 1]} : vector<8x384xf32> to vector<8x128xf32>
    %161 = vector.extract_strided_slice %151 {offsets = [0, 128], sizes = [8, 128], strides = [1, 1]} : vector<8x768xf32> to vector<8x128xf32>
    %162 = arith.addf %160, %161 : vector<8x128xf32>
    %163 = arith.negf %162 : vector<8x128xf32>
    %164 = math.exp %163 : vector<8x128xf32>
    %cst_47 = arith.constant 1.000000e+00 : f32
    %165 = vector.broadcast %cst_47 : f32 to vector<8x128xf32>
    %166 = arith.addf %165, %164 : vector<8x128xf32>
    %167 = arith.divf %165, %166 : vector<8x128xf32>
    %168 = vector.extract_strided_slice %148 {offsets = [0, 256], sizes = [8, 128], strides = [1, 1]} : vector<8x384xf32> to vector<8x128xf32>
    %169 = vector.extract_strided_slice %151 {offsets = [0, 256], sizes = [8, 128], strides = [1, 1]} : vector<8x768xf32> to vector<8x128xf32>
    %170 = vector.broadcast %4 : vector<1x128xf32> to vector<8x128xf32>
    %171 = arith.addf %169, %170 : vector<8x128xf32>
    %172 = arith.mulf %159, %171 : vector<8x128xf32>
    %173 = arith.addf %168, %172 : vector<8x128xf32>
    %174 = math.tanh %173 : vector<8x128xf32>
    %175 = vector.extract_strided_slice %150 {offsets = [0, 0], sizes = [8, 128], strides = [1, 1]} : vector<8x384xf32> to vector<8x128xf32>
    %176 = vector.extract_strided_slice %151 {offsets = [0, 384], sizes = [8, 128], strides = [1, 1]} : vector<8x768xf32> to vector<8x128xf32>
    %177 = arith.addf %175, %176 : vector<8x128xf32>
    %178 = arith.negf %177 : vector<8x128xf32>
    %179 = math.exp %178 : vector<8x128xf32>
    %cst_48 = arith.constant 1.000000e+00 : f32
    %180 = vector.broadcast %cst_48 : f32 to vector<8x128xf32>
    %181 = arith.addf %180, %179 : vector<8x128xf32>
    %182 = arith.divf %180, %181 : vector<8x128xf32>
    %183 = vector.extract_strided_slice %150 {offsets = [0, 128], sizes = [8, 128], strides = [1, 1]} : vector<8x384xf32> to vector<8x128xf32>
    %184 = vector.extract_strided_slice %151 {offsets = [0, 512], sizes = [8, 128], strides = [1, 1]} : vector<8x768xf32> to vector<8x128xf32>
    %185 = arith.addf %183, %184 : vector<8x128xf32>
    %186 = arith.negf %185 : vector<8x128xf32>
    %187 = math.exp %186 : vector<8x128xf32>
    %cst_49 = arith.constant 1.000000e+00 : f32
    %188 = vector.broadcast %cst_49 : f32 to vector<8x128xf32>
    %189 = arith.addf %188, %187 : vector<8x128xf32>
    %190 = arith.divf %188, %189 : vector<8x128xf32>
    %191 = vector.extract_strided_slice %150 {offsets = [0, 256], sizes = [8, 128], strides = [1, 1]} : vector<8x384xf32> to vector<8x128xf32>
    %192 = vector.extract_strided_slice %151 {offsets = [0, 640], sizes = [8, 128], strides = [1, 1]} : vector<8x768xf32> to vector<8x128xf32>
    %193 = vector.broadcast %5 : vector<1x128xf32> to vector<8x128xf32>
    %194 = arith.addf %192, %193 : vector<8x128xf32>
    %195 = arith.mulf %182, %194 : vector<8x128xf32>
    %196 = arith.addf %191, %195 : vector<8x128xf32>
    %197 = math.tanh %196 : vector<8x128xf32>
    %cst_50 = arith.constant 1.000000e+00 : f32
    %198 = vector.broadcast %cst_50 : f32 to vector<8x128xf32>
    %199 = arith.subf %198, %167 : vector<8x128xf32>
    %200 = arith.mulf %199, %174 : vector<8x128xf32>
    %201 = vector.extract_strided_slice %146 {offsets = [0, 0], sizes = [8, 128], strides = [1, 1]} : vector<8x256xf32> to vector<8x128xf32>
    %202 = arith.mulf %167, %201 : vector<8x128xf32>
    %203 = arith.addf %200, %202 : vector<8x128xf32>
    %cst_51 = arith.constant 1.000000e+00 : f32
    %204 = vector.broadcast %cst_51 : f32 to vector<8x128xf32>
    %205 = arith.subf %204, %190 : vector<8x128xf32>
    %206 = arith.mulf %205, %197 : vector<8x128xf32>
    %207 = vector.extract_strided_slice %146 {offsets = [0, 128], sizes = [8, 128], strides = [1, 1]} : vector<8x256xf32> to vector<8x128xf32>
    %208 = arith.mulf %190, %207 : vector<8x128xf32>
    %209 = arith.addf %206, %208 : vector<8x128xf32>
    %c2_52 = arith.constant 2 : index
    %c0_53 = arith.constant 0 : index
    %c0_54 = arith.constant 0 : index
    %210 = vector.load %arg5[%c2_52, %c0_53, %c0_54] : memref<8x8x128xf32, #tpu.memory_space<vmem>>, vector<1x8x128xf32>
    %211 = vector.shape_cast %210 : vector<1x8x128xf32> to vector<8x128xf32>
    %212 = vector.shape_cast %203 : vector<8x128xf32> to vector<1x8x128xf32>
    tpu.vector_store %arg5[%c2_52, %c0_53, %c0_54], %212 {strides = array<i32>} : memref<8x8x128xf32, #tpu.memory_space<vmem>>, vector<1x8x128xf32>,
    %c5_55 = arith.constant 5 : index
    %c0_56 = arith.constant 0 : index
    %c0_57 = arith.constant 0 : index
    %213 = vector.load %arg6[%c5_55, %c0_56, %c0_57] : memref<8x8x128xf32, #tpu.memory_space<vmem>>, vector<1x8x128xf32>
    %214 = vector.shape_cast %213 : vector<1x8x128xf32> to vector<8x128xf32>
    %215 = vector.shape_cast %209 : vector<8x128xf32> to vector<1x8x128xf32>
    tpu.vector_store %arg6[%c5_55, %c0_56, %c0_57], %215 {strides = array<i32>} : memref<8x8x128xf32, #tpu.memory_space<vmem>>, vector<1x8x128xf32>,
    %216 = tpu.concatenate %203, %209 in 1 : vector<8x128xf32>, vector<8x128xf32> -> vector<8x256xf32>
    %c3 = arith.constant 3 : index
    %c0_58 = arith.constant 0 : index
    %c0_59 = arith.constant 0 : index
    %217 = vector.load %arg1[%c3, %c0_58, %c0_59] : memref<8x8x384xf32, #tpu.memory_space<vmem>>, vector<1x8x384xf32>
    %218 = vector.shape_cast %217 : vector<1x8x384xf32> to vector<8x384xf32>
    %c4 = arith.constant 4 : index
    %c0_60 = arith.constant 0 : index
    %c0_61 = arith.constant 0 : index
    %219 = vector.load %arg2[%c4, %c0_60, %c0_61] : memref<8x8x384xf32, #tpu.memory_space<vmem>>, vector<1x8x384xf32>
    %220 = vector.shape_cast %219 : vector<1x8x384xf32> to vector<8x384xf32>
    %cst_62 = arith.constant dense<0.000000e+00> : vector<8x768xf32>
    %221 = tpu.matmul %216, %3, %cst_62 {dimension_numbers = #tpu.dot_dimension_numbers<[1], [0], [0], [1], [0, 0, 1, 1], [], []>} : vector<8x256xf32>, vector<256x768xf32>, vector<8x768xf32> -> vector<8x768xf32>
    %222 = vector.extract_strided_slice %218 {offsets = [0, 0], sizes = [8, 128], strides = [1, 1]} : vector<8x384xf32> to vector<8x128xf32>
    %223 = vector.extract_strided_slice %221 {offsets = [0, 0], sizes = [8, 128], strides = [1, 1]} : vector<8x768xf32> to vector<8x128xf32>
    %224 = arith.addf %222, %223 : vector<8x128xf32>
    %225 = arith.negf %224 : vector<8x128xf32>
    %226 = math.exp %225 : vector<8x128xf32>
    %cst_63 = arith.constant 1.000000e+00 : f32
    %227 = vector.broadcast %cst_63 : f32 to vector<8x128xf32>
    %228 = arith.addf %227, %226 : vector<8x128xf32>
    %229 = arith.divf %227, %228 : vector<8x128xf32>
    %230 = vector.extract_strided_slice %218 {offsets = [0, 128], sizes = [8, 128], strides = [1, 1]} : vector<8x384xf32> to vector<8x128xf32>
    %231 = vector.extract_strided_slice %221 {offsets = [0, 128], sizes = [8, 128], strides = [1, 1]} : vector<8x768xf32> to vector<8x128xf32>
    %232 = arith.addf %230, %231 : vector<8x128xf32>
    %233 = arith.negf %232 : vector<8x128xf32>
    %234 = math.exp %233 : vector<8x128xf32>
    %cst_64 = arith.constant 1.000000e+00 : f32
    %235 = vector.broadcast %cst_64 : f32 to vector<8x128xf32>
    %236 = arith.addf %235, %234 : vector<8x128xf32>
    %237 = arith.divf %235, %236 : vector<8x128xf32>
    %238 = vector.extract_strided_slice %218 {offsets = [0, 256], sizes = [8, 128], strides = [1, 1]} : vector<8x384xf32> to vector<8x128xf32>
    %239 = vector.extract_strided_slice %221 {offsets = [0, 256], sizes = [8, 128], strides = [1, 1]} : vector<8x768xf32> to vector<8x128xf32>
    %240 = vector.broadcast %4 : vector<1x128xf32> to vector<8x128xf32>
    %241 = arith.addf %239, %240 : vector<8x128xf32>
    %242 = arith.mulf %229, %241 : vector<8x128xf32>
    %243 = arith.addf %238, %242 : vector<8x128xf32>
    %244 = math.tanh %243 : vector<8x128xf32>
    %245 = vector.extract_strided_slice %220 {offsets = [0, 0], sizes = [8, 128], strides = [1, 1]} : vector<8x384xf32> to vector<8x128xf32>
    %246 = vector.extract_strided_slice %221 {offsets = [0, 384], sizes = [8, 128], strides = [1, 1]} : vector<8x768xf32> to vector<8x128xf32>
    %247 = arith.addf %245, %246 : vector<8x128xf32>
    %248 = arith.negf %247 : vector<8x128xf32>
    %249 = math.exp %248 : vector<8x128xf32>
    %cst_65 = arith.constant 1.000000e+00 : f32
    %250 = vector.broadcast %cst_65 : f32 to vector<8x128xf32>
    %251 = arith.addf %250, %249 : vector<8x128xf32>
    %252 = arith.divf %250, %251 : vector<8x128xf32>
    %253 = vector.extract_strided_slice %220 {offsets = [0, 128], sizes = [8, 128], strides = [1, 1]} : vector<8x384xf32> to vector<8x128xf32>
    %254 = vector.extract_strided_slice %221 {offsets = [0, 512], sizes = [8, 128], strides = [1, 1]} : vector<8x768xf32> to vector<8x128xf32>
    %255 = arith.addf %253, %254 : vector<8x128xf32>
    %256 = arith.negf %255 : vector<8x128xf32>
    %257 = math.exp %256 : vector<8x128xf32>
    %cst_66 = arith.constant 1.000000e+00 : f32
    %258 = vector.broadcast %cst_66 : f32 to vector<8x128xf32>
    %259 = arith.addf %258, %257 : vector<8x128xf32>
    %260 = arith.divf %258, %259 : vector<8x128xf32>
    %261 = vector.extract_strided_slice %220 {offsets = [0, 256], sizes = [8, 128], strides = [1, 1]} : vector<8x384xf32> to vector<8x128xf32>
    %262 = vector.extract_strided_slice %221 {offsets = [0, 640], sizes = [8, 128], strides = [1, 1]} : vector<8x768xf32> to vector<8x128xf32>
    %263 = vector.broadcast %5 : vector<1x128xf32> to vector<8x128xf32>
    %264 = arith.addf %262, %263 : vector<8x128xf32>
    %265 = arith.mulf %252, %264 : vector<8x128xf32>
    %266 = arith.addf %261, %265 : vector<8x128xf32>
    %267 = math.tanh %266 : vector<8x128xf32>
    %cst_67 = arith.constant 1.000000e+00 : f32
    %268 = vector.broadcast %cst_67 : f32 to vector<8x128xf32>
    %269 = arith.subf %268, %237 : vector<8x128xf32>
    %270 = arith.mulf %269, %244 : vector<8x128xf32>
    %271 = vector.extract_strided_slice %216 {offsets = [0, 0], sizes = [8, 128], strides = [1, 1]} : vector<8x256xf32> to vector<8x128xf32>
    %272 = arith.mulf %237, %271 : vector<8x128xf32>
    %273 = arith.addf %270, %272 : vector<8x128xf32>
    %cst_68 = arith.constant 1.000000e+00 : f32
    %274 = vector.broadcast %cst_68 : f32 to vector<8x128xf32>
    %275 = arith.subf %274, %260 : vector<8x128xf32>
    %276 = arith.mulf %275, %267 : vector<8x128xf32>
    %277 = vector.extract_strided_slice %216 {offsets = [0, 128], sizes = [8, 128], strides = [1, 1]} : vector<8x256xf32> to vector<8x128xf32>
    %278 = arith.mulf %260, %277 : vector<8x128xf32>
    %279 = arith.addf %276, %278 : vector<8x128xf32>
    %c3_69 = arith.constant 3 : index
    %c0_70 = arith.constant 0 : index
    %c0_71 = arith.constant 0 : index
    %280 = vector.load %arg5[%c3_69, %c0_70, %c0_71] : memref<8x8x128xf32, #tpu.memory_space<vmem>>, vector<1x8x128xf32>
    %281 = vector.shape_cast %280 : vector<1x8x128xf32> to vector<8x128xf32>
    %282 = vector.shape_cast %273 : vector<8x128xf32> to vector<1x8x128xf32>
    tpu.vector_store %arg5[%c3_69, %c0_70, %c0_71], %282 {strides = array<i32>} : memref<8x8x128xf32, #tpu.memory_space<vmem>>, vector<1x8x128xf32>,
    %c4_72 = arith.constant 4 : index
    %c0_73 = arith.constant 0 : index
    %c0_74 = arith.constant 0 : index
    %283 = vector.load %arg6[%c4_72, %c0_73, %c0_74] : memref<8x8x128xf32, #tpu.memory_space<vmem>>, vector<1x8x128xf32>
    %284 = vector.shape_cast %283 : vector<1x8x128xf32> to vector<8x128xf32>
    %285 = vector.shape_cast %279 : vector<8x128xf32> to vector<1x8x128xf32>
    tpu.vector_store %arg6[%c4_72, %c0_73, %c0_74], %285 {strides = array<i32>} : memref<8x8x128xf32, #tpu.memory_space<vmem>>, vector<1x8x128xf32>,
    %286 = tpu.concatenate %273, %279 in 1 : vector<8x128xf32>, vector<8x128xf32> -> vector<8x256xf32>
    %c4_75 = arith.constant 4 : index
    %c0_76 = arith.constant 0 : index
    %c0_77 = arith.constant 0 : index
    %287 = vector.load %arg1[%c4_75, %c0_76, %c0_77] : memref<8x8x384xf32, #tpu.memory_space<vmem>>, vector<1x8x384xf32>
    %288 = vector.shape_cast %287 : vector<1x8x384xf32> to vector<8x384xf32>
    %c3_78 = arith.constant 3 : index
    %c0_79 = arith.constant 0 : index
    %c0_80 = arith.constant 0 : index
    %289 = vector.load %arg2[%c3_78, %c0_79, %c0_80] : memref<8x8x384xf32, #tpu.memory_space<vmem>>, vector<1x8x384xf32>
    %290 = vector.shape_cast %289 : vector<1x8x384xf32> to vector<8x384xf32>
    %cst_81 = arith.constant dense<0.000000e+00> : vector<8x768xf32>
    %291 = tpu.matmul %286, %3, %cst_81 {dimension_numbers = #tpu.dot_dimension_numbers<[1], [0], [0], [1], [0, 0, 1, 1], [], []>} : vector<8x256xf32>, vector<256x768xf32>, vector<8x768xf32> -> vector<8x768xf32>
    %292 = vector.extract_strided_slice %288 {offsets = [0, 0], sizes = [8, 128], strides = [1, 1]} : vector<8x384xf32> to vector<8x128xf32>
    %293 = vector.extract_strided_slice %291 {offsets = [0, 0], sizes = [8, 128], strides = [1, 1]} : vector<8x768xf32> to vector<8x128xf32>
    %294 = arith.addf %292, %293 : vector<8x128xf32>
    %295 = arith.negf %294 : vector<8x128xf32>
    %296 = math.exp %295 : vector<8x128xf32>
    %cst_82 = arith.constant 1.000000e+00 : f32
    %297 = vector.broadcast %cst_82 : f32 to vector<8x128xf32>
    %298 = arith.addf %297, %296 : vector<8x128xf32>
    %299 = arith.divf %297, %298 : vector<8x128xf32>
    %300 = vector.extract_strided_slice %288 {offsets = [0, 128], sizes = [8, 128], strides = [1, 1]} : vector<8x384xf32> to vector<8x128xf32>
    %301 = vector.extract_strided_slice %291 {offsets = [0, 128], sizes = [8, 128], strides = [1, 1]} : vector<8x768xf32> to vector<8x128xf32>
    %302 = arith.addf %300, %301 : vector<8x128xf32>
    %303 = arith.negf %302 : vector<8x128xf32>
    %304 = math.exp %303 : vector<8x128xf32>
    %cst_83 = arith.constant 1.000000e+00 : f32
    %305 = vector.broadcast %cst_83 : f32 to vector<8x128xf32>
    %306 = arith.addf %305, %304 : vector<8x128xf32>
    %307 = arith.divf %305, %306 : vector<8x128xf32>
    %308 = vector.extract_strided_slice %288 {offsets = [0, 256], sizes = [8, 128], strides = [1, 1]} : vector<8x384xf32> to vector<8x128xf32>
    %309 = vector.extract_strided_slice %291 {offsets = [0, 256], sizes = [8, 128], strides = [1, 1]} : vector<8x768xf32> to vector<8x128xf32>
    %310 = vector.broadcast %4 : vector<1x128xf32> to vector<8x128xf32>
    %311 = arith.addf %309, %310 : vector<8x128xf32>
    %312 = arith.mulf %299, %311 : vector<8x128xf32>
    %313 = arith.addf %308, %312 : vector<8x128xf32>
    %314 = math.tanh %313 : vector<8x128xf32>
    %315 = vector.extract_strided_slice %290 {offsets = [0, 0], sizes = [8, 128], strides = [1, 1]} : vector<8x384xf32> to vector<8x128xf32>
    %316 = vector.extract_strided_slice %291 {offsets = [0, 384], sizes = [8, 128], strides = [1, 1]} : vector<8x768xf32> to vector<8x128xf32>
    %317 = arith.addf %315, %316 : vector<8x128xf32>
    %318 = arith.negf %317 : vector<8x128xf32>
    %319 = math.exp %318 : vector<8x128xf32>
    %cst_84 = arith.constant 1.000000e+00 : f32
    %320 = vector.broadcast %cst_84 : f32 to vector<8x128xf32>
    %321 = arith.addf %320, %319 : vector<8x128xf32>
    %322 = arith.divf %320, %321 : vector<8x128xf32>
    %323 = vector.extract_strided_slice %290 {offsets = [0, 128], sizes = [8, 128], strides = [1, 1]} : vector<8x384xf32> to vector<8x128xf32>
    %324 = vector.extract_strided_slice %291 {offsets = [0, 512], sizes = [8, 128], strides = [1, 1]} : vector<8x768xf32> to vector<8x128xf32>
    %325 = arith.addf %323, %324 : vector<8x128xf32>
    %326 = arith.negf %325 : vector<8x128xf32>
    %327 = math.exp %326 : vector<8x128xf32>
    %cst_85 = arith.constant 1.000000e+00 : f32
    %328 = vector.broadcast %cst_85 : f32 to vector<8x128xf32>
    %329 = arith.addf %328, %327 : vector<8x128xf32>
    %330 = arith.divf %328, %329 : vector<8x128xf32>
    %331 = vector.extract_strided_slice %290 {offsets = [0, 256], sizes = [8, 128], strides = [1, 1]} : vector<8x384xf32> to vector<8x128xf32>
    %332 = vector.extract_strided_slice %291 {offsets = [0, 640], sizes = [8, 128], strides = [1, 1]} : vector<8x768xf32> to vector<8x128xf32>
    %333 = vector.broadcast %5 : vector<1x128xf32> to vector<8x128xf32>
    %334 = arith.addf %332, %333 : vector<8x128xf32>
    %335 = arith.mulf %322, %334 : vector<8x128xf32>
    %336 = arith.addf %331, %335 : vector<8x128xf32>
    %337 = math.tanh %336 : vector<8x128xf32>
    %cst_86 = arith.constant 1.000000e+00 : f32
    %338 = vector.broadcast %cst_86 : f32 to vector<8x128xf32>
    %339 = arith.subf %338, %307 : vector<8x128xf32>
    %340 = arith.mulf %339, %314 : vector<8x128xf32>
    %341 = vector.extract_strided_slice %286 {offsets = [0, 0], sizes = [8, 128], strides = [1, 1]} : vector<8x256xf32> to vector<8x128xf32>
    %342 = arith.mulf %307, %341 : vector<8x128xf32>
    %343 = arith.addf %340, %342 : vector<8x128xf32>
    %cst_87 = arith.constant 1.000000e+00 : f32
    %344 = vector.broadcast %cst_87 : f32 to vector<8x128xf32>
    %345 = arith.subf %344, %330 : vector<8x128xf32>
    %346 = arith.mulf %345, %337 : vector<8x128xf32>
    %347 = vector.extract_strided_slice %286 {offsets = [0, 128], sizes = [8, 128], strides = [1, 1]} : vector<8x256xf32> to vector<8x128xf32>
    %348 = arith.mulf %330, %347 : vector<8x128xf32>
    %349 = arith.addf %346, %348 : vector<8x128xf32>
    %c4_88 = arith.constant 4 : index
    %c0_89 = arith.constant 0 : index
    %c0_90 = arith.constant 0 : index
    %350 = vector.load %arg5[%c4_88, %c0_89, %c0_90] : memref<8x8x128xf32, #tpu.memory_space<vmem>>, vector<1x8x128xf32>
    %351 = vector.shape_cast %350 : vector<1x8x128xf32> to vector<8x128xf32>
    %352 = vector.shape_cast %343 : vector<8x128xf32> to vector<1x8x128xf32>
    tpu.vector_store %arg5[%c4_88, %c0_89, %c0_90], %352 {strides = array<i32>} : memref<8x8x128xf32, #tpu.memory_space<vmem>>, vector<1x8x128xf32>,
    %c3_91 = arith.constant 3 : index
    %c0_92 = arith.constant 0 : index
    %c0_93 = arith.constant 0 : index
    %353 = vector.load %arg6[%c3_91, %c0_92, %c0_93] : memref<8x8x128xf32, #tpu.memory_space<vmem>>, vector<1x8x128xf32>
    %354 = vector.shape_cast %353 : vector<1x8x128xf32> to vector<8x128xf32>
    %355 = vector.shape_cast %349 : vector<8x128xf32> to vector<1x8x128xf32>
    tpu.vector_store %arg6[%c3_91, %c0_92, %c0_93], %355 {strides = array<i32>} : memref<8x8x128xf32, #tpu.memory_space<vmem>>, vector<1x8x128xf32>,
    %356 = tpu.concatenate %343, %349 in 1 : vector<8x128xf32>, vector<8x128xf32> -> vector<8x256xf32>
    %c5_94 = arith.constant 5 : index
    %c0_95 = arith.constant 0 : index
    %c0_96 = arith.constant 0 : index
    %357 = vector.load %arg1[%c5_94, %c0_95, %c0_96] : memref<8x8x384xf32, #tpu.memory_space<vmem>>, vector<1x8x384xf32>
    %358 = vector.shape_cast %357 : vector<1x8x384xf32> to vector<8x384xf32>
    %c2_97 = arith.constant 2 : index
    %c0_98 = arith.constant 0 : index
    %c0_99 = arith.constant 0 : index
    %359 = vector.load %arg2[%c2_97, %c0_98, %c0_99] : memref<8x8x384xf32, #tpu.memory_space<vmem>>, vector<1x8x384xf32>
    %360 = vector.shape_cast %359 : vector<1x8x384xf32> to vector<8x384xf32>
    %cst_100 = arith.constant dense<0.000000e+00> : vector<8x768xf32>
    %361 = tpu.matmul %356, %3, %cst_100 {dimension_numbers = #tpu.dot_dimension_numbers<[1], [0], [0], [1], [0, 0, 1, 1], [], []>} : vector<8x256xf32>, vector<256x768xf32>, vector<8x768xf32> -> vector<8x768xf32>
    %362 = vector.extract_strided_slice %358 {offsets = [0, 0], sizes = [8, 128], strides = [1, 1]} : vector<8x384xf32> to vector<8x128xf32>
    %363 = vector.extract_strided_slice %361 {offsets = [0, 0], sizes = [8, 128], strides = [1, 1]} : vector<8x768xf32> to vector<8x128xf32>
    %364 = arith.addf %362, %363 : vector<8x128xf32>
    %365 = arith.negf %364 : vector<8x128xf32>
    %366 = math.exp %365 : vector<8x128xf32>
    %cst_101 = arith.constant 1.000000e+00 : f32
    %367 = vector.broadcast %cst_101 : f32 to vector<8x128xf32>
    %368 = arith.addf %367, %366 : vector<8x128xf32>
    %369 = arith.divf %367, %368 : vector<8x128xf32>
    %370 = vector.extract_strided_slice %358 {offsets = [0, 128], sizes = [8, 128], strides = [1, 1]} : vector<8x384xf32> to vector<8x128xf32>
    %371 = vector.extract_strided_slice %361 {offsets = [0, 128], sizes = [8, 128], strides = [1, 1]} : vector<8x768xf32> to vector<8x128xf32>
    %372 = arith.addf %370, %371 : vector<8x128xf32>
    %373 = arith.negf %372 : vector<8x128xf32>
    %374 = math.exp %373 : vector<8x128xf32>
    %cst_102 = arith.constant 1.000000e+00 : f32
    %375 = vector.broadcast %cst_102 : f32 to vector<8x128xf32>
    %376 = arith.addf %375, %374 : vector<8x128xf32>
    %377 = arith.divf %375, %376 : vector<8x128xf32>
    %378 = vector.extract_strided_slice %358 {offsets = [0, 256], sizes = [8, 128], strides = [1, 1]} : vector<8x384xf32> to vector<8x128xf32>
    %379 = vector.extract_strided_slice %361 {offsets = [0, 256], sizes = [8, 128], strides = [1, 1]} : vector<8x768xf32> to vector<8x128xf32>
    %380 = vector.broadcast %4 : vector<1x128xf32> to vector<8x128xf32>
    %381 = arith.addf %379, %380 : vector<8x128xf32>
    %382 = arith.mulf %369, %381 : vector<8x128xf32>
    %383 = arith.addf %378, %382 : vector<8x128xf32>
    %384 = math.tanh %383 : vector<8x128xf32>
    %385 = vector.extract_strided_slice %360 {offsets = [0, 0], sizes = [8, 128], strides = [1, 1]} : vector<8x384xf32> to vector<8x128xf32>
    %386 = vector.extract_strided_slice %361 {offsets = [0, 384], sizes = [8, 128], strides = [1, 1]} : vector<8x768xf32> to vector<8x128xf32>
    %387 = arith.addf %385, %386 : vector<8x128xf32>
    %388 = arith.negf %387 : vector<8x128xf32>
    %389 = math.exp %388 : vector<8x128xf32>
    %cst_103 = arith.constant 1.000000e+00 : f32
    %390 = vector.broadcast %cst_103 : f32 to vector<8x128xf32>
    %391 = arith.addf %390, %389 : vector<8x128xf32>
    %392 = arith.divf %390, %391 : vector<8x128xf32>
    %393 = vector.extract_strided_slice %360 {offsets = [0, 128], sizes = [8, 128], strides = [1, 1]} : vector<8x384xf32> to vector<8x128xf32>
    %394 = vector.extract_strided_slice %361 {offsets = [0, 512], sizes = [8, 128], strides = [1, 1]} : vector<8x768xf32> to vector<8x128xf32>
    %395 = arith.addf %393, %394 : vector<8x128xf32>
    %396 = arith.negf %395 : vector<8x128xf32>
    %397 = math.exp %396 : vector<8x128xf32>
    %cst_104 = arith.constant 1.000000e+00 : f32
    %398 = vector.broadcast %cst_104 : f32 to vector<8x128xf32>
    %399 = arith.addf %398, %397 : vector<8x128xf32>
    %400 = arith.divf %398, %399 : vector<8x128xf32>
    %401 = vector.extract_strided_slice %360 {offsets = [0, 256], sizes = [8, 128], strides = [1, 1]} : vector<8x384xf32> to vector<8x128xf32>
    %402 = vector.extract_strided_slice %361 {offsets = [0, 640], sizes = [8, 128], strides = [1, 1]} : vector<8x768xf32> to vector<8x128xf32>
    %403 = vector.broadcast %5 : vector<1x128xf32> to vector<8x128xf32>
    %404 = arith.addf %402, %403 : vector<8x128xf32>
    %405 = arith.mulf %392, %404 : vector<8x128xf32>
    %406 = arith.addf %401, %405 : vector<8x128xf32>
    %407 = math.tanh %406 : vector<8x128xf32>
    %cst_105 = arith.constant 1.000000e+00 : f32
    %408 = vector.broadcast %cst_105 : f32 to vector<8x128xf32>
    %409 = arith.subf %408, %377 : vector<8x128xf32>
    %410 = arith.mulf %409, %384 : vector<8x128xf32>
    %411 = vector.extract_strided_slice %356 {offsets = [0, 0], sizes = [8, 128], strides = [1, 1]} : vector<8x256xf32> to vector<8x128xf32>
    %412 = arith.mulf %377, %411 : vector<8x128xf32>
    %413 = arith.addf %410, %412 : vector<8x128xf32>
    %cst_106 = arith.constant 1.000000e+00 : f32
    %414 = vector.broadcast %cst_106 : f32 to vector<8x128xf32>
    %415 = arith.subf %414, %400 : vector<8x128xf32>
    %416 = arith.mulf %415, %407 : vector<8x128xf32>
    %417 = vector.extract_strided_slice %356 {offsets = [0, 128], sizes = [8, 128], strides = [1, 1]} : vector<8x256xf32> to vector<8x128xf32>
    %418 = arith.mulf %400, %417 : vector<8x128xf32>
    %419 = arith.addf %416, %418 : vector<8x128xf32>
    %c5_107 = arith.constant 5 : index
    %c0_108 = arith.constant 0 : index
    %c0_109 = arith.constant 0 : index
    %420 = vector.load %arg5[%c5_107, %c0_108, %c0_109] : memref<8x8x128xf32, #tpu.memory_space<vmem>>, vector<1x8x128xf32>
    %421 = vector.shape_cast %420 : vector<1x8x128xf32> to vector<8x128xf32>
    %422 = vector.shape_cast %413 : vector<8x128xf32> to vector<1x8x128xf32>
    tpu.vector_store %arg5[%c5_107, %c0_108, %c0_109], %422 {strides = array<i32>} : memref<8x8x128xf32, #tpu.memory_space<vmem>>, vector<1x8x128xf32>,
    %c2_110 = arith.constant 2 : index
    %c0_111 = arith.constant 0 : index
    %c0_112 = arith.constant 0 : index
    %423 = vector.load %arg6[%c2_110, %c0_111, %c0_112] : memref<8x8x128xf32, #tpu.memory_space<vmem>>, vector<1x8x128xf32>
    %424 = vector.shape_cast %423 : vector<1x8x128xf32> to vector<8x128xf32>
    %425 = vector.shape_cast %419 : vector<8x128xf32> to vector<1x8x128xf32>
    tpu.vector_store %arg6[%c2_110, %c0_111, %c0_112], %425 {strides = array<i32>} : memref<8x8x128xf32, #tpu.memory_space<vmem>>, vector<1x8x128xf32>,
    %426 = tpu.concatenate %413, %419 in 1 : vector<8x128xf32>, vector<8x128xf32> -> vector<8x256xf32>
    %c6_113 = arith.constant 6 : index
    %c0_114 = arith.constant 0 : index
    %c0_115 = arith.constant 0 : index
    %427 = vector.load %arg1[%c6_113, %c0_114, %c0_115] : memref<8x8x384xf32, #tpu.memory_space<vmem>>, vector<1x8x384xf32>
    %428 = vector.shape_cast %427 : vector<1x8x384xf32> to vector<8x384xf32>
    %c1_116 = arith.constant 1 : index
    %c0_117 = arith.constant 0 : index
    %c0_118 = arith.constant 0 : index
    %429 = vector.load %arg2[%c1_116, %c0_117, %c0_118] : memref<8x8x384xf32, #tpu.memory_space<vmem>>, vector<1x8x384xf32>
    %430 = vector.shape_cast %429 : vector<1x8x384xf32> to vector<8x384xf32>
    %cst_119 = arith.constant dense<0.000000e+00> : vector<8x768xf32>
    %431 = tpu.matmul %426, %3, %cst_119 {dimension_numbers = #tpu.dot_dimension_numbers<[1], [0], [0], [1], [0, 0, 1, 1], [], []>} : vector<8x256xf32>, vector<256x768xf32>, vector<8x768xf32> -> vector<8x768xf32>
    %432 = vector.extract_strided_slice %428 {offsets = [0, 0], sizes = [8, 128], strides = [1, 1]} : vector<8x384xf32> to vector<8x128xf32>
    %433 = vector.extract_strided_slice %431 {offsets = [0, 0], sizes = [8, 128], strides = [1, 1]} : vector<8x768xf32> to vector<8x128xf32>
    %434 = arith.addf %432, %433 : vector<8x128xf32>
    %435 = arith.negf %434 : vector<8x128xf32>
    %436 = math.exp %435 : vector<8x128xf32>
    %cst_120 = arith.constant 1.000000e+00 : f32
    %437 = vector.broadcast %cst_120 : f32 to vector<8x128xf32>
    %438 = arith.addf %437, %436 : vector<8x128xf32>
    %439 = arith.divf %437, %438 : vector<8x128xf32>
    %440 = vector.extract_strided_slice %428 {offsets = [0, 128], sizes = [8, 128], strides = [1, 1]} : vector<8x384xf32> to vector<8x128xf32>
    %441 = vector.extract_strided_slice %431 {offsets = [0, 128], sizes = [8, 128], strides = [1, 1]} : vector<8x768xf32> to vector<8x128xf32>
    %442 = arith.addf %440, %441 : vector<8x128xf32>
    %443 = arith.negf %442 : vector<8x128xf32>
    %444 = math.exp %443 : vector<8x128xf32>
    %cst_121 = arith.constant 1.000000e+00 : f32
    %445 = vector.broadcast %cst_121 : f32 to vector<8x128xf32>
    %446 = arith.addf %445, %444 : vector<8x128xf32>
    %447 = arith.divf %445, %446 : vector<8x128xf32>
    %448 = vector.extract_strided_slice %428 {offsets = [0, 256], sizes = [8, 128], strides = [1, 1]} : vector<8x384xf32> to vector<8x128xf32>
    %449 = vector.extract_strided_slice %431 {offsets = [0, 256], sizes = [8, 128], strides = [1, 1]} : vector<8x768xf32> to vector<8x128xf32>
    %450 = vector.broadcast %4 : vector<1x128xf32> to vector<8x128xf32>
    %451 = arith.addf %449, %450 : vector<8x128xf32>
    %452 = arith.mulf %439, %451 : vector<8x128xf32>
    %453 = arith.addf %448, %452 : vector<8x128xf32>
    %454 = math.tanh %453 : vector<8x128xf32>
    %455 = vector.extract_strided_slice %430 {offsets = [0, 0], sizes = [8, 128], strides = [1, 1]} : vector<8x384xf32> to vector<8x128xf32>
    %456 = vector.extract_strided_slice %431 {offsets = [0, 384], sizes = [8, 128], strides = [1, 1]} : vector<8x768xf32> to vector<8x128xf32>
    %457 = arith.addf %455, %456 : vector<8x128xf32>
    %458 = arith.negf %457 : vector<8x128xf32>
    %459 = math.exp %458 : vector<8x128xf32>
    %cst_122 = arith.constant 1.000000e+00 : f32
    %460 = vector.broadcast %cst_122 : f32 to vector<8x128xf32>
    %461 = arith.addf %460, %459 : vector<8x128xf32>
    %462 = arith.divf %460, %461 : vector<8x128xf32>
    %463 = vector.extract_strided_slice %430 {offsets = [0, 128], sizes = [8, 128], strides = [1, 1]} : vector<8x384xf32> to vector<8x128xf32>
    %464 = vector.extract_strided_slice %431 {offsets = [0, 512], sizes = [8, 128], strides = [1, 1]} : vector<8x768xf32> to vector<8x128xf32>
    %465 = arith.addf %463, %464 : vector<8x128xf32>
    %466 = arith.negf %465 : vector<8x128xf32>
    %467 = math.exp %466 : vector<8x128xf32>
    %cst_123 = arith.constant 1.000000e+00 : f32
    %468 = vector.broadcast %cst_123 : f32 to vector<8x128xf32>
    %469 = arith.addf %468, %467 : vector<8x128xf32>
    %470 = arith.divf %468, %469 : vector<8x128xf32>
    %471 = vector.extract_strided_slice %430 {offsets = [0, 256], sizes = [8, 128], strides = [1, 1]} : vector<8x384xf32> to vector<8x128xf32>
    %472 = vector.extract_strided_slice %431 {offsets = [0, 640], sizes = [8, 128], strides = [1, 1]} : vector<8x768xf32> to vector<8x128xf32>
    %473 = vector.broadcast %5 : vector<1x128xf32> to vector<8x128xf32>
    %474 = arith.addf %472, %473 : vector<8x128xf32>
    %475 = arith.mulf %462, %474 : vector<8x128xf32>
    %476 = arith.addf %471, %475 : vector<8x128xf32>
    %477 = math.tanh %476 : vector<8x128xf32>
    %cst_124 = arith.constant 1.000000e+00 : f32
    %478 = vector.broadcast %cst_124 : f32 to vector<8x128xf32>
    %479 = arith.subf %478, %447 : vector<8x128xf32>
    %480 = arith.mulf %479, %454 : vector<8x128xf32>
    %481 = vector.extract_strided_slice %426 {offsets = [0, 0], sizes = [8, 128], strides = [1, 1]} : vector<8x256xf32> to vector<8x128xf32>
    %482 = arith.mulf %447, %481 : vector<8x128xf32>
    %483 = arith.addf %480, %482 : vector<8x128xf32>
    %cst_125 = arith.constant 1.000000e+00 : f32
    %484 = vector.broadcast %cst_125 : f32 to vector<8x128xf32>
    %485 = arith.subf %484, %470 : vector<8x128xf32>
    %486 = arith.mulf %485, %477 : vector<8x128xf32>
    %487 = vector.extract_strided_slice %426 {offsets = [0, 128], sizes = [8, 128], strides = [1, 1]} : vector<8x256xf32> to vector<8x128xf32>
    %488 = arith.mulf %470, %487 : vector<8x128xf32>
    %489 = arith.addf %486, %488 : vector<8x128xf32>
    %c6_126 = arith.constant 6 : index
    %c0_127 = arith.constant 0 : index
    %c0_128 = arith.constant 0 : index
    %490 = vector.load %arg5[%c6_126, %c0_127, %c0_128] : memref<8x8x128xf32, #tpu.memory_space<vmem>>, vector<1x8x128xf32>
    %491 = vector.shape_cast %490 : vector<1x8x128xf32> to vector<8x128xf32>
    %492 = vector.shape_cast %483 : vector<8x128xf32> to vector<1x8x128xf32>
    tpu.vector_store %arg5[%c6_126, %c0_127, %c0_128], %492 {strides = array<i32>} : memref<8x8x128xf32, #tpu.memory_space<vmem>>, vector<1x8x128xf32>,
    %c1_129 = arith.constant 1 : index
    %c0_130 = arith.constant 0 : index
    %c0_131 = arith.constant 0 : index
    %493 = vector.load %arg6[%c1_129, %c0_130, %c0_131] : memref<8x8x128xf32, #tpu.memory_space<vmem>>, vector<1x8x128xf32>
    %494 = vector.shape_cast %493 : vector<1x8x128xf32> to vector<8x128xf32>
    %495 = vector.shape_cast %489 : vector<8x128xf32> to vector<1x8x128xf32>
    tpu.vector_store %arg6[%c1_129, %c0_130, %c0_131], %495 {strides = array<i32>} : memref<8x8x128xf32, #tpu.memory_space<vmem>>, vector<1x8x128xf32>,
    %496 = tpu.concatenate %483, %489 in 1 : vector<8x128xf32>, vector<8x128xf32> -> vector<8x256xf32>
    %c7_132 = arith.constant 7 : index
    %c0_133 = arith.constant 0 : index
    %c0_134 = arith.constant 0 : index
    %497 = vector.load %arg1[%c7_132, %c0_133, %c0_134] : memref<8x8x384xf32, #tpu.memory_space<vmem>>, vector<1x8x384xf32>
    %498 = vector.shape_cast %497 : vector<1x8x384xf32> to vector<8x384xf32>
    %c0_135 = arith.constant 0 : index
    %c0_136 = arith.constant 0 : index
    %c0_137 = arith.constant 0 : index
    %499 = vector.load %arg2[%c0_135, %c0_136, %c0_137] : memref<8x8x384xf32, #tpu.memory_space<vmem>>, vector<1x8x384xf32>
    %500 = vector.shape_cast %499 : vector<1x8x384xf32> to vector<8x384xf32>
    %cst_138 = arith.constant dense<0.000000e+00> : vector<8x768xf32>
    %501 = tpu.matmul %496, %3, %cst_138 {dimension_numbers = #tpu.dot_dimension_numbers<[1], [0], [0], [1], [0, 0, 1, 1], [], []>} : vector<8x256xf32>, vector<256x768xf32>, vector<8x768xf32> -> vector<8x768xf32>
    %502 = vector.extract_strided_slice %498 {offsets = [0, 0], sizes = [8, 128], strides = [1, 1]} : vector<8x384xf32> to vector<8x128xf32>
    %503 = vector.extract_strided_slice %501 {offsets = [0, 0], sizes = [8, 128], strides = [1, 1]} : vector<8x768xf32> to vector<8x128xf32>
    %504 = arith.addf %502, %503 : vector<8x128xf32>
    %505 = arith.negf %504 : vector<8x128xf32>
    %506 = math.exp %505 : vector<8x128xf32>
    %cst_139 = arith.constant 1.000000e+00 : f32
    %507 = vector.broadcast %cst_139 : f32 to vector<8x128xf32>
    %508 = arith.addf %507, %506 : vector<8x128xf32>
    %509 = arith.divf %507, %508 : vector<8x128xf32>
    %510 = vector.extract_strided_slice %498 {offsets = [0, 128], sizes = [8, 128], strides = [1, 1]} : vector<8x384xf32> to vector<8x128xf32>
    %511 = vector.extract_strided_slice %501 {offsets = [0, 128], sizes = [8, 128], strides = [1, 1]} : vector<8x768xf32> to vector<8x128xf32>
    %512 = arith.addf %510, %511 : vector<8x128xf32>
    %513 = arith.negf %512 : vector<8x128xf32>
    %514 = math.exp %513 : vector<8x128xf32>
    %cst_140 = arith.constant 1.000000e+00 : f32
    %515 = vector.broadcast %cst_140 : f32 to vector<8x128xf32>
    %516 = arith.addf %515, %514 : vector<8x128xf32>
    %517 = arith.divf %515, %516 : vector<8x128xf32>
    %518 = vector.extract_strided_slice %498 {offsets = [0, 256], sizes = [8, 128], strides = [1, 1]} : vector<8x384xf32> to vector<8x128xf32>
    %519 = vector.extract_strided_slice %501 {offsets = [0, 256], sizes = [8, 128], strides = [1, 1]} : vector<8x768xf32> to vector<8x128xf32>
    %520 = vector.broadcast %4 : vector<1x128xf32> to vector<8x128xf32>
    %521 = arith.addf %519, %520 : vector<8x128xf32>
    %522 = arith.mulf %509, %521 : vector<8x128xf32>
    %523 = arith.addf %518, %522 : vector<8x128xf32>
    %524 = math.tanh %523 : vector<8x128xf32>
    %525 = vector.extract_strided_slice %500 {offsets = [0, 0], sizes = [8, 128], strides = [1, 1]} : vector<8x384xf32> to vector<8x128xf32>
    %526 = vector.extract_strided_slice %501 {offsets = [0, 384], sizes = [8, 128], strides = [1, 1]} : vector<8x768xf32> to vector<8x128xf32>
    %527 = arith.addf %525, %526 : vector<8x128xf32>
    %528 = arith.negf %527 : vector<8x128xf32>
    %529 = math.exp %528 : vector<8x128xf32>
    %cst_141 = arith.constant 1.000000e+00 : f32
    %530 = vector.broadcast %cst_141 : f32 to vector<8x128xf32>
    %531 = arith.addf %530, %529 : vector<8x128xf32>
    %532 = arith.divf %530, %531 : vector<8x128xf32>
    %533 = vector.extract_strided_slice %500 {offsets = [0, 128], sizes = [8, 128], strides = [1, 1]} : vector<8x384xf32> to vector<8x128xf32>
    %534 = vector.extract_strided_slice %501 {offsets = [0, 512], sizes = [8, 128], strides = [1, 1]} : vector<8x768xf32> to vector<8x128xf32>
    %535 = arith.addf %533, %534 : vector<8x128xf32>
    %536 = arith.negf %535 : vector<8x128xf32>
    %537 = math.exp %536 : vector<8x128xf32>
    %cst_142 = arith.constant 1.000000e+00 : f32
    %538 = vector.broadcast %cst_142 : f32 to vector<8x128xf32>
    %539 = arith.addf %538, %537 : vector<8x128xf32>
    %540 = arith.divf %538, %539 : vector<8x128xf32>
    %541 = vector.extract_strided_slice %500 {offsets = [0, 256], sizes = [8, 128], strides = [1, 1]} : vector<8x384xf32> to vector<8x128xf32>
    %542 = vector.extract_strided_slice %501 {offsets = [0, 640], sizes = [8, 128], strides = [1, 1]} : vector<8x768xf32> to vector<8x128xf32>
    %543 = vector.broadcast %5 : vector<1x128xf32> to vector<8x128xf32>
    %544 = arith.addf %542, %543 : vector<8x128xf32>
    %545 = arith.mulf %532, %544 : vector<8x128xf32>
    %546 = arith.addf %541, %545 : vector<8x128xf32>
    %547 = math.tanh %546 : vector<8x128xf32>
    %cst_143 = arith.constant 1.000000e+00 : f32
    %548 = vector.broadcast %cst_143 : f32 to vector<8x128xf32>
    %549 = arith.subf %548, %517 : vector<8x128xf32>
    %550 = arith.mulf %549, %524 : vector<8x128xf32>
    %551 = vector.extract_strided_slice %496 {offsets = [0, 0], sizes = [8, 128], strides = [1, 1]} : vector<8x256xf32> to vector<8x128xf32>
    %552 = arith.mulf %517, %551 : vector<8x128xf32>
    %553 = arith.addf %550, %552 : vector<8x128xf32>
    %cst_144 = arith.constant 1.000000e+00 : f32
    %554 = vector.broadcast %cst_144 : f32 to vector<8x128xf32>
    %555 = arith.subf %554, %540 : vector<8x128xf32>
    %556 = arith.mulf %555, %547 : vector<8x128xf32>
    %557 = vector.extract_strided_slice %496 {offsets = [0, 128], sizes = [8, 128], strides = [1, 1]} : vector<8x256xf32> to vector<8x128xf32>
    %558 = arith.mulf %540, %557 : vector<8x128xf32>
    %559 = arith.addf %556, %558 : vector<8x128xf32>
    %c7_145 = arith.constant 7 : index
    %c0_146 = arith.constant 0 : index
    %c0_147 = arith.constant 0 : index
    %560 = vector.load %arg5[%c7_145, %c0_146, %c0_147] : memref<8x8x128xf32, #tpu.memory_space<vmem>>, vector<1x8x128xf32>
    %561 = vector.shape_cast %560 : vector<1x8x128xf32> to vector<8x128xf32>
    %562 = vector.shape_cast %553 : vector<8x128xf32> to vector<1x8x128xf32>
    tpu.vector_store %arg5[%c7_145, %c0_146, %c0_147], %562 {strides = array<i32>} : memref<8x8x128xf32, #tpu.memory_space<vmem>>, vector<1x8x128xf32>,
    %c0_148 = arith.constant 0 : index
    %c0_149 = arith.constant 0 : index
    %c0_150 = arith.constant 0 : index
    %563 = vector.load %arg6[%c0_148, %c0_149, %c0_150] : memref<8x8x128xf32, #tpu.memory_space<vmem>>, vector<1x8x128xf32>
    %564 = vector.shape_cast %563 : vector<1x8x128xf32> to vector<8x128xf32>
    %565 = vector.shape_cast %559 : vector<8x128xf32> to vector<1x8x128xf32>
    tpu.vector_store %arg6[%c0_148, %c0_149, %c0_150], %565 {strides = array<i32>} : memref<8x8x128xf32, #tpu.memory_space<vmem>>, vector<1x8x128xf32>,
    %566 = tpu.concatenate %553, %559 in 1 : vector<8x128xf32>, vector<8x128xf32> -> vector<8x256xf32>
    %c0_151 = arith.constant 0 : index
    %c0_152 = arith.constant 0 : index
    %567 = vector.load %arg7[%c0_151, %c0_152] : memref<8x256xf32, #tpu.memory_space<vmem>>, vector<8x256xf32>
    tpu.vector_store %arg7[%c0_151, %c0_152], %566 {strides = array<i32>} : memref<8x256xf32, #tpu.memory_space<vmem>>, vector<8x256xf32>,
    return
  }
  func.func @transform_0(%arg0: i32) -> (i32, i32, i32) {
    %c0_i32 = arith.constant 0 : i32
    %c0_i32_0 = arith.constant 0 : i32
    %c0_i32_1 = arith.constant 0 : i32
    return %arg0, %c0_i32, %c0_i32_0 : i32, i32, i32
  }
  func.func @transform_1(%arg0: i32) -> (i32, i32, i32) {
    %c0_i32 = arith.constant 0 : i32
    %0 = arith.subi %c0_i32, %arg0 : i32
    %c0_i32_0 = arith.constant 0 : i32
    %c1_i32 = arith.constant 1 : i32
    %c0_i32_1 = arith.constant 0 : i32
    return %0, %c0_i32_0, %c1_i32 : i32, i32, i32
  }
  func.func @transform_2(%arg0: i32) -> (i32, i32) {
    %c0_i32 = arith.constant 0 : i32
    %c0_i32_0 = arith.constant 0 : i32
    %c0_i32_1 = arith.constant 0 : i32
    return %c0_i32, %c0_i32_0 : i32, i32
  }
  func.func @transform_3(%arg0: i32) -> (i32, i32) {
    %c0_i32 = arith.constant 0 : i32
    %c0_i32_0 = arith.constant 0 : i32
    %c0_i32_1 = arith.constant 0 : i32
    return %c0_i32, %c0_i32_0 : i32, i32
  }
  func.func @transform_4(%arg0: i32) -> (i32, i32, i32) {
    %c0_i32 = arith.constant 0 : i32
    %c0_i32_0 = arith.constant 0 : i32
    %c0_i32_1 = arith.constant 0 : i32
    return %arg0, %c0_i32, %c0_i32_0 : i32, i32, i32
  }
  func.func @transform_5(%arg0: i32) -> (i32, i32, i32) {
    %c0_i32 = arith.constant 0 : i32
    %0 = arith.subi %c0_i32, %arg0 : i32
    %c0_i32_0 = arith.constant 0 : i32
    %c0_i32_1 = arith.constant 0 : i32
    %c0_i32_2 = arith.constant 0 : i32
    return %0, %c0_i32_0, %c0_i32_1 : i32, i32, i32
  }
}

module attributes {stable_mosaic.version = 11 : i64} {
  func.func @kernel(%arg0: i32, %arg1: memref<8x8x384xf32, #tpu.memory_space<vmem>>, %arg2: memref<8x8x384xf32, #tpu.memory_space<vmem>>, %arg3: memref<256x768xf32, #tpu.memory_space<vmem>>, %arg4: memref<1x256xf32, #tpu.memory_space<vmem>>, %arg5: memref<8x8x128xf32, #tpu.memory_space<vmem>>, %arg6: memref<8x8x128xf32, #tpu.memory_space<vmem>>, %arg7: memref<8x256xf32, #tpu.memory_space<vmem>>) attributes {dimension_semantics = [#tpu.dimension_semantics<arbitrary>], iteration_bounds = array<i64: 1>, scalar_prefetch = 0 : i64, scratch_operands = 1 : i64, tpu.core_type = #tpu.core_type<tc>, window_params = [{transform_indices = @transform_0, window_bounds = array<i64: 8, 8, 384>}, {transform_indices = @transform_1, window_bounds = array<i64: 8, 8, 384>}, {pipeline_mode = #tpu.pipeline_mode<synchronous>, transform_indices = @transform_2, window_bounds = array<i64: 256, 768>}, {pipeline_mode = #tpu.pipeline_mode<synchronous>, transform_indices = @transform_3, window_bounds = array<i64: 1, 256>}, {transform_indices = @transform_4, window_bounds = array<i64: 8, 8, 128>}, {transform_indices = @transform_5, window_bounds = array<i64: 8, 8, 128>}]} {
    %c0_i32 = arith.constant 0 : i32
    %0 = arith.cmpi eq, %arg0, %c0_i32 : i32
    %1 = arith.extui %0 : i1 to i32
    %c0_i32_0 = arith.constant 0 : i32
    %2 = arith.cmpi ne, %1, %c0_i32_0 : i32
    scf.if %2 {
      %cst_153 = arith.constant 0.000000e+00 : f32
      %568 = vector.broadcast %cst_153 : f32 to vector<8x256xf32>
      %c0_154 = arith.constant 0 : index
      %c0_155 = arith.constant 0 : index
      %569 = vector.load %arg7[%c0_154, %c0_155] : memref<8x256xf32, #tpu.memory_space<vmem>>, vector<8x256xf32>
      tpu.vector_store %arg7[%c0_154, %c0_155], %568 {strides = array<i32>} : memref<8x256xf32, #tpu.memory_space<vmem>>, vector<8x256xf32>,
    } else {
    }
    %c0 = arith.constant 0 : index
    %c0_1 = arith.constant 0 : index
    %3 = vector.load %arg3[%c0, %c0_1] : memref<256x768xf32, #tpu.memory_space<vmem>>, vector<256x768xf32>
    %c0_2 = arith.constant 0 : index
    %c0_3 = arith.constant 0 : index
    %4 = vector.load %arg4[%c0_2, %c0_3] : memref<1x256xf32, #tpu.memory_space<vmem>>, vector<1x128xf32>
    %c0_4 = arith.constant 0 : index
    %c128 = arith.constant 128 : index
    %5 = vector.load %arg4[%c0_4, %c128] : memref<1x256xf32, #tpu.memory_space<vmem>>, vector<1x128xf32>
    %c0_5 = arith.constant 0 : index
    %c0_6 = arith.constant 0 : index
    %6 = vector.load %arg7[%c0_5, %c0_6] : memref<8x256xf32, #tpu.memory_space<vmem>>, vector<8x256xf32>
    %c0_7 = arith.constant 0 : index
    %c0_8 = arith.constant 0 : index
    %c0_9 = arith.constant 0 : index
    %7 = vector.load %arg1[%c0_7, %c0_8, %c0_9] : memref<8x8x384xf32, #tpu.memory_space<vmem>>, vector<1x8x384xf32>
    %8 = vector.shape_cast %7 : vector<1x8x384xf32> to vector<8x384xf32>
    %c7 = arith.constant 7 : index
    %c0_10 = arith.constant 0 : index
    %c0_11 = arith.constant 0 : index
    %9 = vector.load %arg2[%c7, %c0_10, %c0_11] : memref<8x8x384xf32, #tpu.memory_space<vmem>>, vector<1x8x384xf32>
    %10 = vector.shape_cast %9 : vector<1x8x384xf32> to vector<8x384xf32>
    %cst = arith.constant dense<0.000000e+00> : vector<8x768xf32>
    %11 = tpu.matmul %6, %3, %cst {dimension_numbers = #tpu.dot_dimension_numbers<[1], [0], [0], [1], [0, 0, 1, 1], [], []>} : vector<8x256xf32>, vector<256x768xf32>, vector<8x768xf32> -> vector<8x768xf32>
    %12 = vector.extract_strided_slice %8 {offsets = [0, 0], sizes = [8, 128], strides = [1, 1]} : vector<8x384xf32> to vector<8x128xf32>
    %13 = vector.extract_strided_slice %11 {offsets = [0, 0], sizes = [8, 128], strides = [1, 1]} : vector<8x768xf32> to vector<8x128xf32>
    %14 = arith.addf %12, %13 : vector<8x128xf32>
    %15 = arith.negf %14 : vector<8x128xf32>
    %16 = math.exp %15 : vector<8x128xf32>
    %cst_12 = arith.constant 1.000000e+00 : f32
    %17 = vector.broadcast %cst_12 : f32 to vector<8x128xf32>
    %18 = arith.addf %17, %16 : vector<8x128xf32>
    %19 = arith.divf %17, %18 : vector<8x128xf32>
    %20 = vector.extract_strided_slice %8 {offsets = [0, 128], sizes = [8, 128], strides = [1, 1]} : vector<8x384xf32> to vector<8x128xf32>
    %21 = vector.extract_strided_slice %11 {offsets = [0, 128], sizes = [8, 128], strides = [1, 1]} : vector<8x768xf32> to vector<8x128xf32>
    %22 = arith.addf %20, %21 : vector<8x128xf32>
    %23 = arith.negf %22 : vector<8x128xf32>
    %24 = math.exp %23 : vector<8x128xf32>
    %cst_13 = arith.constant 1.000000e+00 : f32
    %25 = vector.broadcast %cst_13 : f32 to vector<8x128xf32>
    %26 = arith.addf %25, %24 : vector<8x128xf32>
    %27 = arith.divf %25, %26 : vector<8x128xf32>
    %28 = vector.extract_strided_slice %8 {offsets = [0, 256], sizes = [8, 128], strides = [1, 1]} : vector<8x384xf32> to vector<8x128xf32>
    %29 = vector.extract_strided_slice %11 {offsets = [0, 256], sizes = [8, 128], strides = [1, 1]} : vector<8x768xf32> to vector<8x128xf32>
    %30 = vector.broadcast %4 : vector<1x128xf32> to vector<8x128xf32>
    %31 = arith.addf %29, %30 : vector<8x128xf32>
    %32 = arith.mulf %19, %31 : vector<8x128xf32>
    %33 = arith.addf %28, %32 : vector<8x128xf32>
    %34 = math.tanh %33 : vector<8x128xf32>
    %35 = vector.extract_strided_slice %10 {offsets = [0, 0], sizes = [8, 128], strides = [1, 1]} : vector<8x384xf32> to vector<8x128xf32>
    %36 = vector.extract_strided_slice %11 {offsets = [0, 384], sizes = [8, 128], strides = [1, 1]} : vector<8x768xf32> to vector<8x128xf32>
    %37 = arith.addf %35, %36 : vector<8x128xf32>
    %38 = arith.negf %37 : vector<8x128xf32>
    %39 = math.exp %38 : vector<8x128xf32>
    %cst_14 = arith.constant 1.000000e+00 : f32
    %40 = vector.broadcast %cst_14 : f32 to vector<8x128xf32>
    %41 = arith.addf %40, %39 : vector<8x128xf32>
    %42 = arith.divf %40, %41 : vector<8x128xf32>
    %43 = vector.extract_strided_slice %10 {offsets = [0, 128], sizes = [8, 128], strides = [1, 1]} : vector<8x384xf32> to vector<8x128xf32>
    %44 = vector.extract_strided_slice %11 {offsets = [0, 512], sizes = [8, 128], strides = [1, 1]} : vector<8x768xf32> to vector<8x128xf32>
    %45 = arith.addf %43, %44 : vector<8x128xf32>
    %46 = arith.negf %45 : vector<8x128xf32>
    %47 = math.exp %46 : vector<8x128xf32>
    %cst_15 = arith.constant 1.000000e+00 : f32
    %48 = vector.broadcast %cst_15 : f32 to vector<8x128xf32>
    %49 = arith.addf %48, %47 : vector<8x128xf32>
    %50 = arith.divf %48, %49 : vector<8x128xf32>
    %51 = vector.extract_strided_slice %10 {offsets = [0, 256], sizes = [8, 128], strides = [1, 1]} : vector<8x384xf32> to vector<8x128xf32>
    %52 = vector.extract_strided_slice %11 {offsets = [0, 640], sizes = [8, 128], strides = [1, 1]} : vector<8x768xf32> to vector<8x128xf32>
    %53 = vector.broadcast %5 : vector<1x128xf32> to vector<8x128xf32>
    %54 = arith.addf %52, %53 : vector<8x128xf32>
    %55 = arith.mulf %42, %54 : vector<8x128xf32>
    %56 = arith.addf %51, %55 : vector<8x128xf32>
    %57 = math.tanh %56 : vector<8x128xf32>
    %cst_16 = arith.constant 1.000000e+00 : f32
    %58 = vector.broadcast %cst_16 : f32 to vector<8x128xf32>
    %59 = arith.subf %58, %27 : vector<8x128xf32>
    %60 = arith.mulf %59, %34 : vector<8x128xf32>
    %61 = vector.extract_strided_slice %6 {offsets = [0, 0], sizes = [8, 128], strides = [1, 1]} : vector<8x256xf32> to vector<8x128xf32>
    %62 = arith.mulf %27, %61 : vector<8x128xf32>
    %63 = arith.addf %60, %62 : vector<8x128xf32>
    %cst_17 = arith.constant 1.000000e+00 : f32
    %64 = vector.broadcast %cst_17 : f32 to vector<8x128xf32>
    %65 = arith.subf %64, %50 : vector<8x128xf32>
    %66 = arith.mulf %65, %57 : vector<8x128xf32>
    %67 = vector.extract_strided_slice %6 {offsets = [0, 128], sizes = [8, 128], strides = [1, 1]} : vector<8x256xf32> to vector<8x128xf32>
    %68 = arith.mulf %50, %67 : vector<8x128xf32>
    %69 = arith.addf %66, %68 : vector<8x128xf32>
    %c0_18 = arith.constant 0 : index
    %c0_19 = arith.constant 0 : index
    %c0_20 = arith.constant 0 : index
    %70 = vector.load %arg5[%c0_18, %c0_19, %c0_20] : memref<8x8x128xf32, #tpu.memory_space<vmem>>, vector<1x8x128xf32>
    %71 = vector.shape_cast %70 : vector<1x8x128xf32> to vector<8x128xf32>
    %72 = vector.shape_cast %63 : vector<8x128xf32> to vector<1x8x128xf32>
    tpu.vector_store %arg5[%c0_18, %c0_19, %c0_20], %72 {strides = array<i32>} : memref<8x8x128xf32, #tpu.memory_space<vmem>>, vector<1x8x128xf32>,
    %c7_21 = arith.constant 7 : index
    %c0_22 = arith.constant 0 : index
    %c0_23 = arith.constant 0 : index
    %73 = vector.load %arg6[%c7_21, %c0_22, %c0_23] : memref<8x8x128xf32, #tpu.memory_space<vmem>>, vector<1x8x128xf32>
    %74 = vector.shape_cast %73 : vector<1x8x128xf32> to vector<8x128xf32>
    %75 = vector.shape_cast %69 : vector<8x128xf32> to vector<1x8x128xf32>
    tpu.vector_store %arg6[%c7_21, %c0_22, %c0_23], %75 {strides = array<i32>} : memref<8x8x128xf32, #tpu.memory_space<vmem>>, vector<1x8x128xf32>,
    %76 = tpu.concatenate %63, %69 in 1 : vector<8x128xf32>, vector<8x128xf32> -> vector<8x256xf32>
    %c1 = arith.constant 1 : index
    %c0_24 = arith.constant 0 : index
    %c0_25 = arith.constant 0 : index
    %77 = vector.load %arg1[%c1, %c0_24, %c0_25] : memref<8x8x384xf32, #tpu.memory_space<vmem>>, vector<1x8x384xf32>
    %78 = vector.shape_cast %77 : vector<1x8x384xf32> to vector<8x384xf32>
    %c6 = arith.constant 6 : index
    %c0_26 = arith.constant 0 : index
    %c0_27 = arith.constant 0 : index
    %79 = vector.load %arg2[%c6, %c0_26, %c0_27] : memref<8x8x384xf32, #tpu.memory_space<vmem>>, vector<1x8x384xf32>
    %80 = vector.shape_cast %79 : vector<1x8x384xf32> to vector<8x384xf32>
    %cst_28 = arith.constant dense<0.000000e+00> : vector<8x768xf32>
    %81 = tpu.matmul %76, %3, %cst_28 {dimension_numbers = #tpu.dot_dimension_numbers<[1], [0], [0], [1], [0, 0, 1, 1], [], []>} : vector<8x256xf32>, vector<256x768xf32>, vector<8x768xf32> -> vector<8x768xf32>
    %82 = vector.extract_strided_slice %78 {offsets = [0, 0], sizes = [8, 128], strides = [1, 1]} : vector<8x384xf32> to vector<8x128xf32>
    %83 = vector.extract_strided_slice %81 {offsets = [0, 0], sizes = [8, 128], strides = [1, 1]} : vector<8x768xf32> to vector<8x128xf32>
    %84 = arith.addf %82, %83 : vector<8x128xf32>
    %85 = arith.negf %84 : vector<8x128xf32>
    %86 = math.exp %85 : vector<8x128xf32>
    %cst_29 = arith.constant 1.000000e+00 : f32
    %87 = vector.broadcast %cst_29 : f32 to vector<8x128xf32>
    %88 = arith.addf %87, %86 : vector<8x128xf32>
    %89 = arith.divf %87, %88 : vector<8x128xf32>
    %90 = vector.extract_strided_slice %78 {offsets = [0, 128], sizes = [8, 128], strides = [1, 1]} : vector<8x384xf32> to vector<8x128xf32>
    %91 = vector.extract_strided_slice %81 {offsets = [0, 128], sizes = [8, 128], strides = [1, 1]} : vector<8x768xf32> to vector<8x128xf32>
    %92 = arith.addf %90, %91 : vector<8x128xf32>
    %93 = arith.negf %92 : vector<8x128xf32>
    %94 = math.exp %93 : vector<8x128xf32>
    %cst_30 = arith.constant 1.000000e+00 : f32
    %95 = vector.broadcast %cst_30 : f32 to vector<8x128xf32>
    %96 = arith.addf %95, %94 : vector<8x128xf32>
    %97 = arith.divf %95, %96 : vector<8x128xf32>
    %98 = vector.extract_strided_slice %78 {offsets = [0, 256], sizes = [8, 128], strides = [1, 1]} : vector<8x384xf32> to vector<8x128xf32>
    %99 = vector.extract_strided_slice %81 {offsets = [0, 256], sizes = [8, 128], strides = [1, 1]} : vector<8x768xf32> to vector<8x128xf32>
    %100 = vector.broadcast %4 : vector<1x128xf32> to vector<8x128xf32>
    %101 = arith.addf %99, %100 : vector<8x128xf32>
    %102 = arith.mulf %89, %101 : vector<8x128xf32>
    %103 = arith.addf %98, %102 : vector<8x128xf32>
    %104 = math.tanh %103 : vector<8x128xf32>
    %105 = vector.extract_strided_slice %80 {offsets = [0, 0], sizes = [8, 128], strides = [1, 1]} : vector<8x384xf32> to vector<8x128xf32>
    %106 = vector.extract_strided_slice %81 {offsets = [0, 384], sizes = [8, 128], strides = [1, 1]} : vector<8x768xf32> to vector<8x128xf32>
    %107 = arith.addf %105, %106 : vector<8x128xf32>
    %108 = arith.negf %107 : vector<8x128xf32>
    %109 = math.exp %108 : vector<8x128xf32>
    %cst_31 = arith.constant 1.000000e+00 : f32
    %110 = vector.broadcast %cst_31 : f32 to vector<8x128xf32>
    %111 = arith.addf %110, %109 : vector<8x128xf32>
    %112 = arith.divf %110, %111 : vector<8x128xf32>
    %113 = vector.extract_strided_slice %80 {offsets = [0, 128], sizes = [8, 128], strides = [1, 1]} : vector<8x384xf32> to vector<8x128xf32>
    %114 = vector.extract_strided_slice %81 {offsets = [0, 512], sizes = [8, 128], strides = [1, 1]} : vector<8x768xf32> to vector<8x128xf32>
    %115 = arith.addf %113, %114 : vector<8x128xf32>
    %116 = arith.negf %115 : vector<8x128xf32>
    %117 = math.exp %116 : vector<8x128xf32>
    %cst_32 = arith.constant 1.000000e+00 : f32
    %118 = vector.broadcast %cst_32 : f32 to vector<8x128xf32>
    %119 = arith.addf %118, %117 : vector<8x128xf32>
    %120 = arith.divf %118, %119 : vector<8x128xf32>
    %121 = vector.extract_strided_slice %80 {offsets = [0, 256], sizes = [8, 128], strides = [1, 1]} : vector<8x384xf32> to vector<8x128xf32>
    %122 = vector.extract_strided_slice %81 {offsets = [0, 640], sizes = [8, 128], strides = [1, 1]} : vector<8x768xf32> to vector<8x128xf32>
    %123 = vector.broadcast %5 : vector<1x128xf32> to vector<8x128xf32>
    %124 = arith.addf %122, %123 : vector<8x128xf32>
    %125 = arith.mulf %112, %124 : vector<8x128xf32>
    %126 = arith.addf %121, %125 : vector<8x128xf32>
    %127 = math.tanh %126 : vector<8x128xf32>
    %cst_33 = arith.constant 1.000000e+00 : f32
    %128 = vector.broadcast %cst_33 : f32 to vector<8x128xf32>
    %129 = arith.subf %128, %97 : vector<8x128xf32>
    %130 = arith.mulf %129, %104 : vector<8x128xf32>
    %131 = vector.extract_strided_slice %76 {offsets = [0, 0], sizes = [8, 128], strides = [1, 1]} : vector<8x256xf32> to vector<8x128xf32>
    %132 = arith.mulf %97, %131 : vector<8x128xf32>
    %133 = arith.addf %130, %132 : vector<8x128xf32>
    %cst_34 = arith.constant 1.000000e+00 : f32
    %134 = vector.broadcast %cst_34 : f32 to vector<8x128xf32>
    %135 = arith.subf %134, %120 : vector<8x128xf32>
    %136 = arith.mulf %135, %127 : vector<8x128xf32>
    %137 = vector.extract_strided_slice %76 {offsets = [0, 128], sizes = [8, 128], strides = [1, 1]} : vector<8x256xf32> to vector<8x128xf32>
    %138 = arith.mulf %120, %137 : vector<8x128xf32>
    %139 = arith.addf %136, %138 : vector<8x128xf32>
    %c1_35 = arith.constant 1 : index
    %c0_36 = arith.constant 0 : index
    %c0_37 = arith.constant 0 : index
    %140 = vector.load %arg5[%c1_35, %c0_36, %c0_37] : memref<8x8x128xf32, #tpu.memory_space<vmem>>, vector<1x8x128xf32>
    %141 = vector.shape_cast %140 : vector<1x8x128xf32> to vector<8x128xf32>
    %142 = vector.shape_cast %133 : vector<8x128xf32> to vector<1x8x128xf32>
    tpu.vector_store %arg5[%c1_35, %c0_36, %c0_37], %142 {strides = array<i32>} : memref<8x8x128xf32, #tpu.memory_space<vmem>>, vector<1x8x128xf32>,
    %c6_38 = arith.constant 6 : index
    %c0_39 = arith.constant 0 : index
    %c0_40 = arith.constant 0 : index
    %143 = vector.load %arg6[%c6_38, %c0_39, %c0_40] : memref<8x8x128xf32, #tpu.memory_space<vmem>>, vector<1x8x128xf32>
    %144 = vector.shape_cast %143 : vector<1x8x128xf32> to vector<8x128xf32>
    %145 = vector.shape_cast %139 : vector<8x128xf32> to vector<1x8x128xf32>
    tpu.vector_store %arg6[%c6_38, %c0_39, %c0_40], %145 {strides = array<i32>} : memref<8x8x128xf32, #tpu.memory_space<vmem>>, vector<1x8x128xf32>,
    %146 = tpu.concatenate %133, %139 in 1 : vector<8x128xf32>, vector<8x128xf32> -> vector<8x256xf32>
    %c2 = arith.constant 2 : index
    %c0_41 = arith.constant 0 : index
    %c0_42 = arith.constant 0 : index
    %147 = vector.load %arg1[%c2, %c0_41, %c0_42] : memref<8x8x384xf32, #tpu.memory_space<vmem>>, vector<1x8x384xf32>
    %148 = vector.shape_cast %147 : vector<1x8x384xf32> to vector<8x384xf32>
    %c5 = arith.constant 5 : index
    %c0_43 = arith.constant 0 : index
    %c0_44 = arith.constant 0 : index
    %149 = vector.load %arg2[%c5, %c0_43, %c0_44] : memref<8x8x384xf32, #tpu.memory_space<vmem>>, vector<1x8x384xf32>
    %150 = vector.shape_cast %149 : vector<1x8x384xf32> to vector<8x384xf32>
    %cst_45 = arith.constant dense<0.000000e+00> : vector<8x768xf32>
    %151 = tpu.matmul %146, %3, %cst_45 {dimension_numbers = #tpu.dot_dimension_numbers<[1], [0], [0], [1], [0, 0, 1, 1], [], []>} : vector<8x256xf32>, vector<256x768xf32>, vector<8x768xf32> -> vector<8x768xf32>
    %152 = vector.extract_strided_slice %148 {offsets = [0, 0], sizes = [8, 128], strides = [1, 1]} : vector<8x384xf32> to vector<8x128xf32>
    %153 = vector.extract_strided_slice %151 {offsets = [0, 0], sizes = [8, 128], strides = [1, 1]} : vector<8x768xf32> to vector<8x128xf32>
    %154 = arith.addf %152, %153 : vector<8x128xf32>
    %155 = arith.negf %154 : vector<8x128xf32>
    %156 = math.exp %155 : vector<8x128xf32>
    %cst_46 = arith.constant 1.000000e+00 : f32
    %157 = vector.broadcast %cst_46 : f32 to vector<8x128xf32>
    %158 = arith.addf %157, %156 : vector<8x128xf32>
    %159 = arith.divf %157, %158 : vector<8x128xf32>
    %160 = vector.extract_strided_slice %148 {offsets = [0, 128], sizes = [8, 128], strides = [1, 1]} : vector<8x384xf32> to vector<8x128xf32>
    %161 = vector.extract_strided_slice %151 {offsets = [0, 128], sizes = [8, 128], strides = [1, 1]} : vector<8x768xf32> to vector<8x128xf32>
    %162 = arith.addf %160, %161 : vector<8x128xf32>
    %163 = arith.negf %162 : vector<8x128xf32>
    %164 = math.exp %163 : vector<8x128xf32>
    %cst_47 = arith.constant 1.000000e+00 : f32
    %165 = vector.broadcast %cst_47 : f32 to vector<8x128xf32>
    %166 = arith.addf %165, %164 : vector<8x128xf32>
    %167 = arith.divf %165, %166 : vector<8x128xf32>
    %168 = vector.extract_strided_slice %148 {offsets = [0, 256], sizes = [8, 128], strides = [1, 1]} : vector<8x384xf32> to vector<8x128xf32>
    %169 = vector.extract_strided_slice %151 {offsets = [0, 256], sizes = [8, 128], strides = [1, 1]} : vector<8x768xf32> to vector<8x128xf32>
    %170 = vector.broadcast %4 : vector<1x128xf32> to vector<8x128xf32>
    %171 = arith.addf %169, %170 : vector<8x128xf32>
    %172 = arith.mulf %159, %171 : vector<8x128xf32>
    %173 = arith.addf %168, %172 : vector<8x128xf32>
    %174 = math.tanh %173 : vector<8x128xf32>
    %175 = vector.extract_strided_slice %150 {offsets = [0, 0], sizes = [8, 128], strides = [1, 1]} : vector<8x384xf32> to vector<8x128xf32>
    %176 = vector.extract_strided_slice %151 {offsets = [0, 384], sizes = [8, 128], strides = [1, 1]} : vector<8x768xf32> to vector<8x128xf32>
    %177 = arith.addf %175, %176 : vector<8x128xf32>
    %178 = arith.negf %177 : vector<8x128xf32>
    %179 = math.exp %178 : vector<8x128xf32>
    %cst_48 = arith.constant 1.000000e+00 : f32
    %180 = vector.broadcast %cst_48 : f32 to vector<8x128xf32>
    %181 = arith.addf %180, %179 : vector<8x128xf32>
    %182 = arith.divf %180, %181 : vector<8x128xf32>
    %183 = vector.extract_strided_slice %150 {offsets = [0, 128], sizes = [8, 128], strides = [1, 1]} : vector<8x384xf32> to vector<8x128xf32>
    %184 = vector.extract_strided_slice %151 {offsets = [0, 512], sizes = [8, 128], strides = [1, 1]} : vector<8x768xf32> to vector<8x128xf32>
    %185 = arith.addf %183, %184 : vector<8x128xf32>
    %186 = arith.negf %185 : vector<8x128xf32>
    %187 = math.exp %186 : vector<8x128xf32>
    %cst_49 = arith.constant 1.000000e+00 : f32
    %188 = vector.broadcast %cst_49 : f32 to vector<8x128xf32>
    %189 = arith.addf %188, %187 : vector<8x128xf32>
    %190 = arith.divf %188, %189 : vector<8x128xf32>
    %191 = vector.extract_strided_slice %150 {offsets = [0, 256], sizes = [8, 128], strides = [1, 1]} : vector<8x384xf32> to vector<8x128xf32>
    %192 = vector.extract_strided_slice %151 {offsets = [0, 640], sizes = [8, 128], strides = [1, 1]} : vector<8x768xf32> to vector<8x128xf32>
    %193 = vector.broadcast %5 : vector<1x128xf32> to vector<8x128xf32>
    %194 = arith.addf %192, %193 : vector<8x128xf32>
    %195 = arith.mulf %182, %194 : vector<8x128xf32>
    %196 = arith.addf %191, %195 : vector<8x128xf32>
    %197 = math.tanh %196 : vector<8x128xf32>
    %cst_50 = arith.constant 1.000000e+00 : f32
    %198 = vector.broadcast %cst_50 : f32 to vector<8x128xf32>
    %199 = arith.subf %198, %167 : vector<8x128xf32>
    %200 = arith.mulf %199, %174 : vector<8x128xf32>
    %201 = vector.extract_strided_slice %146 {offsets = [0, 0], sizes = [8, 128], strides = [1, 1]} : vector<8x256xf32> to vector<8x128xf32>
    %202 = arith.mulf %167, %201 : vector<8x128xf32>
    %203 = arith.addf %200, %202 : vector<8x128xf32>
    %cst_51 = arith.constant 1.000000e+00 : f32
    %204 = vector.broadcast %cst_51 : f32 to vector<8x128xf32>
    %205 = arith.subf %204, %190 : vector<8x128xf32>
    %206 = arith.mulf %205, %197 : vector<8x128xf32>
    %207 = vector.extract_strided_slice %146 {offsets = [0, 128], sizes = [8, 128], strides = [1, 1]} : vector<8x256xf32> to vector<8x128xf32>
    %208 = arith.mulf %190, %207 : vector<8x128xf32>
    %209 = arith.addf %206, %208 : vector<8x128xf32>
    %c2_52 = arith.constant 2 : index
    %c0_53 = arith.constant 0 : index
    %c0_54 = arith.constant 0 : index
    %210 = vector.load %arg5[%c2_52, %c0_53, %c0_54] : memref<8x8x128xf32, #tpu.memory_space<vmem>>, vector<1x8x128xf32>
    %211 = vector.shape_cast %210 : vector<1x8x128xf32> to vector<8x128xf32>
    %212 = vector.shape_cast %203 : vector<8x128xf32> to vector<1x8x128xf32>
    tpu.vector_store %arg5[%c2_52, %c0_53, %c0_54], %212 {strides = array<i32>} : memref<8x8x128xf32, #tpu.memory_space<vmem>>, vector<1x8x128xf32>,
    %c5_55 = arith.constant 5 : index
    %c0_56 = arith.constant 0 : index
    %c0_57 = arith.constant 0 : index
    %213 = vector.load %arg6[%c5_55, %c0_56, %c0_57] : memref<8x8x128xf32, #tpu.memory_space<vmem>>, vector<1x8x128xf32>
    %214 = vector.shape_cast %213 : vector<1x8x128xf32> to vector<8x128xf32>
    %215 = vector.shape_cast %209 : vector<8x128xf32> to vector<1x8x128xf32>
    tpu.vector_store %arg6[%c5_55, %c0_56, %c0_57], %215 {strides = array<i32>} : memref<8x8x128xf32, #tpu.memory_space<vmem>>, vector<1x8x128xf32>,
    %216 = tpu.concatenate %203, %209 in 1 : vector<8x128xf32>, vector<8x128xf32> -> vector<8x256xf32>
    %c3 = arith.constant 3 : index
    %c0_58 = arith.constant 0 : index
    %c0_59 = arith.constant 0 : index
    %217 = vector.load %arg1[%c3, %c0_58, %c0_59] : memref<8x8x384xf32, #tpu.memory_space<vmem>>, vector<1x8x384xf32>
    %218 = vector.shape_cast %217 : vector<1x8x384xf32> to vector<8x384xf32>
    %c4 = arith.constant 4 : index
    %c0_60 = arith.constant 0 : index
    %c0_61 = arith.constant 0 : index
    %219 = vector.load %arg2[%c4, %c0_60, %c0_61] : memref<8x8x384xf32, #tpu.memory_space<vmem>>, vector<1x8x384xf32>
    %220 = vector.shape_cast %219 : vector<1x8x384xf32> to vector<8x384xf32>
    %cst_62 = arith.constant dense<0.000000e+00> : vector<8x768xf32>
    %221 = tpu.matmul %216, %3, %cst_62 {dimension_numbers = #tpu.dot_dimension_numbers<[1], [0], [0], [1], [0, 0, 1, 1], [], []>} : vector<8x256xf32>, vector<256x768xf32>, vector<8x768xf32> -> vector<8x768xf32>
    %222 = vector.extract_strided_slice %218 {offsets = [0, 0], sizes = [8, 128], strides = [1, 1]} : vector<8x384xf32> to vector<8x128xf32>
    %223 = vector.extract_strided_slice %221 {offsets = [0, 0], sizes = [8, 128], strides = [1, 1]} : vector<8x768xf32> to vector<8x128xf32>
    %224 = arith.addf %222, %223 : vector<8x128xf32>
    %225 = arith.negf %224 : vector<8x128xf32>
    %226 = math.exp %225 : vector<8x128xf32>
    %cst_63 = arith.constant 1.000000e+00 : f32
    %227 = vector.broadcast %cst_63 : f32 to vector<8x128xf32>
    %228 = arith.addf %227, %226 : vector<8x128xf32>
    %229 = arith.divf %227, %228 : vector<8x128xf32>
    %230 = vector.extract_strided_slice %218 {offsets = [0, 128], sizes = [8, 128], strides = [1, 1]} : vector<8x384xf32> to vector<8x128xf32>
    %231 = vector.extract_strided_slice %221 {offsets = [0, 128], sizes = [8, 128], strides = [1, 1]} : vector<8x768xf32> to vector<8x128xf32>
    %232 = arith.addf %230, %231 : vector<8x128xf32>
    %233 = arith.negf %232 : vector<8x128xf32>
    %234 = math.exp %233 : vector<8x128xf32>
    %cst_64 = arith.constant 1.000000e+00 : f32
    %235 = vector.broadcast %cst_64 : f32 to vector<8x128xf32>
    %236 = arith.addf %235, %234 : vector<8x128xf32>
    %237 = arith.divf %235, %236 : vector<8x128xf32>
    %238 = vector.extract_strided_slice %218 {offsets = [0, 256], sizes = [8, 128], strides = [1, 1]} : vector<8x384xf32> to vector<8x128xf32>
    %239 = vector.extract_strided_slice %221 {offsets = [0, 256], sizes = [8, 128], strides = [1, 1]} : vector<8x768xf32> to vector<8x128xf32>
    %240 = vector.broadcast %4 : vector<1x128xf32> to vector<8x128xf32>
    %241 = arith.addf %239, %240 : vector<8x128xf32>
    %242 = arith.mulf %229, %241 : vector<8x128xf32>
    %243 = arith.addf %238, %242 : vector<8x128xf32>
    %244 = math.tanh %243 : vector<8x128xf32>
    %245 = vector.extract_strided_slice %220 {offsets = [0, 0], sizes = [8, 128], strides = [1, 1]} : vector<8x384xf32> to vector<8x128xf32>
    %246 = vector.extract_strided_slice %221 {offsets = [0, 384], sizes = [8, 128], strides = [1, 1]} : vector<8x768xf32> to vector<8x128xf32>
    %247 = arith.addf %245, %246 : vector<8x128xf32>
    %248 = arith.negf %247 : vector<8x128xf32>
    %249 = math.exp %248 : vector<8x128xf32>
    %cst_65 = arith.constant 1.000000e+00 : f32
    %250 = vector.broadcast %cst_65 : f32 to vector<8x128xf32>
    %251 = arith.addf %250, %249 : vector<8x128xf32>
    %252 = arith.divf %250, %251 : vector<8x128xf32>
    %253 = vector.extract_strided_slice %220 {offsets = [0, 128], sizes = [8, 128], strides = [1, 1]} : vector<8x384xf32> to vector<8x128xf32>
    %254 = vector.extract_strided_slice %221 {offsets = [0, 512], sizes = [8, 128], strides = [1, 1]} : vector<8x768xf32> to vector<8x128xf32>
    %255 = arith.addf %253, %254 : vector<8x128xf32>
    %256 = arith.negf %255 : vector<8x128xf32>
    %257 = math.exp %256 : vector<8x128xf32>
    %cst_66 = arith.constant 1.000000e+00 : f32
    %258 = vector.broadcast %cst_66 : f32 to vector<8x128xf32>
    %259 = arith.addf %258, %257 : vector<8x128xf32>
    %260 = arith.divf %258, %259 : vector<8x128xf32>
    %261 = vector.extract_strided_slice %220 {offsets = [0, 256], sizes = [8, 128], strides = [1, 1]} : vector<8x384xf32> to vector<8x128xf32>
    %262 = vector.extract_strided_slice %221 {offsets = [0, 640], sizes = [8, 128], strides = [1, 1]} : vector<8x768xf32> to vector<8x128xf32>
    %263 = vector.broadcast %5 : vector<1x128xf32> to vector<8x128xf32>
    %264 = arith.addf %262, %263 : vector<8x128xf32>
    %265 = arith.mulf %252, %264 : vector<8x128xf32>
    %266 = arith.addf %261, %265 : vector<8x128xf32>
    %267 = math.tanh %266 : vector<8x128xf32>
    %cst_67 = arith.constant 1.000000e+00 : f32
    %268 = vector.broadcast %cst_67 : f32 to vector<8x128xf32>
    %269 = arith.subf %268, %237 : vector<8x128xf32>
    %270 = arith.mulf %269, %244 : vector<8x128xf32>
    %271 = vector.extract_strided_slice %216 {offsets = [0, 0], sizes = [8, 128], strides = [1, 1]} : vector<8x256xf32> to vector<8x128xf32>
    %272 = arith.mulf %237, %271 : vector<8x128xf32>
    %273 = arith.addf %270, %272 : vector<8x128xf32>
    %cst_68 = arith.constant 1.000000e+00 : f32
    %274 = vector.broadcast %cst_68 : f32 to vector<8x128xf32>
    %275 = arith.subf %274, %260 : vector<8x128xf32>
    %276 = arith.mulf %275, %267 : vector<8x128xf32>
    %277 = vector.extract_strided_slice %216 {offsets = [0, 128], sizes = [8, 128], strides = [1, 1]} : vector<8x256xf32> to vector<8x128xf32>
    %278 = arith.mulf %260, %277 : vector<8x128xf32>
    %279 = arith.addf %276, %278 : vector<8x128xf32>
    %c3_69 = arith.constant 3 : index
    %c0_70 = arith.constant 0 : index
    %c0_71 = arith.constant 0 : index
    %280 = vector.load %arg5[%c3_69, %c0_70, %c0_71] : memref<8x8x128xf32, #tpu.memory_space<vmem>>, vector<1x8x128xf32>
    %281 = vector.shape_cast %280 : vector<1x8x128xf32> to vector<8x128xf32>
    %282 = vector.shape_cast %273 : vector<8x128xf32> to vector<1x8x128xf32>
    tpu.vector_store %arg5[%c3_69, %c0_70, %c0_71], %282 {strides = array<i32>} : memref<8x8x128xf32, #tpu.memory_space<vmem>>, vector<1x8x128xf32>,
    %c4_72 = arith.constant 4 : index
    %c0_73 = arith.constant 0 : index
    %c0_74 = arith.constant 0 : index
    %283 = vector.load %arg6[%c4_72, %c0_73, %c0_74] : memref<8x8x128xf32, #tpu.memory_space<vmem>>, vector<1x8x128xf32>
    %284 = vector.shape_cast %283 : vector<1x8x128xf32> to vector<8x128xf32>
    %285 = vector.shape_cast %279 : vector<8x128xf32> to vector<1x8x128xf32>
    tpu.vector_store %arg6[%c4_72, %c0_73, %c0_74], %285 {strides = array<i32>} : memref<8x8x128xf32, #tpu.memory_space<vmem>>, vector<1x8x128xf32>,
    %286 = tpu.concatenate %273, %279 in 1 : vector<8x128xf32>, vector<8x128xf32> -> vector<8x256xf32>
    %c4_75 = arith.constant 4 : index
    %c0_76 = arith.constant 0 : index
    %c0_77 = arith.constant 0 : index
    %287 = vector.load %arg1[%c4_75, %c0_76, %c0_77] : memref<8x8x384xf32, #tpu.memory_space<vmem>>, vector<1x8x384xf32>
    %288 = vector.shape_cast %287 : vector<1x8x384xf32> to vector<8x384xf32>
    %c3_78 = arith.constant 3 : index
    %c0_79 = arith.constant 0 : index
    %c0_80 = arith.constant 0 : index
    %289 = vector.load %arg2[%c3_78, %c0_79, %c0_80] : memref<8x8x384xf32, #tpu.memory_space<vmem>>, vector<1x8x384xf32>
    %290 = vector.shape_cast %289 : vector<1x8x384xf32> to vector<8x384xf32>
    %cst_81 = arith.constant dense<0.000000e+00> : vector<8x768xf32>
    %291 = tpu.matmul %286, %3, %cst_81 {dimension_numbers = #tpu.dot_dimension_numbers<[1], [0], [0], [1], [0, 0, 1, 1], [], []>} : vector<8x256xf32>, vector<256x768xf32>, vector<8x768xf32> -> vector<8x768xf32>
    %292 = vector.extract_strided_slice %288 {offsets = [0, 0], sizes = [8, 128], strides = [1, 1]} : vector<8x384xf32> to vector<8x128xf32>
    %293 = vector.extract_strided_slice %291 {offsets = [0, 0], sizes = [8, 128], strides = [1, 1]} : vector<8x768xf32> to vector<8x128xf32>
    %294 = arith.addf %292, %293 : vector<8x128xf32>
    %295 = arith.negf %294 : vector<8x128xf32>
    %296 = math.exp %295 : vector<8x128xf32>
    %cst_82 = arith.constant 1.000000e+00 : f32
    %297 = vector.broadcast %cst_82 : f32 to vector<8x128xf32>
    %298 = arith.addf %297, %296 : vector<8x128xf32>
    %299 = arith.divf %297, %298 : vector<8x128xf32>
    %300 = vector.extract_strided_slice %288 {offsets = [0, 128], sizes = [8, 128], strides = [1, 1]} : vector<8x384xf32> to vector<8x128xf32>
    %301 = vector.extract_strided_slice %291 {offsets = [0, 128], sizes = [8, 128], strides = [1, 1]} : vector<8x768xf32> to vector<8x128xf32>
    %302 = arith.addf %300, %301 : vector<8x128xf32>
    %303 = arith.negf %302 : vector<8x128xf32>
    %304 = math.exp %303 : vector<8x128xf32>
    %cst_83 = arith.constant 1.000000e+00 : f32
    %305 = vector.broadcast %cst_83 : f32 to vector<8x128xf32>
    %306 = arith.addf %305, %304 : vector<8x128xf32>
    %307 = arith.divf %305, %306 : vector<8x128xf32>
    %308 = vector.extract_strided_slice %288 {offsets = [0, 256], sizes = [8, 128], strides = [1, 1]} : vector<8x384xf32> to vector<8x128xf32>
    %309 = vector.extract_strided_slice %291 {offsets = [0, 256], sizes = [8, 128], strides = [1, 1]} : vector<8x768xf32> to vector<8x128xf32>
    %310 = vector.broadcast %4 : vector<1x128xf32> to vector<8x128xf32>
    %311 = arith.addf %309, %310 : vector<8x128xf32>
    %312 = arith.mulf %299, %311 : vector<8x128xf32>
    %313 = arith.addf %308, %312 : vector<8x128xf32>
    %314 = math.tanh %313 : vector<8x128xf32>
    %315 = vector.extract_strided_slice %290 {offsets = [0, 0], sizes = [8, 128], strides = [1, 1]} : vector<8x384xf32> to vector<8x128xf32>
    %316 = vector.extract_strided_slice %291 {offsets = [0, 384], sizes = [8, 128], strides = [1, 1]} : vector<8x768xf32> to vector<8x128xf32>
    %317 = arith.addf %315, %316 : vector<8x128xf32>
    %318 = arith.negf %317 : vector<8x128xf32>
    %319 = math.exp %318 : vector<8x128xf32>
    %cst_84 = arith.constant 1.000000e+00 : f32
    %320 = vector.broadcast %cst_84 : f32 to vector<8x128xf32>
    %321 = arith.addf %320, %319 : vector<8x128xf32>
    %322 = arith.divf %320, %321 : vector<8x128xf32>
    %323 = vector.extract_strided_slice %290 {offsets = [0, 128], sizes = [8, 128], strides = [1, 1]} : vector<8x384xf32> to vector<8x128xf32>
    %324 = vector.extract_strided_slice %291 {offsets = [0, 512], sizes = [8, 128], strides = [1, 1]} : vector<8x768xf32> to vector<8x128xf32>
    %325 = arith.addf %323, %324 : vector<8x128xf32>
    %326 = arith.negf %325 : vector<8x128xf32>
    %327 = math.exp %326 : vector<8x128xf32>
    %cst_85 = arith.constant 1.000000e+00 : f32
    %328 = vector.broadcast %cst_85 : f32 to vector<8x128xf32>
    %329 = arith.addf %328, %327 : vector<8x128xf32>
    %330 = arith.divf %328, %329 : vector<8x128xf32>
    %331 = vector.extract_strided_slice %290 {offsets = [0, 256], sizes = [8, 128], strides = [1, 1]} : vector<8x384xf32> to vector<8x128xf32>
    %332 = vector.extract_strided_slice %291 {offsets = [0, 640], sizes = [8, 128], strides = [1, 1]} : vector<8x768xf32> to vector<8x128xf32>
    %333 = vector.broadcast %5 : vector<1x128xf32> to vector<8x128xf32>
    %334 = arith.addf %332, %333 : vector<8x128xf32>
    %335 = arith.mulf %322, %334 : vector<8x128xf32>
    %336 = arith.addf %331, %335 : vector<8x128xf32>
    %337 = math.tanh %336 : vector<8x128xf32>
    %cst_86 = arith.constant 1.000000e+00 : f32
    %338 = vector.broadcast %cst_86 : f32 to vector<8x128xf32>
    %339 = arith.subf %338, %307 : vector<8x128xf32>
    %340 = arith.mulf %339, %314 : vector<8x128xf32>
    %341 = vector.extract_strided_slice %286 {offsets = [0, 0], sizes = [8, 128], strides = [1, 1]} : vector<8x256xf32> to vector<8x128xf32>
    %342 = arith.mulf %307, %341 : vector<8x128xf32>
    %343 = arith.addf %340, %342 : vector<8x128xf32>
    %cst_87 = arith.constant 1.000000e+00 : f32
    %344 = vector.broadcast %cst_87 : f32 to vector<8x128xf32>
    %345 = arith.subf %344, %330 : vector<8x128xf32>
    %346 = arith.mulf %345, %337 : vector<8x128xf32>
    %347 = vector.extract_strided_slice %286 {offsets = [0, 128], sizes = [8, 128], strides = [1, 1]} : vector<8x256xf32> to vector<8x128xf32>
    %348 = arith.mulf %330, %347 : vector<8x128xf32>
    %349 = arith.addf %346, %348 : vector<8x128xf32>
    %c4_88 = arith.constant 4 : index
    %c0_89 = arith.constant 0 : index
    %c0_90 = arith.constant 0 : index
    %350 = vector.load %arg5[%c4_88, %c0_89, %c0_90] : memref<8x8x128xf32, #tpu.memory_space<vmem>>, vector<1x8x128xf32>
    %351 = vector.shape_cast %350 : vector<1x8x128xf32> to vector<8x128xf32>
    %352 = vector.shape_cast %343 : vector<8x128xf32> to vector<1x8x128xf32>
    tpu.vector_store %arg5[%c4_88, %c0_89, %c0_90], %352 {strides = array<i32>} : memref<8x8x128xf32, #tpu.memory_space<vmem>>, vector<1x8x128xf32>,
    %c3_91 = arith.constant 3 : index
    %c0_92 = arith.constant 0 : index
    %c0_93 = arith.constant 0 : index
    %353 = vector.load %arg6[%c3_91, %c0_92, %c0_93] : memref<8x8x128xf32, #tpu.memory_space<vmem>>, vector<1x8x128xf32>
    %354 = vector.shape_cast %353 : vector<1x8x128xf32> to vector<8x128xf32>
    %355 = vector.shape_cast %349 : vector<8x128xf32> to vector<1x8x128xf32>
    tpu.vector_store %arg6[%c3_91, %c0_92, %c0_93], %355 {strides = array<i32>} : memref<8x8x128xf32, #tpu.memory_space<vmem>>, vector<1x8x128xf32>,
    %356 = tpu.concatenate %343, %349 in 1 : vector<8x128xf32>, vector<8x128xf32> -> vector<8x256xf32>
    %c5_94 = arith.constant 5 : index
    %c0_95 = arith.constant 0 : index
    %c0_96 = arith.constant 0 : index
    %357 = vector.load %arg1[%c5_94, %c0_95, %c0_96] : memref<8x8x384xf32, #tpu.memory_space<vmem>>, vector<1x8x384xf32>
    %358 = vector.shape_cast %357 : vector<1x8x384xf32> to vector<8x384xf32>
    %c2_97 = arith.constant 2 : index
    %c0_98 = arith.constant 0 : index
    %c0_99 = arith.constant 0 : index
    %359 = vector.load %arg2[%c2_97, %c0_98, %c0_99] : memref<8x8x384xf32, #tpu.memory_space<vmem>>, vector<1x8x384xf32>
    %360 = vector.shape_cast %359 : vector<1x8x384xf32> to vector<8x384xf32>
    %cst_100 = arith.constant dense<0.000000e+00> : vector<8x768xf32>
    %361 = tpu.matmul %356, %3, %cst_100 {dimension_numbers = #tpu.dot_dimension_numbers<[1], [0], [0], [1], [0, 0, 1, 1], [], []>} : vector<8x256xf32>, vector<256x768xf32>, vector<8x768xf32> -> vector<8x768xf32>
    %362 = vector.extract_strided_slice %358 {offsets = [0, 0], sizes = [8, 128], strides = [1, 1]} : vector<8x384xf32> to vector<8x128xf32>
    %363 = vector.extract_strided_slice %361 {offsets = [0, 0], sizes = [8, 128], strides = [1, 1]} : vector<8x768xf32> to vector<8x128xf32>
    %364 = arith.addf %362, %363 : vector<8x128xf32>
    %365 = arith.negf %364 : vector<8x128xf32>
    %366 = math.exp %365 : vector<8x128xf32>
    %cst_101 = arith.constant 1.000000e+00 : f32
    %367 = vector.broadcast %cst_101 : f32 to vector<8x128xf32>
    %368 = arith.addf %367, %366 : vector<8x128xf32>
    %369 = arith.divf %367, %368 : vector<8x128xf32>
    %370 = vector.extract_strided_slice %358 {offsets = [0, 128], sizes = [8, 128], strides = [1, 1]} : vector<8x384xf32> to vector<8x128xf32>
    %371 = vector.extract_strided_slice %361 {offsets = [0, 128], sizes = [8, 128], strides = [1, 1]} : vector<8x768xf32> to vector<8x128xf32>
    %372 = arith.addf %370, %371 : vector<8x128xf32>
    %373 = arith.negf %372 : vector<8x128xf32>
    %374 = math.exp %373 : vector<8x128xf32>
    %cst_102 = arith.constant 1.000000e+00 : f32
    %375 = vector.broadcast %cst_102 : f32 to vector<8x128xf32>
    %376 = arith.addf %375, %374 : vector<8x128xf32>
    %377 = arith.divf %375, %376 : vector<8x128xf32>
    %378 = vector.extract_strided_slice %358 {offsets = [0, 256], sizes = [8, 128], strides = [1, 1]} : vector<8x384xf32> to vector<8x128xf32>
    %379 = vector.extract_strided_slice %361 {offsets = [0, 256], sizes = [8, 128], strides = [1, 1]} : vector<8x768xf32> to vector<8x128xf32>
    %380 = vector.broadcast %4 : vector<1x128xf32> to vector<8x128xf32>
    %381 = arith.addf %379, %380 : vector<8x128xf32>
    %382 = arith.mulf %369, %381 : vector<8x128xf32>
    %383 = arith.addf %378, %382 : vector<8x128xf32>
    %384 = math.tanh %383 : vector<8x128xf32>
    %385 = vector.extract_strided_slice %360 {offsets = [0, 0], sizes = [8, 128], strides = [1, 1]} : vector<8x384xf32> to vector<8x128xf32>
    %386 = vector.extract_strided_slice %361 {offsets = [0, 384], sizes = [8, 128], strides = [1, 1]} : vector<8x768xf32> to vector<8x128xf32>
    %387 = arith.addf %385, %386 : vector<8x128xf32>
    %388 = arith.negf %387 : vector<8x128xf32>
    %389 = math.exp %388 : vector<8x128xf32>
    %cst_103 = arith.constant 1.000000e+00 : f32
    %390 = vector.broadcast %cst_103 : f32 to vector<8x128xf32>
    %391 = arith.addf %390, %389 : vector<8x128xf32>
    %392 = arith.divf %390, %391 : vector<8x128xf32>
    %393 = vector.extract_strided_slice %360 {offsets = [0, 128], sizes = [8, 128], strides = [1, 1]} : vector<8x384xf32> to vector<8x128xf32>
    %394 = vector.extract_strided_slice %361 {offsets = [0, 512], sizes = [8, 128], strides = [1, 1]} : vector<8x768xf32> to vector<8x128xf32>
    %395 = arith.addf %393, %394 : vector<8x128xf32>
    %396 = arith.negf %395 : vector<8x128xf32>
    %397 = math.exp %396 : vector<8x128xf32>
    %cst_104 = arith.constant 1.000000e+00 : f32
    %398 = vector.broadcast %cst_104 : f32 to vector<8x128xf32>
    %399 = arith.addf %398, %397 : vector<8x128xf32>
    %400 = arith.divf %398, %399 : vector<8x128xf32>
    %401 = vector.extract_strided_slice %360 {offsets = [0, 256], sizes = [8, 128], strides = [1, 1]} : vector<8x384xf32> to vector<8x128xf32>
    %402 = vector.extract_strided_slice %361 {offsets = [0, 640], sizes = [8, 128], strides = [1, 1]} : vector<8x768xf32> to vector<8x128xf32>
    %403 = vector.broadcast %5 : vector<1x128xf32> to vector<8x128xf32>
    %404 = arith.addf %402, %403 : vector<8x128xf32>
    %405 = arith.mulf %392, %404 : vector<8x128xf32>
    %406 = arith.addf %401, %405 : vector<8x128xf32>
    %407 = math.tanh %406 : vector<8x128xf32>
    %cst_105 = arith.constant 1.000000e+00 : f32
    %408 = vector.broadcast %cst_105 : f32 to vector<8x128xf32>
    %409 = arith.subf %408, %377 : vector<8x128xf32>
    %410 = arith.mulf %409, %384 : vector<8x128xf32>
    %411 = vector.extract_strided_slice %356 {offsets = [0, 0], sizes = [8, 128], strides = [1, 1]} : vector<8x256xf32> to vector<8x128xf32>
    %412 = arith.mulf %377, %411 : vector<8x128xf32>
    %413 = arith.addf %410, %412 : vector<8x128xf32>
    %cst_106 = arith.constant 1.000000e+00 : f32
    %414 = vector.broadcast %cst_106 : f32 to vector<8x128xf32>
    %415 = arith.subf %414, %400 : vector<8x128xf32>
    %416 = arith.mulf %415, %407 : vector<8x128xf32>
    %417 = vector.extract_strided_slice %356 {offsets = [0, 128], sizes = [8, 128], strides = [1, 1]} : vector<8x256xf32> to vector<8x128xf32>
    %418 = arith.mulf %400, %417 : vector<8x128xf32>
    %419 = arith.addf %416, %418 : vector<8x128xf32>
    %c5_107 = arith.constant 5 : index
    %c0_108 = arith.constant 0 : index
    %c0_109 = arith.constant 0 : index
    %420 = vector.load %arg5[%c5_107, %c0_108, %c0_109] : memref<8x8x128xf32, #tpu.memory_space<vmem>>, vector<1x8x128xf32>
    %421 = vector.shape_cast %420 : vector<1x8x128xf32> to vector<8x128xf32>
    %422 = vector.shape_cast %413 : vector<8x128xf32> to vector<1x8x128xf32>
    tpu.vector_store %arg5[%c5_107, %c0_108, %c0_109], %422 {strides = array<i32>} : memref<8x8x128xf32, #tpu.memory_space<vmem>>, vector<1x8x128xf32>,
    %c2_110 = arith.constant 2 : index
    %c0_111 = arith.constant 0 : index
    %c0_112 = arith.constant 0 : index
    %423 = vector.load %arg6[%c2_110, %c0_111, %c0_112] : memref<8x8x128xf32, #tpu.memory_space<vmem>>, vector<1x8x128xf32>
    %424 = vector.shape_cast %423 : vector<1x8x128xf32> to vector<8x128xf32>
    %425 = vector.shape_cast %419 : vector<8x128xf32> to vector<1x8x128xf32>
    tpu.vector_store %arg6[%c2_110, %c0_111, %c0_112], %425 {strides = array<i32>} : memref<8x8x128xf32, #tpu.memory_space<vmem>>, vector<1x8x128xf32>,
    %426 = tpu.concatenate %413, %419 in 1 : vector<8x128xf32>, vector<8x128xf32> -> vector<8x256xf32>
    %c6_113 = arith.constant 6 : index
    %c0_114 = arith.constant 0 : index
    %c0_115 = arith.constant 0 : index
    %427 = vector.load %arg1[%c6_113, %c0_114, %c0_115] : memref<8x8x384xf32, #tpu.memory_space<vmem>>, vector<1x8x384xf32>
    %428 = vector.shape_cast %427 : vector<1x8x384xf32> to vector<8x384xf32>
    %c1_116 = arith.constant 1 : index
    %c0_117 = arith.constant 0 : index
    %c0_118 = arith.constant 0 : index
    %429 = vector.load %arg2[%c1_116, %c0_117, %c0_118] : memref<8x8x384xf32, #tpu.memory_space<vmem>>, vector<1x8x384xf32>
    %430 = vector.shape_cast %429 : vector<1x8x384xf32> to vector<8x384xf32>
    %cst_119 = arith.constant dense<0.000000e+00> : vector<8x768xf32>
    %431 = tpu.matmul %426, %3, %cst_119 {dimension_numbers = #tpu.dot_dimension_numbers<[1], [0], [0], [1], [0, 0, 1, 1], [], []>} : vector<8x256xf32>, vector<256x768xf32>, vector<8x768xf32> -> vector<8x768xf32>
    %432 = vector.extract_strided_slice %428 {offsets = [0, 0], sizes = [8, 128], strides = [1, 1]} : vector<8x384xf32> to vector<8x128xf32>
    %433 = vector.extract_strided_slice %431 {offsets = [0, 0], sizes = [8, 128], strides = [1, 1]} : vector<8x768xf32> to vector<8x128xf32>
    %434 = arith.addf %432, %433 : vector<8x128xf32>
    %435 = arith.negf %434 : vector<8x128xf32>
    %436 = math.exp %435 : vector<8x128xf32>
    %cst_120 = arith.constant 1.000000e+00 : f32
    %437 = vector.broadcast %cst_120 : f32 to vector<8x128xf32>
    %438 = arith.addf %437, %436 : vector<8x128xf32>
    %439 = arith.divf %437, %438 : vector<8x128xf32>
    %440 = vector.extract_strided_slice %428 {offsets = [0, 128], sizes = [8, 128], strides = [1, 1]} : vector<8x384xf32> to vector<8x128xf32>
    %441 = vector.extract_strided_slice %431 {offsets = [0, 128], sizes = [8, 128], strides = [1, 1]} : vector<8x768xf32> to vector<8x128xf32>
    %442 = arith.addf %440, %441 : vector<8x128xf32>
    %443 = arith.negf %442 : vector<8x128xf32>
    %444 = math.exp %443 : vector<8x128xf32>
    %cst_121 = arith.constant 1.000000e+00 : f32
    %445 = vector.broadcast %cst_121 : f32 to vector<8x128xf32>
    %446 = arith.addf %445, %444 : vector<8x128xf32>
    %447 = arith.divf %445, %446 : vector<8x128xf32>
    %448 = vector.extract_strided_slice %428 {offsets = [0, 256], sizes = [8, 128], strides = [1, 1]} : vector<8x384xf32> to vector<8x128xf32>
    %449 = vector.extract_strided_slice %431 {offsets = [0, 256], sizes = [8, 128], strides = [1, 1]} : vector<8x768xf32> to vector<8x128xf32>
    %450 = vector.broadcast %4 : vector<1x128xf32> to vector<8x128xf32>
    %451 = arith.addf %449, %450 : vector<8x128xf32>
    %452 = arith.mulf %439, %451 : vector<8x128xf32>
    %453 = arith.addf %448, %452 : vector<8x128xf32>
    %454 = math.tanh %453 : vector<8x128xf32>
    %455 = vector.extract_strided_slice %430 {offsets = [0, 0], sizes = [8, 128], strides = [1, 1]} : vector<8x384xf32> to vector<8x128xf32>
    %456 = vector.extract_strided_slice %431 {offsets = [0, 384], sizes = [8, 128], strides = [1, 1]} : vector<8x768xf32> to vector<8x128xf32>
    %457 = arith.addf %455, %456 : vector<8x128xf32>
    %458 = arith.negf %457 : vector<8x128xf32>
    %459 = math.exp %458 : vector<8x128xf32>
    %cst_122 = arith.constant 1.000000e+00 : f32
    %460 = vector.broadcast %cst_122 : f32 to vector<8x128xf32>
    %461 = arith.addf %460, %459 : vector<8x128xf32>
    %462 = arith.divf %460, %461 : vector<8x128xf32>
    %463 = vector.extract_strided_slice %430 {offsets = [0, 128], sizes = [8, 128], strides = [1, 1]} : vector<8x384xf32> to vector<8x128xf32>
    %464 = vector.extract_strided_slice %431 {offsets = [0, 512], sizes = [8, 128], strides = [1, 1]} : vector<8x768xf32> to vector<8x128xf32>
    %465 = arith.addf %463, %464 : vector<8x128xf32>
    %466 = arith.negf %465 : vector<8x128xf32>
    %467 = math.exp %466 : vector<8x128xf32>
    %cst_123 = arith.constant 1.000000e+00 : f32
    %468 = vector.broadcast %cst_123 : f32 to vector<8x128xf32>
    %469 = arith.addf %468, %467 : vector<8x128xf32>
    %470 = arith.divf %468, %469 : vector<8x128xf32>
    %471 = vector.extract_strided_slice %430 {offsets = [0, 256], sizes = [8, 128], strides = [1, 1]} : vector<8x384xf32> to vector<8x128xf32>
    %472 = vector.extract_strided_slice %431 {offsets = [0, 640], sizes = [8, 128], strides = [1, 1]} : vector<8x768xf32> to vector<8x128xf32>
    %473 = vector.broadcast %5 : vector<1x128xf32> to vector<8x128xf32>
    %474 = arith.addf %472, %473 : vector<8x128xf32>
    %475 = arith.mulf %462, %474 : vector<8x128xf32>
    %476 = arith.addf %471, %475 : vector<8x128xf32>
    %477 = math.tanh %476 : vector<8x128xf32>
    %cst_124 = arith.constant 1.000000e+00 : f32
    %478 = vector.broadcast %cst_124 : f32 to vector<8x128xf32>
    %479 = arith.subf %478, %447 : vector<8x128xf32>
    %480 = arith.mulf %479, %454 : vector<8x128xf32>
    %481 = vector.extract_strided_slice %426 {offsets = [0, 0], sizes = [8, 128], strides = [1, 1]} : vector<8x256xf32> to vector<8x128xf32>
    %482 = arith.mulf %447, %481 : vector<8x128xf32>
    %483 = arith.addf %480, %482 : vector<8x128xf32>
    %cst_125 = arith.constant 1.000000e+00 : f32
    %484 = vector.broadcast %cst_125 : f32 to vector<8x128xf32>
    %485 = arith.subf %484, %470 : vector<8x128xf32>
    %486 = arith.mulf %485, %477 : vector<8x128xf32>
    %487 = vector.extract_strided_slice %426 {offsets = [0, 128], sizes = [8, 128], strides = [1, 1]} : vector<8x256xf32> to vector<8x128xf32>
    %488 = arith.mulf %470, %487 : vector<8x128xf32>
    %489 = arith.addf %486, %488 : vector<8x128xf32>
    %c6_126 = arith.constant 6 : index
    %c0_127 = arith.constant 0 : index
    %c0_128 = arith.constant 0 : index
    %490 = vector.load %arg5[%c6_126, %c0_127, %c0_128] : memref<8x8x128xf32, #tpu.memory_space<vmem>>, vector<1x8x128xf32>
    %491 = vector.shape_cast %490 : vector<1x8x128xf32> to vector<8x128xf32>
    %492 = vector.shape_cast %483 : vector<8x128xf32> to vector<1x8x128xf32>
    tpu.vector_store %arg5[%c6_126, %c0_127, %c0_128], %492 {strides = array<i32>} : memref<8x8x128xf32, #tpu.memory_space<vmem>>, vector<1x8x128xf32>,
    %c1_129 = arith.constant 1 : index
    %c0_130 = arith.constant 0 : index
    %c0_131 = arith.constant 0 : index
    %493 = vector.load %arg6[%c1_129, %c0_130, %c0_131] : memref<8x8x128xf32, #tpu.memory_space<vmem>>, vector<1x8x128xf32>
    %494 = vector.shape_cast %493 : vector<1x8x128xf32> to vector<8x128xf32>
    %495 = vector.shape_cast %489 : vector<8x128xf32> to vector<1x8x128xf32>
    tpu.vector_store %arg6[%c1_129, %c0_130, %c0_131], %495 {strides = array<i32>} : memref<8x8x128xf32, #tpu.memory_space<vmem>>, vector<1x8x128xf32>,
    %496 = tpu.concatenate %483, %489 in 1 : vector<8x128xf32>, vector<8x128xf32> -> vector<8x256xf32>
    %c7_132 = arith.constant 7 : index
    %c0_133 = arith.constant 0 : index
    %c0_134 = arith.constant 0 : index
    %497 = vector.load %arg1[%c7_132, %c0_133, %c0_134] : memref<8x8x384xf32, #tpu.memory_space<vmem>>, vector<1x8x384xf32>
    %498 = vector.shape_cast %497 : vector<1x8x384xf32> to vector<8x384xf32>
    %c0_135 = arith.constant 0 : index
    %c0_136 = arith.constant 0 : index
    %c0_137 = arith.constant 0 : index
    %499 = vector.load %arg2[%c0_135, %c0_136, %c0_137] : memref<8x8x384xf32, #tpu.memory_space<vmem>>, vector<1x8x384xf32>
    %500 = vector.shape_cast %499 : vector<1x8x384xf32> to vector<8x384xf32>
    %cst_138 = arith.constant dense<0.000000e+00> : vector<8x768xf32>
    %501 = tpu.matmul %496, %3, %cst_138 {dimension_numbers = #tpu.dot_dimension_numbers<[1], [0], [0], [1], [0, 0, 1, 1], [], []>} : vector<8x256xf32>, vector<256x768xf32>, vector<8x768xf32> -> vector<8x768xf32>
    %502 = vector.extract_strided_slice %498 {offsets = [0, 0], sizes = [8, 128], strides = [1, 1]} : vector<8x384xf32> to vector<8x128xf32>
    %503 = vector.extract_strided_slice %501 {offsets = [0, 0], sizes = [8, 128], strides = [1, 1]} : vector<8x768xf32> to vector<8x128xf32>
    %504 = arith.addf %502, %503 : vector<8x128xf32>
    %505 = arith.negf %504 : vector<8x128xf32>
    %506 = math.exp %505 : vector<8x128xf32>
    %cst_139 = arith.constant 1.000000e+00 : f32
    %507 = vector.broadcast %cst_139 : f32 to vector<8x128xf32>
    %508 = arith.addf %507, %506 : vector<8x128xf32>
    %509 = arith.divf %507, %508 : vector<8x128xf32>
    %510 = vector.extract_strided_slice %498 {offsets = [0, 128], sizes = [8, 128], strides = [1, 1]} : vector<8x384xf32> to vector<8x128xf32>
    %511 = vector.extract_strided_slice %501 {offsets = [0, 128], sizes = [8, 128], strides = [1, 1]} : vector<8x768xf32> to vector<8x128xf32>
    %512 = arith.addf %510, %511 : vector<8x128xf32>
    %513 = arith.negf %512 : vector<8x128xf32>
    %514 = math.exp %513 : vector<8x128xf32>
    %cst_140 = arith.constant 1.000000e+00 : f32
    %515 = vector.broadcast %cst_140 : f32 to vector<8x128xf32>
    %516 = arith.addf %515, %514 : vector<8x128xf32>
    %517 = arith.divf %515, %516 : vector<8x128xf32>
    %518 = vector.extract_strided_slice %498 {offsets = [0, 256], sizes = [8, 128], strides = [1, 1]} : vector<8x384xf32> to vector<8x128xf32>
    %519 = vector.extract_strided_slice %501 {offsets = [0, 256], sizes = [8, 128], strides = [1, 1]} : vector<8x768xf32> to vector<8x128xf32>
    %520 = vector.broadcast %4 : vector<1x128xf32> to vector<8x128xf32>
    %521 = arith.addf %519, %520 : vector<8x128xf32>
    %522 = arith.mulf %509, %521 : vector<8x128xf32>
    %523 = arith.addf %518, %522 : vector<8x128xf32>
    %524 = math.tanh %523 : vector<8x128xf32>
    %525 = vector.extract_strided_slice %500 {offsets = [0, 0], sizes = [8, 128], strides = [1, 1]} : vector<8x384xf32> to vector<8x128xf32>
    %526 = vector.extract_strided_slice %501 {offsets = [0, 384], sizes = [8, 128], strides = [1, 1]} : vector<8x768xf32> to vector<8x128xf32>
    %527 = arith.addf %525, %526 : vector<8x128xf32>
    %528 = arith.negf %527 : vector<8x128xf32>
    %529 = math.exp %528 : vector<8x128xf32>
    %cst_141 = arith.constant 1.000000e+00 : f32
    %530 = vector.broadcast %cst_141 : f32 to vector<8x128xf32>
    %531 = arith.addf %530, %529 : vector<8x128xf32>
    %532 = arith.divf %530, %531 : vector<8x128xf32>
    %533 = vector.extract_strided_slice %500 {offsets = [0, 128], sizes = [8, 128], strides = [1, 1]} : vector<8x384xf32> to vector<8x128xf32>
    %534 = vector.extract_strided_slice %501 {offsets = [0, 512], sizes = [8, 128], strides = [1, 1]} : vector<8x768xf32> to vector<8x128xf32>
    %535 = arith.addf %533, %534 : vector<8x128xf32>
    %536 = arith.negf %535 : vector<8x128xf32>
    %537 = math.exp %536 : vector<8x128xf32>
    %cst_142 = arith.constant 1.000000e+00 : f32
    %538 = vector.broadcast %cst_142 : f32 to vector<8x128xf32>
    %539 = arith.addf %538, %537 : vector<8x128xf32>
    %540 = arith.divf %538, %539 : vector<8x128xf32>
    %541 = vector.extract_strided_slice %500 {offsets = [0, 256], sizes = [8, 128], strides = [1, 1]} : vector<8x384xf32> to vector<8x128xf32>
    %542 = vector.extract_strided_slice %501 {offsets = [0, 640], sizes = [8, 128], strides = [1, 1]} : vector<8x768xf32> to vector<8x128xf32>
    %543 = vector.broadcast %5 : vector<1x128xf32> to vector<8x128xf32>
    %544 = arith.addf %542, %543 : vector<8x128xf32>
    %545 = arith.mulf %532, %544 : vector<8x128xf32>
    %546 = arith.addf %541, %545 : vector<8x128xf32>
    %547 = math.tanh %546 : vector<8x128xf32>
    %cst_143 = arith.constant 1.000000e+00 : f32
    %548 = vector.broadcast %cst_143 : f32 to vector<8x128xf32>
    %549 = arith.subf %548, %517 : vector<8x128xf32>
    %550 = arith.mulf %549, %524 : vector<8x128xf32>
    %551 = vector.extract_strided_slice %496 {offsets = [0, 0], sizes = [8, 128], strides = [1, 1]} : vector<8x256xf32> to vector<8x128xf32>
    %552 = arith.mulf %517, %551 : vector<8x128xf32>
    %553 = arith.addf %550, %552 : vector<8x128xf32>
    %cst_144 = arith.constant 1.000000e+00 : f32
    %554 = vector.broadcast %cst_144 : f32 to vector<8x128xf32>
    %555 = arith.subf %554, %540 : vector<8x128xf32>
    %556 = arith.mulf %555, %547 : vector<8x128xf32>
    %557 = vector.extract_strided_slice %496 {offsets = [0, 128], sizes = [8, 128], strides = [1, 1]} : vector<8x256xf32> to vector<8x128xf32>
    %558 = arith.mulf %540, %557 : vector<8x128xf32>
    %559 = arith.addf %556, %558 : vector<8x128xf32>
    %c7_145 = arith.constant 7 : index
    %c0_146 = arith.constant 0 : index
    %c0_147 = arith.constant 0 : index
    %560 = vector.load %arg5[%c7_145, %c0_146, %c0_147] : memref<8x8x128xf32, #tpu.memory_space<vmem>>, vector<1x8x128xf32>
    %561 = vector.shape_cast %560 : vector<1x8x128xf32> to vector<8x128xf32>
    %562 = vector.shape_cast %553 : vector<8x128xf32> to vector<1x8x128xf32>
    tpu.vector_store %arg5[%c7_145, %c0_146, %c0_147], %562 {strides = array<i32>} : memref<8x8x128xf32, #tpu.memory_space<vmem>>, vector<1x8x128xf32>,
    %c0_148 = arith.constant 0 : index
    %c0_149 = arith.constant 0 : index
    %c0_150 = arith.constant 0 : index
    %563 = vector.load %arg6[%c0_148, %c0_149, %c0_150] : memref<8x8x128xf32, #tpu.memory_space<vmem>>, vector<1x8x128xf32>
    %564 = vector.shape_cast %563 : vector<1x8x128xf32> to vector<8x128xf32>
    %565 = vector.shape_cast %559 : vector<8x128xf32> to vector<1x8x128xf32>
    tpu.vector_store %arg6[%c0_148, %c0_149, %c0_150], %565 {strides = array<i32>} : memref<8x8x128xf32, #tpu.memory_space<vmem>>, vector<1x8x128xf32>,
    %566 = tpu.concatenate %553, %559 in 1 : vector<8x128xf32>, vector<8x128xf32> -> vector<8x256xf32>
    %c0_151 = arith.constant 0 : index
    %c0_152 = arith.constant 0 : index
    %567 = vector.load %arg7[%c0_151, %c0_152] : memref<8x256xf32, #tpu.memory_space<vmem>>, vector<8x256xf32>
    tpu.vector_store %arg7[%c0_151, %c0_152], %566 {strides = array<i32>} : memref<8x256xf32, #tpu.memory_space<vmem>>, vector<8x256xf32>,
    return
  }
  func.func @transform_0(%arg0: i32) -> (i32, i32, i32) {
    %c0_i32 = arith.constant 0 : i32
    %c0_i32_0 = arith.constant 0 : i32
    %c0_i32_1 = arith.constant 0 : i32
    return %arg0, %c0_i32, %c0_i32_0 : i32, i32, i32
  }
  func.func @transform_1(%arg0: i32) -> (i32, i32, i32) {
    %c0_i32 = arith.constant 0 : i32
    %0 = arith.subi %c0_i32, %arg0 : i32
    %c0_i32_0 = arith.constant 0 : i32
    %c1_i32 = arith.constant 1 : i32
    %c0_i32_1 = arith.constant 0 : i32
    return %0, %c0_i32_0, %c1_i32 : i32, i32, i32
  }
  func.func @transform_2(%arg0: i32) -> (i32, i32) {
    %c0_i32 = arith.constant 0 : i32
    %c0_i32_0 = arith.constant 0 : i32
    %c0_i32_1 = arith.constant 0 : i32
    return %c0_i32, %c0_i32_0 : i32, i32
  }
  func.func @transform_3(%arg0: i32) -> (i32, i32) {
    %c0_i32 = arith.constant 0 : i32
    %c0_i32_0 = arith.constant 0 : i32
    %c0_i32_1 = arith.constant 0 : i32
    return %c0_i32, %c0_i32_0 : i32, i32
  }
  func.func @transform_4(%arg0: i32) -> (i32, i32, i32) {
    %c0_i32 = arith.constant 0 : i32
    %c0_i32_0 = arith.constant 0 : i32
    %c0_i32_1 = arith.constant 0 : i32
    return %arg0, %c0_i32, %c0_i32_0 : i32, i32, i32
  }
  func.func @transform_5(%arg0: i32) -> (i32, i32, i32) {
    %c0_i32 = arith.constant 0 : i32
    %0 = arith.subi %c0_i32, %arg0 : i32
    %c0_i32_0 = arith.constant 0 : i32
    %c0_i32_1 = arith.constant 0 : i32
    %c0_i32_2 = arith.constant 0 : i32
    return %0, %c0_i32_0, %c0_i32_1 : i32, i32, i32
  }
}

module attributes {stable_mosaic.version = 11 : i64} {
  func.func @kernel(%arg0: i32, %arg1: i32, %arg2: memref<64x128xf32, #tpu.memory_space<vmem>>, %arg3: memref<64x128xf32, #tpu.memory_space<vmem>>, %arg4: memref<128x768xf32, #tpu.memory_space<vmem>>, %arg5: memref<128x768xf32, #tpu.memory_space<vmem>>, %arg6: memref<1x768xf32, #tpu.memory_space<vmem>>, %arg7: memref<64x768xf32, #tpu.memory_space<vmem>>) attributes {dimension_semantics = [#tpu.dimension_semantics<parallel>, #tpu.dimension_semantics<parallel>], iteration_bounds = array<i64: 1, 1>, scalar_prefetch = 0 : i64, scratch_operands = 0 : i64, tpu.core_type = #tpu.core_type<tc>, window_params = [{transform_indices = @transform_0, window_bounds = array<i64: 64, 128>}, {transform_indices = @transform_1, window_bounds = array<i64: 64, 128>}, {transform_indices = @transform_2, window_bounds = array<i64: 128, 768>}, {transform_indices = @transform_3, window_bounds = array<i64: 128, 768>}, {transform_indices = @transform_4, window_bounds = array<i64: 1, 768>}, {transform_indices = @transform_5, window_bounds = array<i64: 64, 768>}]} {
    %c0 = arith.constant 0 : index
    %c0_0 = arith.constant 0 : index
    %0 = vector.load %arg2[%c0, %c0_0] : memref<64x128xf32, #tpu.memory_space<vmem>>, vector<64x128xf32>
    %c0_1 = arith.constant 0 : index
    %c0_2 = arith.constant 0 : index
    %1 = vector.load %arg4[%c0_1, %c0_2] : memref<128x768xf32, #tpu.memory_space<vmem>>, vector<128x768xf32>
    %cst = arith.constant dense<0.000000e+00> : vector<64x768xf32>
    %2 = tpu.matmul %0, %1, %cst {dimension_numbers = #tpu.dot_dimension_numbers<[1], [0], [0], [1], [0, 0, 1, 1], [], []>} : vector<64x128xf32>, vector<128x768xf32>, vector<64x768xf32> -> vector<64x768xf32>
    %c0_3 = arith.constant 0 : index
    %c0_4 = arith.constant 0 : index
    %3 = vector.load %arg3[%c0_3, %c0_4] : memref<64x128xf32, #tpu.memory_space<vmem>>, vector<64x128xf32>
    %c0_5 = arith.constant 0 : index
    %c0_6 = arith.constant 0 : index
    %4 = vector.load %arg5[%c0_5, %c0_6] : memref<128x768xf32, #tpu.memory_space<vmem>>, vector<128x768xf32>
    %cst_7 = arith.constant dense<0.000000e+00> : vector<64x768xf32>
    %5 = tpu.matmul %3, %4, %cst_7 {dimension_numbers = #tpu.dot_dimension_numbers<[1], [0], [0], [1], [0, 0, 1, 1], [], []>} : vector<64x128xf32>, vector<128x768xf32>, vector<64x768xf32> -> vector<64x768xf32>
    %6 = arith.addf %2, %5 : vector<64x768xf32>
    %c0_8 = arith.constant 0 : index
    %c0_9 = arith.constant 0 : index
    %7 = vector.load %arg6[%c0_8, %c0_9] : memref<1x768xf32, #tpu.memory_space<vmem>>, vector<1x768xf32>
    %8 = vector.broadcast %7 : vector<1x768xf32> to vector<64x768xf32>
    %9 = arith.addf %6, %8 : vector<64x768xf32>
    %c0_10 = arith.constant 0 : index
    %c0_11 = arith.constant 0 : index
    %10 = vector.load %arg7[%c0_10, %c0_11] : memref<64x768xf32, #tpu.memory_space<vmem>>, vector<64x768xf32>
    tpu.vector_store %arg7[%c0_10, %c0_11], %9 {strides = array<i32>} : memref<64x768xf32, #tpu.memory_space<vmem>>, vector<64x768xf32>,
    return
  }
  func.func @transform_0(%arg0: i32, %arg1: i32) -> (i32, i32) {
    %c0_i32 = arith.constant 0 : i32
    %c0_i32_0 = arith.constant 0 : i32
    return %arg0, %c0_i32 : i32, i32
  }
  func.func @transform_1(%arg0: i32, %arg1: i32) -> (i32, i32) {
    %c0_i32 = arith.constant 0 : i32
    %c0_i32_0 = arith.constant 0 : i32
    return %arg0, %c0_i32 : i32, i32
  }
  func.func @transform_2(%arg0: i32, %arg1: i32) -> (i32, i32) {
    %c0_i32 = arith.constant 0 : i32
    %c0_i32_0 = arith.constant 0 : i32
    return %c0_i32, %arg1 : i32, i32
  }
  func.func @transform_3(%arg0: i32, %arg1: i32) -> (i32, i32) {
    %c0_i32 = arith.constant 0 : i32
    %c0_i32_0 = arith.constant 0 : i32
    return %c0_i32, %arg1 : i32, i32
  }
  func.func @transform_4(%arg0: i32, %arg1: i32) -> (i32, i32) {
    %c0_i32 = arith.constant 0 : i32
    %c0_i32_0 = arith.constant 0 : i32
    return %c0_i32, %arg1 : i32, i32
  }
  func.func @transform_5(%arg0: i32, %arg1: i32) -> (i32, i32) {
    %c0_i32 = arith.constant 0 : i32
    return %arg0, %arg1 : i32, i32
  }
}

module attributes {stable_mosaic.version = 11 : i64} {
  func.func @kernel(%arg0: i32, %arg1: i32, %arg2: memref<64x128xf32, #tpu.memory_space<vmem>>, %arg3: memref<64x128xf32, #tpu.memory_space<vmem>>, %arg4: memref<128x128xf32, #tpu.memory_space<vmem>>, %arg5: memref<128x128xf32, #tpu.memory_space<vmem>>, %arg6: memref<1x128xf32, #tpu.memory_space<vmem>>, %arg7: memref<64x128xf32, #tpu.memory_space<vmem>>) attributes {dimension_semantics = [#tpu.dimension_semantics<parallel>, #tpu.dimension_semantics<parallel>], iteration_bounds = array<i64: 1, 1>, scalar_prefetch = 0 : i64, scratch_operands = 0 : i64, tpu.core_type = #tpu.core_type<tc>, window_params = [{transform_indices = @transform_0, window_bounds = array<i64: 64, 128>}, {transform_indices = @transform_1, window_bounds = array<i64: 64, 128>}, {transform_indices = @transform_2, window_bounds = array<i64: 128, 128>}, {transform_indices = @transform_3, window_bounds = array<i64: 128, 128>}, {transform_indices = @transform_4, window_bounds = array<i64: 1, 128>}, {transform_indices = @transform_5, window_bounds = array<i64: 64, 128>}]} {
    %c0 = arith.constant 0 : index
    %c0_0 = arith.constant 0 : index
    %0 = vector.load %arg2[%c0, %c0_0] : memref<64x128xf32, #tpu.memory_space<vmem>>, vector<64x128xf32>
    %c0_1 = arith.constant 0 : index
    %c0_2 = arith.constant 0 : index
    %1 = vector.load %arg4[%c0_1, %c0_2] : memref<128x128xf32, #tpu.memory_space<vmem>>, vector<128x128xf32>
    %cst = arith.constant dense<0.000000e+00> : vector<64x128xf32>
    %2 = tpu.matmul %0, %1, %cst {dimension_numbers = #tpu.dot_dimension_numbers<[1], [0], [0], [1], [0, 0, 1, 1], [], []>} : vector<64x128xf32>, vector<128x128xf32>, vector<64x128xf32> -> vector<64x128xf32>
    %c0_3 = arith.constant 0 : index
    %c0_4 = arith.constant 0 : index
    %3 = vector.load %arg3[%c0_3, %c0_4] : memref<64x128xf32, #tpu.memory_space<vmem>>, vector<64x128xf32>
    %c0_5 = arith.constant 0 : index
    %c0_6 = arith.constant 0 : index
    %4 = vector.load %arg5[%c0_5, %c0_6] : memref<128x128xf32, #tpu.memory_space<vmem>>, vector<128x128xf32>
    %cst_7 = arith.constant dense<0.000000e+00> : vector<64x128xf32>
    %5 = tpu.matmul %3, %4, %cst_7 {dimension_numbers = #tpu.dot_dimension_numbers<[1], [0], [0], [1], [0, 0, 1, 1], [], []>} : vector<64x128xf32>, vector<128x128xf32>, vector<64x128xf32> -> vector<64x128xf32>
    %6 = arith.addf %2, %5 : vector<64x128xf32>
    %c0_8 = arith.constant 0 : index
    %c0_9 = arith.constant 0 : index
    %7 = vector.load %arg6[%c0_8, %c0_9] : memref<1x128xf32, #tpu.memory_space<vmem>>, vector<1x128xf32>
    %8 = vector.broadcast %7 : vector<1x128xf32> to vector<64x128xf32>
    %9 = arith.addf %6, %8 : vector<64x128xf32>
    %c0_10 = arith.constant 0 : index
    %c0_11 = arith.constant 0 : index
    %10 = vector.load %arg7[%c0_10, %c0_11] : memref<64x128xf32, #tpu.memory_space<vmem>>, vector<64x128xf32>
    tpu.vector_store %arg7[%c0_10, %c0_11], %9 {strides = array<i32>} : memref<64x128xf32, #tpu.memory_space<vmem>>, vector<64x128xf32>,
    return
  }
  func.func @transform_0(%arg0: i32, %arg1: i32) -> (i32, i32) {
    %c0_i32 = arith.constant 0 : i32
    %c0_i32_0 = arith.constant 0 : i32
    return %arg0, %c0_i32 : i32, i32
  }
  func.func @transform_1(%arg0: i32, %arg1: i32) -> (i32, i32) {
    %c0_i32 = arith.constant 0 : i32
    %c0_i32_0 = arith.constant 0 : i32
    return %arg0, %c0_i32 : i32, i32
  }
  func.func @transform_2(%arg0: i32, %arg1: i32) -> (i32, i32) {
    %c0_i32 = arith.constant 0 : i32
    %c0_i32_0 = arith.constant 0 : i32
    return %c0_i32, %arg1 : i32, i32
  }
  func.func @transform_3(%arg0: i32, %arg1: i32) -> (i32, i32) {
    %c0_i32 = arith.constant 0 : i32
    %c0_i32_0 = arith.constant 0 : i32
    return %c0_i32, %arg1 : i32, i32
  }
  func.func @transform_4(%arg0: i32, %arg1: i32) -> (i32, i32) {
    %c0_i32 = arith.constant 0 : i32
    %c0_i32_0 = arith.constant 0 : i32
    return %c0_i32, %arg1 : i32, i32
  }
  func.func @transform_5(%arg0: i32, %arg1: i32) -> (i32, i32) {
    %c0_i32 = arith.constant 0 : i32
    return %arg0, %arg1 : i32, i32
  }
}

</mosaic_0001>

<llo_original>
// kernel: bidirectional_gru_2_forward.5
$region0: #{bidirectional_gru_2_forward.5}
  #allocation0 [shape = 'u32[]', space=smem, size = 0x4, offset = 0x4, fixed_abs, tag = 'smem constant byte address 0x4 - core index']
  #allocation1 [shape = 'u32[144,128]{1,0:T(1,128)}', space=vmem, size = 0x12000, scoped, tag = 'internal scratch']
  %s0 = inlined_call_operand.vmem [shape: f32[64,16], index: 0, kind: input, shape index: {}]
  %s1 = inlined_call_operand.vmem [shape: f32[16,768], index: 1, kind: input, shape index: {}]
  %s2 = inlined_call_operand.vmem [shape: f32[1,768], index: 2, kind: input, shape index: {}]
  %s3 = inlined_call_operand.vmem [shape: f32[64,768], index: 3, kind: output, shape index: {}]
  %s4 = sld [smem:[#allocation0]]
  $region22: #{bidirectional_gru_2_forward.5} parent=0
    _
  %s6 = ssub.s32 1, %s4
  %s7 = scalar_select 0, %s6, %s4
  // Predicated region
  $region2: #{bidirectional_gru_2_forward.5} parent=0 // pred_check
    _
  $region3: #{bidirectional_gru_2_forward.5} parent=0 // pred_check_branch
    %9 = sbr.rel (0) target = $region5
  $region4: #{bidirectional_gru_2_forward.5} parent=0 // pred_region
    _
  $region5: #{bidirectional_gru_2_forward.5} parent=0 // pred_fallthru
    _
  // Predicated region
  $region6: #{bidirectional_gru_2_forward.5} parent=0 // pred_check
    _
  $region7: #{bidirectional_gru_2_forward.5} parent=0 // pred_check_branch
    %11 = sbr.rel (0) target = $region9
  $region8: #{bidirectional_gru_2_forward.5} parent=0 // pred_region
    _
  $region9: #{bidirectional_gru_2_forward.5} parent=0 // pred_fallthru
    _
  // Predicated region
  $region10: #{bidirectional_gru_2_forward.5} parent=0 // pred_check
    _
  $region11: #{bidirectional_gru_2_forward.5} parent=0 // pred_check_branch
    %13 = sbr.rel (0) target = $region13
  $region12: #{bidirectional_gru_2_forward.5} parent=0 // pred_region
    _
  $region13: #{bidirectional_gru_2_forward.5} parent=0 // pred_fallthru
    _
  %v14 = vld [vmem:[%s0] sm:$0xff]
  %v15 = vld [vmem:[%s0 + $0x8] sm:$0xff]
  %v16 = vld [vmem:[%s0 + $0x10] sm:$0xff]
  %v17 = vld [vmem:[%s0 + $0x18] sm:$0xff]
  %v18 = vld [vmem:[%s0 + $0x20] sm:$0xff]
  %v19 = vld [vmem:[%s0 + $0x28] sm:$0xff]
  %v20 = vld [vmem:[%s0 + $0x30] sm:$0xff]
  %v21 = vld [vmem:[%s0 + $0x38] sm:$0xff]
  %v22 = vld [vmem:[%s1] sm:$0xff]
  %v23 = vld [vmem:[%s1 + $0x8] sm:$0xff]
  %v24 = vld [vmem:[%s1 + $0x10] sm:$0xff]
  %v25 = vld [vmem:[%s1 + $0x18] sm:$0xff]
  %v26 = vld [vmem:[%s1 + $0x20] sm:$0xff]
  %v27 = vld [vmem:[%s1 + $0x28] sm:$0xff]
  %v28 = vld [vmem:[%s1 + $0x30] sm:$0xff]
  %v29 = vld [vmem:[%s1 + $0x38] sm:$0xff]
  %v30 = vld [vmem:[%s1 + $0x40] sm:$0xff]
  %v31 = vld [vmem:[%s1 + $0x48] sm:$0xff]
  %v32 = vld [vmem:[%s1 + $0x50] sm:$0xff]
  %v33 = vld [vmem:[%s1 + $0x58] sm:$0xff]
  %v34 = vld [vmem:[%s2] sm:$0x3f]
  %v36 = vlaneseq
  %v37 = vshrl.u32 %v36, 7
  %v38 = vsub.s32 0, %v37
  %v39 = vrot.slane %v34, %v38
  %v40 = vlaneseq
  %v41 = vshrl.u32 %v40, 7
  %v42 = vsub.s32 1, %v41
  %v43 = vrot.slane %v34, %v42
  %v44 = vlaneseq
  %v45 = vshrl.u32 %v44, 7
  %v46 = vsub.s32 2, %v45
  %v47 = vrot.slane %v34, %v46
  %v48 = vlaneseq
  %v49 = vshrl.u32 %v48, 7
  %v50 = vsub.s32 3, %v49
  %v51 = vrot.slane %v34, %v50
  %v52 = vlaneseq
  %v53 = vshrl.u32 %v52, 7
  %v54 = vsub.s32 4, %v53
  %v55 = vrot.slane %v34, %v54
  %v56 = vlaneseq
  %v57 = vshrl.u32 %v56, 7
  %v58 = vsub.s32 5, %v57
  %v59 = vrot.slane %v34, %v58
  %vm66 = vcmask 130048
  %v68 = vsel %vm66, %v14, 0
  %v71 = vsel %vm66, %v15, 0
  %v74 = vsel %vm66, %v16, 0
  %v77 = vsel %vm66, %v17, 0
  %v80 = vsel %vm66, %v18, 0
  %v83 = vsel %vm66, %v19, 0
  %v86 = vsel %vm66, %v20, 0
  %v89 = vsel %vm66, %v21, 0
  %91 = vmatprep.subr.mxu0 %v23
  %92 = vmatpush1.msra.mxu0 %v22
  %93 = vmatprep.subr.mxu0 %v29
  %94 = vmatpush1.msra.mxu0 %v28
  %95 = vmatprep.subr.mxu0 0.0
  %96 = vmatpush1.msra.mxu0 0.0
  %97 = vmatprep.subr.mxu0 0.0
  %98 = vmatpush1.msra.mxu0 0.0
  %99 = vmatprep.subr.mxu0 0.0
  %100 = vmatpush1.msra.mxu0 0.0
  %101 = vmatprep.subr.mxu0 0.0
  %102 = vmatpush1.msra.mxu0 0.0
  %103 = vmatprep.subr.mxu0 0.0
  %104 = vmatpush1.msra.mxu0 0.0
  %105 = vmatprep.subr.mxu0 0.0
  %106 = vmatpush1.msra.mxu0 0.0
  %107 = vmatprep.subr.mxu0 0.0
  %108 = vmatpush1.msra.mxu0 0.0
  %109 = vmatprep.subr.mxu0 0.0
  %110 = vmatpush1.msra.mxu0 0.0
  %111 = vmatprep.subr.mxu0 0.0
  %112 = vmatpush1.msra.mxu0 0.0
  %113 = vmatprep.subr.mxu0 0.0
  %114 = vmatpush1.msra.mxu0 0.0
  %115 = vmatprep.subr.mxu0 0.0
  %116 = vmatpush1.msra.mxu0 0.0
  %117 = vmatprep.subr.mxu0 0.0
  %118 = vmatpush1.msra.mxu0 0.0
  %119 = vmatprep.subr.mxu0 0.0
  %120 = vmatpush1.msra.mxu0 0.0
  %121 = vmatprep.subr.mxu0 0.0
  %122 = vmatpush1.msra.mxu0 0.0
  %123 = vmatprep.subr.mxu0 0.0
  %124 = vmatpush1.msra.mxu0 0.0
  %125 = vmatprep.subr.mxu0 0.0
  %126 = vmatpush1.msra.mxu0 0.0
  %127 = vmatprep.subr.mxu0 0.0
  %128 = vmatpush1.msra.mxu0 0.0
  %129 = vmatprep.subr.mxu0 0.0
  %130 = vmatpush1.msra.mxu0 0.0
  %131 = vmatprep.subr.mxu0 0.0
  %132 = vmatpush1.msra.mxu0 0.0
  %133 = vmatprep.subr.mxu0 0.0
  %134 = vmatpush1.msra.mxu0 0.0
  %135 = vmatprep.subr.mxu0 0.0
  %136 = vmatpush1.msra.mxu0 0.0
  %137 = vmatprep.subr.mxu0 0.0
  %138 = vmatpush1.msra.mxu0 0.0
  %139 = vmatprep.subr.mxu0 0.0
  %140 = vmatpush1.msra.mxu0 0.0
  %141 = vmatprep.subr.mxu0 0.0
  %142 = vmatpush1.msra.mxu0 0.0
  %143 = vmatprep.subr.mxu0 0.0
  %144 = vmatpush1.msra.mxu0 0.0
  %145 = vmatprep.subr.mxu0 0.0
  %146 = vmatpush1.msra.mxu0 0.0
  %147 = vmatprep.subr.mxu0 0.0
  %148 = vmatpush1.msra.mxu0 0.0
  %149 = vmatprep.subr.mxu0 0.0
  %150 = vmatpush1.msra.mxu0 0.0
  %151 = vmatprep.subr.mxu0 0.0
  %152 = vmatpush1.msra.mxu0 0.0
  %153 = vmatprep.subr.mxu0 0.0
  %154 = vmatpush1.msra.mxu0 0.0
  %155 = vmatprep.mubr.f32.mxu0 0.0
  %156 = vmatmul.mubr.f32.gmra.mrb[0].mxu0 %v68
  %v157 = vpop.f32.mrb[0].mxu0
  %v158 = vadd.f32 %v39, %v157
  %v159 = vpop.f32.mrb[0].mxu0
  %v160 = vadd.f32 %v43, %v159
  %161 = vmatprep.mubr.f32.mxu0 0.0
  %162 = vmatmul.mubr.f32.gmra.mrb[0].mxu0 %v71
  %v163 = vpop.f32.mrb[0].mxu0
  %v164 = vadd.f32 %v39, %v163
  %v165 = vpop.f32.mrb[0].mxu0
  %v166 = vadd.f32 %v43, %v165
  %167 = vmatprep.mubr.f32.mxu0 0.0
  %168 = vmatmul.mubr.f32.gmra.mrb[0].mxu0 %v74
  %v169 = vpop.f32.mrb[0].mxu0
  %v170 = vadd.f32 %v39, %v169
  %v171 = vpop.f32.mrb[0].mxu0
  %v172 = vadd.f32 %v43, %v171
  %173 = vmatprep.mubr.f32.mxu0 0.0
  %174 = vmatmul.mubr.f32.gmra.mrb[0].mxu0 %v77
  %v175 = vpop.f32.mrb[0].mxu0
  %v176 = vadd.f32 %v39, %v175
  %v177 = vpop.f32.mrb[0].mxu0
  %v178 = vadd.f32 %v43, %v177
  %179 = vmatprep.mubr.f32.mxu0 0.0
  %180 = vmatmul.mubr.f32.gmra.mrb[0].mxu0 %v80
  %v181 = vpop.f32.mrb[0].mxu0
  %v182 = vadd.f32 %v39, %v181
  %v183 = vpop.f32.mrb[0].mxu0
  %v184 = vadd.f32 %v43, %v183
  %185 = vmatprep.mubr.f32.mxu0 0.0
  %186 = vmatmul.mubr.f32.gmra.mrb[0].mxu0 %v83
  %v187 = vpop.f32.mrb[0].mxu0
  %v188 = vadd.f32 %v39, %v187
  %v189 = vpop.f32.mrb[0].mxu0
  %v190 = vadd.f32 %v43, %v189
  %191 = vmatprep.mubr.f32.mxu0 0.0
  %192 = vmatmul.mubr.f32.gmra.mrb[0].mxu0 %v86
  %v193 = vpop.f32.mrb[0].mxu0
  %v194 = vadd.f32 %v39, %v193
  %v195 = vpop.f32.mrb[0].mxu0
  %v196 = vadd.f32 %v43, %v195
  %197 = vmatprep.mubr.f32.mxu0 0.0
  %198 = vmatmul.mubr.f32.gmra.mrb[0].mxu0 %v89
  %v199 = vpop.f32.mrb[0].mxu0
  %v200 = vadd.f32 %v39, %v199
  %v201 = vpop.f32.mrb[0].mxu0
  %v202 = vadd.f32 %v43, %v201
  %203 = vdwg.mxu0
  %204 = vmatprep.subr.mxu0 %v25
  %205 = vmatpush1.msra.mxu0 %v24
  %206 = vmatprep.subr.mxu0 %v31
  %207 = vmatpush1.msra.mxu0 %v30
  %208 = vmatprep.subr.mxu0 0.0
  %209 = vmatpush1.msra.mxu0 0.0
  %210 = vmatprep.subr.mxu0 0.0
  %211 = vmatpush1.msra.mxu0 0.0
  %212 = vmatprep.subr.mxu0 0.0
  %213 = vmatpush1.msra.mxu0 0.0
  %214 = vmatprep.subr.mxu0 0.0
  %215 = vmatpush1.msra.mxu0 0.0
  %216 = vmatprep.subr.mxu0 0.0
  %217 = vmatpush1.msra.mxu0 0.0
  %218 = vmatprep.subr.mxu0 0.0
  %219 = vmatpush1.msra.mxu0 0.0
  %220 = vmatprep.subr.mxu0 0.0
  %221 = vmatpush1.msra.mxu0 0.0
  %222 = vmatprep.subr.mxu0 0.0
  %223 = vmatpush1.msra.mxu0 0.0
  %224 = vmatprep.subr.mxu0 0.0
  %225 = vmatpush1.msra.mxu0 0.0
  %226 = vmatprep.subr.mxu0 0.0
  %227 = vmatpush1.msra.mxu0 0.0
  %228 = vmatprep.subr.mxu0 0.0
  %229 = vmatpush1.msra.mxu0 0.0
  %230 = vmatprep.subr.mxu0 0.0
  %231 = vmatpush1.msra.mxu0 0.0
  %232 = vmatprep.subr.mxu0 0.0
  %233 = vmatpush1.msra.mxu0 0.0
  %234 = vmatprep.subr.mxu0 0.0
  %235 = vmatpush1.msra.mxu0 0.0
  %236 = vmatprep.subr.mxu0 0.0
  %237 = vmatpush1.msra.mxu0 0.0
  %238 = vmatprep.subr.mxu0 0.0
  %239 = vmatpush1.msra.mxu0 0.0
  %240 = vmatprep.subr.mxu0 0.0
  %241 = vmatpush1.msra.mxu0 0.0
  %242 = vmatprep.subr.mxu0 0.0
  %243 = vmatpush1.msra.mxu0 0.0
  %244 = vmatprep.subr.mxu0 0.0
  %245 = vmatpush1.msra.mxu0 0.0
  %246 = vmatprep.subr.mxu0 0.0
  %247 = vmatpush1.msra.mxu0 0.0
  %248 = vmatprep.subr.mxu0 0.0
  %249 = vmatpush1.msra.mxu0 0.0
  %250 = vmatprep.subr.mxu0 0.0
  %251 = vmatpush1.msra.mxu0 0.0
  %252 = vmatprep.subr.mxu0 0.0
  %253 = vmatpush1.msra.mxu0 0.0
  %254 = vmatprep.subr.mxu0 0.0
  %255 = vmatpush1.msra.mxu0 0.0
  %256 = vmatprep.subr.mxu0 0.0
  %257 = vmatpush1.msra.mxu0 0.0
  %258 = vmatprep.subr.mxu0 0.0
  %259 = vmatpush1.msra.mxu0 0.0
  %260 = vmatprep.subr.mxu0 0.0
  %261 = vmatpush1.msra.mxu0 0.0
  %262 = vmatprep.subr.mxu0 0.0
  %263 = vmatpush1.msra.mxu0 0.0
  %264 = vmatprep.subr.mxu0 0.0
  %265 = vmatpush1.msra.mxu0 0.0
  %266 = vmatprep.subr.mxu0 0.0
  %267 = vmatpush1.msra.mxu0 0.0
  %268 = vmatprep.mubr.f32.mxu0 0.0
  %269 = vmatmul.mubr.f32.gmra.mrb[0].mxu0 %v68
  %v270 = vpop.f32.mrb[0].mxu0
  %v271 = vadd.f32 %v47, %v270
  %v272 = vpop.f32.mrb[0].mxu0
  %v273 = vadd.f32 %v51, %v272
  %274 = vmatprep.mubr.f32.mxu0 0.0
  %275 = vmatmul.mubr.f32.gmra.mrb[0].mxu0 %v71
  %v276 = vpop.f32.mrb[0].mxu0
  %v277 = vadd.f32 %v47, %v276
  %v278 = vpop.f32.mrb[0].mxu0
  %v279 = vadd.f32 %v51, %v278
  %280 = vmatprep.mubr.f32.mxu0 0.0
  %281 = vmatmul.mubr.f32.gmra.mrb[0].mxu0 %v74
  %v282 = vpop.f32.mrb[0].mxu0
  %v283 = vadd.f32 %v47, %v282
  %v284 = vpop.f32.mrb[0].mxu0
  %v285 = vadd.f32 %v51, %v284
  %286 = vmatprep.mubr.f32.mxu0 0.0
  %287 = vmatmul.mubr.f32.gmra.mrb[0].mxu0 %v77
  %v288 = vpop.f32.mrb[0].mxu0
  %v289 = vadd.f32 %v47, %v288
  %v290 = vpop.f32.mrb[0].mxu0
  %v291 = vadd.f32 %v51, %v290
  %292 = vmatprep.mubr.f32.mxu0 0.0
  %293 = vmatmul.mubr.f32.gmra.mrb[0].mxu0 %v80
  %v294 = vpop.f32.mrb[0].mxu0
  %v295 = vadd.f32 %v47, %v294
  %v296 = vpop.f32.mrb[0].mxu0
  %v297 = vadd.f32 %v51, %v296
  %298 = vmatprep.mubr.f32.mxu0 0.0
  %299 = vmatmul.mubr.f32.gmra.mrb[0].mxu0 %v83
  %v300 = vpop.f32.mrb[0].mxu0
  %v301 = vadd.f32 %v47, %v300
  %v302 = vpop.f32.mrb[0].mxu0
  %v303 = vadd.f32 %v51, %v302
  %304 = vmatprep.mubr.f32.mxu0 0.0
  %305 = vmatmul.mubr.f32.gmra.mrb[0].mxu0 %v86
  %v306 = vpop.f32.mrb[0].mxu0
  %v307 = vadd.f32 %v47, %v306
  %v308 = vpop.f32.mrb[0].mxu0
  %v309 = vadd.f32 %v51, %v308
  %310 = vmatprep.mubr.f32.mxu0 0.0
  %311 = vmatmul.mubr.f32.gmra.mrb[0].mxu0 %v89
  %v312 = vpop.f32.mrb[0].mxu0
  %v313 = vadd.f32 %v47, %v312
  %v314 = vpop.f32.mrb[0].mxu0
  %v315 = vadd.f32 %v51, %v314
  %316 = vdwg.mxu0
  %317 = vmatprep.subr.mxu0 %v27
  %318 = vmatpush1.msra.mxu0 %v26
  %319 = vmatprep.subr.mxu0 %v33
  %320 = vmatpush1.msra.mxu0 %v32
  %321 = vmatprep.subr.mxu0 0.0
  %322 = vmatpush1.msra.mxu0 0.0
  %323 = vmatprep.subr.mxu0 0.0
  %324 = vmatpush1.msra.mxu0 0.0
  %325 = vmatprep.subr.mxu0 0.0
  %326 = vmatpush1.msra.mxu0 0.0
  %327 = vmatprep.subr.mxu0 0.0
  %328 = vmatpush1.msra.mxu0 0.0
  %329 = vmatprep.subr.mxu0 0.0
  %330 = vmatpush1.msra.mxu0 0.0
  %331 = vmatprep.subr.mxu0 0.0
  %332 = vmatpush1.msra.mxu0 0.0
  %333 = vmatprep.subr.mxu0 0.0
  %334 = vmatpush1.msra.mxu0 0.0
  %335 = vmatprep.subr.mxu0 0.0
  %336 = vmatpush1.msra.mxu0 0.0
  %337 = vmatprep.subr.mxu0 0.0
  %338 = vmatpush1.msra.mxu0 0.0
  %339 = vmatprep.subr.mxu0 0.0
  %340 = vmatpush1.msra.mxu0 0.0
  %341 = vmatprep.subr.mxu0 0.0
  %342 = vmatpush1.msra.mxu0 0.0
  %343 = vmatprep.subr.mxu0 0.0
  %344 = vmatpush1.msra.mxu0 0.0
  %345 = vmatprep.subr.mxu0 0.0
  %346 = vmatpush1.msra.mxu0 0.0
  %347 = vmatprep.subr.mxu0 0.0
  %348 = vmatpush1.msra.mxu0 0.0
  %349 = vmatprep.subr.mxu0 0.0
  %350 = vmatpush1.msra.mxu0 0.0
  %351 = vmatprep.subr.mxu0 0.0
  %352 = vmatpush1.msra.mxu0 0.0
  %353 = vmatprep.subr.mxu0 0.0
  %354 = vmatpush1.msra.mxu0 0.0
  %355 = vmatprep.subr.mxu0 0.0
  %356 = vmatpush1.msra.mxu0 0.0
  %357 = vmatprep.subr.mxu0 0.0
  %358 = vmatpush1.msra.mxu0 0.0
  %359 = vmatprep.subr.mxu0 0.0
  %360 = vmatpush1.msra.mxu0 0.0
  %361 = vmatprep.subr.mxu0 0.0
  %362 = vmatpush1.msra.mxu0 0.0
  %363 = vmatprep.subr.mxu0 0.0
  %364 = vmatpush1.msra.mxu0 0.0
  %365 = vmatprep.subr.mxu0 0.0
  %366 = vmatpush1.msra.mxu0 0.0
  %367 = vmatprep.subr.mxu0 0.0
  %368 = vmatpush1.msra.mxu0 0.0
  %369 = vmatprep.subr.mxu0 0.0
  %370 = vmatpush1.msra.mxu0 0.0
  %371 = vmatprep.subr.mxu0 0.0
  %372 = vmatpush1.msra.mxu0 0.0
  %373 = vmatprep.subr.mxu0 0.0
  %374 = vmatpush1.msra.mxu0 0.0
  %375 = vmatprep.subr.mxu0 0.0
  %376 = vmatpush1.msra.mxu0 0.0
  %377 = vmatprep.subr.mxu0 0.0
  %378 = vmatpush1.msra.mxu0 0.0
  %379 = vmatprep.subr.mxu0 0.0
  %380 = vmatpush1.msra.mxu0 0.0
  %381 = vmatprep.mubr.f32.mxu0 0.0
  %382 = vmatmul.mubr.f32.gmra.mrb[0].mxu0 %v68
  %v383 = vpop.f32.mrb[0].mxu0
  %v384 = vadd.f32 %v55, %v383
  %v385 = vpop.f32.mrb[0].mxu0
  %v386 = vadd.f32 %v59, %v385
  %387 = vmatprep.mubr.f32.mxu0 0.0
  %388 = vmatmul.mubr.f32.gmra.mrb[0].mxu0 %v71
  %v389 = vpop.f32.mrb[0].mxu0
  %v390 = vadd.f32 %v55, %v389
  %v391 = vpop.f32.mrb[0].mxu0
  %v392 = vadd.f32 %v59, %v391
  %393 = vmatprep.mubr.f32.mxu0 0.0
  %394 = vmatmul.mubr.f32.gmra.mrb[0].mxu0 %v74
  %v395 = vpop.f32.mrb[0].mxu0
  %v396 = vadd.f32 %v55, %v395
  %v397 = vpop.f32.mrb[0].mxu0
  %v398 = vadd.f32 %v59, %v397
  %399 = vmatprep.mubr.f32.mxu0 0.0
  %400 = vmatmul.mubr.f32.gmra.mrb[0].mxu0 %v77
  %v401 = vpop.f32.mrb[0].mxu0
  %v402 = vadd.f32 %v55, %v401
  %v403 = vpop.f32.mrb[0].mxu0
  %v404 = vadd.f32 %v59, %v403
  %405 = vmatprep.mubr.f32.mxu0 0.0
  %406 = vmatmul.mubr.f32.gmra.mrb[0].mxu0 %v80
  %v407 = vpop.f32.mrb[0].mxu0
  %v408 = vadd.f32 %v55, %v407
  %v409 = vpop.f32.mrb[0].mxu0
  %v410 = vadd.f32 %v59, %v409
  %411 = vmatprep.mubr.f32.mxu0 0.0
  %412 = vmatmul.mubr.f32.gmra.mrb[0].mxu0 %v83
  %v413 = vpop.f32.mrb[0].mxu0
  %v414 = vadd.f32 %v55, %v413
  %v415 = vpop.f32.mrb[0].mxu0
  %v416 = vadd.f32 %v59, %v415
  %417 = vmatprep.mubr.f32.mxu0 0.0
  %418 = vmatmul.mubr.f32.gmra.mrb[0].mxu0 %v86
  %v419 = vpop.f32.mrb[0].mxu0
  %v420 = vadd.f32 %v55, %v419
  %v421 = vpop.f32.mrb[0].mxu0
  %v422 = vadd.f32 %v59, %v421
  %423 = vmatprep.mubr.f32.mxu0 0.0
  %424 = vmatmul.mubr.f32.gmra.mrb[0].mxu0 %v89
  %v425 = vpop.f32.mrb[0].mxu0
  %v426 = vadd.f32 %v55, %v425
  %v427 = vpop.f32.mrb[0].mxu0
  %v428 = vadd.f32 %v59, %v427
  %429 = vdwg.mxu0
  %430 = vst [vmem:[%s3] sm:$0xff] %v158
  %431 = vst [vmem:[%s3 + $0x8] sm:$0xff] %v160
  %432 = vst [vmem:[%s3 + $0x10] sm:$0xff] %v271
  %433 = vst [vmem:[%s3 + $0x18] sm:$0xff] %v273
  %434 = vst [vmem:[%s3 + $0x20] sm:$0xff] %v384
  %435 = vst [vmem:[%s3 + $0x28] sm:$0xff] %v386
  %436 = vst [vmem:[%s3 + $0x30] sm:$0xff] %v164
  %437 = vst [vmem:[%s3 + $0x38] sm:$0xff] %v166
  %438 = vst [vmem:[%s3 + $0x40] sm:$0xff] %v277
  %439 = vst [vmem:[%s3 + $0x48] sm:$0xff] %v279
  %440 = vst [vmem:[%s3 + $0x50] sm:$0xff] %v390
  %441 = vst [vmem:[%s3 + $0x58] sm:$0xff] %v392
  %442 = vst [vmem:[%s3 + $0x60] sm:$0xff] %v170
  %443 = vst [vmem:[%s3 + $0x68] sm:$0xff] %v172
  %444 = vst [vmem:[%s3 + $0x70] sm:$0xff] %v283
  %445 = vst [vmem:[%s3 + $0x78] sm:$0xff] %v285
  %446 = vst [vmem:[%s3 + $0x80] sm:$0xff] %v396
  %447 = vst [vmem:[%s3 + $0x88] sm:$0xff] %v398
  %448 = vst [vmem:[%s3 + $0x90] sm:$0xff] %v176
  %449 = vst [vmem:[%s3 + $0x98] sm:$0xff] %v178
  %450 = vst [vmem:[%s3 + $0xa0] sm:$0xff] %v289
  %451 = vst [vmem:[%s3 + $0xa8] sm:$0xff] %v291
  %452 = vst [vmem:[%s3 + $0xb0] sm:$0xff] %v402
  %453 = vst [vmem:[%s3 + $0xb8] sm:$0xff] %v404
  %454 = vst [vmem:[%s3 + $0xc0] sm:$0xff] %v182
  %455 = vst [vmem:[%s3 + $0xc8] sm:$0xff] %v184
  %456 = vst [vmem:[%s3 + $0xd0] sm:$0xff] %v295
  %457 = vst [vmem:[%s3 + $0xd8] sm:$0xff] %v297
  %458 = vst [vmem:[%s3 + $0xe0] sm:$0xff] %v408
  %459 = vst [vmem:[%s3 + $0xe8] sm:$0xff] %v410
  %460 = vst [vmem:[%s3 + $0xf0] sm:$0xff] %v188
  %461 = vst [vmem:[%s3 + $0xf8] sm:$0xff] %v190
  %462 = vst [vmem:[%s3 + $0x100] sm:$0xff] %v301
  %463 = vst [vmem:[%s3 + $0x108] sm:$0xff] %v303
  %464 = vst [vmem:[%s3 + $0x110] sm:$0xff] %v414
  %465 = vst [vmem:[%s3 + $0x118] sm:$0xff] %v416
  %466 = vst [vmem:[%s3 + $0x120] sm:$0xff] %v194
  %467 = vst [vmem:[%s3 + $0x128] sm:$0xff] %v196
  %468 = vst [vmem:[%s3 + $0x130] sm:$0xff] %v307
  %469 = vst [vmem:[%s3 + $0x138] sm:$0xff] %v309
  %470 = vst [vmem:[%s3 + $0x140] sm:$0xff] %v420
  %471 = vst [vmem:[%s3 + $0x148] sm:$0xff] %v422
  %472 = vst [vmem:[%s3 + $0x150] sm:$0xff] %v200
  %473 = vst [vmem:[%s3 + $0x158] sm:$0xff] %v202
  %474 = vst [vmem:[%s3 + $0x160] sm:$0xff] %v313
  %475 = vst [vmem:[%s3 + $0x168] sm:$0xff] %v315
  %476 = vst [vmem:[%s3 + $0x170] sm:$0xff] %v426
  %477 = vst [vmem:[%s3 + $0x178] sm:$0xff] %v428
  // Predicated region
  $region14: #{bidirectional_gru_2_forward.5} parent=0 // pred_check
    _
  $region15: #{bidirectional_gru_2_forward.5} parent=0 // pred_check_branch
    %479 = sbr.rel (0) target = $region17
  $region16: #{bidirectional_gru_2_forward.5} parent=0 // pred_region
    _
  $region17: #{bidirectional_gru_2_forward.5} parent=0 // pred_fallthru
    _
  // Predicated region
  $region18: #{bidirectional_gru_2_forward.5} parent=0 // pred_check
    _
  $region19: #{bidirectional_gru_2_forward.5} parent=0 // pred_check_branch
    %481 = sbr.rel (0) target = $region21
  $region20: #{bidirectional_gru_2_forward.5} parent=0 // pred_region
    _
  $region21: #{bidirectional_gru_2_forward.5} parent=0 // pred_fallthru
    _

// kernel: bidirectional_gru_2_forward.7
$region0: #{bidirectional_gru_2_forward.7}
  #allocation0 [shape = 'u32[]', space=smem, size = 0x4, offset = 0x4, fixed_abs, tag = 'smem constant byte address 0x4 - core index']
  #allocation1 [shape = 'u32[144,128]{1,0:T(1,128)}', space=vmem, size = 0x12000, scoped, tag = 'internal scratch']
  %s0 = inlined_call_operand.vmem [shape: f32[64,128], index: 0, kind: input, shape index: {}]
  %s1 = inlined_call_operand.vmem [shape: f32[64,128], index: 1, kind: input, shape index: {}]
  %s2 = inlined_call_operand.vmem [shape: f32[128,768], index: 2, kind: input, shape index: {}]
  %s3 = inlined_call_operand.vmem [shape: f32[128,768], index: 3, kind: input, shape index: {}]
  %s4 = inlined_call_operand.vmem [shape: f32[1,768], index: 4, kind: input, shape index: {}]
  %s5 = inlined_call_operand.vmem [shape: f32[64,768], index: 5, kind: output, shape index: {}]
  %s6 = sld [smem:[#allocation0]]
  $region30: #{bidirectional_gru_2_forward.7} parent=0
    _
  %s8 = ssub.s32 1, %s6
  %s9 = scalar_select 0, %s8, %s6
  // Predicated region
  $region2: #{bidirectional_gru_2_forward.7} parent=0 // pred_check
    _
  $region3: #{bidirectional_gru_2_forward.7} parent=0 // pred_check_branch
    %11 = sbr.rel (0) target = $region5
  $region4: #{bidirectional_gru_2_forward.7} parent=0 // pred_region
    _
  $region5: #{bidirectional_gru_2_forward.7} parent=0 // pred_fallthru
    _
  // Predicated region
  $region6: #{bidirectional_gru_2_forward.7} parent=0 // pred_check
    _
  $region7: #{bidirectional_gru_2_forward.7} parent=0 // pred_check_branch
    %13 = sbr.rel (0) target = $region9
  $region8: #{bidirectional_gru_2_forward.7} parent=0 // pred_region
    _
  $region9: #{bidirectional_gru_2_forward.7} parent=0 // pred_fallthru
    _
  // Predicated region
  $region10: #{bidirectional_gru_2_forward.7} parent=0 // pred_check
    _
  $region11: #{bidirectional_gru_2_forward.7} parent=0 // pred_check_branch
    %15 = sbr.rel (0) target = $region13
  $region12: #{bidirectional_gru_2_forward.7} parent=0 // pred_region
    _
  $region13: #{bidirectional_gru_2_forward.7} parent=0 // pred_fallthru
    _
  // Predicated region
  $region14: #{bidirectional_gru_2_forward.7} parent=0 // pred_check
    _
  $region15: #{bidirectional_gru_2_forward.7} parent=0 // pred_check_branch
    %17 = sbr.rel (0) target = $region17
  $region16: #{bidirectional_gru_2_forward.7} parent=0 // pred_region
    _
  $region17: #{bidirectional_gru_2_forward.7} parent=0 // pred_fallthru
    _
  // Predicated region
  $region18: #{bidirectional_gru_2_forward.7} parent=0 // pred_check
    _
  $region19: #{bidirectional_gru_2_forward.7} parent=0 // pred_check_branch
    %19 = sbr.rel (0) target = $region21
  $region20: #{bidirectional_gru_2_forward.7} parent=0 // pred_region
    _
  $region21: #{bidirectional_gru_2_forward.7} parent=0 // pred_fallthru
    _
  %v20 = vld [vmem:[%s0] sm:$0xff]
  %v21 = vld [vmem:[%s0 + $0x8] sm:$0xff]
  %v22 = vld [vmem:[%s0 + $0x10] sm:$0xff]
  %v23 = vld [vmem:[%s0 + $0x18] sm:$0xff]
  %v24 = vld [vmem:[%s0 + $0x20] sm:$0xff]
  %v25 = vld [vmem:[%s0 + $0x28] sm:$0xff]
  %v26 = vld [vmem:[%s0 + $0x30] sm:$0xff]
  %v27 = vld [vmem:[%s0 + $0x38] sm:$0xff]
  %v28 = vld [vmem:[%s2] sm:$0xff]
  %v29 = vld [vmem:[%s2 + $0x8] sm:$0xff]
  %v30 = vld [vmem:[%s2 + $0x10] sm:$0xff]
  %v31 = vld [vmem:[%s2 + $0x18] sm:$0xff]
  %v32 = vld [vmem:[%s2 + $0x20] sm:$0xff]
  %v33 = vld [vmem:[%s2 + $0x28] sm:$0xff]
  %v34 = vld [vmem:[%s2 + $0x30] sm:$0xff]
  %v35 = vld [vmem:[%s2 + $0x38] sm:$0xff]
  %v36 = vld [vmem:[%s2 + $0x40] sm:$0xff]
  %v37 = vld [vmem:[%s2 + $0x48] sm:$0xff]
  %v38 = vld [vmem:[%s2 + $0x50] sm:$0xff]
  %v39 = vld [vmem:[%s2 + $0x58] sm:$0xff]
  %v40 = vld [vmem:[%s2 + $0x60] sm:$0xff]
  %v41 = vld [vmem:[%s2 + $0x68] sm:$0xff]
  %v42 = vld [vmem:[%s2 + $0x70] sm:$0xff]
  %v43 = vld [vmem:[%s2 + $0x78] sm:$0xff]
  %v44 = vld [vmem:[%s2 + $0x80] sm:$0xff]
  %v45 = vld [vmem:[%s2 + $0x88] sm:$0xff]
  %v46 = vld [vmem:[%s2 + $0x90] sm:$0xff]
  %v47 = vld [vmem:[%s2 + $0x98] sm:$0xff]
  %v48 = vld [vmem:[%s2 + $0xa0] sm:$0xff]
  %v49 = vld [vmem:[%s2 + $0xa8] sm:$0xff]
  %v50 = vld [vmem:[%s2 + $0xb0] sm:$0xff]
  %v51 = vld [vmem:[%s2 + $0xb8] sm:$0xff]
  %v52 = vld [vmem:[%s2 + $0xc0] sm:$0xff]
  %v53 = vld [vmem:[%s2 + $0xc8] sm:$0xff]
  %v54 = vld [vmem:[%s2 + $0xd0] sm:$0xff]
  %v55 = vld [vmem:[%s2 + $0xd8] sm:$0xff]
  %v56 = vld [vmem:[%s2 + $0xe0] sm:$0xff]
  %v57 = vld [vmem:[%s2 + $0xe8] sm:$0xff]
  %v58 = vld [vmem:[%s2 + $0xf0] sm:$0xff]
  %v59 = vld [vmem:[%s2 + $0xf8] sm:$0xff]
  %v60 = vld [vmem:[%s2 + $0x100] sm:$0xff]
  %v61 = vld [vmem:[%s2 + $0x108] sm:$0xff]
  %v62 = vld [vmem:[%s2 + $0x110] sm:$0xff]
  %v63 = vld [vmem:[%s2 + $0x118] sm:$0xff]
  %v64 = vld [vmem:[%s2 + $0x120] sm:$0xff]
  %v65 = vld [vmem:[%s2 + $0x128] sm:$0xff]
  %v66 = vld [vmem:[%s2 + $0x130] sm:$0xff]
  %v67 = vld [vmem:[%s2 + $0x138] sm:$0xff]
  %v68 = vld [vmem:[%s2 + $0x140] sm:$0xff]
  %v69 = vld [vmem:[%s2 + $0x148] sm:$0xff]
  %v70 = vld [vmem:[%s2 + $0x150] sm:$0xff]
  %v71 = vld [vmem:[%s2 + $0x158] sm:$0xff]
  %v72 = vld [vmem:[%s2 + $0x160] sm:$0xff]
  %v73 = vld [vmem:[%s2 + $0x168] sm:$0xff]
  %v74 = vld [vmem:[%s2 + $0x170] sm:$0xff]
  %v75 = vld [vmem:[%s2 + $0x178] sm:$0xff]
  %v76 = vld [vmem:[%s2 + $0x180] sm:$0xff]
  %v77 = vld [vmem:[%s2 + $0x188] sm:$0xff]
  %v78 = vld [vmem:[%s2 + $0x190] sm:$0xff]
  %v79 = vld [vmem:[%s2 + $0x198] sm:$0xff]
  %v80 = vld [vmem:[%s2 + $0x1a0] sm:$0xff]
  %v81 = vld [vmem:[%s2 + $0x1a8] sm:$0xff]
  %v82 = vld [vmem:[%s2 + $0x1b0] sm:$0xff]
  %v83 = vld [vmem:[%s2 + $0x1b8] sm:$0xff]
  %v84 = vld [vmem:[%s2 + $0x1c0] sm:$0xff]
  %v85 = vld [vmem:[%s2 + $0x1c8] sm:$0xff]
  %v86 = vld [vmem:[%s2 + $0x1d0] sm:$0xff]
  %v87 = vld [vmem:[%s2 + $0x1d8] sm:$0xff]
  %v88 = vld [vmem:[%s2 + $0x1e0] sm:$0xff]
  %v89 = vld [vmem:[%s2 + $0x1e8] sm:$0xff]
  %v90 = vld [vmem:[%s2 + $0x1f0] sm:$0xff]
  %v91 = vld [vmem:[%s2 + $0x1f8] sm:$0xff]
  %v92 = vld [vmem:[%s2 + $0x200] sm:$0xff]
  %v93 = vld [vmem:[%s2 + $0x208] sm:$0xff]
  %v94 = vld [vmem:[%s2 + $0x210] sm:$0xff]
  %v95 = vld [vmem:[%s2 + $0x218] sm:$0xff]
  %v96 = vld [vmem:[%s2 + $0x220] sm:$0xff]
  %v97 = vld [vmem:[%s2 + $0x228] sm:$0xff]
  %v98 = vld [vmem:[%s2 + $0x230] sm:$0xff]
  %v99 = vld [vmem:[%s2 + $0x238] sm:$0xff]
  %v100 = vld [vmem:[%s2 + $0x240] sm:$0xff]
  %v101 = vld [vmem:[%s2 + $0x248] sm:$0xff]
  %v102 = vld [vmem:[%s2 + $0x250] sm:$0xff]
  %v103 = vld [vmem:[%s2 + $0x258] sm:$0xff]
  %v104 = vld [vmem:[%s2 + $0x260] sm:$0xff]
  %v105 = vld [vmem:[%s2 + $0x268] sm:$0xff]
  %v106 = vld [vmem:[%s2 + $0x270] sm:$0xff]
  %v107 = vld [vmem:[%s2 + $0x278] sm:$0xff]
  %v108 = vld [vmem:[%s2 + $0x280] sm:$0xff]
  %v109 = vld [vmem:[%s2 + $0x288] sm:$0xff]
  %v110 = vld [vmem:[%s2 + $0x290] sm:$0xff]
  %v111 = vld [vmem:[%s2 + $0x298] sm:$0xff]
  %v112 = vld [vmem:[%s2 + $0x2a0] sm:$0xff]
  %v113 = vld [vmem:[%s2 + $0x2a8] sm:$0xff]
  %v114 = vld [vmem:[%s2 + $0x2b0] sm:$0xff]
  %v115 = vld [vmem:[%s2 + $0x2b8] sm:$0xff]
  %v116 = vld [vmem:[%s2 + $0x2c0] sm:$0xff]
  %v117 = vld [vmem:[%s2 + $0x2c8] sm:$0xff]
  %v118 = vld [vmem:[%s2 + $0x2d0] sm:$0xff]
  %v119 = vld [vmem:[%s2 + $0x2d8] sm:$0xff]
  %v120 = vld [vmem:[%s2 + $0x2e0] sm:$0xff]
  %v121 = vld [vmem:[%s2 + $0x2e8] sm:$0xff]
  %v122 = vld [vmem:[%s2 + $0x2f0] sm:$0xff]
  %v123 = vld [vmem:[%s2 + $0x2f8] sm:$0xff]
  %v124 = vld [vmem:[%s1] sm:$0xff]
  %v125 = vld [vmem:[%s1 + $0x8] sm:$0xff]
  %v126 = vld [vmem:[%s1 + $0x10] sm:$0xff]
  %v127 = vld [vmem:[%s1 + $0x18] sm:$0xff]
  %v128 = vld [vmem:[%s1 + $0x20] sm:$0xff]
  %v129 = vld [vmem:[%s1 + $0x28] sm:$0xff]
  %v130 = vld [vmem:[%s1 + $0x30] sm:$0xff]
  %v131 = vld [vmem:[%s1 + $0x38] sm:$0xff]
  %v132 = vld [vmem:[%s3] sm:$0xff]
  %v133 = vld [vmem:[%s3 + $0x8] sm:$0xff]
  %v134 = vld [vmem:[%s3 + $0x10] sm:$0xff]
  %v135 = vld [vmem:[%s3 + $0x18] sm:$0xff]
  %v136 = vld [vmem:[%s3 + $0x20] sm:$0xff]
  %v137 = vld [vmem:[%s3 + $0x28] sm:$0xff]
  %v138 = vld [vmem:[%s3 + $0x30] sm:$0xff]
  %v139 = vld [vmem:[%s3 + $0x38] sm:$0xff]
  %v140 = vld [vmem:[%s3 + $0x40] sm:$0xff]
  %v141 = vld [vmem:[%s3 + $0x48] sm:$0xff]
  %v142 = vld [vmem:[%s3 + $0x50] sm:$0xff]
  %v143 = vld [vmem:[%s3 + $0x58] sm:$0xff]
  %v144 = vld [vmem:[%s3 + $0x60] sm:$0xff]
  %v145 = vld [vmem:[%s3 + $0x68] sm:$0xff]
  %v146 = vld [vmem:[%s3 + $0x70] sm:$0xff]
  %v147 = vld [vmem:[%s3 + $0x78] sm:$0xff]
  %v148 = vld [vmem:[%s3 + $0x80] sm:$0xff]
  %v149 = vld [vmem:[%s3 + $0x88] sm:$0xff]
  %v150 = vld [vmem:[%s3 + $0x90] sm:$0xff]
  %v151 = vld [vmem:[%s3 + $0x98] sm:$0xff]
  %v152 = vld [vmem:[%s3 + $0xa0] sm:$0xff]
  %v153 = vld [vmem:[%s3 + $0xa8] sm:$0xff]
  %v154 = vld [vmem:[%s3 + $0xb0] sm:$0xff]
  %v155 = vld [vmem:[%s3 + $0xb8] sm:$0xff]
  %v156 = vld [vmem:[%s3 + $0xc0] sm:$0xff]
  %v157 = vld [vmem:[%s3 + $0xc8] sm:$0xff]
  %v158 = vld [vmem:[%s3 + $0xd0] sm:$0xff]
  %v159 = vld [vmem:[%s3 + $0xd8] sm:$0xff]
  %v160 = vld [vmem:[%s3 + $0xe0] sm:$0xff]
  %v161 = vld [vmem:[%s3 + $0xe8] sm:$0xff]
  %v162 = vld [vmem:[%s3 + $0xf0] sm:$0xff]
  %v163 = vld [vmem:[%s3 + $0xf8] sm:$0xff]
  %v164 = vld [vmem:[%s3 + $0x100] sm:$0xff]
  %v165 = vld [vmem:[%s3 + $0x108] sm:$0xff]
  %v166 = vld [vmem:[%s3 + $0x110] sm:$0xff]
  %v167 = vld [vmem:[%s3 + $0x118] sm:$0xff]
  %v168 = vld [vmem:[%s3 + $0x120] sm:$0xff]
  %v169 = vld [vmem:[%s3 + $0x128] sm:$0xff]
  %v170 = vld [vmem:[%s3 + $0x130] sm:$0xff]
  %v171 = vld [vmem:[%s3 + $0x138] sm:$0xff]
  %v172 = vld [vmem:[%s3 + $0x140] sm:$0xff]
  %v173 = vld [vmem:[%s3 + $0x148] sm:$0xff]
  %v174 = vld [vmem:[%s3 + $0x150] sm:$0xff]
  %v175 = vld [vmem:[%s3 + $0x158] sm:$0xff]
  %v176 = vld [vmem:[%s3 + $0x160] sm:$0xff]
  %v177 = vld [vmem:[%s3 + $0x168] sm:$0xff]
  %v178 = vld [vmem:[%s3 + $0x170] sm:$0xff]
  %v179 = vld [vmem:[%s3 + $0x178] sm:$0xff]
  %v180 = vld [vmem:[%s3 + $0x180] sm:$0xff]
  %v181 = vld [vmem:[%s3 + $0x188] sm:$0xff]
  %v182 = vld [vmem:[%s3 + $0x190] sm:$0xff]
  %v183 = vld [vmem:[%s3 + $0x198] sm:$0xff]
  %v184 = vld [vmem:[%s3 + $0x1a0] sm:$0xff]
  %v185 = vld [vmem:[%s3 + $0x1a8] sm:$0xff]
  %v186 = vld [vmem:[%s3 + $0x1b0] sm:$0xff]
  %v187 = vld [vmem:[%s3 + $0x1b8] sm:$0xff]
  %v188 = vld [vmem:[%s3 + $0x1c0] sm:$0xff]
  %v189 = vld [vmem:[%s3 + $0x1c8] sm:$0xff]
  %v190 = vld [vmem:[%s3 + $0x1d0] sm:$0xff]
  %v191 = vld [vmem:[%s3 + $0x1d8] sm:$0xff]
  %v192 = vld [vmem:[%s3 + $0x1e0] sm:$0xff]
  %v193 = vld [vmem:[%s3 + $0x1e8] sm:$0xff]
  %v194 = vld [vmem:[%s3 + $0x1f0] sm:$0xff]
  %v195 = vld [vmem:[%s3 + $0x1f8] sm:$0xff]
  %v196 = vld [vmem:[%s3 + $0x200] sm:$0xff]
  %v197 = vld [vmem:[%s3 + $0x208] sm:$0xff]
  %v198 = vld [vmem:[%s3 + $0x210] sm:$0xff]
  %v199 = vld [vmem:[%s3 + $0x218] sm:$0xff]
  %v200 = vld [vmem:[%s3 + $0x220] sm:$0xff]
  %v201 = vld [vmem:[%s3 + $0x228] sm:$0xff]
  %v202 = vld [vmem:[%s3 + $0x230] sm:$0xff]
  %v203 = vld [vmem:[%s3 + $0x238] sm:$0xff]
  %v204 = vld [vmem:[%s3 + $0x240] sm:$0xff]
  %v205 = vld [vmem:[%s3 + $0x248] sm:$0xff]
  %v206 = vld [vmem:[%s3 + $0x250] sm:$0xff]
  %v207 = vld [vmem:[%s3 + $0x258] sm:$0xff]
  %v208 = vld [vmem:[%s3 + $0x260] sm:$0xff]
  %v209 = vld [vmem:[%s3 + $0x268] sm:$0xff]
  %v210 = vld [vmem:[%s3 + $0x270] sm:$0xff]
  %v211 = vld [vmem:[%s3 + $0x278] sm:$0xff]
  %v212 = vld [vmem:[%s3 + $0x280] sm:$0xff]
  %v213 = vld [vmem:[%s3 + $0x288] sm:$0xff]
  %v214 = vld [vmem:[%s3 + $0x290] sm:$0xff]
  %v215 = vld [vmem:[%s3 + $0x298] sm:$0xff]
  %v216 = vld [vmem:[%s3 + $0x2a0] sm:$0xff]
  %v217 = vld [vmem:[%s3 + $0x2a8] sm:$0xff]
  %v218 = vld [vmem:[%s3 + $0x2b0] sm:$0xff]
  %v219 = vld [vmem:[%s3 + $0x2b8] sm:$0xff]
  %v220 = vld [vmem:[%s3 + $0x2c0] sm:$0xff]
  %v221 = vld [vmem:[%s3 + $0x2c8] sm:$0xff]
  %v222 = vld [vmem:[%s3 + $0x2d0] sm:$0xff]
  %v223 = vld [vmem:[%s3 + $0x2d8] sm:$0xff]
  %v224 = vld [vmem:[%s3 + $0x2e0] sm:$0xff]
  %v225 = vld [vmem:[%s3 + $0x2e8] sm:$0xff]
  %v226 = vld [vmem:[%s3 + $0x2f0] sm:$0xff]
  %v227 = vld [vmem:[%s3 + $0x2f8] sm:$0xff]
  %228 = vmatprep.subr.mxu0 %v133
  %229 = vmatpush1.msra.mxu0 %v132
  %230 = vmatprep.subr.mxu0 %v139
  %231 = vmatpush1.msra.mxu0 %v138
  %232 = vmatprep.subr.mxu0 %v145
  %233 = vmatpush1.msra.mxu0 %v144
  %234 = vmatprep.subr.mxu0 %v151
  %235 = vmatpush1.msra.mxu0 %v150
  %236 = vmatprep.subr.mxu0 %v157
  %237 = vmatpush1.msra.mxu0 %v156
  %238 = vmatprep.subr.mxu0 %v163
  %239 = vmatpush1.msra.mxu0 %v162
  %240 = vmatprep.subr.mxu0 %v169
  %241 = vmatpush1.msra.mxu0 %v168
  %242 = vmatprep.subr.mxu0 %v175
  %243 = vmatpush1.msra.mxu0 %v174
  %244 = vmatprep.subr.mxu0 %v181
  %245 = vmatpush1.msra.mxu0 %v180
  %246 = vmatprep.subr.mxu0 %v187
  %247 = vmatpush1.msra.mxu0 %v186
  %248 = vmatprep.subr.mxu0 %v193
  %249 = vmatpush1.msra.mxu0 %v192
  %250 = vmatprep.subr.mxu0 %v199
  %251 = vmatpush1.msra.mxu0 %v198
  %252 = vmatprep.subr.mxu0 %v205
  %253 = vmatpush1.msra.mxu0 %v204
  %254 = vmatprep.subr.mxu0 %v211
  %255 = vmatpush1.msra.mxu0 %v210
  %256 = vmatprep.subr.mxu0 %v217
  %257 = vmatpush1.msra.mxu0 %v216
  %258 = vmatprep.subr.mxu0 %v223
  %259 = vmatpush1.msra.mxu0 %v222
  %260 = vmatprep.subr.mxu0 0.0
  %261 = vmatpush1.msra.mxu0 0.0
  %262 = vmatprep.subr.mxu0 0.0
  %263 = vmatpush1.msra.mxu0 0.0
  %264 = vmatprep.subr.mxu0 0.0
  %265 = vmatpush1.msra.mxu0 0.0
  %266 = vmatprep.subr.mxu0 0.0
  %267 = vmatpush1.msra.mxu0 0.0
  %268 = vmatprep.subr.mxu0 0.0
  %269 = vmatpush1.msra.mxu0 0.0
  %270 = vmatprep.subr.mxu0 0.0
  %271 = vmatpush1.msra.mxu0 0.0
  %272 = vmatprep.subr.mxu0 0.0
  %273 = vmatpush1.msra.mxu0 0.0
  %274 = vmatprep.subr.mxu0 0.0
  %275 = vmatpush1.msra.mxu0 0.0
  %276 = vmatprep.subr.mxu0 0.0
  %277 = vmatpush1.msra.mxu0 0.0
  %278 = vmatprep.subr.mxu0 0.0
  %279 = vmatpush1.msra.mxu0 0.0
  %280 = vmatprep.subr.mxu0 0.0
  %281 = vmatpush1.msra.mxu0 0.0
  %282 = vmatprep.subr.mxu0 0.0
  %283 = vmatpush1.msra.mxu0 0.0
  %284 = vmatprep.subr.mxu0 0.0
  %285 = vmatpush1.msra.mxu0 0.0
  %286 = vmatprep.subr.mxu0 0.0
  %287 = vmatpush1.msra.mxu0 0.0
  %288 = vmatprep.subr.mxu0 0.0
  %289 = vmatpush1.msra.mxu0 0.0
  %290 = vmatprep.subr.mxu0 0.0
  %291 = vmatpush1.msra.mxu0 0.0
  %292 = vmatprep.mubr.f32.mxu0 0.0
  %293 = vmatmul.mubr.f32.gmra.mrb[0].mxu0 %v124
  %v294 = vpop.f32.mrb[0].mxu0
  %v295 = vadd.f32 0.0, %v294
  %v296 = vpop.f32.mrb[0].mxu0
  %v297 = vadd.f32 0.0, %v296
  %298 = vmatprep.mubr.f32.mxu0 0.0
  %299 = vmatmul.mubr.f32.gmra.mrb[0].mxu0 %v125
  %v300 = vpop.f32.mrb[0].mxu0
  %v301 = vadd.f32 0.0, %v300
  %v302 = vpop.f32.mrb[0].mxu0
  %v303 = vadd.f32 0.0, %v302
  %304 = vmatprep.mubr.f32.mxu0 0.0
  %305 = vmatmul.mubr.f32.gmra.mrb[0].mxu0 %v126
  %v306 = vpop.f32.mrb[0].mxu0
  %v307 = vadd.f32 0.0, %v306
  %v308 = vpop.f32.mrb[0].mxu0
  %v309 = vadd.f32 0.0, %v308
  %310 = vmatprep.mubr.f32.mxu0 0.0
  %311 = vmatmul.mubr.f32.gmra.mrb[0].mxu0 %v127
  %v312 = vpop.f32.mrb[0].mxu0
  %v313 = vadd.f32 0.0, %v312
  %v314 = vpop.f32.mrb[0].mxu0
  %v315 = vadd.f32 0.0, %v314
  %316 = vmatprep.mubr.f32.mxu0 0.0
  %317 = vmatmul.mubr.f32.gmra.mrb[0].mxu0 %v128
  %v318 = vpop.f32.mrb[0].mxu0
  %v319 = vadd.f32 0.0, %v318
  %v320 = vpop.f32.mrb[0].mxu0
  %v321 = vadd.f32 0.0, %v320
  %322 = vmatprep.mubr.f32.mxu0 0.0
  %323 = vmatmul.mubr.f32.gmra.mrb[0].mxu0 %v129
  %v324 = vpop.f32.mrb[0].mxu0
  %v325 = vadd.f32 0.0, %v324
  %v326 = vpop.f32.mrb[0].mxu0
  %v327 = vadd.f32 0.0, %v326
  %328 = vmatprep.mubr.f32.mxu0 0.0
  %329 = vmatmul.mubr.f32.gmra.mrb[0].mxu0 %v130
  %v330 = vpop.f32.mrb[0].mxu0
  %v331 = vadd.f32 0.0, %v330
  %v332 = vpop.f32.mrb[0].mxu0
  %v333 = vadd.f32 0.0, %v332
  %334 = vmatprep.mubr.f32.mxu0 0.0
  %335 = vmatmul.mubr.f32.gmra.mrb[0].mxu0 %v131
  %v336 = vpop.f32.mrb[0].mxu0
  %v337 = vadd.f32 0.0, %v336
  %v338 = vpop.f32.mrb[0].mxu0
  %v339 = vadd.f32 0.0, %v338
  %340 = vdwg.mxu0
  %341 = vmatprep.subr.mxu0 %v135
  %342 = vmatpush1.msra.mxu0 %v134
  %343 = vmatprep.subr.mxu0 %v141
  %344 = vmatpush1.msra.mxu0 %v140
  %345 = vmatprep.subr.mxu0 %v147
  %346 = vmatpush1.msra.mxu0 %v146
  %347 = vmatprep.subr.mxu0 %v153
  %348 = vmatpush1.msra.mxu0 %v152
  %349 = vmatprep.subr.mxu0 %v159
  %350 = vmatpush1.msra.mxu0 %v158
  %351 = vmatprep.subr.mxu0 %v165
  %352 = vmatpush1.msra.mxu0 %v164
  %353 = vmatprep.subr.mxu0 %v171
  %354 = vmatpush1.msra.mxu0 %v170
  %355 = vmatprep.subr.mxu0 %v177
  %356 = vmatpush1.msra.mxu0 %v176
  %357 = vmatprep.subr.mxu0 %v183
  %358 = vmatpush1.msra.mxu0 %v182
  %359 = vmatprep.subr.mxu0 %v189
  %360 = vmatpush1.msra.mxu0 %v188
  %361 = vmatprep.subr.mxu0 %v195
  %362 = vmatpush1.msra.mxu0 %v194
  %363 = vmatprep.subr.mxu0 %v201
  %364 = vmatpush1.msra.mxu0 %v200
  %365 = vmatprep.subr.mxu0 %v207
  %366 = vmatpush1.msra.mxu0 %v206
  %367 = vmatprep.subr.mxu0 %v213
  %368 = vmatpush1.msra.mxu0 %v212
  %369 = vmatprep.subr.mxu0 %v219
  %370 = vmatpush1.msra.mxu0 %v218
  %371 = vmatprep.subr.mxu0 %v225
  %372 = vmatpush1.msra.mxu0 %v224
  %373 = vmatprep.subr.mxu0 0.0
  %374 = vmatpush1.msra.mxu0 0.0
  %375 = vmatprep.subr.mxu0 0.0
  %376 = vmatpush1.msra.mxu0 0.0
  %377 = vmatprep.subr.mxu0 0.0
  %378 = vmatpush1.msra.mxu0 0.0
  %379 = vmatprep.subr.mxu0 0.0
  %380 = vmatpush1.msra.mxu0 0.0
  %381 = vmatprep.subr.mxu0 0.0
  %382 = vmatpush1.msra.mxu0 0.0
  %383 = vmatprep.subr.mxu0 0.0
  %384 = vmatpush1.msra.mxu0 0.0
  %385 = vmatprep.subr.mxu0 0.0
  %386 = vmatpush1.msra.mxu0 0.0
  %387 = vmatprep.subr.mxu0 0.0
  %388 = vmatpush1.msra.mxu0 0.0
  %389 = vmatprep.subr.mxu0 0.0
  %390 = vmatpush1.msra.mxu0 0.0
  %391 = vmatprep.subr.mxu0 0.0
  %392 = vmatpush1.msra.mxu0 0.0
  %393 = vmatprep.subr.mxu0 0.0
  %394 = vmatpush1.msra.mxu0 0.0
  %395 = vmatprep.subr.mxu0 0.0
  %396 = vmatpush1.msra.mxu0 0.0
  %397 = vmatprep.subr.mxu0 0.0
  %398 = vmatpush1.msra.mxu0 0.0
  %399 = vmatprep.subr.mxu0 0.0
  %400 = vmatpush1.msra.mxu0 0.0
  %401 = vmatprep.subr.mxu0 0.0
  %402 = vmatpush1.msra.mxu0 0.0
  %403 = vmatprep.subr.mxu0 0.0
  %404 = vmatpush1.msra.mxu0 0.0
  %405 = vmatprep.mubr.f32.mxu0 0.0
  %406 = vmatmul.mubr.f32.gmra.mrb[0].mxu0 %v124
  %v407 = vpop.f32.mrb[0].mxu0
  %v408 = vadd.f32 0.0, %v407
  %v409 = vpop.f32.mrb[0].mxu0
  %v410 = vadd.f32 0.0, %v409
  %411 = vmatprep.mubr.f32.mxu0 0.0
  %412 = vmatmul.mubr.f32.gmra.mrb[0].mxu0 %v125
  %v413 = vpop.f32.mrb[0].mxu0
  %v414 = vadd.f32 0.0, %v413
  %v415 = vpop.f32.mrb[0].mxu0
  %v416 = vadd.f32 0.0, %v415
  %417 = vmatprep.mubr.f32.mxu0 0.0
  %418 = vmatmul.mubr.f32.gmra.mrb[0].mxu0 %v126
  %v419 = vpop.f32.mrb[0].mxu0
  %v420 = vadd.f32 0.0, %v419
  %v421 = vpop.f32.mrb[0].mxu0
  %v422 = vadd.f32 0.0, %v421
  %423 = vmatprep.mubr.f32.mxu0 0.0
  %424 = vmatmul.mubr.f32.gmra.mrb[0].mxu0 %v127
  %v425 = vpop.f32.mrb[0].mxu0
  %v426 = vadd.f32 0.0, %v425
  %v427 = vpop.f32.mrb[0].mxu0
  %v428 = vadd.f32 0.0, %v427
  %429 = vmatprep.mubr.f32.mxu0 0.0
  %430 = vmatmul.mubr.f32.gmra.mrb[0].mxu0 %v128
  %v431 = vpop.f32.mrb[0].mxu0
  %v432 = vadd.f32 0.0, %v431
  %v433 = vpop.f32.mrb[0].mxu0
  %v434 = vadd.f32 0.0, %v433
  %435 = vmatprep.mubr.f32.mxu0 0.0
  %436 = vmatmul.mubr.f32.gmra.mrb[0].mxu0 %v129
  %v437 = vpop.f32.mrb[0].mxu0
  %v438 = vadd.f32 0.0, %v437
  %v439 = vpop.f32.mrb[0].mxu0
  %v440 = vadd.f32 0.0, %v439
  %441 = vmatprep.mubr.f32.mxu0 0.0
  %442 = vmatmul.mubr.f32.gmra.mrb[0].mxu0 %v130
  %v443 = vpop.f32.mrb[0].mxu0
  %v444 = vadd.f32 0.0, %v443
  %v445 = vpop.f32.mrb[0].mxu0
  %v446 = vadd.f32 0.0, %v445
  %447 = vmatprep.mubr.f32.mxu0 0.0
  %448 = vmatmul.mubr.f32.gmra.mrb[0].mxu0 %v131
  %v449 = vpop.f32.mrb[0].mxu0
  %v450 = vadd.f32 0.0, %v449
  %v451 = vpop.f32.mrb[0].mxu0
  %v452 = vadd.f32 0.0, %v451
  %453 = vdwg.mxu0
  %454 = vmatprep.subr.mxu0 %v137
  %455 = vmatpush1.msra.mxu0 %v136
  %456 = vmatprep.subr.mxu0 %v143
  %457 = vmatpush1.msra.mxu0 %v142
  %458 = vmatprep.subr.mxu0 %v149
  %459 = vmatpush1.msra.mxu0 %v148
  %460 = vmatprep.subr.mxu0 %v155
  %461 = vmatpush1.msra.mxu0 %v154
  %462 = vmatprep.subr.mxu0 %v161
  %463 = vmatpush1.msra.mxu0 %v160
  %464 = vmatprep.subr.mxu0 %v167
  %465 = vmatpush1.msra.mxu0 %v166
  %466 = vmatprep.subr.mxu0 %v173
  %467 = vmatpush1.msra.mxu0 %v172
  %468 = vmatprep.subr.mxu0 %v179
  %469 = vmatpush1.msra.mxu0 %v178
  %470 = vmatprep.subr.mxu0 %v185
  %471 = vmatpush1.msra.mxu0 %v184
  %472 = vmatprep.subr.mxu0 %v191
  %473 = vmatpush1.msra.mxu0 %v190
  %474 = vmatprep.subr.mxu0 %v197
  %475 = vmatpush1.msra.mxu0 %v196
  %476 = vmatprep.subr.mxu0 %v203
  %477 = vmatpush1.msra.mxu0 %v202
  %478 = vmatprep.subr.mxu0 %v209
  %479 = vmatpush1.msra.mxu0 %v208
  %480 = vmatprep.subr.mxu0 %v215
  %481 = vmatpush1.msra.mxu0 %v214
  %482 = vmatprep.subr.mxu0 %v221
  %483 = vmatpush1.msra.mxu0 %v220
  %484 = vmatprep.subr.mxu0 %v227
  %485 = vmatpush1.msra.mxu0 %v226
  %486 = vmatprep.subr.mxu0 0.0
  %487 = vmatpush1.msra.mxu0 0.0
  %488 = vmatprep.subr.mxu0 0.0
  %489 = vmatpush1.msra.mxu0 0.0
  %490 = vmatprep.subr.mxu0 0.0
  %491 = vmatpush1.msra.mxu0 0.0
  %492 = vmatprep.subr.mxu0 0.0
  %493 = vmatpush1.msra.mxu0 0.0
  %494 = vmatprep.subr.mxu0 0.0
  %495 = vmatpush1.msra.mxu0 0.0
  %496 = vmatprep.subr.mxu0 0.0
  %497 = vmatpush1.msra.mxu0 0.0
  %498 = vmatprep.subr.mxu0 0.0
  %499 = vmatpush1.msra.mxu0 0.0
  %500 = vmatprep.subr.mxu0 0.0
  %501 = vmatpush1.msra.mxu0 0.0
  %502 = vmatprep.subr.mxu0 0.0
  %503 = vmatpush1.msra.mxu0 0.0
  %504 = vmatprep.subr.mxu0 0.0
  %505 = vmatpush1.msra.mxu0 0.0
  %506 = vmatprep.subr.mxu0 0.0
  %507 = vmatpush1.msra.mxu0 0.0
  %508 = vmatprep.subr.mxu0 0.0
  %509 = vmatpush1.msra.mxu0 0.0
  %510 = vmatprep.subr.mxu0 0.0
  %511 = vmatpush1.msra.mxu0 0.0
  %512 = vmatprep.subr.mxu0 0.0
  %513 = vmatpush1.msra.mxu0 0.0
  %514 = vmatprep.subr.mxu0 0.0
  %515 = vmatpush1.msra.mxu0 0.0
  %516 = vmatprep.subr.mxu0 0.0
  %517 = vmatpush1.msra.mxu0 0.0
  %518 = vmatprep.mubr.f32.mxu0 0.0
  %519 = vmatmul.mubr.f32.gmra.mrb[0].mxu0 %v124
  %v520 = vpop.f32.mrb[0].mxu0
  %v521 = vadd.f32 0.0, %v520
  %v522 = vpop.f32.mrb[0].mxu0
  %v523 = vadd.f32 0.0, %v522
  %524 = vmatprep.mubr.f32.mxu0 0.0
  %525 = vmatmul.mubr.f32.gmra.mrb[0].mxu0 %v125
  %v526 = vpop.f32.mrb[0].mxu0
  %v527 = vadd.f32 0.0, %v526
  %v528 = vpop.f32.mrb[0].mxu0
  %v529 = vadd.f32 0.0, %v528
  %530 = vmatprep.mubr.f32.mxu0 0.0
  %531 = vmatmul.mubr.f32.gmra.mrb[0].mxu0 %v126
  %v532 = vpop.f32.mrb[0].mxu0
  %v533 = vadd.f32 0.0, %v532
  %v534 = vpop.f32.mrb[0].mxu0
  %v535 = vadd.f32 0.0, %v534
  %536 = vmatprep.mubr.f32.mxu0 0.0
  %537 = vmatmul.mubr.f32.gmra.mrb[0].mxu0 %v127
  %v538 = vpop.f32.mrb[0].mxu0
  %v539 = vadd.f32 0.0, %v538
  %v540 = vpop.f32.mrb[0].mxu0
  %v541 = vadd.f32 0.0, %v540
  %542 = vmatprep.mubr.f32.mxu0 0.0
  %543 = vmatmul.mubr.f32.gmra.mrb[0].mxu0 %v128
  %v544 = vpop.f32.mrb[0].mxu0
  %v545 = vadd.f32 0.0, %v544
  %v546 = vpop.f32.mrb[0].mxu0
  %v547 = vadd.f32 0.0, %v546
  %548 = vmatprep.mubr.f32.mxu0 0.0
  %549 = vmatmul.mubr.f32.gmra.mrb[0].mxu0 %v129
  %v550 = vpop.f32.mrb[0].mxu0
  %v551 = vadd.f32 0.0, %v550
  %v552 = vpop.f32.mrb[0].mxu0
  %v553 = vadd.f32 0.0, %v552
  %554 = vmatprep.mubr.f32.mxu0 0.0
  %555 = vmatmul.mubr.f32.gmra.mrb[0].mxu0 %v130
  %v556 = vpop.f32.mrb[0].mxu0
  %v557 = vadd.f32 0.0, %v556
  %v558 = vpop.f32.mrb[0].mxu0
  %v559 = vadd.f32 0.0, %v558
  %560 = vmatprep.mubr.f32.mxu0 0.0
  %561 = vmatmul.mubr.f32.gmra.mrb[0].mxu0 %v131
  %v562 = vpop.f32.mrb[0].mxu0
  %v563 = vadd.f32 0.0, %v562
  %v564 = vpop.f32.mrb[0].mxu0
  %v565 = vadd.f32 0.0, %v564
  %566 = vdwg.mxu0
  %567 = vmatprep.subr.mxu0 %v29
  %568 = vmatpush1.msra.mxu0 %v28
  %569 = vmatprep.subr.mxu0 %v35
  %570 = vmatpush1.msra.mxu0 %v34
  %571 = vmatprep.subr.mxu0 %v41
  %572 = vmatpush1.msra.mxu0 %v40
  %573 = vmatprep.subr.mxu0 %v47
  %574 = vmatpush1.msra.mxu0 %v46
  %575 = vmatprep.subr.mxu0 %v53
  %576 = vmatpush1.msra.mxu0 %v52
  %577 = vmatprep.subr.mxu0 %v59
  %578 = vmatpush1.msra.mxu0 %v58
  %579 = vmatprep.subr.mxu0 %v65
  %580 = vmatpush1.msra.mxu0 %v64
  %581 = vmatprep.subr.mxu0 %v71
  %582 = vmatpush1.msra.mxu0 %v70
  %583 = vmatprep.subr.mxu0 %v77
  %584 = vmatpush1.msra.mxu0 %v76
  %585 = vmatprep.subr.mxu0 %v83
  %586 = vmatpush1.msra.mxu0 %v82
  %587 = vmatprep.subr.mxu0 %v89
  %588 = vmatpush1.msra.mxu0 %v88
  %589 = vmatprep.subr.mxu0 %v95
  %590 = vmatpush1.msra.mxu0 %v94
  %591 = vmatprep.subr.mxu0 %v101
  %592 = vmatpush1.msra.mxu0 %v100
  %593 = vmatprep.subr.mxu0 %v107
  %594 = vmatpush1.msra.mxu0 %v106
  %595 = vmatprep.subr.mxu0 %v113
  %596 = vmatpush1.msra.mxu0 %v112
  %597 = vmatprep.subr.mxu0 %v119
  %598 = vmatpush1.msra.mxu0 %v118
  %599 = vmatprep.subr.mxu0 0.0
  %600 = vmatpush1.msra.mxu0 0.0
  %601 = vmatprep.subr.mxu0 0.0
  %602 = vmatpush1.msra.mxu0 0.0
  %603 = vmatprep.subr.mxu0 0.0
  %604 = vmatpush1.msra.mxu0 0.0
  %605 = vmatprep.subr.mxu0 0.0
  %606 = vmatpush1.msra.mxu0 0.0
  %607 = vmatprep.subr.mxu0 0.0
  %608 = vmatpush1.msra.mxu0 0.0
  %609 = vmatprep.subr.mxu0 0.0
  %610 = vmatpush1.msra.mxu0 0.0
  %611 = vmatprep.subr.mxu0 0.0
  %612 = vmatpush1.msra.mxu0 0.0
  %613 = vmatprep.subr.mxu0 0.0
  %614 = vmatpush1.msra.mxu0 0.0
  %615 = vmatprep.subr.mxu0 0.0
  %616 = vmatpush1.msra.mxu0 0.0
  %617 = vmatprep.subr.mxu0 0.0
  %618 = vmatpush1.msra.mxu0 0.0
  %619 = vmatprep.subr.mxu0 0.0
  %620 = vmatpush1.msra.mxu0 0.0
  %621 = vmatprep.subr.mxu0 0.0
  %622 = vmatpush1.msra.mxu0 0.0
  %623 = vmatprep.subr.mxu0 0.0
  %624 = vmatpush1.msra.mxu0 0.0
  %625 = vmatprep.subr.mxu0 0.0
  %626 = vmatpush1.msra.mxu0 0.0
  %627 = vmatprep.subr.mxu0 0.0
  %628 = vmatpush1.msra.mxu0 0.0
  %629 = vmatprep.subr.mxu0 0.0
  %630 = vmatpush1.msra.mxu0 0.0
  %631 = vmatprep.mubr.f32.mxu0 0.0
  %632 = vmatmul.mubr.f32.gmra.mrb[0].mxu0 %v20
  %v633 = vpop.f32.mrb[0].mxu0
  %v634 = vadd.f32 %v295, %v633
  %v635 = vpop.f32.mrb[0].mxu0
  %v636 = vadd.f32 %v297, %v635
  %637 = vmatprep.mubr.f32.mxu0 0.0
  %638 = vmatmul.mubr.f32.gmra.mrb[0].mxu0 %v21
  %v639 = vpop.f32.mrb[0].mxu0
  %v640 = vadd.f32 %v301, %v639
  %v641 = vpop.f32.mrb[0].mxu0
  %v642 = vadd.f32 %v303, %v641
  %643 = vmatprep.mubr.f32.mxu0 0.0
  %644 = vmatmul.mubr.f32.gmra.mrb[0].mxu0 %v22
  %v645 = vpop.f32.mrb[0].mxu0
  %v646 = vadd.f32 %v307, %v645
  %v647 = vpop.f32.mrb[0].mxu0
  %v648 = vadd.f32 %v309, %v647
  %649 = vmatprep.mubr.f32.mxu0 0.0
  %650 = vmatmul.mubr.f32.gmra.mrb[0].mxu0 %v23
  %v651 = vpop.f32.mrb[0].mxu0
  %v652 = vadd.f32 %v313, %v651
  %v653 = vpop.f32.mrb[0].mxu0
  %v654 = vadd.f32 %v315, %v653
  %655 = vmatprep.mubr.f32.mxu0 0.0
  %656 = vmatmul.mubr.f32.gmra.mrb[0].mxu0 %v24
  %v657 = vpop.f32.mrb[0].mxu0
  %v658 = vadd.f32 %v319, %v657
  %v659 = vpop.f32.mrb[0].mxu0
  %v660 = vadd.f32 %v321, %v659
  %661 = vmatprep.mubr.f32.mxu0 0.0
  %662 = vmatmul.mubr.f32.gmra.mrb[0].mxu0 %v25
  %v663 = vpop.f32.mrb[0].mxu0
  %v664 = vadd.f32 %v325, %v663
  %v665 = vpop.f32.mrb[0].mxu0
  %v666 = vadd.f32 %v327, %v665
  %667 = vmatprep.mubr.f32.mxu0 0.0
  %668 = vmatmul.mubr.f32.gmra.mrb[0].mxu0 %v26
  %v669 = vpop.f32.mrb[0].mxu0
  %v670 = vadd.f32 %v331, %v669
  %v671 = vpop.f32.mrb[0].mxu0
  %v672 = vadd.f32 %v333, %v671
  %673 = vmatprep.mubr.f32.mxu0 0.0
  %674 = vmatmul.mubr.f32.gmra.mrb[0].mxu0 %v27
  %v675 = vpop.f32.mrb[0].mxu0
  %v676 = vadd.f32 %v337, %v675
  %v677 = vpop.f32.mrb[0].mxu0
  %v678 = vadd.f32 %v339, %v677
  %679 = vdwg.mxu0
  %680 = vmatprep.subr.mxu0 %v31
  %681 = vmatpush1.msra.mxu0 %v30
  %682 = vmatprep.subr.mxu0 %v37
  %683 = vmatpush1.msra.mxu0 %v36
  %684 = vmatprep.subr.mxu0 %v43
  %685 = vmatpush1.msra.mxu0 %v42
  %686 = vmatprep.subr.mxu0 %v49
  %687 = vmatpush1.msra.mxu0 %v48
  %688 = vmatprep.subr.mxu0 %v55
  %689 = vmatpush1.msra.mxu0 %v54
  %690 = vmatprep.subr.mxu0 %v61
  %691 = vmatpush1.msra.mxu0 %v60
  %692 = vmatprep.subr.mxu0 %v67
  %693 = vmatpush1.msra.mxu0 %v66
  %694 = vmatprep.subr.mxu0 %v73
  %695 = vmatpush1.msra.mxu0 %v72
  %696 = vmatprep.subr.mxu0 %v79
  %697 = vmatpush1.msra.mxu0 %v78
  %698 = vmatprep.subr.mxu0 %v85
  %699 = vmatpush1.msra.mxu0 %v84
  %700 = vmatprep.subr.mxu0 %v91
  %701 = vmatpush1.msra.mxu0 %v90
  %702 = vmatprep.subr.mxu0 %v97
  %703 = vmatpush1.msra.mxu0 %v96
  %704 = vmatprep.subr.mxu0 %v103
  %705 = vmatpush1.msra.mxu0 %v102
  %706 = vmatprep.subr.mxu0 %v109
  %707 = vmatpush1.msra.mxu0 %v108
  %708 = vmatprep.subr.mxu0 %v115
  %709 = vmatpush1.msra.mxu0 %v114
  %710 = vmatprep.subr.mxu0 %v121
  %711 = vmatpush1.msra.mxu0 %v120
  %712 = vmatprep.subr.mxu0 0.0
  %713 = vmatpush1.msra.mxu0 0.0
  %714 = vmatprep.subr.mxu0 0.0
  %715 = vmatpush1.msra.mxu0 0.0
  %716 = vmatprep.subr.mxu0 0.0
  %717 = vmatpush1.msra.mxu0 0.0
  %718 = vmatprep.subr.mxu0 0.0
  %719 = vmatpush1.msra.mxu0 0.0
  %720 = vmatprep.subr.mxu0 0.0
  %721 = vmatpush1.msra.mxu0 0.0
  %722 = vmatprep.subr.mxu0 0.0
  %723 = vmatpush1.msra.mxu0 0.0
  %724 = vmatprep.subr.mxu0 0.0
  %725 = vmatpush1.msra.mxu0 0.0
  %726 = vmatprep.subr.mxu0 0.0
  %727 = vmatpush1.msra.mxu0 0.0
  %728 = vmatprep.subr.mxu0 0.0
  %729 = vmatpush1.msra.mxu0 0.0
  %730 = vmatprep.subr.mxu0 0.0
  %731 = vmatpush1.msra.mxu0 0.0
  %732 = vmatprep.subr.mxu0 0.0
  %733 = vmatpush1.msra.mxu0 0.0
  %734 = vmatprep.subr.mxu0 0.0
  %735 = vmatpush1.msra.mxu0 0.0
  %736 = vmatprep.subr.mxu0 0.0
  %737 = vmatpush1.msra.mxu0 0.0
  %738 = vmatprep.subr.mxu0 0.0
  %739 = vmatpush1.msra.mxu0 0.0
  %740 = vmatprep.subr.mxu0 0.0
  %741 = vmatpush1.msra.mxu0 0.0
  %742 = vmatprep.subr.mxu0 0.0
  %743 = vmatpush1.msra.mxu0 0.0
  %744 = vmatprep.mubr.f32.mxu0 0.0
  %745 = vmatmul.mubr.f32.gmra.mrb[0].mxu0 %v20
  %v746 = vpop.f32.mrb[0].mxu0
  %v747 = vadd.f32 %v408, %v746
  %v748 = vpop.f32.mrb[0].mxu0
  %v749 = vadd.f32 %v410, %v748
  %750 = vmatprep.mubr.f32.mxu0 0.0
  %751 = vmatmul.mubr.f32.gmra.mrb[0].mxu0 %v21
  %v752 = vpop.f32.mrb[0].mxu0
  %v753 = vadd.f32 %v414, %v752
  %v754 = vpop.f32.mrb[0].mxu0
  %v755 = vadd.f32 %v416, %v754
  %756 = vmatprep.mubr.f32.mxu0 0.0
  %757 = vmatmul.mubr.f32.gmra.mrb[0].mxu0 %v22
  %v758 = vpop.f32.mrb[0].mxu0
  %v759 = vadd.f32 %v420, %v758
  %v760 = vpop.f32.mrb[0].mxu0
  %v761 = vadd.f32 %v422, %v760
  %762 = vmatprep.mubr.f32.mxu0 0.0
  %763 = vmatmul.mubr.f32.gmra.mrb[0].mxu0 %v23
  %v764 = vpop.f32.mrb[0].mxu0
  %v765 = vadd.f32 %v426, %v764
  %v766 = vpop.f32.mrb[0].mxu0
  %v767 = vadd.f32 %v428, %v766
  %768 = vmatprep.mubr.f32.mxu0 0.0
  %769 = vmatmul.mubr.f32.gmra.mrb[0].mxu0 %v24
  %v770 = vpop.f32.mrb[0].mxu0
  %v771 = vadd.f32 %v432, %v770
  %v772 = vpop.f32.mrb[0].mxu0
  %v773 = vadd.f32 %v434, %v772
  %774 = vmatprep.mubr.f32.mxu0 0.0
  %775 = vmatmul.mubr.f32.gmra.mrb[0].mxu0 %v25
  %v776 = vpop.f32.mrb[0].mxu0
  %v777 = vadd.f32 %v438, %v776
  %v778 = vpop.f32.mrb[0].mxu0
  %v779 = vadd.f32 %v440, %v778
  %780 = vmatprep.mubr.f32.mxu0 0.0
  %781 = vmatmul.mubr.f32.gmra.mrb[0].mxu0 %v26
  %v782 = vpop.f32.mrb[0].mxu0
  %v783 = vadd.f32 %v444, %v782
  %v784 = vpop.f32.mrb[0].mxu0
  %v785 = vadd.f32 %v446, %v784
  %786 = vmatprep.mubr.f32.mxu0 0.0
  %787 = vmatmul.mubr.f32.gmra.mrb[0].mxu0 %v27
  %v788 = vpop.f32.mrb[0].mxu0
  %v789 = vadd.f32 %v450, %v788
  %v790 = vpop.f32.mrb[0].mxu0
  %v791 = vadd.f32 %v452, %v790
  %792 = vdwg.mxu0
  %793 = vmatprep.subr.mxu0 %v33
  %794 = vmatpush1.msra.mxu0 %v32
  %795 = vmatprep.subr.mxu0 %v39
  %796 = vmatpush1.msra.mxu0 %v38
  %797 = vmatprep.subr.mxu0 %v45
  %798 = vmatpush1.msra.mxu0 %v44
  %799 = vmatprep.subr.mxu0 %v51
  %800 = vmatpush1.msra.mxu0 %v50
  %801 = vmatprep.subr.mxu0 %v57
  %802 = vmatpush1.msra.mxu0 %v56
  %803 = vmatprep.subr.mxu0 %v63
  %804 = vmatpush1.msra.mxu0 %v62
  %805 = vmatprep.subr.mxu0 %v69
  %806 = vmatpush1.msra.mxu0 %v68
  %807 = vmatprep.subr.mxu0 %v75
  %808 = vmatpush1.msra.mxu0 %v74
  %809 = vmatprep.subr.mxu0 %v81
  %810 = vmatpush1.msra.mxu0 %v80
  %811 = vmatprep.subr.mxu0 %v87
  %812 = vmatpush1.msra.mxu0 %v86
  %813 = vmatprep.subr.mxu0 %v93
  %814 = vmatpush1.msra.mxu0 %v92
  %815 = vmatprep.subr.mxu0 %v99
  %816 = vmatpush1.msra.mxu0 %v98
  %817 = vmatprep.subr.mxu0 %v105
  %818 = vmatpush1.msra.mxu0 %v104
  %819 = vmatprep.subr.mxu0 %v111
  %820 = vmatpush1.msra.mxu0 %v110
  %821 = vmatprep.subr.mxu0 %v117
  %822 = vmatpush1.msra.mxu0 %v116
  %823 = vmatprep.subr.mxu0 %v123
  %824 = vmatpush1.msra.mxu0 %v122
  %825 = vmatprep.subr.mxu0 0.0
  %826 = vmatpush1.msra.mxu0 0.0
  %827 = vmatprep.subr.mxu0 0.0
  %828 = vmatpush1.msra.mxu0 0.0
  %829 = vmatprep.subr.mxu0 0.0
  %830 = vmatpush1.msra.mxu0 0.0
  %831 = vmatprep.subr.mxu0 0.0
  %832 = vmatpush1.msra.mxu0 0.0
  %833 = vmatprep.subr.mxu0 0.0
  %834 = vmatpush1.msra.mxu0 0.0
  %835 = vmatprep.subr.mxu0 0.0
  %836 = vmatpush1.msra.mxu0 0.0
  %837 = vmatprep.subr.mxu0 0.0
  %838 = vmatpush1.msra.mxu0 0.0
  %839 = vmatprep.subr.mxu0 0.0
  %840 = vmatpush1.msra.mxu0 0.0
  %841 = vmatprep.subr.mxu0 0.0
  %842 = vmatpush1.msra.mxu0 0.0
  %843 = vmatprep.subr.mxu0 0.0
  %844 = vmatpush1.msra.mxu0 0.0
  %845 = vmatprep.subr.mxu0 0.0
  %846 = vmatpush1.msra.mxu0 0.0
  %847 = vmatprep.subr.mxu0 0.0
  %848 = vmatpush1.msra.mxu0 0.0
  %849 = vmatprep.subr.mxu0 0.0
  %850 = vmatpush1.msra.mxu0 0.0
  %851 = vmatprep.subr.mxu0 0.0
  %852 = vmatpush1.msra.mxu0 0.0
  %853 = vmatprep.subr.mxu0 0.0
  %854 = vmatpush1.msra.mxu0 0.0
  %855 = vmatprep.subr.mxu0 0.0
  %856 = vmatpush1.msra.mxu0 0.0
  %857 = vmatprep.mubr.f32.mxu0 0.0
  %858 = vmatmul.mubr.f32.gmra.mrb[0].mxu0 %v20
  %v859 = vpop.f32.mrb[0].mxu0
  %v860 = vadd.f32 %v521, %v859
  %v861 = vpop.f32.mrb[0].mxu0
  %v862 = vadd.f32 %v523, %v861
  %863 = vmatprep.mubr.f32.mxu0 0.0
  %864 = vmatmul.mubr.f32.gmra.mrb[0].mxu0 %v21
  %v865 = vpop.f32.mrb[0].mxu0
  %v866 = vadd.f32 %v527, %v865
  %v867 = vpop.f32.mrb[0].mxu0
  %v868 = vadd.f32 %v529, %v867
  %869 = vmatprep.mubr.f32.mxu0 0.0
  %870 = vmatmul.mubr.f32.gmra.mrb[0].mxu0 %v22
  %v871 = vpop.f32.mrb[0].mxu0
  %v872 = vadd.f32 %v533, %v871
  %v873 = vpop.f32.mrb[0].mxu0
  %v874 = vadd.f32 %v535, %v873
  %875 = vmatprep.mubr.f32.mxu0 0.0
  %876 = vmatmul.mubr.f32.gmra.mrb[0].mxu0 %v23
  %v877 = vpop.f32.mrb[0].mxu0
  %v878 = vadd.f32 %v539, %v877
  %v879 = vpop.f32.mrb[0].mxu0
  %v880 = vadd.f32 %v541, %v879
  %881 = vmatprep.mubr.f32.mxu0 0.0
  %882 = vmatmul.mubr.f32.gmra.mrb[0].mxu0 %v24
  %v883 = vpop.f32.mrb[0].mxu0
  %v884 = vadd.f32 %v545, %v883
  %v885 = vpop.f32.mrb[0].mxu0
  %v886 = vadd.f32 %v547, %v885
  %887 = vmatprep.mubr.f32.mxu0 0.0
  %888 = vmatmul.mubr.f32.gmra.mrb[0].mxu0 %v25
  %v889 = vpop.f32.mrb[0].mxu0
  %v890 = vadd.f32 %v551, %v889
  %v891 = vpop.f32.mrb[0].mxu0
  %v892 = vadd.f32 %v553, %v891
  %893 = vmatprep.mubr.f32.mxu0 0.0
  %894 = vmatmul.mubr.f32.gmra.mrb[0].mxu0 %v26
  %v895 = vpop.f32.mrb[0].mxu0
  %v896 = vadd.f32 %v557, %v895
  %v897 = vpop.f32.mrb[0].mxu0
  %v898 = vadd.f32 %v559, %v897
  %899 = vmatprep.mubr.f32.mxu0 0.0
  %900 = vmatmul.mubr.f32.gmra.mrb[0].mxu0 %v27
  %v901 = vpop.f32.mrb[0].mxu0
  %v902 = vadd.f32 %v563, %v901
  %v903 = vpop.f32.mrb[0].mxu0
  %v904 = vadd.f32 %v565, %v903
  %905 = vdwg.mxu0
  %v906 = vld [vmem:[%s4] sm:$0x3f]
  %v908 = vlaneseq
  %v909 = vshrl.u32 %v908, 7
  %v910 = vsub.s32 0, %v909
  %v911 = vrot.slane %v906, %v910
  %v912 = vlaneseq
  %v913 = vshrl.u32 %v912, 7
  %v914 = vsub.s32 1, %v913
  %v915 = vrot.slane %v906, %v914
  %v916 = vlaneseq
  %v917 = vshrl.u32 %v916, 7
  %v918 = vsub.s32 2, %v917
  %v919 = vrot.slane %v906, %v918
  %v920 = vlaneseq
  %v921 = vshrl.u32 %v920, 7
  %v922 = vsub.s32 3, %v921
  %v923 = vrot.slane %v906, %v922
  %v924 = vlaneseq
  %v925 = vshrl.u32 %v924, 7
  %v926 = vsub.s32 4, %v925
  %v927 = vrot.slane %v906, %v926
  %v928 = vlaneseq
  %v929 = vshrl.u32 %v928, 7
  %v930 = vsub.s32 5, %v929
  %v931 = vrot.slane %v906, %v930
  %v938 = vadd.f32 %v634, %v911
  %v939 = vadd.f32 %v636, %v915
  %v940 = vadd.f32 %v747, %v919
  %v941 = vadd.f32 %v749, %v923
  %v942 = vadd.f32 %v860, %v927
  %v943 = vadd.f32 %v862, %v931
  %v944 = vadd.f32 %v640, %v911
  %v945 = vadd.f32 %v642, %v915
  %v946 = vadd.f32 %v753, %v919
  %v947 = vadd.f32 %v755, %v923
  %v948 = vadd.f32 %v866, %v927
  %v949 = vadd.f32 %v868, %v931
  %v950 = vadd.f32 %v646, %v911
  %v951 = vadd.f32 %v648, %v915
  %v952 = vadd.f32 %v759, %v919
  %v953 = vadd.f32 %v761, %v923
  %v954 = vadd.f32 %v872, %v927
  %v955 = vadd.f32 %v874, %v931
  %v956 = vadd.f32 %v652, %v911
  %v957 = vadd.f32 %v654, %v915
  %v958 = vadd.f32 %v765, %v919
  %v959 = vadd.f32 %v767, %v923
  %v960 = vadd.f32 %v878, %v927
  %v961 = vadd.f32 %v880, %v931
  %v962 = vadd.f32 %v658, %v911
  %v963 = vadd.f32 %v660, %v915
  %v964 = vadd.f32 %v771, %v919
  %v965 = vadd.f32 %v773, %v923
  %v966 = vadd.f32 %v884, %v927
  %v967 = vadd.f32 %v886, %v931
  %v968 = vadd.f32 %v664, %v911
  %v969 = vadd.f32 %v666, %v915
  %v970 = vadd.f32 %v777, %v919
  %v971 = vadd.f32 %v779, %v923
  %v972 = vadd.f32 %v890, %v927
  %v973 = vadd.f32 %v892, %v931
  %v974 = vadd.f32 %v670, %v911
  %v975 = vadd.f32 %v672, %v915
  %v976 = vadd.f32 %v783, %v919
  %v977 = vadd.f32 %v785, %v923
  %v978 = vadd.f32 %v896, %v927
  %v979 = vadd.f32 %v898, %v931
  %v980 = vadd.f32 %v676, %v911
  %v981 = vadd.f32 %v678, %v915
  %v982 = vadd.f32 %v789, %v919
  %v983 = vadd.f32 %v791, %v923
  %v984 = vadd.f32 %v902, %v927
  %v985 = vadd.f32 %v904, %v931
  %986 = vst [vmem:[%s5] sm:$0xff] %v938
  %987 = vst [vmem:[%s5 + $0x8] sm:$0xff] %v939
  %988 = vst [vmem:[%s5 + $0x10] sm:$0xff] %v940
  %989 = vst [vmem:[%s5 + $0x18] sm:$0xff] %v941
  %990 = vst [vmem:[%s5 + $0x20] sm:$0xff] %v942
  %991 = vst [vmem:[%s5 + $0x28] sm:$0xff] %v943
  %992 = vst [vmem:[%s5 + $0x30] sm:$0xff] %v944
  %993 = vst [vmem:[%s5 + $0x38] sm:$0xff] %v945
  %994 = vst [vmem:[%s5 + $0x40] sm:$0xff] %v946
  %995 = vst [vmem:[%s5 + $0x48] sm:$0xff] %v947
  %996 = vst [vmem:[%s5 + $0x50] sm:$0xff] %v948
  %997 = vst [vmem:[%s5 + $0x58] sm:$0xff] %v949
  %998 = vst [vmem:[%s5 + $0x60] sm:$0xff] %v950
  %999 = vst [vmem:[%s5 + $0x68] sm:$0xff] %v951
  %1000 = vst [vmem:[%s5 + $0x70] sm:$0xff] %v952
  %1001 = vst [vmem:[%s5 + $0x78] sm:$0xff] %v953
  %1002 = vst [vmem:[%s5 + $0x80] sm:$0xff] %v954
  %1003 = vst [vmem:[%s5 + $0x88] sm:$0xff] %v955
  %1004 = vst [vmem:[%s5 + $0x90] sm:$0xff] %v956
  %1005 = vst [vmem:[%s5 + $0x98] sm:$0xff] %v957
  %1006 = vst [vmem:[%s5 + $0xa0] sm:$0xff] %v958
  %1007 = vst [vmem:[%s5 + $0xa8] sm:$0xff] %v959
  %1008 = vst [vmem:[%s5 + $0xb0] sm:$0xff] %v960
  %1009 = vst [vmem:[%s5 + $0xb8] sm:$0xff] %v961
  %1010 = vst [vmem:[%s5 + $0xc0] sm:$0xff] %v962
  %1011 = vst [vmem:[%s5 + $0xc8] sm:$0xff] %v963
  %1012 = vst [vmem:[%s5 + $0xd0] sm:$0xff] %v964
  %1013 = vst [vmem:[%s5 + $0xd8] sm:$0xff] %v965
  %1014 = vst [vmem:[%s5 + $0xe0] sm:$0xff] %v966
  %1015 = vst [vmem:[%s5 + $0xe8] sm:$0xff] %v967
  %1016 = vst [vmem:[%s5 + $0xf0] sm:$0xff] %v968
  %1017 = vst [vmem:[%s5 + $0xf8] sm:$0xff] %v969
  %1018 = vst [vmem:[%s5 + $0x100] sm:$0xff] %v970
  %1019 = vst [vmem:[%s5 + $0x108] sm:$0xff] %v971
  %1020 = vst [vmem:[%s5 + $0x110] sm:$0xff] %v972
  %1021 = vst [vmem:[%s5 + $0x118] sm:$0xff] %v973
  %1022 = vst [vmem:[%s5 + $0x120] sm:$0xff] %v974
  %1023 = vst [vmem:[%s5 + $0x128] sm:$0xff] %v975
  %1024 = vst [vmem:[%s5 + $0x130] sm:$0xff] %v976
  %1025 = vst [vmem:[%s5 + $0x138] sm:$0xff] %v977
  %1026 = vst [vmem:[%s5 + $0x140] sm:$0xff] %v978
  %1027 = vst [vmem:[%s5 + $0x148] sm:$0xff] %v979
  %1028 = vst [vmem:[%s5 + $0x150] sm:$0xff] %v980
  %1029 = vst [vmem:[%s5 + $0x158] sm:$0xff] %v981
  %1030 = vst [vmem:[%s5 + $0x160] sm:$0xff] %v982
  %1031 = vst [vmem:[%s5 + $0x168] sm:$0xff] %v983
  %1032 = vst [vmem:[%s5 + $0x170] sm:$0xff] %v984
  %1033 = vst [vmem:[%s5 + $0x178] sm:$0xff] %v985
  // Predicated region
  $region22: #{bidirectional_gru_2_forward.7} parent=0 // pred_check
    _
  $region23: #{bidirectional_gru_2_forward.7} parent=0 // pred_check_branch
    %1035 = sbr.rel (0) target = $region25
  $region24: #{bidirectional_gru_2_forward.7} parent=0 // pred_region
    _
  $region25: #{bidirectional_gru_2_forward.7} parent=0 // pred_fallthru
    _
  // Predicated region
  $region26: #{bidirectional_gru_2_forward.7} parent=0 // pred_check
    _
  $region27: #{bidirectional_gru_2_forward.7} parent=0 // pred_check_branch
    %1037 = sbr.rel (0) target = $region29
  $region28: #{bidirectional_gru_2_forward.7} parent=0 // pred_region
    _
  $region29: #{bidirectional_gru_2_forward.7} parent=0 // pred_fallthru
    _

// kernel: bidirectional_gru_2_forward.9
$region0: #{bidirectional_gru_2_forward.9}
  #allocation0 [shape = 'u32[]', space=smem, size = 0x4, offset = 0x4, fixed_abs, tag = 'smem constant byte address 0x4 - core index']
  #allocation1 [shape = 'u32[144,128]{1,0:T(1,128)}', space=vmem, size = 0x12000, scoped, tag = 'internal scratch']
  %s0 = inlined_call_operand.vmem [shape: f32[64,128], index: 0, kind: input, shape index: {}]
  %s1 = inlined_call_operand.vmem [shape: f32[64,128], index: 1, kind: input, shape index: {}]
  %s2 = inlined_call_operand.vmem [shape: f32[128,128], index: 2, kind: input, shape index: {}]
  %s3 = inlined_call_operand.vmem [shape: f32[128,128], index: 3, kind: input, shape index: {}]
  %s4 = inlined_call_operand.vmem [shape: f32[1,128], index: 4, kind: input, shape index: {}]
  %s5 = inlined_call_operand.vmem [shape: f32[64,128], index: 5, kind: output, shape index: {}]
  %s6 = sld [smem:[#allocation0]]
  $region30: #{bidirectional_gru_2_forward.9} parent=0
    _
  %s8 = ssub.s32 1, %s6
  %s9 = scalar_select 0, %s8, %s6
  // Predicated region
  $region2: #{bidirectional_gru_2_forward.9} parent=0 // pred_check
    _
  $region3: #{bidirectional_gru_2_forward.9} parent=0 // pred_check_branch
    %11 = sbr.rel (0) target = $region5
  $region4: #{bidirectional_gru_2_forward.9} parent=0 // pred_region
    _
  $region5: #{bidirectional_gru_2_forward.9} parent=0 // pred_fallthru
    _
  // Predicated region
  $region6: #{bidirectional_gru_2_forward.9} parent=0 // pred_check
    _
  $region7: #{bidirectional_gru_2_forward.9} parent=0 // pred_check_branch
    %13 = sbr.rel (0) target = $region9
  $region8: #{bidirectional_gru_2_forward.9} parent=0 // pred_region
    _
  $region9: #{bidirectional_gru_2_forward.9} parent=0 // pred_fallthru
    _
  // Predicated region
  $region10: #{bidirectional_gru_2_forward.9} parent=0 // pred_check
    _
  $region11: #{bidirectional_gru_2_forward.9} parent=0 // pred_check_branch
    %15 = sbr.rel (0) target = $region13
  $region12: #{bidirectional_gru_2_forward.9} parent=0 // pred_region
    _
  $region13: #{bidirectional_gru_2_forward.9} parent=0 // pred_fallthru
    _
  // Predicated region
  $region14: #{bidirectional_gru_2_forward.9} parent=0 // pred_check
    _
  $region15: #{bidirectional_gru_2_forward.9} parent=0 // pred_check_branch
    %17 = sbr.rel (0) target = $region17
  $region16: #{bidirectional_gru_2_forward.9} parent=0 // pred_region
    _
  $region17: #{bidirectional_gru_2_forward.9} parent=0 // pred_fallthru
    _
  // Predicated region
  $region18: #{bidirectional_gru_2_forward.9} parent=0 // pred_check
    _
  $region19: #{bidirectional_gru_2_forward.9} parent=0 // pred_check_branch
    %19 = sbr.rel (0) target = $region21
  $region20: #{bidirectional_gru_2_forward.9} parent=0 // pred_region
    _
  $region21: #{bidirectional_gru_2_forward.9} parent=0 // pred_fallthru
    _
  %v20 = vld [vmem:[%s0] sm:$0xff]
  %v21 = vld [vmem:[%s0 + $0x8] sm:$0xff]
  %v22 = vld [vmem:[%s0 + $0x10] sm:$0xff]
  %v23 = vld [vmem:[%s0 + $0x18] sm:$0xff]
  %v24 = vld [vmem:[%s0 + $0x20] sm:$0xff]
  %v25 = vld [vmem:[%s0 + $0x28] sm:$0xff]
  %v26 = vld [vmem:[%s0 + $0x30] sm:$0xff]
  %v27 = vld [vmem:[%s0 + $0x38] sm:$0xff]
  %v28 = vld [vmem:[%s2] sm:$0xff]
  %v29 = vld [vmem:[%s2 + $0x8] sm:$0xff]
  %v30 = vld [vmem:[%s2 + $0x10] sm:$0xff]
  %v31 = vld [vmem:[%s2 + $0x18] sm:$0xff]
  %v32 = vld [vmem:[%s2 + $0x20] sm:$0xff]
  %v33 = vld [vmem:[%s2 + $0x28] sm:$0xff]
  %v34 = vld [vmem:[%s2 + $0x30] sm:$0xff]
  %v35 = vld [vmem:[%s2 + $0x38] sm:$0xff]
  %v36 = vld [vmem:[%s2 + $0x40] sm:$0xff]
  %v37 = vld [vmem:[%s2 + $0x48] sm:$0xff]
  %v38 = vld [vmem:[%s2 + $0x50] sm:$0xff]
  %v39 = vld [vmem:[%s2 + $0x58] sm:$0xff]
  %v40 = vld [vmem:[%s2 + $0x60] sm:$0xff]
  %v41 = vld [vmem:[%s2 + $0x68] sm:$0xff]
  %v42 = vld [vmem:[%s2 + $0x70] sm:$0xff]
  %v43 = vld [vmem:[%s2 + $0x78] sm:$0xff]
  %v44 = vld [vmem:[%s1] sm:$0xff]
  %v45 = vld [vmem:[%s1 + $0x8] sm:$0xff]
  %v46 = vld [vmem:[%s1 + $0x10] sm:$0xff]
  %v47 = vld [vmem:[%s1 + $0x18] sm:$0xff]
  %v48 = vld [vmem:[%s1 + $0x20] sm:$0xff]
  %v49 = vld [vmem:[%s1 + $0x28] sm:$0xff]
  %v50 = vld [vmem:[%s1 + $0x30] sm:$0xff]
  %v51 = vld [vmem:[%s1 + $0x38] sm:$0xff]
  %v52 = vld [vmem:[%s3] sm:$0xff]
  %v53 = vld [vmem:[%s3 + $0x8] sm:$0xff]
  %v54 = vld [vmem:[%s3 + $0x10] sm:$0xff]
  %v55 = vld [vmem:[%s3 + $0x18] sm:$0xff]
  %v56 = vld [vmem:[%s3 + $0x20] sm:$0xff]
  %v57 = vld [vmem:[%s3 + $0x28] sm:$0xff]
  %v58 = vld [vmem:[%s3 + $0x30] sm:$0xff]
  %v59 = vld [vmem:[%s3 + $0x38] sm:$0xff]
  %v60 = vld [vmem:[%s3 + $0x40] sm:$0xff]
  %v61 = vld [vmem:[%s3 + $0x48] sm:$0xff]
  %v62 = vld [vmem:[%s3 + $0x50] sm:$0xff]
  %v63 = vld [vmem:[%s3 + $0x58] sm:$0xff]
  %v64 = vld [vmem:[%s3 + $0x60] sm:$0xff]
  %v65 = vld [vmem:[%s3 + $0x68] sm:$0xff]
  %v66 = vld [vmem:[%s3 + $0x70] sm:$0xff]
  %v67 = vld [vmem:[%s3 + $0x78] sm:$0xff]
  %68 = vmatprep.subr.mxu0 0.0
  %69 = vmatpush1.msra.mxu0 %v52
  %70 = vmatprep.subr.mxu0 0.0
  %71 = vmatpush1.msra.mxu0 %v53
  %72 = vmatprep.subr.mxu0 0.0
  %73 = vmatpush1.msra.mxu0 %v54
  %74 = vmatprep.subr.mxu0 0.0
  %75 = vmatpush1.msra.mxu0 %v55
  %76 = vmatprep.subr.mxu0 0.0
  %77 = vmatpush1.msra.mxu0 %v56
  %78 = vmatprep.subr.mxu0 0.0
  %79 = vmatpush1.msra.mxu0 %v57
  %80 = vmatprep.subr.mxu0 0.0
  %81 = vmatpush1.msra.mxu0 %v58
  %82 = vmatprep.subr.mxu0 0.0
  %83 = vmatpush1.msra.mxu0 %v59
  %84 = vmatprep.subr.mxu0 0.0
  %85 = vmatpush1.msra.mxu0 %v60
  %86 = vmatprep.subr.mxu0 0.0
  %87 = vmatpush1.msra.mxu0 %v61
  %88 = vmatprep.subr.mxu0 0.0
  %89 = vmatpush1.msra.mxu0 %v62
  %90 = vmatprep.subr.mxu0 0.0
  %91 = vmatpush1.msra.mxu0 %v63
  %92 = vmatprep.subr.mxu0 0.0
  %93 = vmatpush1.msra.mxu0 %v64
  %94 = vmatprep.subr.mxu0 0.0
  %95 = vmatpush1.msra.mxu0 %v65
  %96 = vmatprep.subr.mxu0 0.0
  %97 = vmatpush1.msra.mxu0 %v66
  %98 = vmatprep.subr.mxu0 0.0
  %99 = vmatpush1.msra.mxu0 %v67
  %100 = vmatprep.subr.mxu0 0.0
  %101 = vmatpush1.msra.mxu0 0.0
  %102 = vmatprep.subr.mxu0 0.0
  %103 = vmatpush1.msra.mxu0 0.0
  %104 = vmatprep.subr.mxu0 0.0
  %105 = vmatpush1.msra.mxu0 0.0
  %106 = vmatprep.subr.mxu0 0.0
  %107 = vmatpush1.msra.mxu0 0.0
  %108 = vmatprep.subr.mxu0 0.0
  %109 = vmatpush1.msra.mxu0 0.0
  %110 = vmatprep.subr.mxu0 0.0
  %111 = vmatpush1.msra.mxu0 0.0
  %112 = vmatprep.subr.mxu0 0.0
  %113 = vmatpush1.msra.mxu0 0.0
  %114 = vmatprep.subr.mxu0 0.0
  %115 = vmatpush1.msra.mxu0 0.0
  %116 = vmatprep.subr.mxu0 0.0
  %117 = vmatpush1.msra.mxu0 0.0
  %118 = vmatprep.subr.mxu0 0.0
  %119 = vmatpush1.msra.mxu0 0.0
  %120 = vmatprep.subr.mxu0 0.0
  %121 = vmatpush1.msra.mxu0 0.0
  %122 = vmatprep.subr.mxu0 0.0
  %123 = vmatpush1.msra.mxu0 0.0
  %124 = vmatprep.subr.mxu0 0.0
  %125 = vmatpush1.msra.mxu0 0.0
  %126 = vmatprep.subr.mxu0 0.0
  %127 = vmatpush1.msra.mxu0 0.0
  %128 = vmatprep.subr.mxu0 0.0
  %129 = vmatpush1.msra.mxu0 0.0
  %130 = vmatprep.subr.mxu0 0.0
  %131 = vmatpush1.msra.mxu0 0.0
  %132 = vmatprep.mubr.f32.mxu0 0.0
  %133 = vmatmul.mubr.f32.gmra.mrb[0].mxu0 %v44
  %v134 = vpop.f32.mrb[0].mxu0
  %v135 = vadd.f32 0.0, %v134
  %v136 = vpop.f32.mrb[0].mxu0
  %137 = vmatprep.mubr.f32.mxu0 0.0
  %138 = vmatmul.mubr.f32.gmra.mrb[0].mxu0 %v45
  %v139 = vpop.f32.mrb[0].mxu0
  %v140 = vadd.f32 0.0, %v139
  %v141 = vpop.f32.mrb[0].mxu0
  %142 = vmatprep.mubr.f32.mxu0 0.0
  %143 = vmatmul.mubr.f32.gmra.mrb[0].mxu0 %v46
  %v144 = vpop.f32.mrb[0].mxu0
  %v145 = vadd.f32 0.0, %v144
  %v146 = vpop.f32.mrb[0].mxu0
  %147 = vmatprep.mubr.f32.mxu0 0.0
  %148 = vmatmul.mubr.f32.gmra.mrb[0].mxu0 %v47
  %v149 = vpop.f32.mrb[0].mxu0
  %v150 = vadd.f32 0.0, %v149
  %v151 = vpop.f32.mrb[0].mxu0
  %152 = vmatprep.mubr.f32.mxu0 0.0
  %153 = vmatmul.mubr.f32.gmra.mrb[0].mxu0 %v48
  %v154 = vpop.f32.mrb[0].mxu0
  %v155 = vadd.f32 0.0, %v154
  %v156 = vpop.f32.mrb[0].mxu0
  %157 = vmatprep.mubr.f32.mxu0 0.0
  %158 = vmatmul.mubr.f32.gmra.mrb[0].mxu0 %v49
  %v159 = vpop.f32.mrb[0].mxu0
  %v160 = vadd.f32 0.0, %v159
  %v161 = vpop.f32.mrb[0].mxu0
  %162 = vmatprep.mubr.f32.mxu0 0.0
  %163 = vmatmul.mubr.f32.gmra.mrb[0].mxu0 %v50
  %v164 = vpop.f32.mrb[0].mxu0
  %v165 = vadd.f32 0.0, %v164
  %v166 = vpop.f32.mrb[0].mxu0
  %167 = vmatprep.mubr.f32.mxu0 0.0
  %168 = vmatmul.mubr.f32.gmra.mrb[0].mxu0 %v51
  %v169 = vpop.f32.mrb[0].mxu0
  %v170 = vadd.f32 0.0, %v169
  %v171 = vpop.f32.mrb[0].mxu0
  %172 = vdwg.mxu0
  %173 = vmatprep.subr.mxu0 0.0
  %174 = vmatpush1.msra.mxu0 %v28
  %175 = vmatprep.subr.mxu0 0.0
  %176 = vmatpush1.msra.mxu0 %v29
  %177 = vmatprep.subr.mxu0 0.0
  %178 = vmatpush1.msra.mxu0 %v30
  %179 = vmatprep.subr.mxu0 0.0
  %180 = vmatpush1.msra.mxu0 %v31
  %181 = vmatprep.subr.mxu0 0.0
  %182 = vmatpush1.msra.mxu0 %v32
  %183 = vmatprep.subr.mxu0 0.0
  %184 = vmatpush1.msra.mxu0 %v33
  %185 = vmatprep.subr.mxu0 0.0
  %186 = vmatpush1.msra.mxu0 %v34
  %187 = vmatprep.subr.mxu0 0.0
  %188 = vmatpush1.msra.mxu0 %v35
  %189 = vmatprep.subr.mxu0 0.0
  %190 = vmatpush1.msra.mxu0 %v36
  %191 = vmatprep.subr.mxu0 0.0
  %192 = vmatpush1.msra.mxu0 %v37
  %193 = vmatprep.subr.mxu0 0.0
  %194 = vmatpush1.msra.mxu0 %v38
  %195 = vmatprep.subr.mxu0 0.0
  %196 = vmatpush1.msra.mxu0 %v39
  %197 = vmatprep.subr.mxu0 0.0
  %198 = vmatpush1.msra.mxu0 %v40
  %199 = vmatprep.subr.mxu0 0.0
  %200 = vmatpush1.msra.mxu0 %v41
  %201 = vmatprep.subr.mxu0 0.0
  %202 = vmatpush1.msra.mxu0 %v42
  %203 = vmatprep.subr.mxu0 0.0
  %204 = vmatpush1.msra.mxu0 %v43
  %205 = vmatprep.subr.mxu0 0.0
  %206 = vmatpush1.msra.mxu0 0.0
  %207 = vmatprep.subr.mxu0 0.0
  %208 = vmatpush1.msra.mxu0 0.0
  %209 = vmatprep.subr.mxu0 0.0
  %210 = vmatpush1.msra.mxu0 0.0
  %211 = vmatprep.subr.mxu0 0.0
  %212 = vmatpush1.msra.mxu0 0.0
  %213 = vmatprep.subr.mxu0 0.0
  %214 = vmatpush1.msra.mxu0 0.0
  %215 = vmatprep.subr.mxu0 0.0
  %216 = vmatpush1.msra.mxu0 0.0
  %217 = vmatprep.subr.mxu0 0.0
  %218 = vmatpush1.msra.mxu0 0.0
  %219 = vmatprep.subr.mxu0 0.0
  %220 = vmatpush1.msra.mxu0 0.0
  %221 = vmatprep.subr.mxu0 0.0
  %222 = vmatpush1.msra.mxu0 0.0
  %223 = vmatprep.subr.mxu0 0.0
  %224 = vmatpush1.msra.mxu0 0.0
  %225 = vmatprep.subr.mxu0 0.0
  %226 = vmatpush1.msra.mxu0 0.0
  %227 = vmatprep.subr.mxu0 0.0
  %228 = vmatpush1.msra.mxu0 0.0
  %229 = vmatprep.subr.mxu0 0.0
  %230 = vmatpush1.msra.mxu0 0.0
  %231 = vmatprep.subr.mxu0 0.0
  %232 = vmatpush1.msra.mxu0 0.0
  %233 = vmatprep.subr.mxu0 0.0
  %234 = vmatpush1.msra.mxu0 0.0
  %235 = vmatprep.subr.mxu0 0.0
  %236 = vmatpush1.msra.mxu0 0.0
  %237 = vmatprep.mubr.f32.mxu0 0.0
  %238 = vmatmul.mubr.f32.gmra.mrb[0].mxu0 %v20
  %v239 = vpop.f32.mrb[0].mxu0
  %v240 = vadd.f32 %v135, %v239
  %v241 = vpop.f32.mrb[0].mxu0
  %242 = vmatprep.mubr.f32.mxu0 0.0
  %243 = vmatmul.mubr.f32.gmra.mrb[0].mxu0 %v21
  %v244 = vpop.f32.mrb[0].mxu0
  %v245 = vadd.f32 %v140, %v244
  %v246 = vpop.f32.mrb[0].mxu0
  %247 = vmatprep.mubr.f32.mxu0 0.0
  %248 = vmatmul.mubr.f32.gmra.mrb[0].mxu0 %v22
  %v249 = vpop.f32.mrb[0].mxu0
  %v250 = vadd.f32 %v145, %v249
  %v251 = vpop.f32.mrb[0].mxu0
  %252 = vmatprep.mubr.f32.mxu0 0.0
  %253 = vmatmul.mubr.f32.gmra.mrb[0].mxu0 %v23
  %v254 = vpop.f32.mrb[0].mxu0
  %v255 = vadd.f32 %v150, %v254
  %v256 = vpop.f32.mrb[0].mxu0
  %257 = vmatprep.mubr.f32.mxu0 0.0
  %258 = vmatmul.mubr.f32.gmra.mrb[0].mxu0 %v24
  %v259 = vpop.f32.mrb[0].mxu0
  %v260 = vadd.f32 %v155, %v259
  %v261 = vpop.f32.mrb[0].mxu0
  %262 = vmatprep.mubr.f32.mxu0 0.0
  %263 = vmatmul.mubr.f32.gmra.mrb[0].mxu0 %v25
  %v264 = vpop.f32.mrb[0].mxu0
  %v265 = vadd.f32 %v160, %v264
  %v266 = vpop.f32.mrb[0].mxu0
  %267 = vmatprep.mubr.f32.mxu0 0.0
  %268 = vmatmul.mubr.f32.gmra.mrb[0].mxu0 %v26
  %v269 = vpop.f32.mrb[0].mxu0
  %v270 = vadd.f32 %v165, %v269
  %v271 = vpop.f32.mrb[0].mxu0
  %272 = vmatprep.mubr.f32.mxu0 0.0
  %273 = vmatmul.mubr.f32.gmra.mrb[0].mxu0 %v27
  %v274 = vpop.f32.mrb[0].mxu0
  %v275 = vadd.f32 %v170, %v274
  %v276 = vpop.f32.mrb[0].mxu0
  %277 = vdwg.mxu0
  %v278 = vld [vmem:[%s4] sm:$0x1]
  %v280 = vlaneseq
  %v281 = vshrl.u32 %v280, 7
  %v282 = vsub.s32 0, %v281
  %v283 = vrot.slane %v278, %v282
  %v285 = vadd.f32 %v240, %v283
  %v286 = vadd.f32 %v245, %v283
  %v287 = vadd.f32 %v250, %v283
  %v288 = vadd.f32 %v255, %v283
  %v289 = vadd.f32 %v260, %v283
  %v290 = vadd.f32 %v265, %v283
  %v291 = vadd.f32 %v270, %v283
  %v292 = vadd.f32 %v275, %v283
  %293 = vst [vmem:[%s5] sm:$0xff] %v285
  %294 = vst [vmem:[%s5 + $0x8] sm:$0xff] %v286
  %295 = vst [vmem:[%s5 + $0x10] sm:$0xff] %v287
  %296 = vst [vmem:[%s5 + $0x18] sm:$0xff] %v288
  %297 = vst [vmem:[%s5 + $0x20] sm:$0xff] %v289
  %298 = vst [vmem:[%s5 + $0x28] sm:$0xff] %v290
  %299 = vst [vmem:[%s5 + $0x30] sm:$0xff] %v291
  %300 = vst [vmem:[%s5 + $0x38] sm:$0xff] %v292
  // Predicated region
  $region22: #{bidirectional_gru_2_forward.9} parent=0 // pred_check
    _
  $region23: #{bidirectional_gru_2_forward.9} parent=0 // pred_check_branch
    %302 = sbr.rel (0) target = $region25
  $region24: #{bidirectional_gru_2_forward.9} parent=0 // pred_region
    _
  $region25: #{bidirectional_gru_2_forward.9} parent=0 // pred_fallthru
    _
  // Predicated region
  $region26: #{bidirectional_gru_2_forward.9} parent=0 // pred_check
    _
  $region27: #{bidirectional_gru_2_forward.9} parent=0 // pred_check_branch
    %304 = sbr.rel (0) target = $region29
  $region28: #{bidirectional_gru_2_forward.9} parent=0 // pred_region
    _
  $region29: #{bidirectional_gru_2_forward.9} parent=0 // pred_fallthru
    _

// kernel: bidirectional_gru_2_forward.6
$region0: #{bidirectional_gru_2_forward.6}
  #allocation0 [shape = 'u32[]', space=smem, size = 0x4, offset = 0x4, fixed_abs, tag = 'smem constant byte address 0x4 - core index']
  #allocation1 [shape = 'u32[144,128]{1,0:T(1,128)}', space=vmem, size = 0x12000, scoped, tag = 'internal scratch']
  #allocation2 [shape = 'f32[8,256]{1,0:T(8,128)}', space=vmem, size = 0x2000, scoped, tag = 'scratch operand']
  %s0 = inlined_call_operand.vmem [shape: f32[8,8,768], index: 0, kind: input, shape index: {}, may-alias: {0,1}]
  %s1 = inlined_call_operand.vmem [shape: f32[8,8,768], index: 1, kind: input, shape index: {}, may-alias: {0,1}]
  %s2 = inlined_call_operand.hbm [shape: f32[256,768], index: 2, kind: input, shape index: {}]
  %s3 = inlined_call_operand.vmem [shape: f32[1,256], index: 3, kind: input, shape index: {}]
  %s4 = inlined_call_operand.vmem [shape: f32[8,8,128], index: 4, kind: output, shape index: {0}]
  %s5 = inlined_call_operand.vmem [shape: f32[8,8,128], index: 5, kind: output, shape index: {1}]
  %6 = xla_tuple %s4, %s5
  %s7 = sld [smem:[#allocation0]]
  $region88: #{bidirectional_gru_2_forward.6} parent=0
    _
  %s9 = ssub.s32 1, %s7
  %s10 = scalar_select 0, %s9, %s7
  $region1: #{bidirectional_gru_2_forward.6} parent=0
    #allocation3 [shape = 'u8[98304]{0}', space=vmem, size = 0x18000, scoped, tag = 'input window, operand 0, single buffered']
    #allocation4 [shape = 'u8[98304]{0}', space=vmem, size = 0x18000, scoped, tag = 'input window, operand 1, single buffered']
    #allocation5 [shape = 'u8[786432]{0}', space=vmem, size = 0xc0000, scoped, tag = 'input window, operand 2, single buffered']
    #allocation6 [shape = 's32[1]{0}', space=sflag, size = 0x4, scoped, tag = 'scoped memory for bidirectional_gru_2_forward.6']
    %11 = vsyncpa [#allocation6], 0
    // Predicated region
    $region2: #{bidirectional_gru_2_forward.6} parent=1 // pred_check
      _
    $region3: #{bidirectional_gru_2_forward.6} parent=1 // pred_check_branch
      %13 = sbr.rel (0) target = $region5
    $region4: #{bidirectional_gru_2_forward.6} parent=1 // pred_region
      // Predicated region
      $region6: #{bidirectional_gru_2_forward.6} parent=4 // pred_check
        _
      $region7: #{bidirectional_gru_2_forward.6} parent=4 // pred_check_branch
        %15 = sbr.rel (0) target = $region9
      $region8: #{bidirectional_gru_2_forward.6} parent=4 // pred_region
        // Predicated region
        $region10: #{bidirectional_gru_2_forward.6} parent=8 // pred_check
          _
        $region11: #{bidirectional_gru_2_forward.6} parent=8 // pred_check_branch
          %17 = sbr.rel (0) target = $region13
        $region12: #{bidirectional_gru_2_forward.6} parent=8 // pred_region
          loop: start=0, step=1, limit=1
          $region14: #{bidirectional_gru_2_forward.6} parent=12 // loop_pre_header
            _
          $region15: #{bidirectional_gru_2_forward.6} parent=12 // loop_header
            %s19 = sphi 0, %s23
            %p20 = scmp.ge.s32.totalorder %s19, 1
            %s24 = sphi %s0, %s0
            %s25 = sphi [#allocation3], [#allocation3]
          $region16: #{bidirectional_gru_2_forward.6} parent=12 // loop_header_branch
            %22 = sbr.rel (%p20) target = $region20
          $region17: #{bidirectional_gru_2_forward.6} parent=12 // loop_body
            %v26 = vld [vmem:[%s24] sm:$0xff]
            %27 = vst [vmem:[%s25] sm:$0xff] %v26
            %v28 = vld [vmem:[%s24 + $0x8] sm:$0xff]
            %29 = vst [vmem:[%s25 + $0x8] sm:$0xff] %v28
            %v30 = vld [vmem:[%s24 + $0x10] sm:$0xff]
            %31 = vst [vmem:[%s25 + $0x10] sm:$0xff] %v30
            %v32 = vld [vmem:[%s24 + $0x30] sm:$0xff]
            %33 = vst [vmem:[%s25 + $0x18] sm:$0xff] %v32
            %v34 = vld [vmem:[%s24 + $0x38] sm:$0xff]
            %35 = vst [vmem:[%s25 + $0x20] sm:$0xff] %v34
            %v36 = vld [vmem:[%s24 + $0x40] sm:$0xff]
            %37 = vst [vmem:[%s25 + $0x28] sm:$0xff] %v36
            %v38 = vld [vmem:[%s24 + $0x60] sm:$0xff]
            %39 = vst [vmem:[%s25 + $0x30] sm:$0xff] %v38
            %v40 = vld [vmem:[%s24 + $0x68] sm:$0xff]
            %41 = vst [vmem:[%s25 + $0x38] sm:$0xff] %v40
            %v42 = vld [vmem:[%s24 + $0x70] sm:$0xff]
            %43 = vst [vmem:[%s25 + $0x40] sm:$0xff] %v42
            %v44 = vld [vmem:[%s24 + $0x90] sm:$0xff]
            %45 = vst [vmem:[%s25 + $0x48] sm:$0xff] %v44
            %v46 = vld [vmem:[%s24 + $0x98] sm:$0xff]
            %47 = vst [vmem:[%s25 + $0x50] sm:$0xff] %v46
            %v48 = vld [vmem:[%s24 + $0xa0] sm:$0xff]
            %49 = vst [vmem:[%s25 + $0x58] sm:$0xff] %v48
            %v50 = vld [vmem:[%s24 + $0xc0] sm:$0xff]
            %51 = vst [vmem:[%s25 + $0x60] sm:$0xff] %v50
            %v52 = vld [vmem:[%s24 + $0xc8] sm:$0xff]
            %53 = vst [vmem:[%s25 + $0x68] sm:$0xff] %v52
            %v54 = vld [vmem:[%s24 + $0xd0] sm:$0xff]
            %55 = vst [vmem:[%s25 + $0x70] sm:$0xff] %v54
            %v56 = vld [vmem:[%s24 + $0xf0] sm:$0xff]
            %57 = vst [vmem:[%s25 + $0x78] sm:$0xff] %v56
            %v58 = vld [vmem:[%s24 + $0xf8] sm:$0xff]
            %59 = vst [vmem:[%s25 + $0x80] sm:$0xff] %v58
            %v60 = vld [vmem:[%s24 + $0x100] sm:$0xff]
            %61 = vst [vmem:[%s25 + $0x88] sm:$0xff] %v60
            %v62 = vld [vmem:[%s24 + $0x120] sm:$0xff]
            %63 = vst [vmem:[%s25 + $0x90] sm:$0xff] %v62
            %v64 = vld [vmem:[%s24 + $0x128] sm:$0xff]
            %65 = vst [vmem:[%s25 + $0x98] sm:$0xff] %v64
            %v66 = vld [vmem:[%s24 + $0x130] sm:$0xff]
            %67 = vst [vmem:[%s25 + $0xa0] sm:$0xff] %v66
            %v68 = vld [vmem:[%s24 + $0x150] sm:$0xff]
            %69 = vst [vmem:[%s25 + $0xa8] sm:$0xff] %v68
            %v70 = vld [vmem:[%s24 + $0x158] sm:$0xff]
            %71 = vst [vmem:[%s25 + $0xb0] sm:$0xff] %v70
            %v72 = vld [vmem:[%s24 + $0x160] sm:$0xff]
            %73 = vst [vmem:[%s25 + $0xb8] sm:$0xff] %v72
          $region18: #{bidirectional_gru_2_forward.6} parent=12 // loop_footer
            %s23 = sadd.s32 1, %s19
          $region19: #{bidirectional_gru_2_forward.6} parent=12 // loop_footer_branch
            %18 = sbr.rel target = $region15
          $region20: #{bidirectional_gru_2_forward.6} parent=12 // loop_exit
            _
        $region13: #{bidirectional_gru_2_forward.6} parent=8 // pred_fallthru
          _
        // Predicated region
        $region21: #{bidirectional_gru_2_forward.6} parent=8 // pred_check
          _
        $region22: #{bidirectional_gru_2_forward.6} parent=8 // pred_check_branch
          %75 = sbr.rel target = $region24
        $region23: #{bidirectional_gru_2_forward.6} parent=8 // pred_region
          _
        $region24: #{bidirectional_gru_2_forward.6} parent=8 // pred_fallthru
          _
      $region9: #{bidirectional_gru_2_forward.6} parent=4 // pred_fallthru
        _
      %76 = vnop
    $region5: #{bidirectional_gru_2_forward.6} parent=1 // pred_fallthru
      _
    // Predicated region
    $region25: #{bidirectional_gru_2_forward.6} parent=1 // pred_check
      _
    $region26: #{bidirectional_gru_2_forward.6} parent=1 // pred_check_branch
      %78 = sbr.rel (0) target = $region28
    $region27: #{bidirectional_gru_2_forward.6} parent=1 // pred_region
      %s79 = ssub.s32 0, 0
      %s80 = smul.u32 8, %s79
      %s81 = smul.addr %s80, 6
      %s82 = sadd.s32 3, %s81
      %s83 = smul.addr %s82, 8
      %s84 = scalar_lea.vmem %s1, %s83
      // Predicated region
      $region29: #{bidirectional_gru_2_forward.6} parent=27 // pred_check
        _
      $region30: #{bidirectional_gru_2_forward.6} parent=27 // pred_check_branch
        %86 = sbr.rel (0) target = $region32
      $region31: #{bidirectional_gru_2_forward.6} parent=27 // pred_region
        // Predicated region
        $region33: #{bidirectional_gru_2_forward.6} parent=31 // pred_check
          _
        $region34: #{bidirectional_gru_2_forward.6} parent=31 // pred_check_branch
          %88 = sbr.rel (0) target = $region36
        $region35: #{bidirectional_gru_2_forward.6} parent=31 // pred_region
          loop: start=0, step=1, limit=1
          $region37: #{bidirectional_gru_2_forward.6} parent=35 // loop_pre_header
            _
          $region38: #{bidirectional_gru_2_forward.6} parent=35 // loop_header
            %s90 = sphi 0, %s94
            %p91 = scmp.ge.s32.totalorder %s90, 1
            %s95 = sphi %s84, %s84
            %s96 = sphi [#allocation4], [#allocation4]
          $region39: #{bidirectional_gru_2_forward.6} parent=35 // loop_header_branch
            %93 = sbr.rel (%p91) target = $region43
          $region40: #{bidirectional_gru_2_forward.6} parent=35 // loop_body
            %v97 = vld [vmem:[%s95] sm:$0xff]
            %98 = vst [vmem:[%s96] sm:$0xff] %v97
            %v99 = vld [vmem:[%s95 + $0x8] sm:$0xff]
            %100 = vst [vmem:[%s96 + $0x8] sm:$0xff] %v99
            %v101 = vld [vmem:[%s95 + $0x10] sm:$0xff]
            %102 = vst [vmem:[%s96 + $0x10] sm:$0xff] %v101
            %v103 = vld [vmem:[%s95 + $0x30] sm:$0xff]
            %104 = vst [vmem:[%s96 + $0x18] sm:$0xff] %v103
            %v105 = vld [vmem:[%s95 + $0x38] sm:$0xff]
            %106 = vst [vmem:[%s96 + $0x20] sm:$0xff] %v105
            %v107 = vld [vmem:[%s95 + $0x40] sm:$0xff]
            %108 = vst [vmem:[%s96 + $0x28] sm:$0xff] %v107
            %v109 = vld [vmem:[%s95 + $0x60] sm:$0xff]
            %110 = vst [vmem:[%s96 + $0x30] sm:$0xff] %v109
            %v111 = vld [vmem:[%s95 + $0x68] sm:$0xff]
            %112 = vst [vmem:[%s96 + $0x38] sm:$0xff] %v111
            %v113 = vld [vmem:[%s95 + $0x70] sm:$0xff]
            %114 = vst [vmem:[%s96 + $0x40] sm:$0xff] %v113
            %v115 = vld [vmem:[%s95 + $0x90] sm:$0xff]
            %116 = vst [vmem:[%s96 + $0x48] sm:$0xff] %v115
            %v117 = vld [vmem:[%s95 + $0x98] sm:$0xff]
            %118 = vst [vmem:[%s96 + $0x50] sm:$0xff] %v117
            %v119 = vld [vmem:[%s95 + $0xa0] sm:$0xff]
            %120 = vst [vmem:[%s96 + $0x58] sm:$0xff] %v119
            %v121 = vld [vmem:[%s95 + $0xc0] sm:$0xff]
            %122 = vst [vmem:[%s96 + $0x60] sm:$0xff] %v121
            %v123 = vld [vmem:[%s95 + $0xc8] sm:$0xff]
            %124 = vst [vmem:[%s96 + $0x68] sm:$0xff] %v123
            %v125 = vld [vmem:[%s95 + $0xd0] sm:$0xff]
            %126 = vst [vmem:[%s96 + $0x70] sm:$0xff] %v125
            %v127 = vld [vmem:[%s95 + $0xf0] sm:$0xff]
            %128 = vst [vmem:[%s96 + $0x78] sm:$0xff] %v127
            %v129 = vld [vmem:[%s95 + $0xf8] sm:$0xff]
            %130 = vst [vmem:[%s96 + $0x80] sm:$0xff] %v129
            %v131 = vld [vmem:[%s95 + $0x100] sm:$0xff]
            %132 = vst [vmem:[%s96 + $0x88] sm:$0xff] %v131
            %v133 = vld [vmem:[%s95 + $0x120] sm:$0xff]
            %134 = vst [vmem:[%s96 + $0x90] sm:$0xff] %v133
            %v135 = vld [vmem:[%s95 + $0x128] sm:$0xff]
            %136 = vst [vmem:[%s96 + $0x98] sm:$0xff] %v135
            %v137 = vld [vmem:[%s95 + $0x130] sm:$0xff]
            %138 = vst [vmem:[%s96 + $0xa0] sm:$0xff] %v137
            %v139 = vld [vmem:[%s95 + $0x150] sm:$0xff]
            %140 = vst [vmem:[%s96 + $0xa8] sm:$0xff] %v139
            %v141 = vld [vmem:[%s95 + $0x158] sm:$0xff]
            %142 = vst [vmem:[%s96 + $0xb0] sm:$0xff] %v141
            %v143 = vld [vmem:[%s95 + $0x160] sm:$0xff]
            %144 = vst [vmem:[%s96 + $0xb8] sm:$0xff] %v143
          $region41: #{bidirectional_gru_2_forward.6} parent=35 // loop_footer
            %s94 = sadd.s32 1, %s90
          $region42: #{bidirectional_gru_2_forward.6} parent=35 // loop_footer_branch
            %89 = sbr.rel target = $region38
          $region43: #{bidirectional_gru_2_forward.6} parent=35 // loop_exit
            _
        $region36: #{bidirectional_gru_2_forward.6} parent=31 // pred_fallthru
          _
        // Predicated region
        $region44: #{bidirectional_gru_2_forward.6} parent=31 // pred_check
          _
        $region45: #{bidirectional_gru_2_forward.6} parent=31 // pred_check_branch
          %146 = sbr.rel target = $region47
        $region46: #{bidirectional_gru_2_forward.6} parent=31 // pred_region
          _
        $region47: #{bidirectional_gru_2_forward.6} parent=31 // pred_fallthru
          _
      $region32: #{bidirectional_gru_2_forward.6} parent=27 // pred_fallthru
        _
      %147 = vnop
    $region28: #{bidirectional_gru_2_forward.6} parent=1 // pred_fallthru
      _
    // Predicated region
    $region48: #{bidirectional_gru_2_forward.6} parent=1 // pred_check
      _
    $region49: #{bidirectional_gru_2_forward.6} parent=1 // pred_check_branch
      %149 = sbr.rel (0) target = $region51
    $region50: #{bidirectional_gru_2_forward.6} parent=1 // pred_region
      %s151 = ssub.s32 24576, 24576
      %152 = vsyncadd [#allocation6], %s151
      %s153 = sshll.u32 [#allocation5], 4
      %s154 = int_to_ptr.vmem [resolvable:$true] %s153
      %159 = dma.hbm_to_vmem [thread:$0]  %s2, 24576, %s154, [#allocation6], 768, 768, 48
    $region51: #{bidirectional_gru_2_forward.6} parent=1 // pred_fallthru
      _
    // Predicated region
    $region52: #{bidirectional_gru_2_forward.6} parent=1 // pred_check
      _
    $region53: #{bidirectional_gru_2_forward.6} parent=1 // pred_check_branch
      %161 = sbr.rel (0) target = $region55
    $region54: #{bidirectional_gru_2_forward.6} parent=1 // pred_region
      _
    $region55: #{bidirectional_gru_2_forward.6} parent=1 // pred_fallthru
      _
    // Predicated region
    $region56: #{bidirectional_gru_2_forward.6} parent=1 // pred_check
      _
    $region57: #{bidirectional_gru_2_forward.6} parent=1 // pred_check_branch
      %163 = sbr.rel (0) target = $region59
    $region58: #{bidirectional_gru_2_forward.6} parent=1 // pred_region
      _
    $region59: #{bidirectional_gru_2_forward.6} parent=1 // pred_fallthru
      _
    // Predicated region
    $region60: #{bidirectional_gru_2_forward.6} parent=1 // pred_check
      _
    $region61: #{bidirectional_gru_2_forward.6} parent=1 // pred_check_branch
      %165 = sbr.rel (0) target = $region63
    $region62: #{bidirectional_gru_2_forward.6} parent=1 // pred_region
      _
    $region63: #{bidirectional_gru_2_forward.6} parent=1 // pred_fallthru
      _
    // Predicated region
    $region64: #{bidirectional_gru_2_forward.6} parent=1 // pred_check
      _
    $region65: #{bidirectional_gru_2_forward.6} parent=1 // pred_check_branch
      %167 = sbr.rel (0) target = $region67
    $region66: #{bidirectional_gru_2_forward.6} parent=1 // pred_region
      %168 = dma.done [#allocation6], 24576
    $region67: #{bidirectional_gru_2_forward.6} parent=1 // pred_fallthru
      _
    %s169 = ssub.s32 0, 0
    %s170 = smul.u32 8, %s169
    %p171 = scmp.lt.s32.totalorder %s170, 7
    %s172 = scalar_select %p171, %s170, 7
    %s173 = smul.addr %s172, 8
    %s174 = scalar_lea.vmem %s5, %s173
    %s175 = ssub.s32 0, 0
    %s176 = smul.u32 8, %s175
    %s177 = ssub.s32 0, 0
    %s178 = smul.u32 8, %s177
    %p179 = scmp.lt.s32.totalorder %s178, 7
    %s180 = scalar_select %p179, %s178, 7
    %s181 = smul.addr %s180, 8
    %s182 = scalar_lea.vmem %s5, %s181
    %s183 = ssub.s32 0, 0
    %s184 = smul.u32 8, %s183
    %p185 = scmp.eq.s32.totalorder 0, 0
    // Predicated region
    $region68: #{bidirectional_gru_2_forward.6} parent=1 // pred_check
      %p186 = pneg %p185
    $region69: #{bidirectional_gru_2_forward.6} parent=1 // pred_check_branch
      %188 = sbr.rel (%p186) target = $region71
    $region70: #{bidirectional_gru_2_forward.6} parent=1 // pred_region
      %189 = vst [vmem:[#allocation2] sm:$0xff] 0.0
      %190 = vst [vmem:[#allocation2 + $0x8] sm:$0xff] 0.0
    $region71: #{bidirectional_gru_2_forward.6} parent=1 // pred_fallthru
      _
    %v191 = vld [vmem:[#allocation5] sm:$0xff]
    %v192 = vld [vmem:[#allocation5 + $0x8] sm:$0xff]
    %v193 = vld [vmem:[#allocation5 + $0x10] sm:$0xff]
    %v194 = vld [vmem:[#allocation5 + $0x18] sm:$0xff]
    %v195 = vld [vmem:[#allocation5 + $0x20] sm:$0xff]
    %v196 = vld [vmem:[#allocation5 + $0x28] sm:$0xff]
    %v197 = vld [vmem:[#allocation5 + $0x30] sm:$0xff]
    %v198 = vld [vmem:[#allocation5 + $0x38] sm:$0xff]
    %v199 = vld [vmem:[#allocation5 + $0x40] sm:$0xff]
    %v200 = vld [vmem:[#allocation5 + $0x48] sm:$0xff]
    %v201 = vld [vmem:[#allocation5 + $0x50] sm:$0xff]
    %v202 = vld [vmem:[#allocation5 + $0x58] sm:$0xff]
    %v203 = vld [vmem:[#allocation5 + $0x60] sm:$0xff]
    %v204 = vld [vmem:[#allocation5 + $0x68] sm:$0xff]
    %v205 = vld [vmem:[#allocation5 + $0x70] sm:$0xff]
    %v206 = vld [vmem:[#allocation5 + $0x78] sm:$0xff]
    %v207 = vld [vmem:[#allocation5 + $0x80] sm:$0xff]
    %v208 = vld [vmem:[#allocation5 + $0x88] sm:$0xff]
    %v209 = vld [vmem:[#allocation5 + $0x90] sm:$0xff]
    %v210 = vld [vmem:[#allocation5 + $0x98] sm:$0xff]
    %v211 = vld [vmem:[#allocation5 + $0xa0] sm:$0xff]
    %v212 = vld [vmem:[#allocation5 + $0xa8] sm:$0xff]
    %v213 = vld [vmem:[#allocation5 + $0xb0] sm:$0xff]
    %v214 = vld [vmem:[#allocation5 + $0xb8] sm:$0xff]
    %v215 = vld [vmem:[#allocation5 + $0xc0] sm:$0xff]
    %v216 = vld [vmem:[#allocation5 + $0xc8] sm:$0xff]
    %v217 = vld [vmem:[#allocation5 + $0xd0] sm:$0xff]
    %v218 = vld [vmem:[#allocation5 + $0xd8] sm:$0xff]
    %v219 = vld [vmem:[#allocation5 + $0xe0] sm:$0xff]
    %v220 = vld [vmem:[#allocation5 + $0xe8] sm:$0xff]
    %v221 = vld [vmem:[#allocation5 + $0xf0] sm:$0xff]
    %v222 = vld [vmem:[#allocation5 + $0xf8] sm:$0xff]
    %v223 = vld [vmem:[#allocation5 + $0x100] sm:$0xff]
    %v224 = vld [vmem:[#allocation5 + $0x108] sm:$0xff]
    %v225 = vld [vmem:[#allocation5 + $0x110] sm:$0xff]
    %v226 = vld [vmem:[#allocation5 + $0x118] sm:$0xff]
    %v227 = vld [vmem:[#allocation5 + $0x120] sm:$0xff]
    %v228 = vld [vmem:[#allocation5 + $0x128] sm:$0xff]
    %v229 = vld [vmem:[#allocation5 + $0x130] sm:$0xff]
    %v230 = vld [vmem:[#allocation5 + $0x138] sm:$0xff]
    %v231 = vld [vmem:[#allocation5 + $0x140] sm:$0xff]
    %v232 = vld [vmem:[#allocation5 + $0x148] sm:$0xff]
    %v233 = vld [vmem:[#allocation5 + $0x150] sm:$0xff]
    %v234 = vld [vmem:[#allocation5 + $0x158] sm:$0xff]
    %v235 = vld [vmem:[#allocation5 + $0x160] sm:$0xff]
    %v236 = vld [vmem:[#allocation5 + $0x168] sm:$0xff]
    %v237 = vld [vmem:[#allocation5 + $0x170] sm:$0xff]
    %v238 = vld [vmem:[#allocation5 + $0x178] sm:$0xff]
    %v239 = vld [vmem:[#allocation5 + $0x180] sm:$0xff]
    %v240 = vld [vmem:[#allocation5 + $0x188] sm:$0xff]
    %v241 = vld [vmem:[#allocation5 + $0x190] sm:$0xff]
    %v242 = vld [vmem:[#allocation5 + $0x198] sm:$0xff]
    %v243 = vld [vmem:[#allocation5 + $0x1a0] sm:$0xff]
    %v244 = vld [vmem:[#allocation5 + $0x1a8] sm:$0xff]
    %v245 = vld [vmem:[#allocation5 + $0x1b0] sm:$0xff]
    %v246 = vld [vmem:[#allocation5 + $0x1b8] sm:$0xff]
    %v247 = vld [vmem:[#allocation5 + $0x1c0] sm:$0xff]
    %v248 = vld [vmem:[#allocation5 + $0x1c8] sm:$0xff]
    %v249 = vld [vmem:[#allocation5 + $0x1d0] sm:$0xff]
    %v250 = vld [vmem:[#allocation5 + $0x1d8] sm:$0xff]
    %v251 = vld [vmem:[#allocation5 + $0x1e0] sm:$0xff]
    %v252 = vld [vmem:[#allocation5 + $0x1e8] sm:$0xff]
    %v253 = vld [vmem:[#allocation5 + $0x1f0] sm:$0xff]
    %v254 = vld [vmem:[#allocation5 + $0x1f8] sm:$0xff]
    %v255 = vld [vmem:[#allocation5 + $0x200] sm:$0xff]
    %v256 = vld [vmem:[#allocation5 + $0x208] sm:$0xff]
    %v257 = vld [vmem:[#allocation5 + $0x210] sm:$0xff]
    %v258 = vld [vmem:[#allocation5 + $0x218] sm:$0xff]
    %v259 = vld [vmem:[#allocation5 + $0x220] sm:$0xff]
    %v260 = vld [vmem:[#allocation5 + $0x228] sm:$0xff]
    %v261 = vld [vmem:[#allocation5 + $0x230] sm:$0xff]
    %v262 = vld [vmem:[#allocation5 + $0x238] sm:$0xff]
    %v263 = vld [vmem:[#allocation5 + $0x240] sm:$0xff]
    %v264 = vld [vmem:[#allocation5 + $0x248] sm:$0xff]
    %v265 = vld [vmem:[#allocation5 + $0x250] sm:$0xff]
    %v266 = vld [vmem:[#allocation5 + $0x258] sm:$0xff]
    %v267 = vld [vmem:[#allocation5 + $0x260] sm:$0xff]
    %v268 = vld [vmem:[#allocation5 + $0x268] sm:$0xff]
    %v269 = vld [vmem:[#allocation5 + $0x270] sm:$0xff]
    %v270 = vld [vmem:[#allocation5 + $0x278] sm:$0xff]
    %v271 = vld [vmem:[#allocation5 + $0x280] sm:$0xff]
    %v272 = vld [vmem:[#allocation5 + $0x288] sm:$0xff]
    %v273 = vld [vmem:[#allocation5 + $0x290] sm:$0xff]
    %v274 = vld [vmem:[#allocation5 + $0x298] sm:$0xff]
    %v275 = vld [vmem:[#allocation5 + $0x2a0] sm:$0xff]
    %v276 = vld [vmem:[#allocation5 + $0x2a8] sm:$0xff]
    %v277 = vld [vmem:[#allocation5 + $0x2b0] sm:$0xff]
    %v278 = vld [vmem:[#allocation5 + $0x2b8] sm:$0xff]
    %v279 = vld [vmem:[#allocation5 + $0x2c0] sm:$0xff]
    %v280 = vld [vmem:[#allocation5 + $0x2c8] sm:$0xff]
    %v281 = vld [vmem:[#allocation5 + $0x2d0] sm:$0xff]
    %v282 = vld [vmem:[#allocation5 + $0x2d8] sm:$0xff]
    %v283 = vld [vmem:[#allocation5 + $0x2e0] sm:$0xff]
    %v284 = vld [vmem:[#allocation5 + $0x2e8] sm:$0xff]
    %v285 = vld [vmem:[#allocation5 + $0x2f0] sm:$0xff]
    %v286 = vld [vmem:[#allocation5 + $0x2f8] sm:$0xff]
    %v287 = vld [vmem:[#allocation5 + $0x300] sm:$0xff]
    %v288 = vld [vmem:[#allocation5 + $0x308] sm:$0xff]
    %v289 = vld [vmem:[#allocation5 + $0x310] sm:$0xff]
    %v290 = vld [vmem:[#allocation5 + $0x318] sm:$0xff]
    %v291 = vld [vmem:[#allocation5 + $0x320] sm:$0xff]
    %v292 = vld [vmem:[#allocation5 + $0x328] sm:$0xff]
    %v293 = vld [vmem:[#allocation5 + $0x330] sm:$0xff]
    %v294 = vld [vmem:[#allocation5 + $0x338] sm:$0xff]
    %v295 = vld [vmem:[#allocation5 + $0x340] sm:$0xff]
    %v296 = vld [vmem:[#allocation5 + $0x348] sm:$0xff]
    %v297 = vld [vmem:[#allocation5 + $0x350] sm:$0xff]
    %v298 = vld [vmem:[#allocation5 + $0x358] sm:$0xff]
    %v299 = vld [vmem:[#allocation5 + $0x360] sm:$0xff]
    %v300 = vld [vmem:[#allocation5 + $0x368] sm:$0xff]
    %v301 = vld [vmem:[#allocation5 + $0x370] sm:$0xff]
    %v302 = vld [vmem:[#allocation5 + $0x378] sm:$0xff]
    %v303 = vld [vmem:[#allocation5 + $0x380] sm:$0xff]
    %v304 = vld [vmem:[#allocation5 + $0x388] sm:$0xff]
    %v305 = vld [vmem:[#allocation5 + $0x390] sm:$0xff]
    %v306 = vld [vmem:[#allocation5 + $0x398] sm:$0xff]
    %v307 = vld [vmem:[#allocation5 + $0x3a0] sm:$0xff]
    %v308 = vld [vmem:[#allocation5 + $0x3a8] sm:$0xff]
    %v309 = vld [vmem:[#allocation5 + $0x3b0] sm:$0xff]
    %v310 = vld [vmem:[#allocation5 + $0x3b8] sm:$0xff]
    %v311 = vld [vmem:[#allocation5 + $0x3c0] sm:$0xff]
    %v312 = vld [vmem:[#allocation5 + $0x3c8] sm:$0xff]
    %v313 = vld [vmem:[#allocation5 + $0x3d0] sm:$0xff]
    %v314 = vld [vmem:[#allocation5 + $0x3d8] sm:$0xff]
    %v315 = vld [vmem:[#allocation5 + $0x3e0] sm:$0xff]
    %v316 = vld [vmem:[#allocation5 + $0x3e8] sm:$0xff]
    %v317 = vld [vmem:[#allocation5 + $0x3f0] sm:$0xff]
    %v318 = vld [vmem:[#allocation5 + $0x3f8] sm:$0xff]
    %v319 = vld [vmem:[#allocation5 + $0x400] sm:$0xff]
    %v320 = vld [vmem:[#allocation5 + $0x408] sm:$0xff]
    %v321 = vld [vmem:[#allocation5 + $0x410] sm:$0xff]
    %v322 = vld [vmem:[#allocation5 + $0x418] sm:$0xff]
    %v323 = vld [vmem:[#allocation5 + $0x420] sm:$0xff]
    %v324 = vld [vmem:[#allocation5 + $0x428] sm:$0xff]
    %v325 = vld [vmem:[#allocation5 + $0x430] sm:$0xff]
    %v326 = vld [vmem:[#allocation5 + $0x438] sm:$0xff]
    %v327 = vld [vmem:[#allocation5 + $0x440] sm:$0xff]
    %v328 = vld [vmem:[#allocation5 + $0x448] sm:$0xff]
    %v329 = vld [vmem:[#allocation5 + $0x450] sm:$0xff]
    %v330 = vld [vmem:[#allocation5 + $0x458] sm:$0xff]
    %v331 = vld [vmem:[#allocation5 + $0x460] sm:$0xff]
    %v332 = vld [vmem:[#allocation5 + $0x468] sm:$0xff]
    %v333 = vld [vmem:[#allocation5 + $0x470] sm:$0xff]
    %v334 = vld [vmem:[#allocation5 + $0x478] sm:$0xff]
    %v335 = vld [vmem:[#allocation5 + $0x480] sm:$0xff]
    %v336 = vld [vmem:[#allocation5 + $0x488] sm:$0xff]
    %v337 = vld [vmem:[#allocation5 + $0x490] sm:$0xff]
    %v338 = vld [vmem:[#allocation5 + $0x498] sm:$0xff]
    %v339 = vld [vmem:[#allocation5 + $0x4a0] sm:$0xff]
    %v340 = vld [vmem:[#allocation5 + $0x4a8] sm:$0xff]
    %v341 = vld [vmem:[#allocation5 + $0x4b0] sm:$0xff]
    %v342 = vld [vmem:[#allocation5 + $0x4b8] sm:$0xff]
    %v343 = vld [vmem:[#allocation5 + $0x4c0] sm:$0xff]
    %v344 = vld [vmem:[#allocation5 + $0x4c8] sm:$0xff]
    %v345 = vld [vmem:[#allocation5 + $0x4d0] sm:$0xff]
    %v346 = vld [vmem:[#allocation5 + $0x4d8] sm:$0xff]
    %v347 = vld [vmem:[#allocation5 + $0x4e0] sm:$0xff]
    %v348 = vld [vmem:[#allocation5 + $0x4e8] sm:$0xff]
    %v349 = vld [vmem:[#allocation5 + $0x4f0] sm:$0xff]
    %v350 = vld [vmem:[#allocation5 + $0x4f8] sm:$0xff]
    %v351 = vld [vmem:[#allocation5 + $0x500] sm:$0xff]
    %v352 = vld [vmem:[#allocation5 + $0x508] sm:$0xff]
    %v353 = vld [vmem:[#allocation5 + $0x510] sm:$0xff]
    %v354 = vld [vmem:[#allocation5 + $0x518] sm:$0xff]
    %v355 = vld [vmem:[#allocation5 + $0x520] sm:$0xff]
    %v356 = vld [vmem:[#allocation5 + $0x528] sm:$0xff]
    %v357 = vld [vmem:[#allocation5 + $0x530] sm:$0xff]
    %v358 = vld [vmem:[#allocation5 + $0x538] sm:$0xff]
    %v359 = vld [vmem:[#allocation5 + $0x540] sm:$0xff]
    %v360 = vld [vmem:[#allocation5 + $0x548] sm:$0xff]
    %v361 = vld [vmem:[#allocation5 + $0x550] sm:$0xff]
    %v362 = vld [vmem:[#allocation5 + $0x558] sm:$0xff]
    %v363 = vld [vmem:[#allocation5 + $0x560] sm:$0xff]
    %v364 = vld [vmem:[#allocation5 + $0x568] sm:$0xff]
    %v365 = vld [vmem:[#allocation5 + $0x570] sm:$0xff]
    %v366 = vld [vmem:[#allocation5 + $0x578] sm:$0xff]
    %v367 = vld [vmem:[#allocation5 + $0x580] sm:$0xff]
    %v368 = vld [vmem:[#allocation5 + $0x588] sm:$0xff]
    %v369 = vld [vmem:[#allocation5 + $0x590] sm:$0xff]
    %v370 = vld [vmem:[#allocation5 + $0x598] sm:$0xff]
    %v371 = vld [vmem:[#allocation5 + $0x5a0] sm:$0xff]
    %v372 = vld [vmem:[#allocation5 + $0x5a8] sm:$0xff]
    %v373 = vld [vmem:[#allocation5 + $0x5b0] sm:$0xff]
    %v374 = vld [vmem:[#allocation5 + $0x5b8] sm:$0xff]
    %v375 = vld [vmem:[#allocation5 + $0x5c0] sm:$0xff]
    %v376 = vld [vmem:[#allocation5 + $0x5c8] sm:$0xff]
    %v377 = vld [vmem:[#allocation5 + $0x5d0] sm:$0xff]
    %v378 = vld [vmem:[#allocation5 + $0x5d8] sm:$0xff]
    %v379 = vld [vmem:[#allocation5 + $0x5e0] sm:$0xff]
    %v380 = vld [vmem:[#allocation5 + $0x5e8] sm:$0xff]
    %v381 = vld [vmem:[#allocation5 + $0x5f0] sm:$0xff]
    %v382 = vld [vmem:[#allocation5 + $0x5f8] sm:$0xff]
    %v383 = vld [vmem:[%s3] sm:$0x1]
    %v384 = vld [vmem:[%s3 + $0x1] sm:$0x1]
    %v385 = vld [vmem:[#allocation2] sm:$0xff]
    %v386 = vld [vmem:[#allocation2 + $0x8] sm:$0xff]
    %v387 = vld [vmem:[#allocation3] sm:$0xff]
    %v388 = vld [vmem:[#allocation3 + $0x8] sm:$0xff]
    %v389 = vld [vmem:[#allocation3 + $0x10] sm:$0xff]
    %s390 = scalar_lea.vmem [#allocation4], 168
    %v391 = vld [vmem:[%s390] sm:$0xff]
    %v392 = vld [vmem:[%s390 + $0x8] sm:$0xff]
    %v393 = vld [vmem:[%s390 + $0x10] sm:$0xff]
    %394 = vmatprep.subr.mxu0 %v192
    %395 = vmatpush1.msra.mxu0 %v191
    %396 = vmatprep.subr.mxu0 %v198
    %397 = vmatpush1.msra.mxu0 %v197
    %398 = vmatprep.subr.mxu0 %v204
    %399 = vmatpush1.msra.mxu0 %v203
    %400 = vmatprep.subr.mxu0 %v210
    %401 = vmatpush1.msra.mxu0 %v209
    %402 = vmatprep.subr.mxu0 %v216
    %403 = vmatpush1.msra.mxu0 %v215
    %404 = vmatprep.subr.mxu0 %v222
    %405 = vmatpush1.msra.mxu0 %v221
    %406 = vmatprep.subr.mxu0 %v228
    %407 = vmatpush1.msra.mxu0 %v227
    %408 = vmatprep.subr.mxu0 %v234
    %409 = vmatpush1.msra.mxu0 %v233
    %410 = vmatprep.subr.mxu0 %v240
    %411 = vmatpush1.msra.mxu0 %v239
    %412 = vmatprep.subr.mxu0 %v246
    %413 = vmatpush1.msra.mxu0 %v245
    %414 = vmatprep.subr.mxu0 %v252
    %415 = vmatpush1.msra.mxu0 %v251
    %416 = vmatprep.subr.mxu0 %v258
    %417 = vmatpush1.msra.mxu0 %v257
    %418 = vmatprep.subr.mxu0 %v264
    %419 = vmatpush1.msra.mxu0 %v263
    %420 = vmatprep.subr.mxu0 %v270
    %421 = vmatpush1.msra.mxu0 %v269
    %422 = vmatprep.subr.mxu0 %v276
    %423 = vmatpush1.msra.mxu0 %v275
    %424 = vmatprep.subr.mxu0 %v282
    %425 = vmatpush1.msra.mxu0 %v281
    %426 = vmatprep.subr.mxu0 %v288
    %427 = vmatpush1.msra.mxu0 %v287
    %428 = vmatprep.subr.mxu0 %v294
    %429 = vmatpush1.msra.mxu0 %v293
    %430 = vmatprep.subr.mxu0 %v300
    %431 = vmatpush1.msra.mxu0 %v299
    %432 = vmatprep.subr.mxu0 %v306
    %433 = vmatpush1.msra.mxu0 %v305
    %434 = vmatprep.subr.mxu0 %v312
    %435 = vmatpush1.msra.mxu0 %v311
    %436 = vmatprep.subr.mxu0 %v318
    %437 = vmatpush1.msra.mxu0 %v317
    %438 = vmatprep.subr.mxu0 %v324
    %439 = vmatpush1.msra.mxu0 %v323
    %440 = vmatprep.subr.mxu0 %v330
    %441 = vmatpush1.msra.mxu0 %v329
    %442 = vmatprep.subr.mxu0 %v336
    %443 = vmatpush1.msra.mxu0 %v335
    %444 = vmatprep.subr.mxu0 %v342
    %445 = vmatpush1.msra.mxu0 %v341
    %446 = vmatprep.subr.mxu0 %v348
    %447 = vmatpush1.msra.mxu0 %v347
    %448 = vmatprep.subr.mxu0 %v354
    %449 = vmatpush1.msra.mxu0 %v353
    %450 = vmatprep.subr.mxu0 %v360
    %451 = vmatpush1.msra.mxu0 %v359
    %452 = vmatprep.subr.mxu0 %v366
    %453 = vmatpush1.msra.mxu0 %v365
    %454 = vmatprep.subr.mxu0 %v372
    %455 = vmatpush1.msra.mxu0 %v371
    %456 = vmatprep.subr.mxu0 %v378
    %457 = vmatpush1.msra.mxu0 %v377
    %458 = vmatprep.mubr.f32.mxu0 %v386
    %459 = vmatmul.mubr.f32.gmra.mrb[0].mxu0 %v385
    %v460 = vpop.f32.mrb[0].mxu0
    %v461 = vadd.f32 0.0, %v460
    %v462 = vpop.f32.mrb[0].mxu0
    %v463 = vadd.f32 0.0, %v462
    %464 = vdwg.mxu0
    %465 = vmatprep.subr.mxu0 %v194
    %466 = vmatpush1.msra.mxu0 %v193
    %467 = vmatprep.subr.mxu0 %v200
    %468 = vmatpush1.msra.mxu0 %v199
    %469 = vmatprep.subr.mxu0 %v206
    %470 = vmatpush1.msra.mxu0 %v205
    %471 = vmatprep.subr.mxu0 %v212
    %472 = vmatpush1.msra.mxu0 %v211
    %473 = vmatprep.subr.mxu0 %v218
    %474 = vmatpush1.msra.mxu0 %v217
    %475 = vmatprep.subr.mxu0 %v224
    %476 = vmatpush1.msra.mxu0 %v223
    %477 = vmatprep.subr.mxu0 %v230
    %478 = vmatpush1.msra.mxu0 %v229
    %479 = vmatprep.subr.mxu0 %v236
    %480 = vmatpush1.msra.mxu0 %v235
    %481 = vmatprep.subr.mxu0 %v242
    %482 = vmatpush1.msra.mxu0 %v241
    %483 = vmatprep.subr.mxu0 %v248
    %484 = vmatpush1.msra.mxu0 %v247
    %485 = vmatprep.subr.mxu0 %v254
    %486 = vmatpush1.msra.mxu0 %v253
    %487 = vmatprep.subr.mxu0 %v260
    %488 = vmatpush1.msra.mxu0 %v259
    %489 = vmatprep.subr.mxu0 %v266
    %490 = vmatpush1.msra.mxu0 %v265
    %491 = vmatprep.subr.mxu0 %v272
    %492 = vmatpush1.msra.mxu0 %v271
    %493 = vmatprep.subr.mxu0 %v278
    %494 = vmatpush1.msra.mxu0 %v277
    %495 = vmatprep.subr.mxu0 %v284
    %496 = vmatpush1.msra.mxu0 %v283
    %497 = vmatprep.subr.mxu0 %v290
    %498 = vmatpush1.msra.mxu0 %v289
    %499 = vmatprep.subr.mxu0 %v296
    %500 = vmatpush1.msra.mxu0 %v295
    %501 = vmatprep.subr.mxu0 %v302
    %502 = vmatpush1.msra.mxu0 %v301
    %503 = vmatprep.subr.mxu0 %v308
    %504 = vmatpush1.msra.mxu0 %v307
    %505 = vmatprep.subr.mxu0 %v314
    %506 = vmatpush1.msra.mxu0 %v313
    %507 = vmatprep.subr.mxu0 %v320
    %508 = vmatpush1.msra.mxu0 %v319
    %509 = vmatprep.subr.mxu0 %v326
    %510 = vmatpush1.msra.mxu0 %v325
    %511 = vmatprep.subr.mxu0 %v332
    %512 = vmatpush1.msra.mxu0 %v331
    %513 = vmatprep.subr.mxu0 %v338
    %514 = vmatpush1.msra.mxu0 %v337
    %515 = vmatprep.subr.mxu0 %v344
    %516 = vmatpush1.msra.mxu0 %v343
    %517 = vmatprep.subr.mxu0 %v350
    %518 = vmatpush1.msra.mxu0 %v349
    %519 = vmatprep.subr.mxu0 %v356
    %520 = vmatpush1.msra.mxu0 %v355
    %521 = vmatprep.subr.mxu0 %v362
    %522 = vmatpush1.msra.mxu0 %v361
    %523 = vmatprep.subr.mxu0 %v368
    %524 = vmatpush1.msra.mxu0 %v367
    %525 = vmatprep.subr.mxu0 %v374
    %526 = vmatpush1.msra.mxu0 %v373
    %527 = vmatprep.subr.mxu0 %v380
    %528 = vmatpush1.msra.mxu0 %v379
    %529 = vmatprep.mubr.f32.mxu0 %v386
    %530 = vmatmul.mubr.f32.gmra.mrb[0].mxu0 %v385
    %v531 = vpop.f32.mrb[0].mxu0
    %v532 = vadd.f32 0.0, %v531
    %v533 = vpop.f32.mrb[0].mxu0
    %v534 = vadd.f32 0.0, %v533
    %535 = vdwg.mxu0
    %536 = vmatprep.subr.mxu0 %v196
    %537 = vmatpush1.msra.mxu0 %v195
    %538 = vmatprep.subr.mxu0 %v202
    %539 = vmatpush1.msra.mxu0 %v201
    %540 = vmatprep.subr.mxu0 %v208
    %541 = vmatpush1.msra.mxu0 %v207
    %542 = vmatprep.subr.mxu0 %v214
    %543 = vmatpush1.msra.mxu0 %v213
    %544 = vmatprep.subr.mxu0 %v220
    %545 = vmatpush1.msra.mxu0 %v219
    %546 = vmatprep.subr.mxu0 %v226
    %547 = vmatpush1.msra.mxu0 %v225
    %548 = vmatprep.subr.mxu0 %v232
    %549 = vmatpush1.msra.mxu0 %v231
    %550 = vmatprep.subr.mxu0 %v238
    %551 = vmatpush1.msra.mxu0 %v237
    %552 = vmatprep.subr.mxu0 %v244
    %553 = vmatpush1.msra.mxu0 %v243
    %554 = vmatprep.subr.mxu0 %v250
    %555 = vmatpush1.msra.mxu0 %v249
    %556 = vmatprep.subr.mxu0 %v256
    %557 = vmatpush1.msra.mxu0 %v255
    %558 = vmatprep.subr.mxu0 %v262
    %559 = vmatpush1.msra.mxu0 %v261
    %560 = vmatprep.subr.mxu0 %v268
    %561 = vmatpush1.msra.mxu0 %v267
    %562 = vmatprep.subr.mxu0 %v274
    %563 = vmatpush1.msra.mxu0 %v273
    %564 = vmatprep.subr.mxu0 %v280
    %565 = vmatpush1.msra.mxu0 %v279
    %566 = vmatprep.subr.mxu0 %v286
    %567 = vmatpush1.msra.mxu0 %v285
    %568 = vmatprep.subr.mxu0 %v292
    %569 = vmatpush1.msra.mxu0 %v291
    %570 = vmatprep.subr.mxu0 %v298
    %571 = vmatpush1.msra.mxu0 %v297
    %572 = vmatprep.subr.mxu0 %v304
    %573 = vmatpush1.msra.mxu0 %v303
    %574 = vmatprep.subr.mxu0 %v310
    %575 = vmatpush1.msra.mxu0 %v309
    %576 = vmatprep.subr.mxu0 %v316
    %577 = vmatpush1.msra.mxu0 %v315
    %578 = vmatprep.subr.mxu0 %v322
    %579 = vmatpush1.msra.mxu0 %v321
    %580 = vmatprep.subr.mxu0 %v328
    %581 = vmatpush1.msra.mxu0 %v327
    %582 = vmatprep.subr.mxu0 %v334
    %583 = vmatpush1.msra.mxu0 %v333
    %584 = vmatprep.subr.mxu0 %v340
    %585 = vmatpush1.msra.mxu0 %v339
    %586 = vmatprep.subr.mxu0 %v346
    %587 = vmatpush1.msra.mxu0 %v345
    %588 = vmatprep.subr.mxu0 %v352
    %589 = vmatpush1.msra.mxu0 %v351
    %590 = vmatprep.subr.mxu0 %v358
    %591 = vmatpush1.msra.mxu0 %v357
    %592 = vmatprep.subr.mxu0 %v364
    %593 = vmatpush1.msra.mxu0 %v363
    %594 = vmatprep.subr.mxu0 %v370
    %595 = vmatpush1.msra.mxu0 %v369
    %596 = vmatprep.subr.mxu0 %v376
    %597 = vmatpush1.msra.mxu0 %v375
    %598 = vmatprep.subr.mxu0 %v382
    %599 = vmatpush1.msra.mxu0 %v381
    %600 = vmatprep.mubr.f32.mxu0 %v386
    %601 = vmatmul.mubr.f32.gmra.mrb[0].mxu0 %v385
    %v602 = vpop.f32.mrb[0].mxu0
    %v603 = vadd.f32 0.0, %v602
    %v604 = vpop.f32.mrb[0].mxu0
    %v605 = vadd.f32 0.0, %v604
    %606 = vdwg.mxu0
    %v607 = vadd.f32 %v387, %v461
    %v608 = vxor.u32 %v607, 2147483648
    %v609 = vmul.f32 %v608, 1.442695
    %v610 = vpow.pop %v609
    %v611 = vadd.f32 %v610, 1.0
    %v612 = vrcp.pop %v611
    %v613 = vmul.f32 1.0, %v612
    %v614 = vadd.f32 %v388, %v463
    %v615 = vxor.u32 %v614, 2147483648
    %v616 = vmul.f32 %v615, 1.442695
    %v617 = vpow.pop %v616
    %v618 = vadd.f32 %v617, 1.0
    %v619 = vrcp.pop %v618
    %v620 = vmul.f32 1.0, %v619
    %v622 = vlaneseq
    %v623 = vshrl.u32 %v622, 7
    %v624 = vsub.s32 0, %v623
    %v625 = vrot.slane %v383, %v624
    %v627 = vadd.f32 %v532, %v625
    %v628 = vmul.f32 %v613, %v627
    %v629 = vadd.f32 %v389, %v628
    %v630 = vtanh.pop %v629
    %v631 = vadd.f32 %v391, %v534
    %v632 = vxor.u32 %v631, 2147483648
    %v633 = vmul.f32 %v632, 1.442695
    %v634 = vpow.pop %v633
    %v635 = vadd.f32 %v634, 1.0
    %v636 = vrcp.pop %v635
    %v637 = vmul.f32 1.0, %v636
    %v638 = vadd.f32 %v392, %v603
    %v639 = vxor.u32 %v638, 2147483648
    %v640 = vmul.f32 %v639, 1.442695
    %v641 = vpow.pop %v640
    %v642 = vadd.f32 %v641, 1.0
    %v643 = vrcp.pop %v642
    %v644 = vmul.f32 1.0, %v643
    %v646 = vlaneseq
    %v647 = vshrl.u32 %v646, 7
    %v648 = vsub.s32 0, %v647
    %v649 = vrot.slane %v384, %v648
    %v651 = vadd.f32 %v605, %v649
    %v652 = vmul.f32 %v637, %v651
    %v653 = vadd.f32 %v393, %v652
    %v654 = vtanh.pop %v653
    %v655 = vsub.f32 1.0, %v620
    %v656 = vmul.f32 %v655, %v630
    %v657 = vmul.f32 %v620, %v385
    %v658 = vadd.f32 %v656, %v657
    %v659 = vsub.f32 1.0, %v644
    %v660 = vmul.f32 %v659, %v654
    %v661 = vmul.f32 %v644, %v386
    %v662 = vadd.f32 %v660, %v661
    %663 = vst [vmem:[%s4] sm:$0xff] %v658
    %s664 = scalar_lea.vmem %s182, 56
    %665 = vst [vmem:[%s664] sm:$0xff] %v662
    %s666 = scalar_lea.vmem [#allocation3], 24
    %v667 = vld [vmem:[%s666] sm:$0xff]
    %v668 = vld [vmem:[%s666 + $0x8] sm:$0xff]
    %v669 = vld [vmem:[%s666 + $0x10] sm:$0xff]
    %s670 = scalar_lea.vmem [#allocation4], 144
    %v671 = vld [vmem:[%s670] sm:$0xff]
    %v672 = vld [vmem:[%s670 + $0x8] sm:$0xff]
    %v673 = vld [vmem:[%s670 + $0x10] sm:$0xff]
    %674 = vmatprep.subr.mxu0 %v192
    %675 = vmatpush1.msra.mxu0 %v191
    %676 = vmatprep.subr.mxu0 %v198
    %677 = vmatpush1.msra.mxu0 %v197
    %678 = vmatprep.subr.mxu0 %v204
    %679 = vmatpush1.msra.mxu0 %v203
    %680 = vmatprep.subr.mxu0 %v210
    %681 = vmatpush1.msra.mxu0 %v209
    %682 = vmatprep.subr.mxu0 %v216
    %683 = vmatpush1.msra.mxu0 %v215
    %684 = vmatprep.subr.mxu0 %v222
    %685 = vmatpush1.msra.mxu0 %v221
    %686 = vmatprep.subr.mxu0 %v228
    %687 = vmatpush1.msra.mxu0 %v227
    %688 = vmatprep.subr.mxu0 %v234
    %689 = vmatpush1.msra.mxu0 %v233
    %690 = vmatprep.subr.mxu0 %v240
    %691 = vmatpush1.msra.mxu0 %v239
    %692 = vmatprep.subr.mxu0 %v246
    %693 = vmatpush1.msra.mxu0 %v245
    %694 = vmatprep.subr.mxu0 %v252
    %695 = vmatpush1.msra.mxu0 %v251
    %696 = vmatprep.subr.mxu0 %v258
    %697 = vmatpush1.msra.mxu0 %v257
    %698 = vmatprep.subr.mxu0 %v264
    %699 = vmatpush1.msra.mxu0 %v263
    %700 = vmatprep.subr.mxu0 %v270
    %701 = vmatpush1.msra.mxu0 %v269
    %702 = vmatprep.subr.mxu0 %v276
    %703 = vmatpush1.msra.mxu0 %v275
    %704 = vmatprep.subr.mxu0 %v282
    %705 = vmatpush1.msra.mxu0 %v281
    %706 = vmatprep.subr.mxu0 %v288
    %707 = vmatpush1.msra.mxu0 %v287
    %708 = vmatprep.subr.mxu0 %v294
    %709 = vmatpush1.msra.mxu0 %v293
    %710 = vmatprep.subr.mxu0 %v300
    %711 = vmatpush1.msra.mxu0 %v299
    %712 = vmatprep.subr.mxu0 %v306
    %713 = vmatpush1.msra.mxu0 %v305
    %714 = vmatprep.subr.mxu0 %v312
    %715 = vmatpush1.msra.mxu0 %v311
    %716 = vmatprep.subr.mxu0 %v318
    %717 = vmatpush1.msra.mxu0 %v317
    %718 = vmatprep.subr.mxu0 %v324
    %719 = vmatpush1.msra.mxu0 %v323
    %720 = vmatprep.subr.mxu0 %v330
    %721 = vmatpush1.msra.mxu0 %v329
    %722 = vmatprep.subr.mxu0 %v336
    %723 = vmatpush1.msra.mxu0 %v335
    %724 = vmatprep.subr.mxu0 %v342
    %725 = vmatpush1.msra.mxu0 %v341
    %726 = vmatprep.subr.mxu0 %v348
    %727 = vmatpush1.msra.mxu0 %v347
    %728 = vmatprep.subr.mxu0 %v354
    %729 = vmatpush1.msra.mxu0 %v353
    %730 = vmatprep.subr.mxu0 %v360
    %731 = vmatpush1.msra.mxu0 %v359
    %732 = vmatprep.subr.mxu0 %v366
    %733 = vmatpush1.msra.mxu0 %v365
    %734 = vmatprep.subr.mxu0 %v372
    %735 = vmatpush1.msra.mxu0 %v371
    %736 = vmatprep.subr.mxu0 %v378
    %737 = vmatpush1.msra.mxu0 %v377
    %738 = vmatprep.mubr.f32.mxu0 %v662
    %739 = vmatmul.mubr.f32.gmra.mrb[0].mxu0 %v658
    %v740 = vpop.f32.mrb[0].mxu0
    %v741 = vadd.f32 0.0, %v740
    %v742 = vpop.f32.mrb[0].mxu0
    %v743 = vadd.f32 0.0, %v742
    %744 = vdwg.mxu0
    %745 = vmatprep.subr.mxu0 %v194
    %746 = vmatpush1.msra.mxu0 %v193
    %747 = vmatprep.subr.mxu0 %v200
    %748 = vmatpush1.msra.mxu0 %v199
    %749 = vmatprep.subr.mxu0 %v206
    %750 = vmatpush1.msra.mxu0 %v205
    %751 = vmatprep.subr.mxu0 %v212
    %752 = vmatpush1.msra.mxu0 %v211
    %753 = vmatprep.subr.mxu0 %v218
    %754 = vmatpush1.msra.mxu0 %v217
    %755 = vmatprep.subr.mxu0 %v224
    %756 = vmatpush1.msra.mxu0 %v223
    %757 = vmatprep.subr.mxu0 %v230
    %758 = vmatpush1.msra.mxu0 %v229
    %759 = vmatprep.subr.mxu0 %v236
    %760 = vmatpush1.msra.mxu0 %v235
    %761 = vmatprep.subr.mxu0 %v242
    %762 = vmatpush1.msra.mxu0 %v241
    %763 = vmatprep.subr.mxu0 %v248
    %764 = vmatpush1.msra.mxu0 %v247
    %765 = vmatprep.subr.mxu0 %v254
    %766 = vmatpush1.msra.mxu0 %v253
    %767 = vmatprep.subr.mxu0 %v260
    %768 = vmatpush1.msra.mxu0 %v259
    %769 = vmatprep.subr.mxu0 %v266
    %770 = vmatpush1.msra.mxu0 %v265
    %771 = vmatprep.subr.mxu0 %v272
    %772 = vmatpush1.msra.mxu0 %v271
    %773 = vmatprep.subr.mxu0 %v278
    %774 = vmatpush1.msra.mxu0 %v277
    %775 = vmatprep.subr.mxu0 %v284
    %776 = vmatpush1.msra.mxu0 %v283
    %777 = vmatprep.subr.mxu0 %v290
    %778 = vmatpush1.msra.mxu0 %v289
    %779 = vmatprep.subr.mxu0 %v296
    %780 = vmatpush1.msra.mxu0 %v295
    %781 = vmatprep.subr.mxu0 %v302
    %782 = vmatpush1.msra.mxu0 %v301
    %783 = vmatprep.subr.mxu0 %v308
    %784 = vmatpush1.msra.mxu0 %v307
    %785 = vmatprep.subr.mxu0 %v314
    %786 = vmatpush1.msra.mxu0 %v313
    %787 = vmatprep.subr.mxu0 %v320
    %788 = vmatpush1.msra.mxu0 %v319
    %789 = vmatprep.subr.mxu0 %v326
    %790 = vmatpush1.msra.mxu0 %v325
    %791 = vmatprep.subr.mxu0 %v332
    %792 = vmatpush1.msra.mxu0 %v331
    %793 = vmatprep.subr.mxu0 %v338
    %794 = vmatpush1.msra.mxu0 %v337
    %795 = vmatprep.subr.mxu0 %v344
    %796 = vmatpush1.msra.mxu0 %v343
    %797 = vmatprep.subr.mxu0 %v350
    %798 = vmatpush1.msra.mxu0 %v349
    %799 = vmatprep.subr.mxu0 %v356
    %800 = vmatpush1.msra.mxu0 %v355
    %801 = vmatprep.subr.mxu0 %v362
    %802 = vmatpush1.msra.mxu0 %v361
    %803 = vmatprep.subr.mxu0 %v368
    %804 = vmatpush1.msra.mxu0 %v367
    %805 = vmatprep.subr.mxu0 %v374
    %806 = vmatpush1.msra.mxu0 %v373
    %807 = vmatprep.subr.mxu0 %v380
    %808 = vmatpush1.msra.mxu0 %v379
    %809 = vmatprep.mubr.f32.mxu0 %v662
    %810 = vmatmul.mubr.f32.gmra.mrb[0].mxu0 %v658
    %v811 = vpop.f32.mrb[0].mxu0
    %v812 = vadd.f32 0.0, %v811
    %v813 = vpop.f32.mrb[0].mxu0
    %v814 = vadd.f32 0.0, %v813
    %815 = vdwg.mxu0
    %816 = vmatprep.subr.mxu0 %v196
    %817 = vmatpush1.msra.mxu0 %v195
    %818 = vmatprep.subr.mxu0 %v202
    %819 = vmatpush1.msra.mxu0 %v201
    %820 = vmatprep.subr.mxu0 %v208
    %821 = vmatpush1.msra.mxu0 %v207
    %822 = vmatprep.subr.mxu0 %v214
    %823 = vmatpush1.msra.mxu0 %v213
    %824 = vmatprep.subr.mxu0 %v220
    %825 = vmatpush1.msra.mxu0 %v219
    %826 = vmatprep.subr.mxu0 %v226
    %827 = vmatpush1.msra.mxu0 %v225
    %828 = vmatprep.subr.mxu0 %v232
    %829 = vmatpush1.msra.mxu0 %v231
    %830 = vmatprep.subr.mxu0 %v238
    %831 = vmatpush1.msra.mxu0 %v237
    %832 = vmatprep.subr.mxu0 %v244
    %833 = vmatpush1.msra.mxu0 %v243
    %834 = vmatprep.subr.mxu0 %v250
    %835 = vmatpush1.msra.mxu0 %v249
    %836 = vmatprep.subr.mxu0 %v256
    %837 = vmatpush1.msra.mxu0 %v255
    %838 = vmatprep.subr.mxu0 %v262
    %839 = vmatpush1.msra.mxu0 %v261
    %840 = vmatprep.subr.mxu0 %v268
    %841 = vmatpush1.msra.mxu0 %v267
    %842 = vmatprep.subr.mxu0 %v274
    %843 = vmatpush1.msra.mxu0 %v273
    %844 = vmatprep.subr.mxu0 %v280
    %845 = vmatpush1.msra.mxu0 %v279
    %846 = vmatprep.subr.mxu0 %v286
    %847 = vmatpush1.msra.mxu0 %v285
    %848 = vmatprep.subr.mxu0 %v292
    %849 = vmatpush1.msra.mxu0 %v291
    %850 = vmatprep.subr.mxu0 %v298
    %851 = vmatpush1.msra.mxu0 %v297
    %852 = vmatprep.subr.mxu0 %v304
    %853 = vmatpush1.msra.mxu0 %v303
    %854 = vmatprep.subr.mxu0 %v310
    %855 = vmatpush1.msra.mxu0 %v309
    %856 = vmatprep.subr.mxu0 %v316
    %857 = vmatpush1.msra.mxu0 %v315
    %858 = vmatprep.subr.mxu0 %v322
    %859 = vmatpush1.msra.mxu0 %v321
    %860 = vmatprep.subr.mxu0 %v328
    %861 = vmatpush1.msra.mxu0 %v327
    %862 = vmatprep.subr.mxu0 %v334
    %863 = vmatpush1.msra.mxu0 %v333
    %864 = vmatprep.subr.mxu0 %v340
    %865 = vmatpush1.msra.mxu0 %v339
    %866 = vmatprep.subr.mxu0 %v346
    %867 = vmatpush1.msra.mxu0 %v345
    %868 = vmatprep.subr.mxu0 %v352
    %869 = vmatpush1.msra.mxu0 %v351
    %870 = vmatprep.subr.mxu0 %v358
    %871 = vmatpush1.msra.mxu0 %v357
    %872 = vmatprep.subr.mxu0 %v364
    %873 = vmatpush1.msra.mxu0 %v363
    %874 = vmatprep.subr.mxu0 %v370
    %875 = vmatpush1.msra.mxu0 %v369
    %876 = vmatprep.subr.mxu0 %v376
    %877 = vmatpush1.msra.mxu0 %v375
    %878 = vmatprep.subr.mxu0 %v382
    %879 = vmatpush1.msra.mxu0 %v381
    %880 = vmatprep.mubr.f32.mxu0 %v662
    %881 = vmatmul.mubr.f32.gmra.mrb[0].mxu0 %v658
    %v882 = vpop.f32.mrb[0].mxu0
    %v883 = vadd.f32 0.0, %v882
    %v884 = vpop.f32.mrb[0].mxu0
    %v885 = vadd.f32 0.0, %v884
    %886 = vdwg.mxu0
    %v887 = vadd.f32 %v667, %v741
    %v888 = vxor.u32 %v887, 2147483648
    %v889 = vmul.f32 %v888, 1.442695
    %v890 = vpow.pop %v889
    %v891 = vadd.f32 %v890, 1.0
    %v892 = vrcp.pop %v891
    %v893 = vmul.f32 1.0, %v892
    %v894 = vadd.f32 %v668, %v743
    %v895 = vxor.u32 %v894, 2147483648
    %v896 = vmul.f32 %v895, 1.442695
    %v897 = vpow.pop %v896
    %v898 = vadd.f32 %v897, 1.0
    %v899 = vrcp.pop %v898
    %v900 = vmul.f32 1.0, %v899
    %v901 = vadd.f32 %v812, %v625
    %v902 = vmul.f32 %v893, %v901
    %v903 = vadd.f32 %v669, %v902
    %v904 = vtanh.pop %v903
    %v905 = vadd.f32 %v671, %v814
    %v906 = vxor.u32 %v905, 2147483648
    %v907 = vmul.f32 %v906, 1.442695
    %v908 = vpow.pop %v907
    %v909 = vadd.f32 %v908, 1.0
    %v910 = vrcp.pop %v909
    %v911 = vmul.f32 1.0, %v910
    %v912 = vadd.f32 %v672, %v883
    %v913 = vxor.u32 %v912, 2147483648
    %v914 = vmul.f32 %v913, 1.442695
    %v915 = vpow.pop %v914
    %v916 = vadd.f32 %v915, 1.0
    %v917 = vrcp.pop %v916
    %v918 = vmul.f32 1.0, %v917
    %v919 = vadd.f32 %v885, %v649
    %v920 = vmul.f32 %v911, %v919
    %v921 = vadd.f32 %v673, %v920
    %v922 = vtanh.pop %v921
    %v923 = vsub.f32 1.0, %v900
    %v924 = vmul.f32 %v923, %v904
    %v925 = vmul.f32 %v900, %v658
    %v926 = vadd.f32 %v924, %v925
    %v927 = vsub.f32 1.0, %v918
    %v928 = vmul.f32 %v927, %v922
    %v929 = vmul.f32 %v918, %v662
    %v930 = vadd.f32 %v928, %v929
    %s931 = scalar_lea.vmem %s4, 8
    %932 = vst [vmem:[%s931] sm:$0xff] %v926
    %s933 = scalar_lea.vmem %s182, 48
    %934 = vst [vmem:[%s933] sm:$0xff] %v930
    %s935 = scalar_lea.vmem [#allocation3], 48
    %v936 = vld [vmem:[%s935] sm:$0xff]
    %v937 = vld [vmem:[%s935 + $0x8] sm:$0xff]
    %v938 = vld [vmem:[%s935 + $0x10] sm:$0xff]
    %s939 = scalar_lea.vmem [#allocation4], 120
    %v940 = vld [vmem:[%s939] sm:$0xff]
    %v941 = vld [vmem:[%s939 + $0x8] sm:$0xff]
    %v942 = vld [vmem:[%s939 + $0x10] sm:$0xff]
    %943 = vmatprep.subr.mxu0 %v192
    %944 = vmatpush1.msra.mxu0 %v191
    %945 = vmatprep.subr.mxu0 %v198
    %946 = vmatpush1.msra.mxu0 %v197
    %947 = vmatprep.subr.mxu0 %v204
    %948 = vmatpush1.msra.mxu0 %v203
    %949 = vmatprep.subr.mxu0 %v210
    %950 = vmatpush1.msra.mxu0 %v209
    %951 = vmatprep.subr.mxu0 %v216
    %952 = vmatpush1.msra.mxu0 %v215
    %953 = vmatprep.subr.mxu0 %v222
    %954 = vmatpush1.msra.mxu0 %v221
    %955 = vmatprep.subr.mxu0 %v228
    %956 = vmatpush1.msra.mxu0 %v227
    %957 = vmatprep.subr.mxu0 %v234
    %958 = vmatpush1.msra.mxu0 %v233
    %959 = vmatprep.subr.mxu0 %v240
    %960 = vmatpush1.msra.mxu0 %v239
    %961 = vmatprep.subr.mxu0 %v246
    %962 = vmatpush1.msra.mxu0 %v245
    %963 = vmatprep.subr.mxu0 %v252
    %964 = vmatpush1.msra.mxu0 %v251
    %965 = vmatprep.subr.mxu0 %v258
    %966 = vmatpush1.msra.mxu0 %v257
    %967 = vmatprep.subr.mxu0 %v264
    %968 = vmatpush1.msra.mxu0 %v263
    %969 = vmatprep.subr.mxu0 %v270
    %970 = vmatpush1.msra.mxu0 %v269
    %971 = vmatprep.subr.mxu0 %v276
    %972 = vmatpush1.msra.mxu0 %v275
    %973 = vmatprep.subr.mxu0 %v282
    %974 = vmatpush1.msra.mxu0 %v281
    %975 = vmatprep.subr.mxu0 %v288
    %976 = vmatpush1.msra.mxu0 %v287
    %977 = vmatprep.subr.mxu0 %v294
    %978 = vmatpush1.msra.mxu0 %v293
    %979 = vmatprep.subr.mxu0 %v300
    %980 = vmatpush1.msra.mxu0 %v299
    %981 = vmatprep.subr.mxu0 %v306
    %982 = vmatpush1.msra.mxu0 %v305
    %983 = vmatprep.subr.mxu0 %v312
    %984 = vmatpush1.msra.mxu0 %v311
    %985 = vmatprep.subr.mxu0 %v318
    %986 = vmatpush1.msra.mxu0 %v317
    %987 = vmatprep.subr.mxu0 %v324
    %988 = vmatpush1.msra.mxu0 %v323
    %989 = vmatprep.subr.mxu0 %v330
    %990 = vmatpush1.msra.mxu0 %v329
    %991 = vmatprep.subr.mxu0 %v336
    %992 = vmatpush1.msra.mxu0 %v335
    %993 = vmatprep.subr.mxu0 %v342
    %994 = vmatpush1.msra.mxu0 %v341
    %995 = vmatprep.subr.mxu0 %v348
    %996 = vmatpush1.msra.mxu0 %v347
    %997 = vmatprep.subr.mxu0 %v354
    %998 = vmatpush1.msra.mxu0 %v353
    %999 = vmatprep.subr.mxu0 %v360
    %1000 = vmatpush1.msra.mxu0 %v359
    %1001 = vmatprep.subr.mxu0 %v366
    %1002 = vmatpush1.msra.mxu0 %v365
    %1003 = vmatprep.subr.mxu0 %v372
    %1004 = vmatpush1.msra.mxu0 %v371
    %1005 = vmatprep.subr.mxu0 %v378
    %1006 = vmatpush1.msra.mxu0 %v377
    %1007 = vmatprep.mubr.f32.mxu0 %v930
    %1008 = vmatmul.mubr.f32.gmra.mrb[0].mxu0 %v926
    %v1009 = vpop.f32.mrb[0].mxu0
    %v1010 = vadd.f32 0.0, %v1009
    %v1011 = vpop.f32.mrb[0].mxu0
    %v1012 = vadd.f32 0.0, %v1011
    %1013 = vdwg.mxu0
    %1014 = vmatprep.subr.mxu0 %v194
    %1015 = vmatpush1.msra.mxu0 %v193
    %1016 = vmatprep.subr.mxu0 %v200
    %1017 = vmatpush1.msra.mxu0 %v199
    %1018 = vmatprep.subr.mxu0 %v206
    %1019 = vmatpush1.msra.mxu0 %v205
    %1020 = vmatprep.subr.mxu0 %v212
    %1021 = vmatpush1.msra.mxu0 %v211
    %1022 = vmatprep.subr.mxu0 %v218
    %1023 = vmatpush1.msra.mxu0 %v217
    %1024 = vmatprep.subr.mxu0 %v224
    %1025 = vmatpush1.msra.mxu0 %v223
    %1026 = vmatprep.subr.mxu0 %v230
    %1027 = vmatpush1.msra.mxu0 %v229
    %1028 = vmatprep.subr.mxu0 %v236
    %1029 = vmatpush1.msra.mxu0 %v235
    %1030 = vmatprep.subr.mxu0 %v242
    %1031 = vmatpush1.msra.mxu0 %v241
    %1032 = vmatprep.subr.mxu0 %v248
    %1033 = vmatpush1.msra.mxu0 %v247
    %1034 = vmatprep.subr.mxu0 %v254
    %1035 = vmatpush1.msra.mxu0 %v253
    %1036 = vmatprep.subr.mxu0 %v260
    %1037 = vmatpush1.msra.mxu0 %v259
    %1038 = vmatprep.subr.mxu0 %v266
    %1039 = vmatpush1.msra.mxu0 %v265
    %1040 = vmatprep.subr.mxu0 %v272
    %1041 = vmatpush1.msra.mxu0 %v271
    %1042 = vmatprep.subr.mxu0 %v278
    %1043 = vmatpush1.msra.mxu0 %v277
    %1044 = vmatprep.subr.mxu0 %v284
    %1045 = vmatpush1.msra.mxu0 %v283
    %1046 = vmatprep.subr.mxu0 %v290
    %1047 = vmatpush1.msra.mxu0 %v289
    %1048 = vmatprep.subr.mxu0 %v296
    %1049 = vmatpush1.msra.mxu0 %v295
    %1050 = vmatprep.subr.mxu0 %v302
    %1051 = vmatpush1.msra.mxu0 %v301
    %1052 = vmatprep.subr.mxu0 %v308
    %1053 = vmatpush1.msra.mxu0 %v307
    %1054 = vmatprep.subr.mxu0 %v314
    %1055 = vmatpush1.msra.mxu0 %v313
    %1056 = vmatprep.subr.mxu0 %v320
    %1057 = vmatpush1.msra.mxu0 %v319
    %1058 = vmatprep.subr.mxu0 %v326
    %1059 = vmatpush1.msra.mxu0 %v325
    %1060 = vmatprep.subr.mxu0 %v332
    %1061 = vmatpush1.msra.mxu0 %v331
    %1062 = vmatprep.subr.mxu0 %v338
    %1063 = vmatpush1.msra.mxu0 %v337
    %1064 = vmatprep.subr.mxu0 %v344
    %1065 = vmatpush1.msra.mxu0 %v343
    %1066 = vmatprep.subr.mxu0 %v350
    %1067 = vmatpush1.msra.mxu0 %v349
    %1068 = vmatprep.subr.mxu0 %v356
    %1069 = vmatpush1.msra.mxu0 %v355
    %1070 = vmatprep.subr.mxu0 %v362
    %1071 = vmatpush1.msra.mxu0 %v361
    %1072 = vmatprep.subr.mxu0 %v368
    %1073 = vmatpush1.msra.mxu0 %v367
    %1074 = vmatprep.subr.mxu0 %v374
    %1075 = vmatpush1.msra.mxu0 %v373
    %1076 = vmatprep.subr.mxu0 %v380
    %1077 = vmatpush1.msra.mxu0 %v379
    %1078 = vmatprep.mubr.f32.mxu0 %v930
    %1079 = vmatmul.mubr.f32.gmra.mrb[0].mxu0 %v926
    %v1080 = vpop.f32.mrb[0].mxu0
    %v1081 = vadd.f32 0.0, %v1080
    %v1082 = vpop.f32.mrb[0].mxu0
    %v1083 = vadd.f32 0.0, %v1082
    %1084 = vdwg.mxu0
    %1085 = vmatprep.subr.mxu0 %v196
    %1086 = vmatpush1.msra.mxu0 %v195
    %1087 = vmatprep.subr.mxu0 %v202
    %1088 = vmatpush1.msra.mxu0 %v201
    %1089 = vmatprep.subr.mxu0 %v208
    %1090 = vmatpush1.msra.mxu0 %v207
    %1091 = vmatprep.subr.mxu0 %v214
    %1092 = vmatpush1.msra.mxu0 %v213
    %1093 = vmatprep.subr.mxu0 %v220
    %1094 = vmatpush1.msra.mxu0 %v219
    %1095 = vmatprep.subr.mxu0 %v226
    %1096 = vmatpush1.msra.mxu0 %v225
    %1097 = vmatprep.subr.mxu0 %v232
    %1098 = vmatpush1.msra.mxu0 %v231
    %1099 = vmatprep.subr.mxu0 %v238
    %1100 = vmatpush1.msra.mxu0 %v237
    %1101 = vmatprep.subr.mxu0 %v244
    %1102 = vmatpush1.msra.mxu0 %v243
    %1103 = vmatprep.subr.mxu0 %v250
    %1104 = vmatpush1.msra.mxu0 %v249
    %1105 = vmatprep.subr.mxu0 %v256
    %1106 = vmatpush1.msra.mxu0 %v255
    %1107 = vmatprep.subr.mxu0 %v262
    %1108 = vmatpush1.msra.mxu0 %v261
    %1109 = vmatprep.subr.mxu0 %v268
    %1110 = vmatpush1.msra.mxu0 %v267
    %1111 = vmatprep.subr.mxu0 %v274
    %1112 = vmatpush1.msra.mxu0 %v273
    %1113 = vmatprep.subr.mxu0 %v280
    %1114 = vmatpush1.msra.mxu0 %v279
    %1115 = vmatprep.subr.mxu0 %v286
    %1116 = vmatpush1.msra.mxu0 %v285
    %1117 = vmatprep.subr.mxu0 %v292
    %1118 = vmatpush1.msra.mxu0 %v291
    %1119 = vmatprep.subr.mxu0 %v298
    %1120 = vmatpush1.msra.mxu0 %v297
    %1121 = vmatprep.subr.mxu0 %v304
    %1122 = vmatpush1.msra.mxu0 %v303
    %1123 = vmatprep.subr.mxu0 %v310
    %1124 = vmatpush1.msra.mxu0 %v309
    %1125 = vmatprep.subr.mxu0 %v316
    %1126 = vmatpush1.msra.mxu0 %v315
    %1127 = vmatprep.subr.mxu0 %v322
    %1128 = vmatpush1.msra.mxu0 %v321
    %1129 = vmatprep.subr.mxu0 %v328
    %1130 = vmatpush1.msra.mxu0 %v327
    %1131 = vmatprep.subr.mxu0 %v334
    %1132 = vmatpush1.msra.mxu0 %v333
    %1133 = vmatprep.subr.mxu0 %v340
    %1134 = vmatpush1.msra.mxu0 %v339
    %1135 = vmatprep.subr.mxu0 %v346
    %1136 = vmatpush1.msra.mxu0 %v345
    %1137 = vmatprep.subr.mxu0 %v352
    %1138 = vmatpush1.msra.mxu0 %v351
    %1139 = vmatprep.subr.mxu0 %v358
    %1140 = vmatpush1.msra.mxu0 %v357
    %1141 = vmatprep.subr.mxu0 %v364
    %1142 = vmatpush1.msra.mxu0 %v363
    %1143 = vmatprep.subr.mxu0 %v370
    %1144 = vmatpush1.msra.mxu0 %v369
    %1145 = vmatprep.subr.mxu0 %v376
    %1146 = vmatpush1.msra.mxu0 %v375
    %1147 = vmatprep.subr.mxu0 %v382
    %1148 = vmatpush1.msra.mxu0 %v381
    %1149 = vmatprep.mubr.f32.mxu0 %v930
    %1150 = vmatmul.mubr.f32.gmra.mrb[0].mxu0 %v926
    %v1151 = vpop.f32.mrb[0].mxu0
    %v1152 = vadd.f32 0.0, %v1151
    %v1153 = vpop.f32.mrb[0].mxu0
    %v1154 = vadd.f32 0.0, %v1153
    %1155 = vdwg.mxu0
    %v1156 = vadd.f32 %v936, %v1010
    %v1157 = vxor.u32 %v1156, 2147483648
    %v1158 = vmul.f32 %v1157, 1.442695
    %v1159 = vpow.pop %v1158
    %v1160 = vadd.f32 %v1159, 1.0
    %v1161 = vrcp.pop %v1160
    %v1162 = vmul.f32 1.0, %v1161
    %v1163 = vadd.f32 %v937, %v1012
    %v1164 = vxor.u32 %v1163, 2147483648
    %v1165 = vmul.f32 %v1164, 1.442695
    %v1166 = vpow.pop %v1165
    %v1167 = vadd.f32 %v1166, 1.0
    %v1168 = vrcp.pop %v1167
    %v1169 = vmul.f32 1.0, %v1168
    %v1170 = vadd.f32 %v1081, %v625
    %v1171 = vmul.f32 %v1162, %v1170
    %v1172 = vadd.f32 %v938, %v1171
    %v1173 = vtanh.pop %v1172
    %v1174 = vadd.f32 %v940, %v1083
    %v1175 = vxor.u32 %v1174, 2147483648
    %v1176 = vmul.f32 %v1175, 1.442695
    %v1177 = vpow.pop %v1176
    %v1178 = vadd.f32 %v1177, 1.0
    %v1179 = vrcp.pop %v1178
    %v1180 = vmul.f32 1.0, %v1179
    %v1181 = vadd.f32 %v941, %v1152
    %v1182 = vxor.u32 %v1181, 2147483648
    %v1183 = vmul.f32 %v1182, 1.442695
    %v1184 = vpow.pop %v1183
    %v1185 = vadd.f32 %v1184, 1.0
    %v1186 = vrcp.pop %v1185
    %v1187 = vmul.f32 1.0, %v1186
    %v1188 = vadd.f32 %v1154, %v649
    %v1189 = vmul.f32 %v1180, %v1188
    %v1190 = vadd.f32 %v942, %v1189
    %v1191 = vtanh.pop %v1190
    %v1192 = vsub.f32 1.0, %v1169
    %v1193 = vmul.f32 %v1192, %v1173
    %v1194 = vmul.f32 %v1169, %v926
    %v1195 = vadd.f32 %v1193, %v1194
    %v1196 = vsub.f32 1.0, %v1187
    %v1197 = vmul.f32 %v1196, %v1191
    %v1198 = vmul.f32 %v1187, %v930
    %v1199 = vadd.f32 %v1197, %v1198
    %s1200 = scalar_lea.vmem %s4, 16
    %1201 = vst [vmem:[%s1200] sm:$0xff] %v1195
    %s1202 = scalar_lea.vmem %s182, 40
    %1203 = vst [vmem:[%s1202] sm:$0xff] %v1199
    %s1204 = scalar_lea.vmem [#allocation3], 72
    %v1205 = vld [vmem:[%s1204] sm:$0xff]
    %v1206 = vld [vmem:[%s1204 + $0x8] sm:$0xff]
    %v1207 = vld [vmem:[%s1204 + $0x10] sm:$0xff]
    %s1208 = scalar_lea.vmem [#allocation4], 96
    %v1209 = vld [vmem:[%s1208] sm:$0xff]
    %v1210 = vld [vmem:[%s1208 + $0x8] sm:$0xff]
    %v1211 = vld [vmem:[%s1208 + $0x10] sm:$0xff]
    %1212 = vmatprep.subr.mxu0 %v192
    %1213 = vmatpush1.msra.mxu0 %v191
    %1214 = vmatprep.subr.mxu0 %v198
    %1215 = vmatpush1.msra.mxu0 %v197
    %1216 = vmatprep.subr.mxu0 %v204
    %1217 = vmatpush1.msra.mxu0 %v203
    %1218 = vmatprep.subr.mxu0 %v210
    %1219 = vmatpush1.msra.mxu0 %v209
    %1220 = vmatprep.subr.mxu0 %v216
    %1221 = vmatpush1.msra.mxu0 %v215
    %1222 = vmatprep.subr.mxu0 %v222
    %1223 = vmatpush1.msra.mxu0 %v221
    %1224 = vmatprep.subr.mxu0 %v228
    %1225 = vmatpush1.msra.mxu0 %v227
    %1226 = vmatprep.subr.mxu0 %v234
    %1227 = vmatpush1.msra.mxu0 %v233
    %1228 = vmatprep.subr.mxu0 %v240
    %1229 = vmatpush1.msra.mxu0 %v239
    %1230 = vmatprep.subr.mxu0 %v246
    %1231 = vmatpush1.msra.mxu0 %v245
    %1232 = vmatprep.subr.mxu0 %v252
    %1233 = vmatpush1.msra.mxu0 %v251
    %1234 = vmatprep.subr.mxu0 %v258
    %1235 = vmatpush1.msra.mxu0 %v257
    %1236 = vmatprep.subr.mxu0 %v264
    %1237 = vmatpush1.msra.mxu0 %v263
    %1238 = vmatprep.subr.mxu0 %v270
    %1239 = vmatpush1.msra.mxu0 %v269
    %1240 = vmatprep.subr.mxu0 %v276
    %1241 = vmatpush1.msra.mxu0 %v275
    %1242 = vmatprep.subr.mxu0 %v282
    %1243 = vmatpush1.msra.mxu0 %v281
    %1244 = vmatprep.subr.mxu0 %v288
    %1245 = vmatpush1.msra.mxu0 %v287
    %1246 = vmatprep.subr.mxu0 %v294
    %1247 = vmatpush1.msra.mxu0 %v293
    %1248 = vmatprep.subr.mxu0 %v300
    %1249 = vmatpush1.msra.mxu0 %v299
    %1250 = vmatprep.subr.mxu0 %v306
    %1251 = vmatpush1.msra.mxu0 %v305
    %1252 = vmatprep.subr.mxu0 %v312
    %1253 = vmatpush1.msra.mxu0 %v311
    %1254 = vmatprep.subr.mxu0 %v318
    %1255 = vmatpush1.msra.mxu0 %v317
    %1256 = vmatprep.subr.mxu0 %v324
    %1257 = vmatpush1.msra.mxu0 %v323
    %1258 = vmatprep.subr.mxu0 %v330
    %1259 = vmatpush1.msra.mxu0 %v329
    %1260 = vmatprep.subr.mxu0 %v336
    %1261 = vmatpush1.msra.mxu0 %v335
    %1262 = vmatprep.subr.mxu0 %v342
    %1263 = vmatpush1.msra.mxu0 %v341
    %1264 = vmatprep.subr.mxu0 %v348
    %1265 = vmatpush1.msra.mxu0 %v347
    %1266 = vmatprep.subr.mxu0 %v354
    %1267 = vmatpush1.msra.mxu0 %v353
    %1268 = vmatprep.subr.mxu0 %v360
    %1269 = vmatpush1.msra.mxu0 %v359
    %1270 = vmatprep.subr.mxu0 %v366
    %1271 = vmatpush1.msra.mxu0 %v365
    %1272 = vmatprep.subr.mxu0 %v372
    %1273 = vmatpush1.msra.mxu0 %v371
    %1274 = vmatprep.subr.mxu0 %v378
    %1275 = vmatpush1.msra.mxu0 %v377
    %1276 = vmatprep.mubr.f32.mxu0 %v1199
    %1277 = vmatmul.mubr.f32.gmra.mrb[0].mxu0 %v1195
    %v1278 = vpop.f32.mrb[0].mxu0
    %v1279 = vadd.f32 0.0, %v1278
    %v1280 = vpop.f32.mrb[0].mxu0
    %v1281 = vadd.f32 0.0, %v1280
    %1282 = vdwg.mxu0
    %1283 = vmatprep.subr.mxu0 %v194
    %1284 = vmatpush1.msra.mxu0 %v193
    %1285 = vmatprep.subr.mxu0 %v200
    %1286 = vmatpush1.msra.mxu0 %v199
    %1287 = vmatprep.subr.mxu0 %v206
    %1288 = vmatpush1.msra.mxu0 %v205
    %1289 = vmatprep.subr.mxu0 %v212
    %1290 = vmatpush1.msra.mxu0 %v211
    %1291 = vmatprep.subr.mxu0 %v218
    %1292 = vmatpush1.msra.mxu0 %v217
    %1293 = vmatprep.subr.mxu0 %v224
    %1294 = vmatpush1.msra.mxu0 %v223
    %1295 = vmatprep.subr.mxu0 %v230
    %1296 = vmatpush1.msra.mxu0 %v229
    %1297 = vmatprep.subr.mxu0 %v236
    %1298 = vmatpush1.msra.mxu0 %v235
    %1299 = vmatprep.subr.mxu0 %v242
    %1300 = vmatpush1.msra.mxu0 %v241
    %1301 = vmatprep.subr.mxu0 %v248
    %1302 = vmatpush1.msra.mxu0 %v247
    %1303 = vmatprep.subr.mxu0 %v254
    %1304 = vmatpush1.msra.mxu0 %v253
    %1305 = vmatprep.subr.mxu0 %v260
    %1306 = vmatpush1.msra.mxu0 %v259
    %1307 = vmatprep.subr.mxu0 %v266
    %1308 = vmatpush1.msra.mxu0 %v265
    %1309 = vmatprep.subr.mxu0 %v272
    %1310 = vmatpush1.msra.mxu0 %v271
    %1311 = vmatprep.subr.mxu0 %v278
    %1312 = vmatpush1.msra.mxu0 %v277
    %1313 = vmatprep.subr.mxu0 %v284
    %1314 = vmatpush1.msra.mxu0 %v283
    %1315 = vmatprep.subr.mxu0 %v290
    %1316 = vmatpush1.msra.mxu0 %v289
    %1317 = vmatprep.subr.mxu0 %v296
    %1318 = vmatpush1.msra.mxu0 %v295
    %1319 = vmatprep.subr.mxu0 %v302
    %1320 = vmatpush1.msra.mxu0 %v301
    %1321 = vmatprep.subr.mxu0 %v308
    %1322 = vmatpush1.msra.mxu0 %v307
    %1323 = vmatprep.subr.mxu0 %v314
    %1324 = vmatpush1.msra.mxu0 %v313
    %1325 = vmatprep.subr.mxu0 %v320
    %1326 = vmatpush1.msra.mxu0 %v319
    %1327 = vmatprep.subr.mxu0 %v326
    %1328 = vmatpush1.msra.mxu0 %v325
    %1329 = vmatprep.subr.mxu0 %v332
    %1330 = vmatpush1.msra.mxu0 %v331
    %1331 = vmatprep.subr.mxu0 %v338
    %1332 = vmatpush1.msra.mxu0 %v337
    %1333 = vmatprep.subr.mxu0 %v344
    %1334 = vmatpush1.msra.mxu0 %v343
    %1335 = vmatprep.subr.mxu0 %v350
    %1336 = vmatpush1.msra.mxu0 %v349
    %1337 = vmatprep.subr.mxu0 %v356
    %1338 = vmatpush1.msra.mxu0 %v355
    %1339 = vmatprep.subr.mxu0 %v362
    %1340 = vmatpush1.msra.mxu0 %v361
    %1341 = vmatprep.subr.mxu0 %v368
    %1342 = vmatpush1.msra.mxu0 %v367
    %1343 = vmatprep.subr.mxu0 %v374
    %1344 = vmatpush1.msra.mxu0 %v373
    %1345 = vmatprep.subr.mxu0 %v380
    %1346 = vmatpush1.msra.mxu0 %v379
    %1347 = vmatprep.mubr.f32.mxu0 %v1199
    %1348 = vmatmul.mubr.f32.gmra.mrb[0].mxu0 %v1195
    %v1349 = vpop.f32.mrb[0].mxu0
    %v1350 = vadd.f32 0.0, %v1349
    %v1351 = vpop.f32.mrb[0].mxu0
    %v1352 = vadd.f32 0.0, %v1351
    %1353 = vdwg.mxu0
    %1354 = vmatprep.subr.mxu0 %v196
    %1355 = vmatpush1.msra.mxu0 %v195
    %1356 = vmatprep.subr.mxu0 %v202
    %1357 = vmatpush1.msra.mxu0 %v201
    %1358 = vmatprep.subr.mxu0 %v208
    %1359 = vmatpush1.msra.mxu0 %v207
    %1360 = vmatprep.subr.mxu0 %v214
    %1361 = vmatpush1.msra.mxu0 %v213
    %1362 = vmatprep.subr.mxu0 %v220
    %1363 = vmatpush1.msra.mxu0 %v219
    %1364 = vmatprep.subr.mxu0 %v226
    %1365 = vmatpush1.msra.mxu0 %v225
    %1366 = vmatprep.subr.mxu0 %v232
    %1367 = vmatpush1.msra.mxu0 %v231
    %1368 = vmatprep.subr.mxu0 %v238
    %1369 = vmatpush1.msra.mxu0 %v237
    %1370 = vmatprep.subr.mxu0 %v244
    %1371 = vmatpush1.msra.mxu0 %v243
    %1372 = vmatprep.subr.mxu0 %v250
    %1373 = vmatpush1.msra.mxu0 %v249
    %1374 = vmatprep.subr.mxu0 %v256
    %1375 = vmatpush1.msra.mxu0 %v255
    %1376 = vmatprep.subr.mxu0 %v262
    %1377 = vmatpush1.msra.mxu0 %v261
    %1378 = vmatprep.subr.mxu0 %v268
    %1379 = vmatpush1.msra.mxu0 %v267
    %1380 = vmatprep.subr.mxu0 %v274
    %1381 = vmatpush1.msra.mxu0 %v273
    %1382 = vmatprep.subr.mxu0 %v280
    %1383 = vmatpush1.msra.mxu0 %v279
    %1384 = vmatprep.subr.mxu0 %v286
    %1385 = vmatpush1.msra.mxu0 %v285
    %1386 = vmatprep.subr.mxu0 %v292
    %1387 = vmatpush1.msra.mxu0 %v291
    %1388 = vmatprep.subr.mxu0 %v298
    %1389 = vmatpush1.msra.mxu0 %v297
    %1390 = vmatprep.subr.mxu0 %v304
    %1391 = vmatpush1.msra.mxu0 %v303
    %1392 = vmatprep.subr.mxu0 %v310
    %1393 = vmatpush1.msra.mxu0 %v309
    %1394 = vmatprep.subr.mxu0 %v316
    %1395 = vmatpush1.msra.mxu0 %v315
    %1396 = vmatprep.subr.mxu0 %v322
    %1397 = vmatpush1.msra.mxu0 %v321
    %1398 = vmatprep.subr.mxu0 %v328
    %1399 = vmatpush1.msra.mxu0 %v327
    %1400 = vmatprep.subr.mxu0 %v334
    %1401 = vmatpush1.msra.mxu0 %v333
    %1402 = vmatprep.subr.mxu0 %v340
    %1403 = vmatpush1.msra.mxu0 %v339
    %1404 = vmatprep.subr.mxu0 %v346
    %1405 = vmatpush1.msra.mxu0 %v345
    %1406 = vmatprep.subr.mxu0 %v352
    %1407 = vmatpush1.msra.mxu0 %v351
    %1408 = vmatprep.subr.mxu0 %v358
    %1409 = vmatpush1.msra.mxu0 %v357
    %1410 = vmatprep.subr.mxu0 %v364
    %1411 = vmatpush1.msra.mxu0 %v363
    %1412 = vmatprep.subr.mxu0 %v370
    %1413 = vmatpush1.msra.mxu0 %v369
    %1414 = vmatprep.subr.mxu0 %v376
    %1415 = vmatpush1.msra.mxu0 %v375
    %1416 = vmatprep.subr.mxu0 %v382
    %1417 = vmatpush1.msra.mxu0 %v381
    %1418 = vmatprep.mubr.f32.mxu0 %v1199
    %1419 = vmatmul.mubr.f32.gmra.mrb[0].mxu0 %v1195
    %v1420 = vpop.f32.mrb[0].mxu0
    %v1421 = vadd.f32 0.0, %v1420
    %v1422 = vpop.f32.mrb[0].mxu0
    %v1423 = vadd.f32 0.0, %v1422
    %1424 = vdwg.mxu0
    %v1425 = vadd.f32 %v1205, %v1279
    %v1426 = vxor.u32 %v1425, 2147483648
    %v1427 = vmul.f32 %v1426, 1.442695
    %v1428 = vpow.pop %v1427
    %v1429 = vadd.f32 %v1428, 1.0
    %v1430 = vrcp.pop %v1429
    %v1431 = vmul.f32 1.0, %v1430
    %v1432 = vadd.f32 %v1206, %v1281
    %v1433 = vxor.u32 %v1432, 2147483648
    %v1434 = vmul.f32 %v1433, 1.442695
    %v1435 = vpow.pop %v1434
    %v1436 = vadd.f32 %v1435, 1.0
    %v1437 = vrcp.pop %v1436
    %v1438 = vmul.f32 1.0, %v1437
    %v1439 = vadd.f32 %v1350, %v625
    %v1440 = vmul.f32 %v1431, %v1439
    %v1441 = vadd.f32 %v1207, %v1440
    %v1442 = vtanh.pop %v1441
    %v1443 = vadd.f32 %v1209, %v1352
    %v1444 = vxor.u32 %v1443, 2147483648
    %v1445 = vmul.f32 %v1444, 1.442695
    %v1446 = vpow.pop %v1445
    %v1447 = vadd.f32 %v1446, 1.0
    %v1448 = vrcp.pop %v1447
    %v1449 = vmul.f32 1.0, %v1448
    %v1450 = vadd.f32 %v1210, %v1421
    %v1451 = vxor.u32 %v1450, 2147483648
    %v1452 = vmul.f32 %v1451, 1.442695
    %v1453 = vpow.pop %v1452
    %v1454 = vadd.f32 %v1453, 1.0
    %v1455 = vrcp.pop %v1454
    %v1456 = vmul.f32 1.0, %v1455
    %v1457 = vadd.f32 %v1423, %v649
    %v1458 = vmul.f32 %v1449, %v1457
    %v1459 = vadd.f32 %v1211, %v1458
    %v1460 = vtanh.pop %v1459
    %v1461 = vsub.f32 1.0, %v1438
    %v1462 = vmul.f32 %v1461, %v1442
    %v1463 = vmul.f32 %v1438, %v1195
    %v1464 = vadd.f32 %v1462, %v1463
    %v1465 = vsub.f32 1.0, %v1456
    %v1466 = vmul.f32 %v1465, %v1460
    %v1467 = vmul.f32 %v1456, %v1199
    %v1468 = vadd.f32 %v1466, %v1467
    %s1469 = scalar_lea.vmem %s4, 24
    %1470 = vst [vmem:[%s1469] sm:$0xff] %v1464
    %s1471 = scalar_lea.vmem %s182, 32
    %1472 = vst [vmem:[%s1471] sm:$0xff] %v1468
    %s1473 = scalar_lea.vmem [#allocation3], 96
    %v1474 = vld [vmem:[%s1473] sm:$0xff]
    %v1475 = vld [vmem:[%s1473 + $0x8] sm:$0xff]
    %v1476 = vld [vmem:[%s1473 + $0x10] sm:$0xff]
    %s1477 = scalar_lea.vmem [#allocation4], 72
    %v1478 = vld [vmem:[%s1477] sm:$0xff]
    %v1479 = vld [vmem:[%s1477 + $0x8] sm:$0xff]
    %v1480 = vld [vmem:[%s1477 + $0x10] sm:$0xff]
    %1481 = vmatprep.subr.mxu0 %v192
    %1482 = vmatpush1.msra.mxu0 %v191
    %1483 = vmatprep.subr.mxu0 %v198
    %1484 = vmatpush1.msra.mxu0 %v197
    %1485 = vmatprep.subr.mxu0 %v204
    %1486 = vmatpush1.msra.mxu0 %v203
    %1487 = vmatprep.subr.mxu0 %v210
    %1488 = vmatpush1.msra.mxu0 %v209
    %1489 = vmatprep.subr.mxu0 %v216
    %1490 = vmatpush1.msra.mxu0 %v215
    %1491 = vmatprep.subr.mxu0 %v222
    %1492 = vmatpush1.msra.mxu0 %v221
    %1493 = vmatprep.subr.mxu0 %v228
    %1494 = vmatpush1.msra.mxu0 %v227
    %1495 = vmatprep.subr.mxu0 %v234
    %1496 = vmatpush1.msra.mxu0 %v233
    %1497 = vmatprep.subr.mxu0 %v240
    %1498 = vmatpush1.msra.mxu0 %v239
    %1499 = vmatprep.subr.mxu0 %v246
    %1500 = vmatpush1.msra.mxu0 %v245
    %1501 = vmatprep.subr.mxu0 %v252
    %1502 = vmatpush1.msra.mxu0 %v251
    %1503 = vmatprep.subr.mxu0 %v258
    %1504 = vmatpush1.msra.mxu0 %v257
    %1505 = vmatprep.subr.mxu0 %v264
    %1506 = vmatpush1.msra.mxu0 %v263
    %1507 = vmatprep.subr.mxu0 %v270
    %1508 = vmatpush1.msra.mxu0 %v269
    %1509 = vmatprep.subr.mxu0 %v276
    %1510 = vmatpush1.msra.mxu0 %v275
    %1511 = vmatprep.subr.mxu0 %v282
    %1512 = vmatpush1.msra.mxu0 %v281
    %1513 = vmatprep.subr.mxu0 %v288
    %1514 = vmatpush1.msra.mxu0 %v287
    %1515 = vmatprep.subr.mxu0 %v294
    %1516 = vmatpush1.msra.mxu0 %v293
    %1517 = vmatprep.subr.mxu0 %v300
    %1518 = vmatpush1.msra.mxu0 %v299
    %1519 = vmatprep.subr.mxu0 %v306
    %1520 = vmatpush1.msra.mxu0 %v305
    %1521 = vmatprep.subr.mxu0 %v312
    %1522 = vmatpush1.msra.mxu0 %v311
    %1523 = vmatprep.subr.mxu0 %v318
    %1524 = vmatpush1.msra.mxu0 %v317
    %1525 = vmatprep.subr.mxu0 %v324
    %1526 = vmatpush1.msra.mxu0 %v323
    %1527 = vmatprep.subr.mxu0 %v330
    %1528 = vmatpush1.msra.mxu0 %v329
    %1529 = vmatprep.subr.mxu0 %v336
    %1530 = vmatpush1.msra.mxu0 %v335
    %1531 = vmatprep.subr.mxu0 %v342
    %1532 = vmatpush1.msra.mxu0 %v341
    %1533 = vmatprep.subr.mxu0 %v348
    %1534 = vmatpush1.msra.mxu0 %v347
    %1535 = vmatprep.subr.mxu0 %v354
    %1536 = vmatpush1.msra.mxu0 %v353
    %1537 = vmatprep.subr.mxu0 %v360
    %1538 = vmatpush1.msra.mxu0 %v359
    %1539 = vmatprep.subr.mxu0 %v366
    %1540 = vmatpush1.msra.mxu0 %v365
    %1541 = vmatprep.subr.mxu0 %v372
    %1542 = vmatpush1.msra.mxu0 %v371
    %1543 = vmatprep.subr.mxu0 %v378
    %1544 = vmatpush1.msra.mxu0 %v377
    %1545 = vmatprep.mubr.f32.mxu0 %v1468
    %1546 = vmatmul.mubr.f32.gmra.mrb[0].mxu0 %v1464
    %v1547 = vpop.f32.mrb[0].mxu0
    %v1548 = vadd.f32 0.0, %v1547
    %v1549 = vpop.f32.mrb[0].mxu0
    %v1550 = vadd.f32 0.0, %v1549
    %1551 = vdwg.mxu0
    %1552 = vmatprep.subr.mxu0 %v194
    %1553 = vmatpush1.msra.mxu0 %v193
    %1554 = vmatprep.subr.mxu0 %v200
    %1555 = vmatpush1.msra.mxu0 %v199
    %1556 = vmatprep.subr.mxu0 %v206
    %1557 = vmatpush1.msra.mxu0 %v205
    %1558 = vmatprep.subr.mxu0 %v212
    %1559 = vmatpush1.msra.mxu0 %v211
    %1560 = vmatprep.subr.mxu0 %v218
    %1561 = vmatpush1.msra.mxu0 %v217
    %1562 = vmatprep.subr.mxu0 %v224
    %1563 = vmatpush1.msra.mxu0 %v223
    %1564 = vmatprep.subr.mxu0 %v230
    %1565 = vmatpush1.msra.mxu0 %v229
    %1566 = vmatprep.subr.mxu0 %v236
    %1567 = vmatpush1.msra.mxu0 %v235
    %1568 = vmatprep.subr.mxu0 %v242
    %1569 = vmatpush1.msra.mxu0 %v241
    %1570 = vmatprep.subr.mxu0 %v248
    %1571 = vmatpush1.msra.mxu0 %v247
    %1572 = vmatprep.subr.mxu0 %v254
    %1573 = vmatpush1.msra.mxu0 %v253
    %1574 = vmatprep.subr.mxu0 %v260
    %1575 = vmatpush1.msra.mxu0 %v259
    %1576 = vmatprep.subr.mxu0 %v266
    %1577 = vmatpush1.msra.mxu0 %v265
    %1578 = vmatprep.subr.mxu0 %v272
    %1579 = vmatpush1.msra.mxu0 %v271
    %1580 = vmatprep.subr.mxu0 %v278
    %1581 = vmatpush1.msra.mxu0 %v277
    %1582 = vmatprep.subr.mxu0 %v284
    %1583 = vmatpush1.msra.mxu0 %v283
    %1584 = vmatprep.subr.mxu0 %v290
    %1585 = vmatpush1.msra.mxu0 %v289
    %1586 = vmatprep.subr.mxu0 %v296
    %1587 = vmatpush1.msra.mxu0 %v295
    %1588 = vmatprep.subr.mxu0 %v302
    %1589 = vmatpush1.msra.mxu0 %v301
    %1590 = vmatprep.subr.mxu0 %v308
    %1591 = vmatpush1.msra.mxu0 %v307
    %1592 = vmatprep.subr.mxu0 %v314
    %1593 = vmatpush1.msra.mxu0 %v313
    %1594 = vmatprep.subr.mxu0 %v320
    %1595 = vmatpush1.msra.mxu0 %v319
    %1596 = vmatprep.subr.mxu0 %v326
    %1597 = vmatpush1.msra.mxu0 %v325
    %1598 = vmatprep.subr.mxu0 %v332
    %1599 = vmatpush1.msra.mxu0 %v331
    %1600 = vmatprep.subr.mxu0 %v338
    %1601 = vmatpush1.msra.mxu0 %v337
    %1602 = vmatprep.subr.mxu0 %v344
    %1603 = vmatpush1.msra.mxu0 %v343
    %1604 = vmatprep.subr.mxu0 %v350
    %1605 = vmatpush1.msra.mxu0 %v349
    %1606 = vmatprep.subr.mxu0 %v356
    %1607 = vmatpush1.msra.mxu0 %v355
    %1608 = vmatprep.subr.mxu0 %v362
    %1609 = vmatpush1.msra.mxu0 %v361
    %1610 = vmatprep.subr.mxu0 %v368
    %1611 = vmatpush1.msra.mxu0 %v367
    %1612 = vmatprep.subr.mxu0 %v374
    %1613 = vmatpush1.msra.mxu0 %v373
    %1614 = vmatprep.subr.mxu0 %v380
    %1615 = vmatpush1.msra.mxu0 %v379
    %1616 = vmatprep.mubr.f32.mxu0 %v1468
    %1617 = vmatmul.mubr.f32.gmra.mrb[0].mxu0 %v1464
    %v1618 = vpop.f32.mrb[0].mxu0
    %v1619 = vadd.f32 0.0, %v1618
    %v1620 = vpop.f32.mrb[0].mxu0
    %v1621 = vadd.f32 0.0, %v1620
    %1622 = vdwg.mxu0
    %1623 = vmatprep.subr.mxu0 %v196
    %1624 = vmatpush1.msra.mxu0 %v195
    %1625 = vmatprep.subr.mxu0 %v202
    %1626 = vmatpush1.msra.mxu0 %v201
    %1627 = vmatprep.subr.mxu0 %v208
    %1628 = vmatpush1.msra.mxu0 %v207
    %1629 = vmatprep.subr.mxu0 %v214
    %1630 = vmatpush1.msra.mxu0 %v213
    %1631 = vmatprep.subr.mxu0 %v220
    %1632 = vmatpush1.msra.mxu0 %v219
    %1633 = vmatprep.subr.mxu0 %v226
    %1634 = vmatpush1.msra.mxu0 %v225
    %1635 = vmatprep.subr.mxu0 %v232
    %1636 = vmatpush1.msra.mxu0 %v231
    %1637 = vmatprep.subr.mxu0 %v238
    %1638 = vmatpush1.msra.mxu0 %v237
    %1639 = vmatprep.subr.mxu0 %v244
    %1640 = vmatpush1.msra.mxu0 %v243
    %1641 = vmatprep.subr.mxu0 %v250
    %1642 = vmatpush1.msra.mxu0 %v249
    %1643 = vmatprep.subr.mxu0 %v256
    %1644 = vmatpush1.msra.mxu0 %v255
    %1645 = vmatprep.subr.mxu0 %v262
    %1646 = vmatpush1.msra.mxu0 %v261
    %1647 = vmatprep.subr.mxu0 %v268
    %1648 = vmatpush1.msra.mxu0 %v267
    %1649 = vmatprep.subr.mxu0 %v274
    %1650 = vmatpush1.msra.mxu0 %v273
    %1651 = vmatprep.subr.mxu0 %v280
    %1652 = vmatpush1.msra.mxu0 %v279
    %1653 = vmatprep.subr.mxu0 %v286
    %1654 = vmatpush1.msra.mxu0 %v285
    %1655 = vmatprep.subr.mxu0 %v292
    %1656 = vmatpush1.msra.mxu0 %v291
    %1657 = vmatprep.subr.mxu0 %v298
    %1658 = vmatpush1.msra.mxu0 %v297
    %1659 = vmatprep.subr.mxu0 %v304
    %1660 = vmatpush1.msra.mxu0 %v303
    %1661 = vmatprep.subr.mxu0 %v310
    %1662 = vmatpush1.msra.mxu0 %v309
    %1663 = vmatprep.subr.mxu0 %v316
    %1664 = vmatpush1.msra.mxu0 %v315
    %1665 = vmatprep.subr.mxu0 %v322
    %1666 = vmatpush1.msra.mxu0 %v321
    %1667 = vmatprep.subr.mxu0 %v328
    %1668 = vmatpush1.msra.mxu0 %v327
    %1669 = vmatprep.subr.mxu0 %v334
    %1670 = vmatpush1.msra.mxu0 %v333
    %1671 = vmatprep.subr.mxu0 %v340
    %1672 = vmatpush1.msra.mxu0 %v339
    %1673 = vmatprep.subr.mxu0 %v346
    %1674 = vmatpush1.msra.mxu0 %v345
    %1675 = vmatprep.subr.mxu0 %v352
    %1676 = vmatpush1.msra.mxu0 %v351
    %1677 = vmatprep.subr.mxu0 %v358
    %1678 = vmatpush1.msra.mxu0 %v357
    %1679 = vmatprep.subr.mxu0 %v364
    %1680 = vmatpush1.msra.mxu0 %v363
    %1681 = vmatprep.subr.mxu0 %v370
    %1682 = vmatpush1.msra.mxu0 %v369
    %1683 = vmatprep.subr.mxu0 %v376
    %1684 = vmatpush1.msra.mxu0 %v375
    %1685 = vmatprep.subr.mxu0 %v382
    %1686 = vmatpush1.msra.mxu0 %v381
    %1687 = vmatprep.mubr.f32.mxu0 %v1468
    %1688 = vmatmul.mubr.f32.gmra.mrb[0].mxu0 %v1464
    %v1689 = vpop.f32.mrb[0].mxu0
    %v1690 = vadd.f32 0.0, %v1689
    %v1691 = vpop.f32.mrb[0].mxu0
    %v1692 = vadd.f32 0.0, %v1691
    %1693 = vdwg.mxu0
    %v1694 = vadd.f32 %v1474, %v1548
    %v1695 = vxor.u32 %v1694, 2147483648
    %v1696 = vmul.f32 %v1695, 1.442695
    %v1697 = vpow.pop %v1696
    %v1698 = vadd.f32 %v1697, 1.0
    %v1699 = vrcp.pop %v1698
    %v1700 = vmul.f32 1.0, %v1699
    %v1701 = vadd.f32 %v1475, %v1550
    %v1702 = vxor.u32 %v1701, 2147483648
    %v1703 = vmul.f32 %v1702, 1.442695
    %v1704 = vpow.pop %v1703
    %v1705 = vadd.f32 %v1704, 1.0
    %v1706 = vrcp.pop %v1705
    %v1707 = vmul.f32 1.0, %v1706
    %v1708 = vadd.f32 %v1619, %v625
    %v1709 = vmul.f32 %v1700, %v1708
    %v1710 = vadd.f32 %v1476, %v1709
    %v1711 = vtanh.pop %v1710
    %v1712 = vadd.f32 %v1478, %v1621
    %v1713 = vxor.u32 %v1712, 2147483648
    %v1714 = vmul.f32 %v1713, 1.442695
    %v1715 = vpow.pop %v1714
    %v1716 = vadd.f32 %v1715, 1.0
    %v1717 = vrcp.pop %v1716
    %v1718 = vmul.f32 1.0, %v1717
    %v1719 = vadd.f32 %v1479, %v1690
    %v1720 = vxor.u32 %v1719, 2147483648
    %v1721 = vmul.f32 %v1720, 1.442695
    %v1722 = vpow.pop %v1721
    %v1723 = vadd.f32 %v1722, 1.0
    %v1724 = vrcp.pop %v1723
    %v1725 = vmul.f32 1.0, %v1724
    %v1726 = vadd.f32 %v1692, %v649
    %v1727 = vmul.f32 %v1718, %v1726
    %v1728 = vadd.f32 %v1480, %v1727
    %v1729 = vtanh.pop %v1728
    %v1730 = vsub.f32 1.0, %v1707
    %v1731 = vmul.f32 %v1730, %v1711
    %v1732 = vmul.f32 %v1707, %v1464
    %v1733 = vadd.f32 %v1731, %v1732
    %v1734 = vsub.f32 1.0, %v1725
    %v1735 = vmul.f32 %v1734, %v1729
    %v1736 = vmul.f32 %v1725, %v1468
    %v1737 = vadd.f32 %v1735, %v1736
    %s1738 = scalar_lea.vmem %s4, 32
    %1739 = vst [vmem:[%s1738] sm:$0xff] %v1733
    %s1740 = scalar_lea.vmem %s182, 24
    %1741 = vst [vmem:[%s1740] sm:$0xff] %v1737
    %s1742 = scalar_lea.vmem [#allocation3], 120
    %v1743 = vld [vmem:[%s1742] sm:$0xff]
    %v1744 = vld [vmem:[%s1742 + $0x8] sm:$0xff]
    %v1745 = vld [vmem:[%s1742 + $0x10] sm:$0xff]
    %s1746 = scalar_lea.vmem [#allocation4], 48
    %v1747 = vld [vmem:[%s1746] sm:$0xff]
    %v1748 = vld [vmem:[%s1746 + $0x8] sm:$0xff]
    %v1749 = vld [vmem:[%s1746 + $0x10] sm:$0xff]
    %1750 = vmatprep.subr.mxu0 %v192
    %1751 = vmatpush1.msra.mxu0 %v191
    %1752 = vmatprep.subr.mxu0 %v198
    %1753 = vmatpush1.msra.mxu0 %v197
    %1754 = vmatprep.subr.mxu0 %v204
    %1755 = vmatpush1.msra.mxu0 %v203
    %1756 = vmatprep.subr.mxu0 %v210
    %1757 = vmatpush1.msra.mxu0 %v209
    %1758 = vmatprep.subr.mxu0 %v216
    %1759 = vmatpush1.msra.mxu0 %v215
    %1760 = vmatprep.subr.mxu0 %v222
    %1761 = vmatpush1.msra.mxu0 %v221
    %1762 = vmatprep.subr.mxu0 %v228
    %1763 = vmatpush1.msra.mxu0 %v227
    %1764 = vmatprep.subr.mxu0 %v234
    %1765 = vmatpush1.msra.mxu0 %v233
    %1766 = vmatprep.subr.mxu0 %v240
    %1767 = vmatpush1.msra.mxu0 %v239
    %1768 = vmatprep.subr.mxu0 %v246
    %1769 = vmatpush1.msra.mxu0 %v245
    %1770 = vmatprep.subr.mxu0 %v252
    %1771 = vmatpush1.msra.mxu0 %v251
    %1772 = vmatprep.subr.mxu0 %v258
    %1773 = vmatpush1.msra.mxu0 %v257
    %1774 = vmatprep.subr.mxu0 %v264
    %1775 = vmatpush1.msra.mxu0 %v263
    %1776 = vmatprep.subr.mxu0 %v270
    %1777 = vmatpush1.msra.mxu0 %v269
    %1778 = vmatprep.subr.mxu0 %v276
    %1779 = vmatpush1.msra.mxu0 %v275
    %1780 = vmatprep.subr.mxu0 %v282
    %1781 = vmatpush1.msra.mxu0 %v281
    %1782 = vmatprep.subr.mxu0 %v288
    %1783 = vmatpush1.msra.mxu0 %v287
    %1784 = vmatprep.subr.mxu0 %v294
    %1785 = vmatpush1.msra.mxu0 %v293
    %1786 = vmatprep.subr.mxu0 %v300
    %1787 = vmatpush1.msra.mxu0 %v299
    %1788 = vmatprep.subr.mxu0 %v306
    %1789 = vmatpush1.msra.mxu0 %v305
    %1790 = vmatprep.subr.mxu0 %v312
    %1791 = vmatpush1.msra.mxu0 %v311
    %1792 = vmatprep.subr.mxu0 %v318
    %1793 = vmatpush1.msra.mxu0 %v317
    %1794 = vmatprep.subr.mxu0 %v324
    %1795 = vmatpush1.msra.mxu0 %v323
    %1796 = vmatprep.subr.mxu0 %v330
    %1797 = vmatpush1.msra.mxu0 %v329
    %1798 = vmatprep.subr.mxu0 %v336
    %1799 = vmatpush1.msra.mxu0 %v335
    %1800 = vmatprep.subr.mxu0 %v342
    %1801 = vmatpush1.msra.mxu0 %v341
    %1802 = vmatprep.subr.mxu0 %v348
    %1803 = vmatpush1.msra.mxu0 %v347
    %1804 = vmatprep.subr.mxu0 %v354
    %1805 = vmatpush1.msra.mxu0 %v353
    %1806 = vmatprep.subr.mxu0 %v360
    %1807 = vmatpush1.msra.mxu0 %v359
    %1808 = vmatprep.subr.mxu0 %v366
    %1809 = vmatpush1.msra.mxu0 %v365
    %1810 = vmatprep.subr.mxu0 %v372
    %1811 = vmatpush1.msra.mxu0 %v371
    %1812 = vmatprep.subr.mxu0 %v378
    %1813 = vmatpush1.msra.mxu0 %v377
    %1814 = vmatprep.mubr.f32.mxu0 %v1737
    %1815 = vmatmul.mubr.f32.gmra.mrb[0].mxu0 %v1733
    %v1816 = vpop.f32.mrb[0].mxu0
    %v1817 = vadd.f32 0.0, %v1816
    %v1818 = vpop.f32.mrb[0].mxu0
    %v1819 = vadd.f32 0.0, %v1818
    %1820 = vdwg.mxu0
    %1821 = vmatprep.subr.mxu0 %v194
    %1822 = vmatpush1.msra.mxu0 %v193
    %1823 = vmatprep.subr.mxu0 %v200
    %1824 = vmatpush1.msra.mxu0 %v199
    %1825 = vmatprep.subr.mxu0 %v206
    %1826 = vmatpush1.msra.mxu0 %v205
    %1827 = vmatprep.subr.mxu0 %v212
    %1828 = vmatpush1.msra.mxu0 %v211
    %1829 = vmatprep.subr.mxu0 %v218
    %1830 = vmatpush1.msra.mxu0 %v217
    %1831 = vmatprep.subr.mxu0 %v224
    %1832 = vmatpush1.msra.mxu0 %v223
    %1833 = vmatprep.subr.mxu0 %v230
    %1834 = vmatpush1.msra.mxu0 %v229
    %1835 = vmatprep.subr.mxu0 %v236
    %1836 = vmatpush1.msra.mxu0 %v235
    %1837 = vmatprep.subr.mxu0 %v242
    %1838 = vmatpush1.msra.mxu0 %v241
    %1839 = vmatprep.subr.mxu0 %v248
    %1840 = vmatpush1.msra.mxu0 %v247
    %1841 = vmatprep.subr.mxu0 %v254
    %1842 = vmatpush1.msra.mxu0 %v253
    %1843 = vmatprep.subr.mxu0 %v260
    %1844 = vmatpush1.msra.mxu0 %v259
    %1845 = vmatprep.subr.mxu0 %v266
    %1846 = vmatpush1.msra.mxu0 %v265
    %1847 = vmatprep.subr.mxu0 %v272
    %1848 = vmatpush1.msra.mxu0 %v271
    %1849 = vmatprep.subr.mxu0 %v278
    %1850 = vmatpush1.msra.mxu0 %v277
    %1851 = vmatprep.subr.mxu0 %v284
    %1852 = vmatpush1.msra.mxu0 %v283
    %1853 = vmatprep.subr.mxu0 %v290
    %1854 = vmatpush1.msra.mxu0 %v289
    %1855 = vmatprep.subr.mxu0 %v296
    %1856 = vmatpush1.msra.mxu0 %v295
    %1857 = vmatprep.subr.mxu0 %v302
    %1858 = vmatpush1.msra.mxu0 %v301
    %1859 = vmatprep.subr.mxu0 %v308
    %1860 = vmatpush1.msra.mxu0 %v307
    %1861 = vmatprep.subr.mxu0 %v314
    %1862 = vmatpush1.msra.mxu0 %v313
    %1863 = vmatprep.subr.mxu0 %v320
    %1864 = vmatpush1.msra.mxu0 %v319
    %1865 = vmatprep.subr.mxu0 %v326
    %1866 = vmatpush1.msra.mxu0 %v325
    %1867 = vmatprep.subr.mxu0 %v332
    %1868 = vmatpush1.msra.mxu0 %v331
    %1869 = vmatprep.subr.mxu0 %v338
    %1870 = vmatpush1.msra.mxu0 %v337
    %1871 = vmatprep.subr.mxu0 %v344
    %1872 = vmatpush1.msra.mxu0 %v343
    %1873 = vmatprep.subr.mxu0 %v350
    %1874 = vmatpush1.msra.mxu0 %v349
    %1875 = vmatprep.subr.mxu0 %v356
    %1876 = vmatpush1.msra.mxu0 %v355
    %1877 = vmatprep.subr.mxu0 %v362
    %1878 = vmatpush1.msra.mxu0 %v361
    %1879 = vmatprep.subr.mxu0 %v368
    %1880 = vmatpush1.msra.mxu0 %v367
    %1881 = vmatprep.subr.mxu0 %v374
    %1882 = vmatpush1.msra.mxu0 %v373
    %1883 = vmatprep.subr.mxu0 %v380
    %1884 = vmatpush1.msra.mxu0 %v379
    %1885 = vmatprep.mubr.f32.mxu0 %v1737
    %1886 = vmatmul.mubr.f32.gmra.mrb[0].mxu0 %v1733
    %v1887 = vpop.f32.mrb[0].mxu0
    %v1888 = vadd.f32 0.0, %v1887
    %v1889 = vpop.f32.mrb[0].mxu0
    %v1890 = vadd.f32 0.0, %v1889
    %1891 = vdwg.mxu0
    %1892 = vmatprep.subr.mxu0 %v196
    %1893 = vmatpush1.msra.mxu0 %v195
    %1894 = vmatprep.subr.mxu0 %v202
    %1895 = vmatpush1.msra.mxu0 %v201
    %1896 = vmatprep.subr.mxu0 %v208
    %1897 = vmatpush1.msra.mxu0 %v207
    %1898 = vmatprep.subr.mxu0 %v214
    %1899 = vmatpush1.msra.mxu0 %v213
    %1900 = vmatprep.subr.mxu0 %v220
    %1901 = vmatpush1.msra.mxu0 %v219
    %1902 = vmatprep.subr.mxu0 %v226
    %1903 = vmatpush1.msra.mxu0 %v225
    %1904 = vmatprep.subr.mxu0 %v232
    %1905 = vmatpush1.msra.mxu0 %v231
    %1906 = vmatprep.subr.mxu0 %v238
    %1907 = vmatpush1.msra.mxu0 %v237
    %1908 = vmatprep.subr.mxu0 %v244
    %1909 = vmatpush1.msra.mxu0 %v243
    %1910 = vmatprep.subr.mxu0 %v250
    %1911 = vmatpush1.msra.mxu0 %v249
    %1912 = vmatprep.subr.mxu0 %v256
    %1913 = vmatpush1.msra.mxu0 %v255
    %1914 = vmatprep.subr.mxu0 %v262
    %1915 = vmatpush1.msra.mxu0 %v261
    %1916 = vmatprep.subr.mxu0 %v268
    %1917 = vmatpush1.msra.mxu0 %v267
    %1918 = vmatprep.subr.mxu0 %v274
    %1919 = vmatpush1.msra.mxu0 %v273
    %1920 = vmatprep.subr.mxu0 %v280
    %1921 = vmatpush1.msra.mxu0 %v279
    %1922 = vmatprep.subr.mxu0 %v286
    %1923 = vmatpush1.msra.mxu0 %v285
    %1924 = vmatprep.subr.mxu0 %v292
    %1925 = vmatpush1.msra.mxu0 %v291
    %1926 = vmatprep.subr.mxu0 %v298
    %1927 = vmatpush1.msra.mxu0 %v297
    %1928 = vmatprep.subr.mxu0 %v304
    %1929 = vmatpush1.msra.mxu0 %v303
    %1930 = vmatprep.subr.mxu0 %v310
    %1931 = vmatpush1.msra.mxu0 %v309
    %1932 = vmatprep.subr.mxu0 %v316
    %1933 = vmatpush1.msra.mxu0 %v315
    %1934 = vmatprep.subr.mxu0 %v322
    %1935 = vmatpush1.msra.mxu0 %v321
    %1936 = vmatprep.subr.mxu0 %v328
    %1937 = vmatpush1.msra.mxu0 %v327
    %1938 = vmatprep.subr.mxu0 %v334
    %1939 = vmatpush1.msra.mxu0 %v333
    %1940 = vmatprep.subr.mxu0 %v340
    %1941 = vmatpush1.msra.mxu0 %v339
    %1942 = vmatprep.subr.mxu0 %v346
    %1943 = vmatpush1.msra.mxu0 %v345
    %1944 = vmatprep.subr.mxu0 %v352
    %1945 = vmatpush1.msra.mxu0 %v351
    %1946 = vmatprep.subr.mxu0 %v358
    %1947 = vmatpush1.msra.mxu0 %v357
    %1948 = vmatprep.subr.mxu0 %v364
    %1949 = vmatpush1.msra.mxu0 %v363
    %1950 = vmatprep.subr.mxu0 %v370
    %1951 = vmatpush1.msra.mxu0 %v369
    %1952 = vmatprep.subr.mxu0 %v376
    %1953 = vmatpush1.msra.mxu0 %v375
    %1954 = vmatprep.subr.mxu0 %v382
    %1955 = vmatpush1.msra.mxu0 %v381
    %1956 = vmatprep.mubr.f32.mxu0 %v1737
    %1957 = vmatmul.mubr.f32.gmra.mrb[0].mxu0 %v1733
    %v1958 = vpop.f32.mrb[0].mxu0
    %v1959 = vadd.f32 0.0, %v1958
    %v1960 = vpop.f32.mrb[0].mxu0
    %v1961 = vadd.f32 0.0, %v1960
    %1962 = vdwg.mxu0
    %v1963 = vadd.f32 %v1743, %v1817
    %v1964 = vxor.u32 %v1963, 2147483648
    %v1965 = vmul.f32 %v1964, 1.442695
    %v1966 = vpow.pop %v1965
    %v1967 = vadd.f32 %v1966, 1.0
    %v1968 = vrcp.pop %v1967
    %v1969 = vmul.f32 1.0, %v1968
    %v1970 = vadd.f32 %v1744, %v1819
    %v1971 = vxor.u32 %v1970, 2147483648
    %v1972 = vmul.f32 %v1971, 1.442695
    %v1973 = vpow.pop %v1972
    %v1974 = vadd.f32 %v1973, 1.0
    %v1975 = vrcp.pop %v1974
    %v1976 = vmul.f32 1.0, %v1975
    %v1977 = vadd.f32 %v1888, %v625
    %v1978 = vmul.f32 %v1969, %v1977
    %v1979 = vadd.f32 %v1745, %v1978
    %v1980 = vtanh.pop %v1979
    %v1981 = vadd.f32 %v1747, %v1890
    %v1982 = vxor.u32 %v1981, 2147483648
    %v1983 = vmul.f32 %v1982, 1.442695
    %v1984 = vpow.pop %v1983
    %v1985 = vadd.f32 %v1984, 1.0
    %v1986 = vrcp.pop %v1985
    %v1987 = vmul.f32 1.0, %v1986
    %v1988 = vadd.f32 %v1748, %v1959
    %v1989 = vxor.u32 %v1988, 2147483648
    %v1990 = vmul.f32 %v1989, 1.442695
    %v1991 = vpow.pop %v1990
    %v1992 = vadd.f32 %v1991, 1.0
    %v1993 = vrcp.pop %v1992
    %v1994 = vmul.f32 1.0, %v1993
    %v1995 = vadd.f32 %v1961, %v649
    %v1996 = vmul.f32 %v1987, %v1995
    %v1997 = vadd.f32 %v1749, %v1996
    %v1998 = vtanh.pop %v1997
    %v1999 = vsub.f32 1.0, %v1976
    %v2000 = vmul.f32 %v1999, %v1980
    %v2001 = vmul.f32 %v1976, %v1733
    %v2002 = vadd.f32 %v2000, %v2001
    %v2003 = vsub.f32 1.0, %v1994
    %v2004 = vmul.f32 %v2003, %v1998
    %v2005 = vmul.f32 %v1994, %v1737
    %v2006 = vadd.f32 %v2004, %v2005
    %s2007 = scalar_lea.vmem %s4, 40
    %2008 = vst [vmem:[%s2007] sm:$0xff] %v2002
    %s2009 = scalar_lea.vmem %s182, 16
    %2010 = vst [vmem:[%s2009] sm:$0xff] %v2006
    %s2011 = scalar_lea.vmem [#allocation3], 144
    %v2012 = vld [vmem:[%s2011] sm:$0xff]
    %v2013 = vld [vmem:[%s2011 + $0x8] sm:$0xff]
    %v2014 = vld [vmem:[%s2011 + $0x10] sm:$0xff]
    %s2015 = scalar_lea.vmem [#allocation4], 24
    %v2016 = vld [vmem:[%s2015] sm:$0xff]
    %v2017 = vld [vmem:[%s2015 + $0x8] sm:$0xff]
    %v2018 = vld [vmem:[%s2015 + $0x10] sm:$0xff]
    %2019 = vmatprep.subr.mxu0 %v192
    %2020 = vmatpush1.msra.mxu0 %v191
    %2021 = vmatprep.subr.mxu0 %v198
    %2022 = vmatpush1.msra.mxu0 %v197
    %2023 = vmatprep.subr.mxu0 %v204
    %2024 = vmatpush1.msra.mxu0 %v203
    %2025 = vmatprep.subr.mxu0 %v210
    %2026 = vmatpush1.msra.mxu0 %v209
    %2027 = vmatprep.subr.mxu0 %v216
    %2028 = vmatpush1.msra.mxu0 %v215
    %2029 = vmatprep.subr.mxu0 %v222
    %2030 = vmatpush1.msra.mxu0 %v221
    %2031 = vmatprep.subr.mxu0 %v228
    %2032 = vmatpush1.msra.mxu0 %v227
    %2033 = vmatprep.subr.mxu0 %v234
    %2034 = vmatpush1.msra.mxu0 %v233
    %2035 = vmatprep.subr.mxu0 %v240
    %2036 = vmatpush1.msra.mxu0 %v239
    %2037 = vmatprep.subr.mxu0 %v246
    %2038 = vmatpush1.msra.mxu0 %v245
    %2039 = vmatprep.subr.mxu0 %v252
    %2040 = vmatpush1.msra.mxu0 %v251
    %2041 = vmatprep.subr.mxu0 %v258
    %2042 = vmatpush1.msra.mxu0 %v257
    %2043 = vmatprep.subr.mxu0 %v264
    %2044 = vmatpush1.msra.mxu0 %v263
    %2045 = vmatprep.subr.mxu0 %v270
    %2046 = vmatpush1.msra.mxu0 %v269
    %2047 = vmatprep.subr.mxu0 %v276
    %2048 = vmatpush1.msra.mxu0 %v275
    %2049 = vmatprep.subr.mxu0 %v282
    %2050 = vmatpush1.msra.mxu0 %v281
    %2051 = vmatprep.subr.mxu0 %v288
    %2052 = vmatpush1.msra.mxu0 %v287
    %2053 = vmatprep.subr.mxu0 %v294
    %2054 = vmatpush1.msra.mxu0 %v293
    %2055 = vmatprep.subr.mxu0 %v300
    %2056 = vmatpush1.msra.mxu0 %v299
    %2057 = vmatprep.subr.mxu0 %v306
    %2058 = vmatpush1.msra.mxu0 %v305
    %2059 = vmatprep.subr.mxu0 %v312
    %2060 = vmatpush1.msra.mxu0 %v311
    %2061 = vmatprep.subr.mxu0 %v318
    %2062 = vmatpush1.msra.mxu0 %v317
    %2063 = vmatprep.subr.mxu0 %v324
    %2064 = vmatpush1.msra.mxu0 %v323
    %2065 = vmatprep.subr.mxu0 %v330
    %2066 = vmatpush1.msra.mxu0 %v329
    %2067 = vmatprep.subr.mxu0 %v336
    %2068 = vmatpush1.msra.mxu0 %v335
    %2069 = vmatprep.subr.mxu0 %v342
    %2070 = vmatpush1.msra.mxu0 %v341
    %2071 = vmatprep.subr.mxu0 %v348
    %2072 = vmatpush1.msra.mxu0 %v347
    %2073 = vmatprep.subr.mxu0 %v354
    %2074 = vmatpush1.msra.mxu0 %v353
    %2075 = vmatprep.subr.mxu0 %v360
    %2076 = vmatpush1.msra.mxu0 %v359
    %2077 = vmatprep.subr.mxu0 %v366
    %2078 = vmatpush1.msra.mxu0 %v365
    %2079 = vmatprep.subr.mxu0 %v372
    %2080 = vmatpush1.msra.mxu0 %v371
    %2081 = vmatprep.subr.mxu0 %v378
    %2082 = vmatpush1.msra.mxu0 %v377
    %2083 = vmatprep.mubr.f32.mxu0 %v2006
    %2084 = vmatmul.mubr.f32.gmra.mrb[0].mxu0 %v2002
    %v2085 = vpop.f32.mrb[0].mxu0
    %v2086 = vadd.f32 0.0, %v2085
    %v2087 = vpop.f32.mrb[0].mxu0
    %v2088 = vadd.f32 0.0, %v2087
    %2089 = vdwg.mxu0
    %2090 = vmatprep.subr.mxu0 %v194
    %2091 = vmatpush1.msra.mxu0 %v193
    %2092 = vmatprep.subr.mxu0 %v200
    %2093 = vmatpush1.msra.mxu0 %v199
    %2094 = vmatprep.subr.mxu0 %v206
    %2095 = vmatpush1.msra.mxu0 %v205
    %2096 = vmatprep.subr.mxu0 %v212
    %2097 = vmatpush1.msra.mxu0 %v211
    %2098 = vmatprep.subr.mxu0 %v218
    %2099 = vmatpush1.msra.mxu0 %v217
    %2100 = vmatprep.subr.mxu0 %v224
    %2101 = vmatpush1.msra.mxu0 %v223
    %2102 = vmatprep.subr.mxu0 %v230
    %2103 = vmatpush1.msra.mxu0 %v229
    %2104 = vmatprep.subr.mxu0 %v236
    %2105 = vmatpush1.msra.mxu0 %v235
    %2106 = vmatprep.subr.mxu0 %v242
    %2107 = vmatpush1.msra.mxu0 %v241
    %2108 = vmatprep.subr.mxu0 %v248
    %2109 = vmatpush1.msra.mxu0 %v247
    %2110 = vmatprep.subr.mxu0 %v254
    %2111 = vmatpush1.msra.mxu0 %v253
    %2112 = vmatprep.subr.mxu0 %v260
    %2113 = vmatpush1.msra.mxu0 %v259
    %2114 = vmatprep.subr.mxu0 %v266
    %2115 = vmatpush1.msra.mxu0 %v265
    %2116 = vmatprep.subr.mxu0 %v272
    %2117 = vmatpush1.msra.mxu0 %v271
    %2118 = vmatprep.subr.mxu0 %v278
    %2119 = vmatpush1.msra.mxu0 %v277
    %2120 = vmatprep.subr.mxu0 %v284
    %2121 = vmatpush1.msra.mxu0 %v283
    %2122 = vmatprep.subr.mxu0 %v290
    %2123 = vmatpush1.msra.mxu0 %v289
    %2124 = vmatprep.subr.mxu0 %v296
    %2125 = vmatpush1.msra.mxu0 %v295
    %2126 = vmatprep.subr.mxu0 %v302
    %2127 = vmatpush1.msra.mxu0 %v301
    %2128 = vmatprep.subr.mxu0 %v308
    %2129 = vmatpush1.msra.mxu0 %v307
    %2130 = vmatprep.subr.mxu0 %v314
    %2131 = vmatpush1.msra.mxu0 %v313
    %2132 = vmatprep.subr.mxu0 %v320
    %2133 = vmatpush1.msra.mxu0 %v319
    %2134 = vmatprep.subr.mxu0 %v326
    %2135 = vmatpush1.msra.mxu0 %v325
    %2136 = vmatprep.subr.mxu0 %v332
    %2137 = vmatpush1.msra.mxu0 %v331
    %2138 = vmatprep.subr.mxu0 %v338
    %2139 = vmatpush1.msra.mxu0 %v337
    %2140 = vmatprep.subr.mxu0 %v344
    %2141 = vmatpush1.msra.mxu0 %v343
    %2142 = vmatprep.subr.mxu0 %v350
    %2143 = vmatpush1.msra.mxu0 %v349
    %2144 = vmatprep.subr.mxu0 %v356
    %2145 = vmatpush1.msra.mxu0 %v355
    %2146 = vmatprep.subr.mxu0 %v362
    %2147 = vmatpush1.msra.mxu0 %v361
    %2148 = vmatprep.subr.mxu0 %v368
    %2149 = vmatpush1.msra.mxu0 %v367
    %2150 = vmatprep.subr.mxu0 %v374
    %2151 = vmatpush1.msra.mxu0 %v373
    %2152 = vmatprep.subr.mxu0 %v380
    %2153 = vmatpush1.msra.mxu0 %v379
    %2154 = vmatprep.mubr.f32.mxu0 %v2006
    %2155 = vmatmul.mubr.f32.gmra.mrb[0].mxu0 %v2002
    %v2156 = vpop.f32.mrb[0].mxu0
    %v2157 = vadd.f32 0.0, %v2156
    %v2158 = vpop.f32.mrb[0].mxu0
    %v2159 = vadd.f32 0.0, %v2158
    %2160 = vdwg.mxu0
    %2161 = vmatprep.subr.mxu0 %v196
    %2162 = vmatpush1.msra.mxu0 %v195
    %2163 = vmatprep.subr.mxu0 %v202
    %2164 = vmatpush1.msra.mxu0 %v201
    %2165 = vmatprep.subr.mxu0 %v208
    %2166 = vmatpush1.msra.mxu0 %v207
    %2167 = vmatprep.subr.mxu0 %v214
    %2168 = vmatpush1.msra.mxu0 %v213
    %2169 = vmatprep.subr.mxu0 %v220
    %2170 = vmatpush1.msra.mxu0 %v219
    %2171 = vmatprep.subr.mxu0 %v226
    %2172 = vmatpush1.msra.mxu0 %v225
    %2173 = vmatprep.subr.mxu0 %v232
    %2174 = vmatpush1.msra.mxu0 %v231
    %2175 = vmatprep.subr.mxu0 %v238
    %2176 = vmatpush1.msra.mxu0 %v237
    %2177 = vmatprep.subr.mxu0 %v244
    %2178 = vmatpush1.msra.mxu0 %v243
    %2179 = vmatprep.subr.mxu0 %v250
    %2180 = vmatpush1.msra.mxu0 %v249
    %2181 = vmatprep.subr.mxu0 %v256
    %2182 = vmatpush1.msra.mxu0 %v255
    %2183 = vmatprep.subr.mxu0 %v262
    %2184 = vmatpush1.msra.mxu0 %v261
    %2185 = vmatprep.subr.mxu0 %v268
    %2186 = vmatpush1.msra.mxu0 %v267
    %2187 = vmatprep.subr.mxu0 %v274
    %2188 = vmatpush1.msra.mxu0 %v273
    %2189 = vmatprep.subr.mxu0 %v280
    %2190 = vmatpush1.msra.mxu0 %v279
    %2191 = vmatprep.subr.mxu0 %v286
    %2192 = vmatpush1.msra.mxu0 %v285
    %2193 = vmatprep.subr.mxu0 %v292
    %2194 = vmatpush1.msra.mxu0 %v291
    %2195 = vmatprep.subr.mxu0 %v298
    %2196 = vmatpush1.msra.mxu0 %v297
    %2197 = vmatprep.subr.mxu0 %v304
    %2198 = vmatpush1.msra.mxu0 %v303
    %2199 = vmatprep.subr.mxu0 %v310
    %2200 = vmatpush1.msra.mxu0 %v309
    %2201 = vmatprep.subr.mxu0 %v316
    %2202 = vmatpush1.msra.mxu0 %v315
    %2203 = vmatprep.subr.mxu0 %v322
    %2204 = vmatpush1.msra.mxu0 %v321
    %2205 = vmatprep.subr.mxu0 %v328
    %2206 = vmatpush1.msra.mxu0 %v327
    %2207 = vmatprep.subr.mxu0 %v334
    %2208 = vmatpush1.msra.mxu0 %v333
    %2209 = vmatprep.subr.mxu0 %v340
    %2210 = vmatpush1.msra.mxu0 %v339
    %2211 = vmatprep.subr.mxu0 %v346
    %2212 = vmatpush1.msra.mxu0 %v345
    %2213 = vmatprep.subr.mxu0 %v352
    %2214 = vmatpush1.msra.mxu0 %v351
    %2215 = vmatprep.subr.mxu0 %v358
    %2216 = vmatpush1.msra.mxu0 %v357
    %2217 = vmatprep.subr.mxu0 %v364
    %2218 = vmatpush1.msra.mxu0 %v363
    %2219 = vmatprep.subr.mxu0 %v370
    %2220 = vmatpush1.msra.mxu0 %v369
    %2221 = vmatprep.subr.mxu0 %v376
    %2222 = vmatpush1.msra.mxu0 %v375
    %2223 = vmatprep.subr.mxu0 %v382
    %2224 = vmatpush1.msra.mxu0 %v381
    %2225 = vmatprep.mubr.f32.mxu0 %v2006
    %2226 = vmatmul.mubr.f32.gmra.mrb[0].mxu0 %v2002
    %v2227 = vpop.f32.mrb[0].mxu0
    %v2228 = vadd.f32 0.0, %v2227
    %v2229 = vpop.f32.mrb[0].mxu0
    %v2230 = vadd.f32 0.0, %v2229
    %2231 = vdwg.mxu0
    %v2232 = vadd.f32 %v2012, %v2086
    %v2233 = vxor.u32 %v2232, 2147483648
    %v2234 = vmul.f32 %v2233, 1.442695
    %v2235 = vpow.pop %v2234
    %v2236 = vadd.f32 %v2235, 1.0
    %v2237 = vrcp.pop %v2236
    %v2238 = vmul.f32 1.0, %v2237
    %v2239 = vadd.f32 %v2013, %v2088
    %v2240 = vxor.u32 %v2239, 2147483648
    %v2241 = vmul.f32 %v2240, 1.442695
    %v2242 = vpow.pop %v2241
    %v2243 = vadd.f32 %v2242, 1.0
    %v2244 = vrcp.pop %v2243
    %v2245 = vmul.f32 1.0, %v2244
    %v2246 = vadd.f32 %v2157, %v625
    %v2247 = vmul.f32 %v2238, %v2246
    %v2248 = vadd.f32 %v2014, %v2247
    %v2249 = vtanh.pop %v2248
    %v2250 = vadd.f32 %v2016, %v2159
    %v2251 = vxor.u32 %v2250, 2147483648
    %v2252 = vmul.f32 %v2251, 1.442695
    %v2253 = vpow.pop %v2252
    %v2254 = vadd.f32 %v2253, 1.0
    %v2255 = vrcp.pop %v2254
    %v2256 = vmul.f32 1.0, %v2255
    %v2257 = vadd.f32 %v2017, %v2228
    %v2258 = vxor.u32 %v2257, 2147483648
    %v2259 = vmul.f32 %v2258, 1.442695
    %v2260 = vpow.pop %v2259
    %v2261 = vadd.f32 %v2260, 1.0
    %v2262 = vrcp.pop %v2261
    %v2263 = vmul.f32 1.0, %v2262
    %v2264 = vadd.f32 %v2230, %v649
    %v2265 = vmul.f32 %v2256, %v2264
    %v2266 = vadd.f32 %v2018, %v2265
    %v2267 = vtanh.pop %v2266
    %v2268 = vsub.f32 1.0, %v2245
    %v2269 = vmul.f32 %v2268, %v2249
    %v2270 = vmul.f32 %v2245, %v2002
    %v2271 = vadd.f32 %v2269, %v2270
    %v2272 = vsub.f32 1.0, %v2263
    %v2273 = vmul.f32 %v2272, %v2267
    %v2274 = vmul.f32 %v2263, %v2006
    %v2275 = vadd.f32 %v2273, %v2274
    %s2276 = scalar_lea.vmem %s4, 48
    %2277 = vst [vmem:[%s2276] sm:$0xff] %v2271
    %s2278 = scalar_lea.vmem %s182, 8
    %2279 = vst [vmem:[%s2278] sm:$0xff] %v2275
    %s2280 = scalar_lea.vmem [#allocation3], 168
    %v2281 = vld [vmem:[%s2280] sm:$0xff]
    %v2282 = vld [vmem:[%s2280 + $0x8] sm:$0xff]
    %v2283 = vld [vmem:[%s2280 + $0x10] sm:$0xff]
    %v2284 = vld [vmem:[#allocation4] sm:$0xff]
    %v2285 = vld [vmem:[#allocation4 + $0x8] sm:$0xff]
    %v2286 = vld [vmem:[#allocation4 + $0x10] sm:$0xff]
    %2287 = vmatprep.subr.mxu0 %v192
    %2288 = vmatpush1.msra.mxu0 %v191
    %2289 = vmatprep.subr.mxu0 %v198
    %2290 = vmatpush1.msra.mxu0 %v197
    %2291 = vmatprep.subr.mxu0 %v204
    %2292 = vmatpush1.msra.mxu0 %v203
    %2293 = vmatprep.subr.mxu0 %v210
    %2294 = vmatpush1.msra.mxu0 %v209
    %2295 = vmatprep.subr.mxu0 %v216
    %2296 = vmatpush1.msra.mxu0 %v215
    %2297 = vmatprep.subr.mxu0 %v222
    %2298 = vmatpush1.msra.mxu0 %v221
    %2299 = vmatprep.subr.mxu0 %v228
    %2300 = vmatpush1.msra.mxu0 %v227
    %2301 = vmatprep.subr.mxu0 %v234
    %2302 = vmatpush1.msra.mxu0 %v233
    %2303 = vmatprep.subr.mxu0 %v240
    %2304 = vmatpush1.msra.mxu0 %v239
    %2305 = vmatprep.subr.mxu0 %v246
    %2306 = vmatpush1.msra.mxu0 %v245
    %2307 = vmatprep.subr.mxu0 %v252
    %2308 = vmatpush1.msra.mxu0 %v251
    %2309 = vmatprep.subr.mxu0 %v258
    %2310 = vmatpush1.msra.mxu0 %v257
    %2311 = vmatprep.subr.mxu0 %v264
    %2312 = vmatpush1.msra.mxu0 %v263
    %2313 = vmatprep.subr.mxu0 %v270
    %2314 = vmatpush1.msra.mxu0 %v269
    %2315 = vmatprep.subr.mxu0 %v276
    %2316 = vmatpush1.msra.mxu0 %v275
    %2317 = vmatprep.subr.mxu0 %v282
    %2318 = vmatpush1.msra.mxu0 %v281
    %2319 = vmatprep.subr.mxu0 %v288
    %2320 = vmatpush1.msra.mxu0 %v287
    %2321 = vmatprep.subr.mxu0 %v294
    %2322 = vmatpush1.msra.mxu0 %v293
    %2323 = vmatprep.subr.mxu0 %v300
    %2324 = vmatpush1.msra.mxu0 %v299
    %2325 = vmatprep.subr.mxu0 %v306
    %2326 = vmatpush1.msra.mxu0 %v305
    %2327 = vmatprep.subr.mxu0 %v312
    %2328 = vmatpush1.msra.mxu0 %v311
    %2329 = vmatprep.subr.mxu0 %v318
    %2330 = vmatpush1.msra.mxu0 %v317
    %2331 = vmatprep.subr.mxu0 %v324
    %2332 = vmatpush1.msra.mxu0 %v323
    %2333 = vmatprep.subr.mxu0 %v330
    %2334 = vmatpush1.msra.mxu0 %v329
    %2335 = vmatprep.subr.mxu0 %v336
    %2336 = vmatpush1.msra.mxu0 %v335
    %2337 = vmatprep.subr.mxu0 %v342
    %2338 = vmatpush1.msra.mxu0 %v341
    %2339 = vmatprep.subr.mxu0 %v348
    %2340 = vmatpush1.msra.mxu0 %v347
    %2341 = vmatprep.subr.mxu0 %v354
    %2342 = vmatpush1.msra.mxu0 %v353
    %2343 = vmatprep.subr.mxu0 %v360
    %2344 = vmatpush1.msra.mxu0 %v359
    %2345 = vmatprep.subr.mxu0 %v366
    %2346 = vmatpush1.msra.mxu0 %v365
    %2347 = vmatprep.subr.mxu0 %v372
    %2348 = vmatpush1.msra.mxu0 %v371
    %2349 = vmatprep.subr.mxu0 %v378
    %2350 = vmatpush1.msra.mxu0 %v377
    %2351 = vmatprep.mubr.f32.mxu0 %v2275
    %2352 = vmatmul.mubr.f32.gmra.mrb[0].mxu0 %v2271
    %v2353 = vpop.f32.mrb[0].mxu0
    %v2354 = vadd.f32 0.0, %v2353
    %v2355 = vpop.f32.mrb[0].mxu0
    %v2356 = vadd.f32 0.0, %v2355
    %2357 = vdwg.mxu0
    %2358 = vmatprep.subr.mxu0 %v194
    %2359 = vmatpush1.msra.mxu0 %v193
    %2360 = vmatprep.subr.mxu0 %v200
    %2361 = vmatpush1.msra.mxu0 %v199
    %2362 = vmatprep.subr.mxu0 %v206
    %2363 = vmatpush1.msra.mxu0 %v205
    %2364 = vmatprep.subr.mxu0 %v212
    %2365 = vmatpush1.msra.mxu0 %v211
    %2366 = vmatprep.subr.mxu0 %v218
    %2367 = vmatpush1.msra.mxu0 %v217
    %2368 = vmatprep.subr.mxu0 %v224
    %2369 = vmatpush1.msra.mxu0 %v223
    %2370 = vmatprep.subr.mxu0 %v230
    %2371 = vmatpush1.msra.mxu0 %v229
    %2372 = vmatprep.subr.mxu0 %v236
    %2373 = vmatpush1.msra.mxu0 %v235
    %2374 = vmatprep.subr.mxu0 %v242
    %2375 = vmatpush1.msra.mxu0 %v241
    %2376 = vmatprep.subr.mxu0 %v248
    %2377 = vmatpush1.msra.mxu0 %v247
    %2378 = vmatprep.subr.mxu0 %v254
    %2379 = vmatpush1.msra.mxu0 %v253
    %2380 = vmatprep.subr.mxu0 %v260
    %2381 = vmatpush1.msra.mxu0 %v259
    %2382 = vmatprep.subr.mxu0 %v266
    %2383 = vmatpush1.msra.mxu0 %v265
    %2384 = vmatprep.subr.mxu0 %v272
    %2385 = vmatpush1.msra.mxu0 %v271
    %2386 = vmatprep.subr.mxu0 %v278
    %2387 = vmatpush1.msra.mxu0 %v277
    %2388 = vmatprep.subr.mxu0 %v284
    %2389 = vmatpush1.msra.mxu0 %v283
    %2390 = vmatprep.subr.mxu0 %v290
    %2391 = vmatpush1.msra.mxu0 %v289
    %2392 = vmatprep.subr.mxu0 %v296
    %2393 = vmatpush1.msra.mxu0 %v295
    %2394 = vmatprep.subr.mxu0 %v302
    %2395 = vmatpush1.msra.mxu0 %v301
    %2396 = vmatprep.subr.mxu0 %v308
    %2397 = vmatpush1.msra.mxu0 %v307
    %2398 = vmatprep.subr.mxu0 %v314
    %2399 = vmatpush1.msra.mxu0 %v313
    %2400 = vmatprep.subr.mxu0 %v320
    %2401 = vmatpush1.msra.mxu0 %v319
    %2402 = vmatprep.subr.mxu0 %v326
    %2403 = vmatpush1.msra.mxu0 %v325
    %2404 = vmatprep.subr.mxu0 %v332
    %2405 = vmatpush1.msra.mxu0 %v331
    %2406 = vmatprep.subr.mxu0 %v338
    %2407 = vmatpush1.msra.mxu0 %v337
    %2408 = vmatprep.subr.mxu0 %v344
    %2409 = vmatpush1.msra.mxu0 %v343
    %2410 = vmatprep.subr.mxu0 %v350
    %2411 = vmatpush1.msra.mxu0 %v349
    %2412 = vmatprep.subr.mxu0 %v356
    %2413 = vmatpush1.msra.mxu0 %v355
    %2414 = vmatprep.subr.mxu0 %v362
    %2415 = vmatpush1.msra.mxu0 %v361
    %2416 = vmatprep.subr.mxu0 %v368
    %2417 = vmatpush1.msra.mxu0 %v367
    %2418 = vmatprep.subr.mxu0 %v374
    %2419 = vmatpush1.msra.mxu0 %v373
    %2420 = vmatprep.subr.mxu0 %v380
    %2421 = vmatpush1.msra.mxu0 %v379
    %2422 = vmatprep.mubr.f32.mxu0 %v2275
    %2423 = vmatmul.mubr.f32.gmra.mrb[0].mxu0 %v2271
    %v2424 = vpop.f32.mrb[0].mxu0
    %v2425 = vadd.f32 0.0, %v2424
    %v2426 = vpop.f32.mrb[0].mxu0
    %v2427 = vadd.f32 0.0, %v2426
    %2428 = vdwg.mxu0
    %2429 = vmatprep.subr.mxu0 %v196
    %2430 = vmatpush1.msra.mxu0 %v195
    %2431 = vmatprep.subr.mxu0 %v202
    %2432 = vmatpush1.msra.mxu0 %v201
    %2433 = vmatprep.subr.mxu0 %v208
    %2434 = vmatpush1.msra.mxu0 %v207
    %2435 = vmatprep.subr.mxu0 %v214
    %2436 = vmatpush1.msra.mxu0 %v213
    %2437 = vmatprep.subr.mxu0 %v220
    %2438 = vmatpush1.msra.mxu0 %v219
    %2439 = vmatprep.subr.mxu0 %v226
    %2440 = vmatpush1.msra.mxu0 %v225
    %2441 = vmatprep.subr.mxu0 %v232
    %2442 = vmatpush1.msra.mxu0 %v231
    %2443 = vmatprep.subr.mxu0 %v238
    %2444 = vmatpush1.msra.mxu0 %v237
    %2445 = vmatprep.subr.mxu0 %v244
    %2446 = vmatpush1.msra.mxu0 %v243
    %2447 = vmatprep.subr.mxu0 %v250
    %2448 = vmatpush1.msra.mxu0 %v249
    %2449 = vmatprep.subr.mxu0 %v256
    %2450 = vmatpush1.msra.mxu0 %v255
    %2451 = vmatprep.subr.mxu0 %v262
    %2452 = vmatpush1.msra.mxu0 %v261
    %2453 = vmatprep.subr.mxu0 %v268
    %2454 = vmatpush1.msra.mxu0 %v267
    %2455 = vmatprep.subr.mxu0 %v274
    %2456 = vmatpush1.msra.mxu0 %v273
    %2457 = vmatprep.subr.mxu0 %v280
    %2458 = vmatpush1.msra.mxu0 %v279
    %2459 = vmatprep.subr.mxu0 %v286
    %2460 = vmatpush1.msra.mxu0 %v285
    %2461 = vmatprep.subr.mxu0 %v292
    %2462 = vmatpush1.msra.mxu0 %v291
    %2463 = vmatprep.subr.mxu0 %v298
    %2464 = vmatpush1.msra.mxu0 %v297
    %2465 = vmatprep.subr.mxu0 %v304
    %2466 = vmatpush1.msra.mxu0 %v303
    %2467 = vmatprep.subr.mxu0 %v310
    %2468 = vmatpush1.msra.mxu0 %v309
    %2469 = vmatprep.subr.mxu0 %v316
    %2470 = vmatpush1.msra.mxu0 %v315
    %2471 = vmatprep.subr.mxu0 %v322
    %2472 = vmatpush1.msra.mxu0 %v321
    %2473 = vmatprep.subr.mxu0 %v328
    %2474 = vmatpush1.msra.mxu0 %v327
    %2475 = vmatprep.subr.mxu0 %v334
    %2476 = vmatpush1.msra.mxu0 %v333
    %2477 = vmatprep.subr.mxu0 %v340
    %2478 = vmatpush1.msra.mxu0 %v339
    %2479 = vmatprep.subr.mxu0 %v346
    %2480 = vmatpush1.msra.mxu0 %v345
    %2481 = vmatprep.subr.mxu0 %v352
    %2482 = vmatpush1.msra.mxu0 %v351
    %2483 = vmatprep.subr.mxu0 %v358
    %2484 = vmatpush1.msra.mxu0 %v357
    %2485 = vmatprep.subr.mxu0 %v364
    %2486 = vmatpush1.msra.mxu0 %v363
    %2487 = vmatprep.subr.mxu0 %v370
    %2488 = vmatpush1.msra.mxu0 %v369
    %2489 = vmatprep.subr.mxu0 %v376
    %2490 = vmatpush1.msra.mxu0 %v375
    %2491 = vmatprep.subr.mxu0 %v382
    %2492 = vmatpush1.msra.mxu0 %v381
    %2493 = vmatprep.mubr.f32.mxu0 %v2275
    %2494 = vmatmul.mubr.f32.gmra.mrb[0].mxu0 %v2271
    %v2495 = vpop.f32.mrb[0].mxu0
    %v2496 = vadd.f32 0.0, %v2495
    %v2497 = vpop.f32.mrb[0].mxu0
    %v2498 = vadd.f32 0.0, %v2497
    %2499 = vdwg.mxu0
    %v2500 = vadd.f32 %v2281, %v2354
    %v2501 = vxor.u32 %v2500, 2147483648
    %v2502 = vmul.f32 %v2501, 1.442695
    %v2503 = vpow.pop %v2502
    %v2504 = vadd.f32 %v2503, 1.0
    %v2505 = vrcp.pop %v2504
    %v2506 = vmul.f32 1.0, %v2505
    %v2507 = vadd.f32 %v2282, %v2356
    %v2508 = vxor.u32 %v2507, 2147483648
    %v2509 = vmul.f32 %v2508, 1.442695
    %v2510 = vpow.pop %v2509
    %v2511 = vadd.f32 %v2510, 1.0
    %v2512 = vrcp.pop %v2511
    %v2513 = vmul.f32 1.0, %v2512
    %v2514 = vadd.f32 %v2425, %v625
    %v2515 = vmul.f32 %v2506, %v2514
    %v2516 = vadd.f32 %v2283, %v2515
    %v2517 = vtanh.pop %v2516
    %v2518 = vadd.f32 %v2284, %v2427
    %v2519 = vxor.u32 %v2518, 2147483648
    %v2520 = vmul.f32 %v2519, 1.442695
    %v2521 = vpow.pop %v2520
    %v2522 = vadd.f32 %v2521, 1.0
    %v2523 = vrcp.pop %v2522
    %v2524 = vmul.f32 1.0, %v2523
    %v2525 = vadd.f32 %v2285, %v2496
    %v2526 = vxor.u32 %v2525, 2147483648
    %v2527 = vmul.f32 %v2526, 1.442695
    %v2528 = vpow.pop %v2527
    %v2529 = vadd.f32 %v2528, 1.0
    %v2530 = vrcp.pop %v2529
    %v2531 = vmul.f32 1.0, %v2530
    %v2532 = vadd.f32 %v2498, %v649
    %v2533 = vmul.f32 %v2524, %v2532
    %v2534 = vadd.f32 %v2286, %v2533
    %v2535 = vtanh.pop %v2534
    %v2536 = vsub.f32 1.0, %v2513
    %v2537 = vmul.f32 %v2536, %v2517
    %v2538 = vmul.f32 %v2513, %v2271
    %v2539 = vadd.f32 %v2537, %v2538
    %v2540 = vsub.f32 1.0, %v2531
    %v2541 = vmul.f32 %v2540, %v2535
    %v2542 = vmul.f32 %v2531, %v2275
    %v2543 = vadd.f32 %v2541, %v2542
    %s2544 = scalar_lea.vmem %s4, 56
    %2545 = vst [vmem:[%s2544] sm:$0xff] %v2539
    %2546 = vst [vmem:[%s182] sm:$0xff] %v2543
    %2547 = vst [vmem:[#allocation2] sm:$0xff] %v2539
    %2548 = vst [vmem:[#allocation2 + $0x8] sm:$0xff] %v2543
    %s2549 = ssub.s32 0, 0
    %s2550 = smul.u32 8, %s2549
    %p2551 = scmp.lt.s32.totalorder %s2550, 7
    %s2552 = scalar_select %p2551, %s2550, 7
    %s2553 = smul.addr %s2552, 8
    %s2554 = scalar_lea.vmem %s5, %s2553
    // Predicated region
    $region72: #{bidirectional_gru_2_forward.6} parent=1 // pred_check
      _
    $region73: #{bidirectional_gru_2_forward.6} parent=1 // pred_check_branch
      %2556 = sbr.rel (0) target = $region75
    $region74: #{bidirectional_gru_2_forward.6} parent=1 // pred_region
      _
    $region75: #{bidirectional_gru_2_forward.6} parent=1 // pred_fallthru
      _
    // Predicated region
    $region76: #{bidirectional_gru_2_forward.6} parent=1 // pred_check
      _
    $region77: #{bidirectional_gru_2_forward.6} parent=1 // pred_check_branch
      %2558 = sbr.rel (0) target = $region79
    $region78: #{bidirectional_gru_2_forward.6} parent=1 // pred_region
      %s2559 = ssub.s32 0, 0
      %s2560 = smul.u32 8, %s2559
    $region79: #{bidirectional_gru_2_forward.6} parent=1 // pred_fallthru
      _
    // Predicated region
    $region80: #{bidirectional_gru_2_forward.6} parent=1 // pred_check
      _
    $region81: #{bidirectional_gru_2_forward.6} parent=1 // pred_check_branch
      %2562 = sbr.rel (0) target = $region83
    $region82: #{bidirectional_gru_2_forward.6} parent=1 // pred_region
      _
    $region83: #{bidirectional_gru_2_forward.6} parent=1 // pred_fallthru
      _
    // Predicated region
    $region84: #{bidirectional_gru_2_forward.6} parent=1 // pred_check
      _
    $region85: #{bidirectional_gru_2_forward.6} parent=1 // pred_check_branch
      %2564 = sbr.rel (0) target = $region87
    $region86: #{bidirectional_gru_2_forward.6} parent=1 // pred_region
      %s2565 = ssub.s32 0, 0
      %s2566 = smul.u32 8, %s2565
      %p2567 = scmp.lt.s32.totalorder %s2566, 7
      %s2568 = scalar_select %p2567, %s2566, 7
      %s2569 = smul.addr %s2568, 8
      %s2570 = scalar_lea.vmem %s5, %s2569
    $region87: #{bidirectional_gru_2_forward.6} parent=1 // pred_fallthru
      _
    %2571 = vsyncpa [#allocation6], 1

// kernel: bidirectional_gru_2_forward.8
$region0: #{bidirectional_gru_2_forward.8}
  #allocation0 [shape = 'u32[]', space=smem, size = 0x4, offset = 0x4, fixed_abs, tag = 'smem constant byte address 0x4 - core index']
  #allocation1 [shape = 'u32[144,128]{1,0:T(1,128)}', space=vmem, size = 0x12000, scoped, tag = 'internal scratch']
  #allocation2 [shape = 'f32[8,256]{1,0:T(8,128)}', space=vmem, size = 0x2000, scoped, tag = 'scratch operand']
  %s0 = inlined_call_operand.vmem [shape: f32[8,8,768], index: 0, kind: input, shape index: {}, may-alias: {0,1}]
  %s1 = inlined_call_operand.vmem [shape: f32[8,8,768], index: 1, kind: input, shape index: {}, may-alias: {0,1}]
  %s2 = inlined_call_operand.vmem [shape: f32[256,768], index: 2, kind: input, shape index: {}]
  %s3 = inlined_call_operand.vmem [shape: f32[1,256], index: 3, kind: input, shape index: {}]
  %s4 = inlined_call_operand.vmem [shape: f32[8,8,128], index: 4, kind: output, shape index: {0}]
  %s5 = inlined_call_operand.vmem [shape: f32[8,8,128], index: 5, kind: output, shape index: {1}]
  %6 = xla_tuple %s4, %s5
  %s7 = sld [smem:[#allocation0]]
  $region84: #{bidirectional_gru_2_forward.8} parent=0
    _
  %s9 = ssub.s32 1, %s7
  %s10 = scalar_select 0, %s9, %s7
  $region1: #{bidirectional_gru_2_forward.8} parent=0
    #allocation3 [shape = 'u8[98304]{0}', space=vmem, size = 0x18000, scoped, tag = 'input window, operand 0, single buffered']
    #allocation4 [shape = 'u8[98304]{0}', space=vmem, size = 0x18000, scoped, tag = 'input window, operand 1, single buffered']
    // Predicated region
    $region2: #{bidirectional_gru_2_forward.8} parent=1 // pred_check
      _
    $region3: #{bidirectional_gru_2_forward.8} parent=1 // pred_check_branch
      %12 = sbr.rel (0) target = $region5
    $region4: #{bidirectional_gru_2_forward.8} parent=1 // pred_region
      // Predicated region
      $region6: #{bidirectional_gru_2_forward.8} parent=4 // pred_check
        _
      $region7: #{bidirectional_gru_2_forward.8} parent=4 // pred_check_branch
        %14 = sbr.rel (0) target = $region9
      $region8: #{bidirectional_gru_2_forward.8} parent=4 // pred_region
        // Predicated region
        $region10: #{bidirectional_gru_2_forward.8} parent=8 // pred_check
          _
        $region11: #{bidirectional_gru_2_forward.8} parent=8 // pred_check_branch
          %16 = sbr.rel (0) target = $region13
        $region12: #{bidirectional_gru_2_forward.8} parent=8 // pred_region
          loop: start=0, step=1, limit=1
          $region14: #{bidirectional_gru_2_forward.8} parent=12 // loop_pre_header
            _
          $region15: #{bidirectional_gru_2_forward.8} parent=12 // loop_header
            %s18 = sphi 0, %s22
            %p19 = scmp.ge.s32.totalorder %s18, 1
            %s23 = sphi %s0, %s0
            %s24 = sphi [#allocation3], [#allocation3]
          $region16: #{bidirectional_gru_2_forward.8} parent=12 // loop_header_branch
            %21 = sbr.rel (%p19) target = $region20
          $region17: #{bidirectional_gru_2_forward.8} parent=12 // loop_body
            %v25 = vld [vmem:[%s23] sm:$0xff]
            %26 = vst [vmem:[%s24] sm:$0xff] %v25
            %v27 = vld [vmem:[%s23 + $0x8] sm:$0xff]
            %28 = vst [vmem:[%s24 + $0x8] sm:$0xff] %v27
            %v29 = vld [vmem:[%s23 + $0x10] sm:$0xff]
            %30 = vst [vmem:[%s24 + $0x10] sm:$0xff] %v29
            %v31 = vld [vmem:[%s23 + $0x30] sm:$0xff]
            %32 = vst [vmem:[%s24 + $0x18] sm:$0xff] %v31
            %v33 = vld [vmem:[%s23 + $0x38] sm:$0xff]
            %34 = vst [vmem:[%s24 + $0x20] sm:$0xff] %v33
            %v35 = vld [vmem:[%s23 + $0x40] sm:$0xff]
            %36 = vst [vmem:[%s24 + $0x28] sm:$0xff] %v35
            %v37 = vld [vmem:[%s23 + $0x60] sm:$0xff]
            %38 = vst [vmem:[%s24 + $0x30] sm:$0xff] %v37
            %v39 = vld [vmem:[%s23 + $0x68] sm:$0xff]
            %40 = vst [vmem:[%s24 + $0x38] sm:$0xff] %v39
            %v41 = vld [vmem:[%s23 + $0x70] sm:$0xff]
            %42 = vst [vmem:[%s24 + $0x40] sm:$0xff] %v41
            %v43 = vld [vmem:[%s23 + $0x90] sm:$0xff]
            %44 = vst [vmem:[%s24 + $0x48] sm:$0xff] %v43
            %v45 = vld [vmem:[%s23 + $0x98] sm:$0xff]
            %46 = vst [vmem:[%s24 + $0x50] sm:$0xff] %v45
            %v47 = vld [vmem:[%s23 + $0xa0] sm:$0xff]
            %48 = vst [vmem:[%s24 + $0x58] sm:$0xff] %v47
            %v49 = vld [vmem:[%s23 + $0xc0] sm:$0xff]
            %50 = vst [vmem:[%s24 + $0x60] sm:$0xff] %v49
            %v51 = vld [vmem:[%s23 + $0xc8] sm:$0xff]
            %52 = vst [vmem:[%s24 + $0x68] sm:$0xff] %v51
            %v53 = vld [vmem:[%s23 + $0xd0] sm:$0xff]
            %54 = vst [vmem:[%s24 + $0x70] sm:$0xff] %v53
            %v55 = vld [vmem:[%s23 + $0xf0] sm:$0xff]
            %56 = vst [vmem:[%s24 + $0x78] sm:$0xff] %v55
            %v57 = vld [vmem:[%s23 + $0xf8] sm:$0xff]
            %58 = vst [vmem:[%s24 + $0x80] sm:$0xff] %v57
            %v59 = vld [vmem:[%s23 + $0x100] sm:$0xff]
            %60 = vst [vmem:[%s24 + $0x88] sm:$0xff] %v59
            %v61 = vld [vmem:[%s23 + $0x120] sm:$0xff]
            %62 = vst [vmem:[%s24 + $0x90] sm:$0xff] %v61
            %v63 = vld [vmem:[%s23 + $0x128] sm:$0xff]
            %64 = vst [vmem:[%s24 + $0x98] sm:$0xff] %v63
            %v65 = vld [vmem:[%s23 + $0x130] sm:$0xff]
            %66 = vst [vmem:[%s24 + $0xa0] sm:$0xff] %v65
            %v67 = vld [vmem:[%s23 + $0x150] sm:$0xff]
            %68 = vst [vmem:[%s24 + $0xa8] sm:$0xff] %v67
            %v69 = vld [vmem:[%s23 + $0x158] sm:$0xff]
            %70 = vst [vmem:[%s24 + $0xb0] sm:$0xff] %v69
            %v71 = vld [vmem:[%s23 + $0x160] sm:$0xff]
            %72 = vst [vmem:[%s24 + $0xb8] sm:$0xff] %v71
          $region18: #{bidirectional_gru_2_forward.8} parent=12 // loop_footer
            %s22 = sadd.s32 1, %s18
          $region19: #{bidirectional_gru_2_forward.8} parent=12 // loop_footer_branch
            %17 = sbr.rel target = $region15
          $region20: #{bidirectional_gru_2_forward.8} parent=12 // loop_exit
            _
        $region13: #{bidirectional_gru_2_forward.8} parent=8 // pred_fallthru
          _
        // Predicated region
        $region21: #{bidirectional_gru_2_forward.8} parent=8 // pred_check
          _
        $region22: #{bidirectional_gru_2_forward.8} parent=8 // pred_check_branch
          %74 = sbr.rel target = $region24
        $region23: #{bidirectional_gru_2_forward.8} parent=8 // pred_region
          _
        $region24: #{bidirectional_gru_2_forward.8} parent=8 // pred_fallthru
          _
      $region9: #{bidirectional_gru_2_forward.8} parent=4 // pred_fallthru
        _
      %75 = vnop
    $region5: #{bidirectional_gru_2_forward.8} parent=1 // pred_fallthru
      _
    // Predicated region
    $region25: #{bidirectional_gru_2_forward.8} parent=1 // pred_check
      _
    $region26: #{bidirectional_gru_2_forward.8} parent=1 // pred_check_branch
      %77 = sbr.rel (0) target = $region28
    $region27: #{bidirectional_gru_2_forward.8} parent=1 // pred_region
      %s78 = ssub.s32 0, 0
      %s79 = smul.u32 8, %s78
      %s80 = smul.addr %s79, 6
      %s81 = sadd.s32 3, %s80
      %s82 = smul.addr %s81, 8
      %s83 = scalar_lea.vmem %s1, %s82
      // Predicated region
      $region29: #{bidirectional_gru_2_forward.8} parent=27 // pred_check
        _
      $region30: #{bidirectional_gru_2_forward.8} parent=27 // pred_check_branch
        %85 = sbr.rel (0) target = $region32
      $region31: #{bidirectional_gru_2_forward.8} parent=27 // pred_region
        // Predicated region
        $region33: #{bidirectional_gru_2_forward.8} parent=31 // pred_check
          _
        $region34: #{bidirectional_gru_2_forward.8} parent=31 // pred_check_branch
          %87 = sbr.rel (0) target = $region36
        $region35: #{bidirectional_gru_2_forward.8} parent=31 // pred_region
          loop: start=0, step=1, limit=1
          $region37: #{bidirectional_gru_2_forward.8} parent=35 // loop_pre_header
            _
          $region38: #{bidirectional_gru_2_forward.8} parent=35 // loop_header
            %s89 = sphi 0, %s93
            %p90 = scmp.ge.s32.totalorder %s89, 1
            %s94 = sphi %s83, %s83
            %s95 = sphi [#allocation4], [#allocation4]
          $region39: #{bidirectional_gru_2_forward.8} parent=35 // loop_header_branch
            %92 = sbr.rel (%p90) target = $region43
          $region40: #{bidirectional_gru_2_forward.8} parent=35 // loop_body
            %v96 = vld [vmem:[%s94] sm:$0xff]
            %97 = vst [vmem:[%s95] sm:$0xff] %v96
            %v98 = vld [vmem:[%s94 + $0x8] sm:$0xff]
            %99 = vst [vmem:[%s95 + $0x8] sm:$0xff] %v98
            %v100 = vld [vmem:[%s94 + $0x10] sm:$0xff]
            %101 = vst [vmem:[%s95 + $0x10] sm:$0xff] %v100
            %v102 = vld [vmem:[%s94 + $0x30] sm:$0xff]
            %103 = vst [vmem:[%s95 + $0x18] sm:$0xff] %v102
            %v104 = vld [vmem:[%s94 + $0x38] sm:$0xff]
            %105 = vst [vmem:[%s95 + $0x20] sm:$0xff] %v104
            %v106 = vld [vmem:[%s94 + $0x40] sm:$0xff]
            %107 = vst [vmem:[%s95 + $0x28] sm:$0xff] %v106
            %v108 = vld [vmem:[%s94 + $0x60] sm:$0xff]
            %109 = vst [vmem:[%s95 + $0x30] sm:$0xff] %v108
            %v110 = vld [vmem:[%s94 + $0x68] sm:$0xff]
            %111 = vst [vmem:[%s95 + $0x38] sm:$0xff] %v110
            %v112 = vld [vmem:[%s94 + $0x70] sm:$0xff]
            %113 = vst [vmem:[%s95 + $0x40] sm:$0xff] %v112
            %v114 = vld [vmem:[%s94 + $0x90] sm:$0xff]
            %115 = vst [vmem:[%s95 + $0x48] sm:$0xff] %v114
            %v116 = vld [vmem:[%s94 + $0x98] sm:$0xff]
            %117 = vst [vmem:[%s95 + $0x50] sm:$0xff] %v116
            %v118 = vld [vmem:[%s94 + $0xa0] sm:$0xff]
            %119 = vst [vmem:[%s95 + $0x58] sm:$0xff] %v118
            %v120 = vld [vmem:[%s94 + $0xc0] sm:$0xff]
            %121 = vst [vmem:[%s95 + $0x60] sm:$0xff] %v120
            %v122 = vld [vmem:[%s94 + $0xc8] sm:$0xff]
            %123 = vst [vmem:[%s95 + $0x68] sm:$0xff] %v122
            %v124 = vld [vmem:[%s94 + $0xd0] sm:$0xff]
            %125 = vst [vmem:[%s95 + $0x70] sm:$0xff] %v124
            %v126 = vld [vmem:[%s94 + $0xf0] sm:$0xff]
            %127 = vst [vmem:[%s95 + $0x78] sm:$0xff] %v126
            %v128 = vld [vmem:[%s94 + $0xf8] sm:$0xff]
            %129 = vst [vmem:[%s95 + $0x80] sm:$0xff] %v128
            %v130 = vld [vmem:[%s94 + $0x100] sm:$0xff]
            %131 = vst [vmem:[%s95 + $0x88] sm:$0xff] %v130
            %v132 = vld [vmem:[%s94 + $0x120] sm:$0xff]
            %133 = vst [vmem:[%s95 + $0x90] sm:$0xff] %v132
            %v134 = vld [vmem:[%s94 + $0x128] sm:$0xff]
            %135 = vst [vmem:[%s95 + $0x98] sm:$0xff] %v134
            %v136 = vld [vmem:[%s94 + $0x130] sm:$0xff]
            %137 = vst [vmem:[%s95 + $0xa0] sm:$0xff] %v136
            %v138 = vld [vmem:[%s94 + $0x150] sm:$0xff]
            %139 = vst [vmem:[%s95 + $0xa8] sm:$0xff] %v138
            %v140 = vld [vmem:[%s94 + $0x158] sm:$0xff]
            %141 = vst [vmem:[%s95 + $0xb0] sm:$0xff] %v140
            %v142 = vld [vmem:[%s94 + $0x160] sm:$0xff]
            %143 = vst [vmem:[%s95 + $0xb8] sm:$0xff] %v142
          $region41: #{bidirectional_gru_2_forward.8} parent=35 // loop_footer
            %s93 = sadd.s32 1, %s89
          $region42: #{bidirectional_gru_2_forward.8} parent=35 // loop_footer_branch
            %88 = sbr.rel target = $region38
          $region43: #{bidirectional_gru_2_forward.8} parent=35 // loop_exit
            _
        $region36: #{bidirectional_gru_2_forward.8} parent=31 // pred_fallthru
          _
        // Predicated region
        $region44: #{bidirectional_gru_2_forward.8} parent=31 // pred_check
          _
        $region45: #{bidirectional_gru_2_forward.8} parent=31 // pred_check_branch
          %145 = sbr.rel target = $region47
        $region46: #{bidirectional_gru_2_forward.8} parent=31 // pred_region
          _
        $region47: #{bidirectional_gru_2_forward.8} parent=31 // pred_fallthru
          _
      $region32: #{bidirectional_gru_2_forward.8} parent=27 // pred_fallthru
        _
      %146 = vnop
    $region28: #{bidirectional_gru_2_forward.8} parent=1 // pred_fallthru
      _
    // Predicated region
    $region48: #{bidirectional_gru_2_forward.8} parent=1 // pred_check
      _
    $region49: #{bidirectional_gru_2_forward.8} parent=1 // pred_check_branch
      %148 = sbr.rel (0) target = $region51
    $region50: #{bidirectional_gru_2_forward.8} parent=1 // pred_region
      _
    $region51: #{bidirectional_gru_2_forward.8} parent=1 // pred_fallthru
      _
    // Predicated region
    $region52: #{bidirectional_gru_2_forward.8} parent=1 // pred_check
      _
    $region53: #{bidirectional_gru_2_forward.8} parent=1 // pred_check_branch
      %150 = sbr.rel (0) target = $region55
    $region54: #{bidirectional_gru_2_forward.8} parent=1 // pred_region
      _
    $region55: #{bidirectional_gru_2_forward.8} parent=1 // pred_fallthru
      _
    // Predicated region
    $region56: #{bidirectional_gru_2_forward.8} parent=1 // pred_check
      _
    $region57: #{bidirectional_gru_2_forward.8} parent=1 // pred_check_branch
      %152 = sbr.rel (0) target = $region59
    $region58: #{bidirectional_gru_2_forward.8} parent=1 // pred_region
      _
    $region59: #{bidirectional_gru_2_forward.8} parent=1 // pred_fallthru
      _
    // Predicated region
    $region60: #{bidirectional_gru_2_forward.8} parent=1 // pred_check
      _
    $region61: #{bidirectional_gru_2_forward.8} parent=1 // pred_check_branch
      %154 = sbr.rel (0) target = $region63
    $region62: #{bidirectional_gru_2_forward.8} parent=1 // pred_region
      _
    $region63: #{bidirectional_gru_2_forward.8} parent=1 // pred_fallthru
      _
    %s155 = ssub.s32 0, 0
    %s156 = smul.u32 8, %s155
    %p157 = scmp.lt.s32.totalorder %s156, 7
    %s158 = scalar_select %p157, %s156, 7
    %s159 = smul.addr %s158, 8
    %s160 = scalar_lea.vmem %s5, %s159
    %s161 = ssub.s32 0, 0
    %s162 = smul.u32 8, %s161
    %s163 = ssub.s32 0, 0
    %s164 = smul.u32 8, %s163
    %p165 = scmp.lt.s32.totalorder %s164, 7
    %s166 = scalar_select %p165, %s164, 7
    %s167 = smul.addr %s166, 8
    %s168 = scalar_lea.vmem %s5, %s167
    %s169 = ssub.s32 0, 0
    %s170 = smul.u32 8, %s169
    %p171 = scmp.eq.s32.totalorder 0, 0
    // Predicated region
    $region64: #{bidirectional_gru_2_forward.8} parent=1 // pred_check
      %p172 = pneg %p171
    $region65: #{bidirectional_gru_2_forward.8} parent=1 // pred_check_branch
      %174 = sbr.rel (%p172) target = $region67
    $region66: #{bidirectional_gru_2_forward.8} parent=1 // pred_region
      %175 = vst [vmem:[#allocation2] sm:$0xff] 0.0
      %176 = vst [vmem:[#allocation2 + $0x8] sm:$0xff] 0.0
    $region67: #{bidirectional_gru_2_forward.8} parent=1 // pred_fallthru
      _
    %v177 = vld [vmem:[%s2] sm:$0xff]
    %v178 = vld [vmem:[%s2 + $0x8] sm:$0xff]
    %v179 = vld [vmem:[%s2 + $0x10] sm:$0xff]
    %v180 = vld [vmem:[%s2 + $0x18] sm:$0xff]
    %v181 = vld [vmem:[%s2 + $0x20] sm:$0xff]
    %v182 = vld [vmem:[%s2 + $0x28] sm:$0xff]
    %v183 = vld [vmem:[%s2 + $0x30] sm:$0xff]
    %v184 = vld [vmem:[%s2 + $0x38] sm:$0xff]
    %v185 = vld [vmem:[%s2 + $0x40] sm:$0xff]
    %v186 = vld [vmem:[%s2 + $0x48] sm:$0xff]
    %v187 = vld [vmem:[%s2 + $0x50] sm:$0xff]
    %v188 = vld [vmem:[%s2 + $0x58] sm:$0xff]
    %v189 = vld [vmem:[%s2 + $0x60] sm:$0xff]
    %v190 = vld [vmem:[%s2 + $0x68] sm:$0xff]
    %v191 = vld [vmem:[%s2 + $0x70] sm:$0xff]
    %v192 = vld [vmem:[%s2 + $0x78] sm:$0xff]
    %v193 = vld [vmem:[%s2 + $0x80] sm:$0xff]
    %v194 = vld [vmem:[%s2 + $0x88] sm:$0xff]
    %v195 = vld [vmem:[%s2 + $0x90] sm:$0xff]
    %v196 = vld [vmem:[%s2 + $0x98] sm:$0xff]
    %v197 = vld [vmem:[%s2 + $0xa0] sm:$0xff]
    %v198 = vld [vmem:[%s2 + $0xa8] sm:$0xff]
    %v199 = vld [vmem:[%s2 + $0xb0] sm:$0xff]
    %v200 = vld [vmem:[%s2 + $0xb8] sm:$0xff]
    %v201 = vld [vmem:[%s2 + $0xc0] sm:$0xff]
    %v202 = vld [vmem:[%s2 + $0xc8] sm:$0xff]
    %v203 = vld [vmem:[%s2 + $0xd0] sm:$0xff]
    %v204 = vld [vmem:[%s2 + $0xd8] sm:$0xff]
    %v205 = vld [vmem:[%s2 + $0xe0] sm:$0xff]
    %v206 = vld [vmem:[%s2 + $0xe8] sm:$0xff]
    %v207 = vld [vmem:[%s2 + $0xf0] sm:$0xff]
    %v208 = vld [vmem:[%s2 + $0xf8] sm:$0xff]
    %v209 = vld [vmem:[%s2 + $0x100] sm:$0xff]
    %v210 = vld [vmem:[%s2 + $0x108] sm:$0xff]
    %v211 = vld [vmem:[%s2 + $0x110] sm:$0xff]
    %v212 = vld [vmem:[%s2 + $0x118] sm:$0xff]
    %v213 = vld [vmem:[%s2 + $0x120] sm:$0xff]
    %v214 = vld [vmem:[%s2 + $0x128] sm:$0xff]
    %v215 = vld [vmem:[%s2 + $0x130] sm:$0xff]
    %v216 = vld [vmem:[%s2 + $0x138] sm:$0xff]
    %v217 = vld [vmem:[%s2 + $0x140] sm:$0xff]
    %v218 = vld [vmem:[%s2 + $0x148] sm:$0xff]
    %v219 = vld [vmem:[%s2 + $0x150] sm:$0xff]
    %v220 = vld [vmem:[%s2 + $0x158] sm:$0xff]
    %v221 = vld [vmem:[%s2 + $0x160] sm:$0xff]
    %v222 = vld [vmem:[%s2 + $0x168] sm:$0xff]
    %v223 = vld [vmem:[%s2 + $0x170] sm:$0xff]
    %v224 = vld [vmem:[%s2 + $0x178] sm:$0xff]
    %v225 = vld [vmem:[%s2 + $0x180] sm:$0xff]
    %v226 = vld [vmem:[%s2 + $0x188] sm:$0xff]
    %v227 = vld [vmem:[%s2 + $0x190] sm:$0xff]
    %v228 = vld [vmem:[%s2 + $0x198] sm:$0xff]
    %v229 = vld [vmem:[%s2 + $0x1a0] sm:$0xff]
    %v230 = vld [vmem:[%s2 + $0x1a8] sm:$0xff]
    %v231 = vld [vmem:[%s2 + $0x1b0] sm:$0xff]
    %v232 = vld [vmem:[%s2 + $0x1b8] sm:$0xff]
    %v233 = vld [vmem:[%s2 + $0x1c0] sm:$0xff]
    %v234 = vld [vmem:[%s2 + $0x1c8] sm:$0xff]
    %v235 = vld [vmem:[%s2 + $0x1d0] sm:$0xff]
    %v236 = vld [vmem:[%s2 + $0x1d8] sm:$0xff]
    %v237 = vld [vmem:[%s2 + $0x1e0] sm:$0xff]
    %v238 = vld [vmem:[%s2 + $0x1e8] sm:$0xff]
    %v239 = vld [vmem:[%s2 + $0x1f0] sm:$0xff]
    %v240 = vld [vmem:[%s2 + $0x1f8] sm:$0xff]
    %v241 = vld [vmem:[%s2 + $0x200] sm:$0xff]
    %v242 = vld [vmem:[%s2 + $0x208] sm:$0xff]
    %v243 = vld [vmem:[%s2 + $0x210] sm:$0xff]
    %v244 = vld [vmem:[%s2 + $0x218] sm:$0xff]
    %v245 = vld [vmem:[%s2 + $0x220] sm:$0xff]
    %v246 = vld [vmem:[%s2 + $0x228] sm:$0xff]
    %v247 = vld [vmem:[%s2 + $0x230] sm:$0xff]
    %v248 = vld [vmem:[%s2 + $0x238] sm:$0xff]
    %v249 = vld [vmem:[%s2 + $0x240] sm:$0xff]
    %v250 = vld [vmem:[%s2 + $0x248] sm:$0xff]
    %v251 = vld [vmem:[%s2 + $0x250] sm:$0xff]
    %v252 = vld [vmem:[%s2 + $0x258] sm:$0xff]
    %v253 = vld [vmem:[%s2 + $0x260] sm:$0xff]
    %v254 = vld [vmem:[%s2 + $0x268] sm:$0xff]
    %v255 = vld [vmem:[%s2 + $0x270] sm:$0xff]
    %v256 = vld [vmem:[%s2 + $0x278] sm:$0xff]
    %v257 = vld [vmem:[%s2 + $0x280] sm:$0xff]
    %v258 = vld [vmem:[%s2 + $0x288] sm:$0xff]
    %v259 = vld [vmem:[%s2 + $0x290] sm:$0xff]
    %v260 = vld [vmem:[%s2 + $0x298] sm:$0xff]
    %v261 = vld [vmem:[%s2 + $0x2a0] sm:$0xff]
    %v262 = vld [vmem:[%s2 + $0x2a8] sm:$0xff]
    %v263 = vld [vmem:[%s2 + $0x2b0] sm:$0xff]
    %v264 = vld [vmem:[%s2 + $0x2b8] sm:$0xff]
    %v265 = vld [vmem:[%s2 + $0x2c0] sm:$0xff]
    %v266 = vld [vmem:[%s2 + $0x2c8] sm:$0xff]
    %v267 = vld [vmem:[%s2 + $0x2d0] sm:$0xff]
    %v268 = vld [vmem:[%s2 + $0x2d8] sm:$0xff]
    %v269 = vld [vmem:[%s2 + $0x2e0] sm:$0xff]
    %v270 = vld [vmem:[%s2 + $0x2e8] sm:$0xff]
    %v271 = vld [vmem:[%s2 + $0x2f0] sm:$0xff]
    %v272 = vld [vmem:[%s2 + $0x2f8] sm:$0xff]
    %v273 = vld [vmem:[%s2 + $0x300] sm:$0xff]
    %v274 = vld [vmem:[%s2 + $0x308] sm:$0xff]
    %v275 = vld [vmem:[%s2 + $0x310] sm:$0xff]
    %v276 = vld [vmem:[%s2 + $0x318] sm:$0xff]
    %v277 = vld [vmem:[%s2 + $0x320] sm:$0xff]
    %v278 = vld [vmem:[%s2 + $0x328] sm:$0xff]
    %v279 = vld [vmem:[%s2 + $0x330] sm:$0xff]
    %v280 = vld [vmem:[%s2 + $0x338] sm:$0xff]
    %v281 = vld [vmem:[%s2 + $0x340] sm:$0xff]
    %v282 = vld [vmem:[%s2 + $0x348] sm:$0xff]
    %v283 = vld [vmem:[%s2 + $0x350] sm:$0xff]
    %v284 = vld [vmem:[%s2 + $0x358] sm:$0xff]
    %v285 = vld [vmem:[%s2 + $0x360] sm:$0xff]
    %v286 = vld [vmem:[%s2 + $0x368] sm:$0xff]
    %v287 = vld [vmem:[%s2 + $0x370] sm:$0xff]
    %v288 = vld [vmem:[%s2 + $0x378] sm:$0xff]
    %v289 = vld [vmem:[%s2 + $0x380] sm:$0xff]
    %v290 = vld [vmem:[%s2 + $0x388] sm:$0xff]
    %v291 = vld [vmem:[%s2 + $0x390] sm:$0xff]
    %v292 = vld [vmem:[%s2 + $0x398] sm:$0xff]
    %v293 = vld [vmem:[%s2 + $0x3a0] sm:$0xff]
    %v294 = vld [vmem:[%s2 + $0x3a8] sm:$0xff]
    %v295 = vld [vmem:[%s2 + $0x3b0] sm:$0xff]
    %v296 = vld [vmem:[%s2 + $0x3b8] sm:$0xff]
    %v297 = vld [vmem:[%s2 + $0x3c0] sm:$0xff]
    %v298 = vld [vmem:[%s2 + $0x3c8] sm:$0xff]
    %v299 = vld [vmem:[%s2 + $0x3d0] sm:$0xff]
    %v300 = vld [vmem:[%s2 + $0x3d8] sm:$0xff]
    %v301 = vld [vmem:[%s2 + $0x3e0] sm:$0xff]
    %v302 = vld [vmem:[%s2 + $0x3e8] sm:$0xff]
    %v303 = vld [vmem:[%s2 + $0x3f0] sm:$0xff]
    %v304 = vld [vmem:[%s2 + $0x3f8] sm:$0xff]
    %v305 = vld [vmem:[%s2 + $0x400] sm:$0xff]
    %v306 = vld [vmem:[%s2 + $0x408] sm:$0xff]
    %v307 = vld [vmem:[%s2 + $0x410] sm:$0xff]
    %v308 = vld [vmem:[%s2 + $0x418] sm:$0xff]
    %v309 = vld [vmem:[%s2 + $0x420] sm:$0xff]
    %v310 = vld [vmem:[%s2 + $0x428] sm:$0xff]
    %v311 = vld [vmem:[%s2 + $0x430] sm:$0xff]
    %v312 = vld [vmem:[%s2 + $0x438] sm:$0xff]
    %v313 = vld [vmem:[%s2 + $0x440] sm:$0xff]
    %v314 = vld [vmem:[%s2 + $0x448] sm:$0xff]
    %v315 = vld [vmem:[%s2 + $0x450] sm:$0xff]
    %v316 = vld [vmem:[%s2 + $0x458] sm:$0xff]
    %v317 = vld [vmem:[%s2 + $0x460] sm:$0xff]
    %v318 = vld [vmem:[%s2 + $0x468] sm:$0xff]
    %v319 = vld [vmem:[%s2 + $0x470] sm:$0xff]
    %v320 = vld [vmem:[%s2 + $0x478] sm:$0xff]
    %v321 = vld [vmem:[%s2 + $0x480] sm:$0xff]
    %v322 = vld [vmem:[%s2 + $0x488] sm:$0xff]
    %v323 = vld [vmem:[%s2 + $0x490] sm:$0xff]
    %v324 = vld [vmem:[%s2 + $0x498] sm:$0xff]
    %v325 = vld [vmem:[%s2 + $0x4a0] sm:$0xff]
    %v326 = vld [vmem:[%s2 + $0x4a8] sm:$0xff]
    %v327 = vld [vmem:[%s2 + $0x4b0] sm:$0xff]
    %v328 = vld [vmem:[%s2 + $0x4b8] sm:$0xff]
    %v329 = vld [vmem:[%s2 + $0x4c0] sm:$0xff]
    %v330 = vld [vmem:[%s2 + $0x4c8] sm:$0xff]
    %v331 = vld [vmem:[%s2 + $0x4d0] sm:$0xff]
    %v332 = vld [vmem:[%s2 + $0x4d8] sm:$0xff]
    %v333 = vld [vmem:[%s2 + $0x4e0] sm:$0xff]
    %v334 = vld [vmem:[%s2 + $0x4e8] sm:$0xff]
    %v335 = vld [vmem:[%s2 + $0x4f0] sm:$0xff]
    %v336 = vld [vmem:[%s2 + $0x4f8] sm:$0xff]
    %v337 = vld [vmem:[%s2 + $0x500] sm:$0xff]
    %v338 = vld [vmem:[%s2 + $0x508] sm:$0xff]
    %v339 = vld [vmem:[%s2 + $0x510] sm:$0xff]
    %v340 = vld [vmem:[%s2 + $0x518] sm:$0xff]
    %v341 = vld [vmem:[%s2 + $0x520] sm:$0xff]
    %v342 = vld [vmem:[%s2 + $0x528] sm:$0xff]
    %v343 = vld [vmem:[%s2 + $0x530] sm:$0xff]
    %v344 = vld [vmem:[%s2 + $0x538] sm:$0xff]
    %v345 = vld [vmem:[%s2 + $0x540] sm:$0xff]
    %v346 = vld [vmem:[%s2 + $0x548] sm:$0xff]
    %v347 = vld [vmem:[%s2 + $0x550] sm:$0xff]
    %v348 = vld [vmem:[%s2 + $0x558] sm:$0xff]
    %v349 = vld [vmem:[%s2 + $0x560] sm:$0xff]
    %v350 = vld [vmem:[%s2 + $0x568] sm:$0xff]
    %v351 = vld [vmem:[%s2 + $0x570] sm:$0xff]
    %v352 = vld [vmem:[%s2 + $0x578] sm:$0xff]
    %v353 = vld [vmem:[%s2 + $0x580] sm:$0xff]
    %v354 = vld [vmem:[%s2 + $0x588] sm:$0xff]
    %v355 = vld [vmem:[%s2 + $0x590] sm:$0xff]
    %v356 = vld [vmem:[%s2 + $0x598] sm:$0xff]
    %v357 = vld [vmem:[%s2 + $0x5a0] sm:$0xff]
    %v358 = vld [vmem:[%s2 + $0x5a8] sm:$0xff]
    %v359 = vld [vmem:[%s2 + $0x5b0] sm:$0xff]
    %v360 = vld [vmem:[%s2 + $0x5b8] sm:$0xff]
    %v361 = vld [vmem:[%s2 + $0x5c0] sm:$0xff]
    %v362 = vld [vmem:[%s2 + $0x5c8] sm:$0xff]
    %v363 = vld [vmem:[%s2 + $0x5d0] sm:$0xff]
    %v364 = vld [vmem:[%s2 + $0x5d8] sm:$0xff]
    %v365 = vld [vmem:[%s2 + $0x5e0] sm:$0xff]
    %v366 = vld [vmem:[%s2 + $0x5e8] sm:$0xff]
    %v367 = vld [vmem:[%s2 + $0x5f0] sm:$0xff]
    %v368 = vld [vmem:[%s2 + $0x5f8] sm:$0xff]
    %v369 = vld [vmem:[%s3] sm:$0x1]
    %v370 = vld [vmem:[%s3 + $0x1] sm:$0x1]
    %v371 = vld [vmem:[#allocation2] sm:$0xff]
    %v372 = vld [vmem:[#allocation2 + $0x8] sm:$0xff]
    %v373 = vld [vmem:[#allocation3] sm:$0xff]
    %v374 = vld [vmem:[#allocation3 + $0x8] sm:$0xff]
    %v375 = vld [vmem:[#allocation3 + $0x10] sm:$0xff]
    %s376 = scalar_lea.vmem [#allocation4], 168
    %v377 = vld [vmem:[%s376] sm:$0xff]
    %v378 = vld [vmem:[%s376 + $0x8] sm:$0xff]
    %v379 = vld [vmem:[%s376 + $0x10] sm:$0xff]
    %380 = vmatprep.subr.mxu0 %v178
    %381 = vmatpush1.msra.mxu0 %v177
    %382 = vmatprep.subr.mxu0 %v184
    %383 = vmatpush1.msra.mxu0 %v183
    %384 = vmatprep.subr.mxu0 %v190
    %385 = vmatpush1.msra.mxu0 %v189
    %386 = vmatprep.subr.mxu0 %v196
    %387 = vmatpush1.msra.mxu0 %v195
    %388 = vmatprep.subr.mxu0 %v202
    %389 = vmatpush1.msra.mxu0 %v201
    %390 = vmatprep.subr.mxu0 %v208
    %391 = vmatpush1.msra.mxu0 %v207
    %392 = vmatprep.subr.mxu0 %v214
    %393 = vmatpush1.msra.mxu0 %v213
    %394 = vmatprep.subr.mxu0 %v220
    %395 = vmatpush1.msra.mxu0 %v219
    %396 = vmatprep.subr.mxu0 %v226
    %397 = vmatpush1.msra.mxu0 %v225
    %398 = vmatprep.subr.mxu0 %v232
    %399 = vmatpush1.msra.mxu0 %v231
    %400 = vmatprep.subr.mxu0 %v238
    %401 = vmatpush1.msra.mxu0 %v237
    %402 = vmatprep.subr.mxu0 %v244
    %403 = vmatpush1.msra.mxu0 %v243
    %404 = vmatprep.subr.mxu0 %v250
    %405 = vmatpush1.msra.mxu0 %v249
    %406 = vmatprep.subr.mxu0 %v256
    %407 = vmatpush1.msra.mxu0 %v255
    %408 = vmatprep.subr.mxu0 %v262
    %409 = vmatpush1.msra.mxu0 %v261
    %410 = vmatprep.subr.mxu0 %v268
    %411 = vmatpush1.msra.mxu0 %v267
    %412 = vmatprep.subr.mxu0 %v274
    %413 = vmatpush1.msra.mxu0 %v273
    %414 = vmatprep.subr.mxu0 %v280
    %415 = vmatpush1.msra.mxu0 %v279
    %416 = vmatprep.subr.mxu0 %v286
    %417 = vmatpush1.msra.mxu0 %v285
    %418 = vmatprep.subr.mxu0 %v292
    %419 = vmatpush1.msra.mxu0 %v291
    %420 = vmatprep.subr.mxu0 %v298
    %421 = vmatpush1.msra.mxu0 %v297
    %422 = vmatprep.subr.mxu0 %v304
    %423 = vmatpush1.msra.mxu0 %v303
    %424 = vmatprep.subr.mxu0 %v310
    %425 = vmatpush1.msra.mxu0 %v309
    %426 = vmatprep.subr.mxu0 %v316
    %427 = vmatpush1.msra.mxu0 %v315
    %428 = vmatprep.subr.mxu0 %v322
    %429 = vmatpush1.msra.mxu0 %v321
    %430 = vmatprep.subr.mxu0 %v328
    %431 = vmatpush1.msra.mxu0 %v327
    %432 = vmatprep.subr.mxu0 %v334
    %433 = vmatpush1.msra.mxu0 %v333
    %434 = vmatprep.subr.mxu0 %v340
    %435 = vmatpush1.msra.mxu0 %v339
    %436 = vmatprep.subr.mxu0 %v346
    %437 = vmatpush1.msra.mxu0 %v345
    %438 = vmatprep.subr.mxu0 %v352
    %439 = vmatpush1.msra.mxu0 %v351
    %440 = vmatprep.subr.mxu0 %v358
    %441 = vmatpush1.msra.mxu0 %v357
    %442 = vmatprep.subr.mxu0 %v364
    %443 = vmatpush1.msra.mxu0 %v363
    %444 = vmatprep.mubr.f32.mxu0 %v372
    %445 = vmatmul.mubr.f32.gmra.mrb[0].mxu0 %v371
    %v446 = vpop.f32.mrb[0].mxu0
    %v447 = vadd.f32 0.0, %v446
    %v448 = vpop.f32.mrb[0].mxu0
    %v449 = vadd.f32 0.0, %v448
    %450 = vdwg.mxu0
    %451 = vmatprep.subr.mxu0 %v180
    %452 = vmatpush1.msra.mxu0 %v179
    %453 = vmatprep.subr.mxu0 %v186
    %454 = vmatpush1.msra.mxu0 %v185
    %455 = vmatprep.subr.mxu0 %v192
    %456 = vmatpush1.msra.mxu0 %v191
    %457 = vmatprep.subr.mxu0 %v198
    %458 = vmatpush1.msra.mxu0 %v197
    %459 = vmatprep.subr.mxu0 %v204
    %460 = vmatpush1.msra.mxu0 %v203
    %461 = vmatprep.subr.mxu0 %v210
    %462 = vmatpush1.msra.mxu0 %v209
    %463 = vmatprep.subr.mxu0 %v216
    %464 = vmatpush1.msra.mxu0 %v215
    %465 = vmatprep.subr.mxu0 %v222
    %466 = vmatpush1.msra.mxu0 %v221
    %467 = vmatprep.subr.mxu0 %v228
    %468 = vmatpush1.msra.mxu0 %v227
    %469 = vmatprep.subr.mxu0 %v234
    %470 = vmatpush1.msra.mxu0 %v233
    %471 = vmatprep.subr.mxu0 %v240
    %472 = vmatpush1.msra.mxu0 %v239
    %473 = vmatprep.subr.mxu0 %v246
    %474 = vmatpush1.msra.mxu0 %v245
    %475 = vmatprep.subr.mxu0 %v252
    %476 = vmatpush1.msra.mxu0 %v251
    %477 = vmatprep.subr.mxu0 %v258
    %478 = vmatpush1.msra.mxu0 %v257
    %479 = vmatprep.subr.mxu0 %v264
    %480 = vmatpush1.msra.mxu0 %v263
    %481 = vmatprep.subr.mxu0 %v270
    %482 = vmatpush1.msra.mxu0 %v269
    %483 = vmatprep.subr.mxu0 %v276
    %484 = vmatpush1.msra.mxu0 %v275
    %485 = vmatprep.subr.mxu0 %v282
    %486 = vmatpush1.msra.mxu0 %v281
    %487 = vmatprep.subr.mxu0 %v288
    %488 = vmatpush1.msra.mxu0 %v287
    %489 = vmatprep.subr.mxu0 %v294
    %490 = vmatpush1.msra.mxu0 %v293
    %491 = vmatprep.subr.mxu0 %v300
    %492 = vmatpush1.msra.mxu0 %v299
    %493 = vmatprep.subr.mxu0 %v306
    %494 = vmatpush1.msra.mxu0 %v305
    %495 = vmatprep.subr.mxu0 %v312
    %496 = vmatpush1.msra.mxu0 %v311
    %497 = vmatprep.subr.mxu0 %v318
    %498 = vmatpush1.msra.mxu0 %v317
    %499 = vmatprep.subr.mxu0 %v324
    %500 = vmatpush1.msra.mxu0 %v323
    %501 = vmatprep.subr.mxu0 %v330
    %502 = vmatpush1.msra.mxu0 %v329
    %503 = vmatprep.subr.mxu0 %v336
    %504 = vmatpush1.msra.mxu0 %v335
    %505 = vmatprep.subr.mxu0 %v342
    %506 = vmatpush1.msra.mxu0 %v341
    %507 = vmatprep.subr.mxu0 %v348
    %508 = vmatpush1.msra.mxu0 %v347
    %509 = vmatprep.subr.mxu0 %v354
    %510 = vmatpush1.msra.mxu0 %v353
    %511 = vmatprep.subr.mxu0 %v360
    %512 = vmatpush1.msra.mxu0 %v359
    %513 = vmatprep.subr.mxu0 %v366
    %514 = vmatpush1.msra.mxu0 %v365
    %515 = vmatprep.mubr.f32.mxu0 %v372
    %516 = vmatmul.mubr.f32.gmra.mrb[0].mxu0 %v371
    %v517 = vpop.f32.mrb[0].mxu0
    %v518 = vadd.f32 0.0, %v517
    %v519 = vpop.f32.mrb[0].mxu0
    %v520 = vadd.f32 0.0, %v519
    %521 = vdwg.mxu0
    %522 = vmatprep.subr.mxu0 %v182
    %523 = vmatpush1.msra.mxu0 %v181
    %524 = vmatprep.subr.mxu0 %v188
    %525 = vmatpush1.msra.mxu0 %v187
    %526 = vmatprep.subr.mxu0 %v194
    %527 = vmatpush1.msra.mxu0 %v193
    %528 = vmatprep.subr.mxu0 %v200
    %529 = vmatpush1.msra.mxu0 %v199
    %530 = vmatprep.subr.mxu0 %v206
    %531 = vmatpush1.msra.mxu0 %v205
    %532 = vmatprep.subr.mxu0 %v212
    %533 = vmatpush1.msra.mxu0 %v211
    %534 = vmatprep.subr.mxu0 %v218
    %535 = vmatpush1.msra.mxu0 %v217
    %536 = vmatprep.subr.mxu0 %v224
    %537 = vmatpush1.msra.mxu0 %v223
    %538 = vmatprep.subr.mxu0 %v230
    %539 = vmatpush1.msra.mxu0 %v229
    %540 = vmatprep.subr.mxu0 %v236
    %541 = vmatpush1.msra.mxu0 %v235
    %542 = vmatprep.subr.mxu0 %v242
    %543 = vmatpush1.msra.mxu0 %v241
    %544 = vmatprep.subr.mxu0 %v248
    %545 = vmatpush1.msra.mxu0 %v247
    %546 = vmatprep.subr.mxu0 %v254
    %547 = vmatpush1.msra.mxu0 %v253
    %548 = vmatprep.subr.mxu0 %v260
    %549 = vmatpush1.msra.mxu0 %v259
    %550 = vmatprep.subr.mxu0 %v266
    %551 = vmatpush1.msra.mxu0 %v265
    %552 = vmatprep.subr.mxu0 %v272
    %553 = vmatpush1.msra.mxu0 %v271
    %554 = vmatprep.subr.mxu0 %v278
    %555 = vmatpush1.msra.mxu0 %v277
    %556 = vmatprep.subr.mxu0 %v284
    %557 = vmatpush1.msra.mxu0 %v283
    %558 = vmatprep.subr.mxu0 %v290
    %559 = vmatpush1.msra.mxu0 %v289
    %560 = vmatprep.subr.mxu0 %v296
    %561 = vmatpush1.msra.mxu0 %v295
    %562 = vmatprep.subr.mxu0 %v302
    %563 = vmatpush1.msra.mxu0 %v301
    %564 = vmatprep.subr.mxu0 %v308
    %565 = vmatpush1.msra.mxu0 %v307
    %566 = vmatprep.subr.mxu0 %v314
    %567 = vmatpush1.msra.mxu0 %v313
    %568 = vmatprep.subr.mxu0 %v320
    %569 = vmatpush1.msra.mxu0 %v319
    %570 = vmatprep.subr.mxu0 %v326
    %571 = vmatpush1.msra.mxu0 %v325
    %572 = vmatprep.subr.mxu0 %v332
    %573 = vmatpush1.msra.mxu0 %v331
    %574 = vmatprep.subr.mxu0 %v338
    %575 = vmatpush1.msra.mxu0 %v337
    %576 = vmatprep.subr.mxu0 %v344
    %577 = vmatpush1.msra.mxu0 %v343
    %578 = vmatprep.subr.mxu0 %v350
    %579 = vmatpush1.msra.mxu0 %v349
    %580 = vmatprep.subr.mxu0 %v356
    %581 = vmatpush1.msra.mxu0 %v355
    %582 = vmatprep.subr.mxu0 %v362
    %583 = vmatpush1.msra.mxu0 %v361
    %584 = vmatprep.subr.mxu0 %v368
    %585 = vmatpush1.msra.mxu0 %v367
    %586 = vmatprep.mubr.f32.mxu0 %v372
    %587 = vmatmul.mubr.f32.gmra.mrb[0].mxu0 %v371
    %v588 = vpop.f32.mrb[0].mxu0
    %v589 = vadd.f32 0.0, %v588
    %v590 = vpop.f32.mrb[0].mxu0
    %v591 = vadd.f32 0.0, %v590
    %592 = vdwg.mxu0
    %v593 = vadd.f32 %v373, %v447
    %v594 = vxor.u32 %v593, 2147483648
    %v595 = vmul.f32 %v594, 1.442695
    %v596 = vpow.pop %v595
    %v597 = vadd.f32 %v596, 1.0
    %v598 = vrcp.pop %v597
    %v599 = vmul.f32 1.0, %v598
    %v600 = vadd.f32 %v374, %v449
    %v601 = vxor.u32 %v600, 2147483648
    %v602 = vmul.f32 %v601, 1.442695
    %v603 = vpow.pop %v602
    %v604 = vadd.f32 %v603, 1.0
    %v605 = vrcp.pop %v604
    %v606 = vmul.f32 1.0, %v605
    %v608 = vlaneseq
    %v609 = vshrl.u32 %v608, 7
    %v610 = vsub.s32 0, %v609
    %v611 = vrot.slane %v369, %v610
    %v613 = vadd.f32 %v518, %v611
    %v614 = vmul.f32 %v599, %v613
    %v615 = vadd.f32 %v375, %v614
    %v616 = vtanh.pop %v615
    %v617 = vadd.f32 %v377, %v520
    %v618 = vxor.u32 %v617, 2147483648
    %v619 = vmul.f32 %v618, 1.442695
    %v620 = vpow.pop %v619
    %v621 = vadd.f32 %v620, 1.0
    %v622 = vrcp.pop %v621
    %v623 = vmul.f32 1.0, %v622
    %v624 = vadd.f32 %v378, %v589
    %v625 = vxor.u32 %v624, 2147483648
    %v626 = vmul.f32 %v625, 1.442695
    %v627 = vpow.pop %v626
    %v628 = vadd.f32 %v627, 1.0
    %v629 = vrcp.pop %v628
    %v630 = vmul.f32 1.0, %v629
    %v632 = vlaneseq
    %v633 = vshrl.u32 %v632, 7
    %v634 = vsub.s32 0, %v633
    %v635 = vrot.slane %v370, %v634
    %v637 = vadd.f32 %v591, %v635
    %v638 = vmul.f32 %v623, %v637
    %v639 = vadd.f32 %v379, %v638
    %v640 = vtanh.pop %v639
    %v641 = vsub.f32 1.0, %v606
    %v642 = vmul.f32 %v641, %v616
    %v643 = vmul.f32 %v606, %v371
    %v644 = vadd.f32 %v642, %v643
    %v645 = vsub.f32 1.0, %v630
    %v646 = vmul.f32 %v645, %v640
    %v647 = vmul.f32 %v630, %v372
    %v648 = vadd.f32 %v646, %v647
    %649 = vst [vmem:[%s4] sm:$0xff] %v644
    %s650 = scalar_lea.vmem %s168, 56
    %651 = vst [vmem:[%s650] sm:$0xff] %v648
    %s652 = scalar_lea.vmem [#allocation3], 24
    %v653 = vld [vmem:[%s652] sm:$0xff]
    %v654 = vld [vmem:[%s652 + $0x8] sm:$0xff]
    %v655 = vld [vmem:[%s652 + $0x10] sm:$0xff]
    %s656 = scalar_lea.vmem [#allocation4], 144
    %v657 = vld [vmem:[%s656] sm:$0xff]
    %v658 = vld [vmem:[%s656 + $0x8] sm:$0xff]
    %v659 = vld [vmem:[%s656 + $0x10] sm:$0xff]
    %660 = vmatprep.subr.mxu0 %v178
    %661 = vmatpush1.msra.mxu0 %v177
    %662 = vmatprep.subr.mxu0 %v184
    %663 = vmatpush1.msra.mxu0 %v183
    %664 = vmatprep.subr.mxu0 %v190
    %665 = vmatpush1.msra.mxu0 %v189
    %666 = vmatprep.subr.mxu0 %v196
    %667 = vmatpush1.msra.mxu0 %v195
    %668 = vmatprep.subr.mxu0 %v202
    %669 = vmatpush1.msra.mxu0 %v201
    %670 = vmatprep.subr.mxu0 %v208
    %671 = vmatpush1.msra.mxu0 %v207
    %672 = vmatprep.subr.mxu0 %v214
    %673 = vmatpush1.msra.mxu0 %v213
    %674 = vmatprep.subr.mxu0 %v220
    %675 = vmatpush1.msra.mxu0 %v219
    %676 = vmatprep.subr.mxu0 %v226
    %677 = vmatpush1.msra.mxu0 %v225
    %678 = vmatprep.subr.mxu0 %v232
    %679 = vmatpush1.msra.mxu0 %v231
    %680 = vmatprep.subr.mxu0 %v238
    %681 = vmatpush1.msra.mxu0 %v237
    %682 = vmatprep.subr.mxu0 %v244
    %683 = vmatpush1.msra.mxu0 %v243
    %684 = vmatprep.subr.mxu0 %v250
    %685 = vmatpush1.msra.mxu0 %v249
    %686 = vmatprep.subr.mxu0 %v256
    %687 = vmatpush1.msra.mxu0 %v255
    %688 = vmatprep.subr.mxu0 %v262
    %689 = vmatpush1.msra.mxu0 %v261
    %690 = vmatprep.subr.mxu0 %v268
    %691 = vmatpush1.msra.mxu0 %v267
    %692 = vmatprep.subr.mxu0 %v274
    %693 = vmatpush1.msra.mxu0 %v273
    %694 = vmatprep.subr.mxu0 %v280
    %695 = vmatpush1.msra.mxu0 %v279
    %696 = vmatprep.subr.mxu0 %v286
    %697 = vmatpush1.msra.mxu0 %v285
    %698 = vmatprep.subr.mxu0 %v292
    %699 = vmatpush1.msra.mxu0 %v291
    %700 = vmatprep.subr.mxu0 %v298
    %701 = vmatpush1.msra.mxu0 %v297
    %702 = vmatprep.subr.mxu0 %v304
    %703 = vmatpush1.msra.mxu0 %v303
    %704 = vmatprep.subr.mxu0 %v310
    %705 = vmatpush1.msra.mxu0 %v309
    %706 = vmatprep.subr.mxu0 %v316
    %707 = vmatpush1.msra.mxu0 %v315
    %708 = vmatprep.subr.mxu0 %v322
    %709 = vmatpush1.msra.mxu0 %v321
    %710 = vmatprep.subr.mxu0 %v328
    %711 = vmatpush1.msra.mxu0 %v327
    %712 = vmatprep.subr.mxu0 %v334
    %713 = vmatpush1.msra.mxu0 %v333
    %714 = vmatprep.subr.mxu0 %v340
    %715 = vmatpush1.msra.mxu0 %v339
    %716 = vmatprep.subr.mxu0 %v346
    %717 = vmatpush1.msra.mxu0 %v345
    %718 = vmatprep.subr.mxu0 %v352
    %719 = vmatpush1.msra.mxu0 %v351
    %720 = vmatprep.subr.mxu0 %v358
    %721 = vmatpush1.msra.mxu0 %v357
    %722 = vmatprep.subr.mxu0 %v364
    %723 = vmatpush1.msra.mxu0 %v363
    %724 = vmatprep.mubr.f32.mxu0 %v648
    %725 = vmatmul.mubr.f32.gmra.mrb[0].mxu0 %v644
    %v726 = vpop.f32.mrb[0].mxu0
    %v727 = vadd.f32 0.0, %v726
    %v728 = vpop.f32.mrb[0].mxu0
    %v729 = vadd.f32 0.0, %v728
    %730 = vdwg.mxu0
    %731 = vmatprep.subr.mxu0 %v180
    %732 = vmatpush1.msra.mxu0 %v179
    %733 = vmatprep.subr.mxu0 %v186
    %734 = vmatpush1.msra.mxu0 %v185
    %735 = vmatprep.subr.mxu0 %v192
    %736 = vmatpush1.msra.mxu0 %v191
    %737 = vmatprep.subr.mxu0 %v198
    %738 = vmatpush1.msra.mxu0 %v197
    %739 = vmatprep.subr.mxu0 %v204
    %740 = vmatpush1.msra.mxu0 %v203
    %741 = vmatprep.subr.mxu0 %v210
    %742 = vmatpush1.msra.mxu0 %v209
    %743 = vmatprep.subr.mxu0 %v216
    %744 = vmatpush1.msra.mxu0 %v215
    %745 = vmatprep.subr.mxu0 %v222
    %746 = vmatpush1.msra.mxu0 %v221
    %747 = vmatprep.subr.mxu0 %v228
    %748 = vmatpush1.msra.mxu0 %v227
    %749 = vmatprep.subr.mxu0 %v234
    %750 = vmatpush1.msra.mxu0 %v233
    %751 = vmatprep.subr.mxu0 %v240
    %752 = vmatpush1.msra.mxu0 %v239
    %753 = vmatprep.subr.mxu0 %v246
    %754 = vmatpush1.msra.mxu0 %v245
    %755 = vmatprep.subr.mxu0 %v252
    %756 = vmatpush1.msra.mxu0 %v251
    %757 = vmatprep.subr.mxu0 %v258
    %758 = vmatpush1.msra.mxu0 %v257
    %759 = vmatprep.subr.mxu0 %v264
    %760 = vmatpush1.msra.mxu0 %v263
    %761 = vmatprep.subr.mxu0 %v270
    %762 = vmatpush1.msra.mxu0 %v269
    %763 = vmatprep.subr.mxu0 %v276
    %764 = vmatpush1.msra.mxu0 %v275
    %765 = vmatprep.subr.mxu0 %v282
    %766 = vmatpush1.msra.mxu0 %v281
    %767 = vmatprep.subr.mxu0 %v288
    %768 = vmatpush1.msra.mxu0 %v287
    %769 = vmatprep.subr.mxu0 %v294
    %770 = vmatpush1.msra.mxu0 %v293
    %771 = vmatprep.subr.mxu0 %v300
    %772 = vmatpush1.msra.mxu0 %v299
    %773 = vmatprep.subr.mxu0 %v306
    %774 = vmatpush1.msra.mxu0 %v305
    %775 = vmatprep.subr.mxu0 %v312
    %776 = vmatpush1.msra.mxu0 %v311
    %777 = vmatprep.subr.mxu0 %v318
    %778 = vmatpush1.msra.mxu0 %v317
    %779 = vmatprep.subr.mxu0 %v324
    %780 = vmatpush1.msra.mxu0 %v323
    %781 = vmatprep.subr.mxu0 %v330
    %782 = vmatpush1.msra.mxu0 %v329
    %783 = vmatprep.subr.mxu0 %v336
    %784 = vmatpush1.msra.mxu0 %v335
    %785 = vmatprep.subr.mxu0 %v342
    %786 = vmatpush1.msra.mxu0 %v341
    %787 = vmatprep.subr.mxu0 %v348
    %788 = vmatpush1.msra.mxu0 %v347
    %789 = vmatprep.subr.mxu0 %v354
    %790 = vmatpush1.msra.mxu0 %v353
    %791 = vmatprep.subr.mxu0 %v360
    %792 = vmatpush1.msra.mxu0 %v359
    %793 = vmatprep.subr.mxu0 %v366
    %794 = vmatpush1.msra.mxu0 %v365
    %795 = vmatprep.mubr.f32.mxu0 %v648
    %796 = vmatmul.mubr.f32.gmra.mrb[0].mxu0 %v644
    %v797 = vpop.f32.mrb[0].mxu0
    %v798 = vadd.f32 0.0, %v797
    %v799 = vpop.f32.mrb[0].mxu0
    %v800 = vadd.f32 0.0, %v799
    %801 = vdwg.mxu0
    %802 = vmatprep.subr.mxu0 %v182
    %803 = vmatpush1.msra.mxu0 %v181
    %804 = vmatprep.subr.mxu0 %v188
    %805 = vmatpush1.msra.mxu0 %v187
    %806 = vmatprep.subr.mxu0 %v194
    %807 = vmatpush1.msra.mxu0 %v193
    %808 = vmatprep.subr.mxu0 %v200
    %809 = vmatpush1.msra.mxu0 %v199
    %810 = vmatprep.subr.mxu0 %v206
    %811 = vmatpush1.msra.mxu0 %v205
    %812 = vmatprep.subr.mxu0 %v212
    %813 = vmatpush1.msra.mxu0 %v211
    %814 = vmatprep.subr.mxu0 %v218
    %815 = vmatpush1.msra.mxu0 %v217
    %816 = vmatprep.subr.mxu0 %v224
    %817 = vmatpush1.msra.mxu0 %v223
    %818 = vmatprep.subr.mxu0 %v230
    %819 = vmatpush1.msra.mxu0 %v229
    %820 = vmatprep.subr.mxu0 %v236
    %821 = vmatpush1.msra.mxu0 %v235
    %822 = vmatprep.subr.mxu0 %v242
    %823 = vmatpush1.msra.mxu0 %v241
    %824 = vmatprep.subr.mxu0 %v248
    %825 = vmatpush1.msra.mxu0 %v247
    %826 = vmatprep.subr.mxu0 %v254
    %827 = vmatpush1.msra.mxu0 %v253
    %828 = vmatprep.subr.mxu0 %v260
    %829 = vmatpush1.msra.mxu0 %v259
    %830 = vmatprep.subr.mxu0 %v266
    %831 = vmatpush1.msra.mxu0 %v265
    %832 = vmatprep.subr.mxu0 %v272
    %833 = vmatpush1.msra.mxu0 %v271
    %834 = vmatprep.subr.mxu0 %v278
    %835 = vmatpush1.msra.mxu0 %v277
    %836 = vmatprep.subr.mxu0 %v284
    %837 = vmatpush1.msra.mxu0 %v283
    %838 = vmatprep.subr.mxu0 %v290
    %839 = vmatpush1.msra.mxu0 %v289
    %840 = vmatprep.subr.mxu0 %v296
    %841 = vmatpush1.msra.mxu0 %v295
    %842 = vmatprep.subr.mxu0 %v302
    %843 = vmatpush1.msra.mxu0 %v301
    %844 = vmatprep.subr.mxu0 %v308
    %845 = vmatpush1.msra.mxu0 %v307
    %846 = vmatprep.subr.mxu0 %v314
    %847 = vmatpush1.msra.mxu0 %v313
    %848 = vmatprep.subr.mxu0 %v320
    %849 = vmatpush1.msra.mxu0 %v319
    %850 = vmatprep.subr.mxu0 %v326
    %851 = vmatpush1.msra.mxu0 %v325
    %852 = vmatprep.subr.mxu0 %v332
    %853 = vmatpush1.msra.mxu0 %v331
    %854 = vmatprep.subr.mxu0 %v338
    %855 = vmatpush1.msra.mxu0 %v337
    %856 = vmatprep.subr.mxu0 %v344
    %857 = vmatpush1.msra.mxu0 %v343
    %858 = vmatprep.subr.mxu0 %v350
    %859 = vmatpush1.msra.mxu0 %v349
    %860 = vmatprep.subr.mxu0 %v356
    %861 = vmatpush1.msra.mxu0 %v355
    %862 = vmatprep.subr.mxu0 %v362
    %863 = vmatpush1.msra.mxu0 %v361
    %864 = vmatprep.subr.mxu0 %v368
    %865 = vmatpush1.msra.mxu0 %v367
    %866 = vmatprep.mubr.f32.mxu0 %v648
    %867 = vmatmul.mubr.f32.gmra.mrb[0].mxu0 %v644
    %v868 = vpop.f32.mrb[0].mxu0
    %v869 = vadd.f32 0.0, %v868
    %v870 = vpop.f32.mrb[0].mxu0
    %v871 = vadd.f32 0.0, %v870
    %872 = vdwg.mxu0
    %v873 = vadd.f32 %v653, %v727
    %v874 = vxor.u32 %v873, 2147483648
    %v875 = vmul.f32 %v874, 1.442695
    %v876 = vpow.pop %v875
    %v877 = vadd.f32 %v876, 1.0
    %v878 = vrcp.pop %v877
    %v879 = vmul.f32 1.0, %v878
    %v880 = vadd.f32 %v654, %v729
    %v881 = vxor.u32 %v880, 2147483648
    %v882 = vmul.f32 %v881, 1.442695
    %v883 = vpow.pop %v882
    %v884 = vadd.f32 %v883, 1.0
    %v885 = vrcp.pop %v884
    %v886 = vmul.f32 1.0, %v885
    %v887 = vadd.f32 %v798, %v611
    %v888 = vmul.f32 %v879, %v887
    %v889 = vadd.f32 %v655, %v888
    %v890 = vtanh.pop %v889
    %v891 = vadd.f32 %v657, %v800
    %v892 = vxor.u32 %v891, 2147483648
    %v893 = vmul.f32 %v892, 1.442695
    %v894 = vpow.pop %v893
    %v895 = vadd.f32 %v894, 1.0
    %v896 = vrcp.pop %v895
    %v897 = vmul.f32 1.0, %v896
    %v898 = vadd.f32 %v658, %v869
    %v899 = vxor.u32 %v898, 2147483648
    %v900 = vmul.f32 %v899, 1.442695
    %v901 = vpow.pop %v900
    %v902 = vadd.f32 %v901, 1.0
    %v903 = vrcp.pop %v902
    %v904 = vmul.f32 1.0, %v903
    %v905 = vadd.f32 %v871, %v635
    %v906 = vmul.f32 %v897, %v905
    %v907 = vadd.f32 %v659, %v906
    %v908 = vtanh.pop %v907
    %v909 = vsub.f32 1.0, %v886
    %v910 = vmul.f32 %v909, %v890
    %v911 = vmul.f32 %v886, %v644
    %v912 = vadd.f32 %v910, %v911
    %v913 = vsub.f32 1.0, %v904
    %v914 = vmul.f32 %v913, %v908
    %v915 = vmul.f32 %v904, %v648
    %v916 = vadd.f32 %v914, %v915
    %s917 = scalar_lea.vmem %s4, 8
    %918 = vst [vmem:[%s917] sm:$0xff] %v912
    %s919 = scalar_lea.vmem %s168, 48
    %920 = vst [vmem:[%s919] sm:$0xff] %v916
    %s921 = scalar_lea.vmem [#allocation3], 48
    %v922 = vld [vmem:[%s921] sm:$0xff]
    %v923 = vld [vmem:[%s921 + $0x8] sm:$0xff]
    %v924 = vld [vmem:[%s921 + $0x10] sm:$0xff]
    %s925 = scalar_lea.vmem [#allocation4], 120
    %v926 = vld [vmem:[%s925] sm:$0xff]
    %v927 = vld [vmem:[%s925 + $0x8] sm:$0xff]
    %v928 = vld [vmem:[%s925 + $0x10] sm:$0xff]
    %929 = vmatprep.subr.mxu0 %v178
    %930 = vmatpush1.msra.mxu0 %v177
    %931 = vmatprep.subr.mxu0 %v184
    %932 = vmatpush1.msra.mxu0 %v183
    %933 = vmatprep.subr.mxu0 %v190
    %934 = vmatpush1.msra.mxu0 %v189
    %935 = vmatprep.subr.mxu0 %v196
    %936 = vmatpush1.msra.mxu0 %v195
    %937 = vmatprep.subr.mxu0 %v202
    %938 = vmatpush1.msra.mxu0 %v201
    %939 = vmatprep.subr.mxu0 %v208
    %940 = vmatpush1.msra.mxu0 %v207
    %941 = vmatprep.subr.mxu0 %v214
    %942 = vmatpush1.msra.mxu0 %v213
    %943 = vmatprep.subr.mxu0 %v220
    %944 = vmatpush1.msra.mxu0 %v219
    %945 = vmatprep.subr.mxu0 %v226
    %946 = vmatpush1.msra.mxu0 %v225
    %947 = vmatprep.subr.mxu0 %v232
    %948 = vmatpush1.msra.mxu0 %v231
    %949 = vmatprep.subr.mxu0 %v238
    %950 = vmatpush1.msra.mxu0 %v237
    %951 = vmatprep.subr.mxu0 %v244
    %952 = vmatpush1.msra.mxu0 %v243
    %953 = vmatprep.subr.mxu0 %v250
    %954 = vmatpush1.msra.mxu0 %v249
    %955 = vmatprep.subr.mxu0 %v256
    %956 = vmatpush1.msra.mxu0 %v255
    %957 = vmatprep.subr.mxu0 %v262
    %958 = vmatpush1.msra.mxu0 %v261
    %959 = vmatprep.subr.mxu0 %v268
    %960 = vmatpush1.msra.mxu0 %v267
    %961 = vmatprep.subr.mxu0 %v274
    %962 = vmatpush1.msra.mxu0 %v273
    %963 = vmatprep.subr.mxu0 %v280
    %964 = vmatpush1.msra.mxu0 %v279
    %965 = vmatprep.subr.mxu0 %v286
    %966 = vmatpush1.msra.mxu0 %v285
    %967 = vmatprep.subr.mxu0 %v292
    %968 = vmatpush1.msra.mxu0 %v291
    %969 = vmatprep.subr.mxu0 %v298
    %970 = vmatpush1.msra.mxu0 %v297
    %971 = vmatprep.subr.mxu0 %v304
    %972 = vmatpush1.msra.mxu0 %v303
    %973 = vmatprep.subr.mxu0 %v310
    %974 = vmatpush1.msra.mxu0 %v309
    %975 = vmatprep.subr.mxu0 %v316
    %976 = vmatpush1.msra.mxu0 %v315
    %977 = vmatprep.subr.mxu0 %v322
    %978 = vmatpush1.msra.mxu0 %v321
    %979 = vmatprep.subr.mxu0 %v328
    %980 = vmatpush1.msra.mxu0 %v327
    %981 = vmatprep.subr.mxu0 %v334
    %982 = vmatpush1.msra.mxu0 %v333
    %983 = vmatprep.subr.mxu0 %v340
    %984 = vmatpush1.msra.mxu0 %v339
    %985 = vmatprep.subr.mxu0 %v346
    %986 = vmatpush1.msra.mxu0 %v345
    %987 = vmatprep.subr.mxu0 %v352
    %988 = vmatpush1.msra.mxu0 %v351
    %989 = vmatprep.subr.mxu0 %v358
    %990 = vmatpush1.msra.mxu0 %v357
    %991 = vmatprep.subr.mxu0 %v364
    %992 = vmatpush1.msra.mxu0 %v363
    %993 = vmatprep.mubr.f32.mxu0 %v916
    %994 = vmatmul.mubr.f32.gmra.mrb[0].mxu0 %v912
    %v995 = vpop.f32.mrb[0].mxu0
    %v996 = vadd.f32 0.0, %v995
    %v997 = vpop.f32.mrb[0].mxu0
    %v998 = vadd.f32 0.0, %v997
    %999 = vdwg.mxu0
    %1000 = vmatprep.subr.mxu0 %v180
    %1001 = vmatpush1.msra.mxu0 %v179
    %1002 = vmatprep.subr.mxu0 %v186
    %1003 = vmatpush1.msra.mxu0 %v185
    %1004 = vmatprep.subr.mxu0 %v192
    %1005 = vmatpush1.msra.mxu0 %v191
    %1006 = vmatprep.subr.mxu0 %v198
    %1007 = vmatpush1.msra.mxu0 %v197
    %1008 = vmatprep.subr.mxu0 %v204
    %1009 = vmatpush1.msra.mxu0 %v203
    %1010 = vmatprep.subr.mxu0 %v210
    %1011 = vmatpush1.msra.mxu0 %v209
    %1012 = vmatprep.subr.mxu0 %v216
    %1013 = vmatpush1.msra.mxu0 %v215
    %1014 = vmatprep.subr.mxu0 %v222
    %1015 = vmatpush1.msra.mxu0 %v221
    %1016 = vmatprep.subr.mxu0 %v228
    %1017 = vmatpush1.msra.mxu0 %v227
    %1018 = vmatprep.subr.mxu0 %v234
    %1019 = vmatpush1.msra.mxu0 %v233
    %1020 = vmatprep.subr.mxu0 %v240
    %1021 = vmatpush1.msra.mxu0 %v239
    %1022 = vmatprep.subr.mxu0 %v246
    %1023 = vmatpush1.msra.mxu0 %v245
    %1024 = vmatprep.subr.mxu0 %v252
    %1025 = vmatpush1.msra.mxu0 %v251
    %1026 = vmatprep.subr.mxu0 %v258
    %1027 = vmatpush1.msra.mxu0 %v257
    %1028 = vmatprep.subr.mxu0 %v264
    %1029 = vmatpush1.msra.mxu0 %v263
    %1030 = vmatprep.subr.mxu0 %v270
    %1031 = vmatpush1.msra.mxu0 %v269
    %1032 = vmatprep.subr.mxu0 %v276
    %1033 = vmatpush1.msra.mxu0 %v275
    %1034 = vmatprep.subr.mxu0 %v282
    %1035 = vmatpush1.msra.mxu0 %v281
    %1036 = vmatprep.subr.mxu0 %v288
    %1037 = vmatpush1.msra.mxu0 %v287
    %1038 = vmatprep.subr.mxu0 %v294
    %1039 = vmatpush1.msra.mxu0 %v293
    %1040 = vmatprep.subr.mxu0 %v300
    %1041 = vmatpush1.msra.mxu0 %v299
    %1042 = vmatprep.subr.mxu0 %v306
    %1043 = vmatpush1.msra.mxu0 %v305
    %1044 = vmatprep.subr.mxu0 %v312
    %1045 = vmatpush1.msra.mxu0 %v311
    %1046 = vmatprep.subr.mxu0 %v318
    %1047 = vmatpush1.msra.mxu0 %v317
    %1048 = vmatprep.subr.mxu0 %v324
    %1049 = vmatpush1.msra.mxu0 %v323
    %1050 = vmatprep.subr.mxu0 %v330
    %1051 = vmatpush1.msra.mxu0 %v329
    %1052 = vmatprep.subr.mxu0 %v336
    %1053 = vmatpush1.msra.mxu0 %v335
    %1054 = vmatprep.subr.mxu0 %v342
    %1055 = vmatpush1.msra.mxu0 %v341
    %1056 = vmatprep.subr.mxu0 %v348
    %1057 = vmatpush1.msra.mxu0 %v347
    %1058 = vmatprep.subr.mxu0 %v354
    %1059 = vmatpush1.msra.mxu0 %v353
    %1060 = vmatprep.subr.mxu0 %v360
    %1061 = vmatpush1.msra.mxu0 %v359
    %1062 = vmatprep.subr.mxu0 %v366
    %1063 = vmatpush1.msra.mxu0 %v365
    %1064 = vmatprep.mubr.f32.mxu0 %v916
    %1065 = vmatmul.mubr.f32.gmra.mrb[0].mxu0 %v912
    %v1066 = vpop.f32.mrb[0].mxu0
    %v1067 = vadd.f32 0.0, %v1066
    %v1068 = vpop.f32.mrb[0].mxu0
    %v1069 = vadd.f32 0.0, %v1068
    %1070 = vdwg.mxu0
    %1071 = vmatprep.subr.mxu0 %v182
    %1072 = vmatpush1.msra.mxu0 %v181
    %1073 = vmatprep.subr.mxu0 %v188
    %1074 = vmatpush1.msra.mxu0 %v187
    %1075 = vmatprep.subr.mxu0 %v194
    %1076 = vmatpush1.msra.mxu0 %v193
    %1077 = vmatprep.subr.mxu0 %v200
    %1078 = vmatpush1.msra.mxu0 %v199
    %1079 = vmatprep.subr.mxu0 %v206
    %1080 = vmatpush1.msra.mxu0 %v205
    %1081 = vmatprep.subr.mxu0 %v212
    %1082 = vmatpush1.msra.mxu0 %v211
    %1083 = vmatprep.subr.mxu0 %v218
    %1084 = vmatpush1.msra.mxu0 %v217
    %1085 = vmatprep.subr.mxu0 %v224
    %1086 = vmatpush1.msra.mxu0 %v223
    %1087 = vmatprep.subr.mxu0 %v230
    %1088 = vmatpush1.msra.mxu0 %v229
    %1089 = vmatprep.subr.mxu0 %v236
    %1090 = vmatpush1.msra.mxu0 %v235
    %1091 = vmatprep.subr.mxu0 %v242
    %1092 = vmatpush1.msra.mxu0 %v241
    %1093 = vmatprep.subr.mxu0 %v248
    %1094 = vmatpush1.msra.mxu0 %v247
    %1095 = vmatprep.subr.mxu0 %v254
    %1096 = vmatpush1.msra.mxu0 %v253
    %1097 = vmatprep.subr.mxu0 %v260
    %1098 = vmatpush1.msra.mxu0 %v259
    %1099 = vmatprep.subr.mxu0 %v266
    %1100 = vmatpush1.msra.mxu0 %v265
    %1101 = vmatprep.subr.mxu0 %v272
    %1102 = vmatpush1.msra.mxu0 %v271
    %1103 = vmatprep.subr.mxu0 %v278
    %1104 = vmatpush1.msra.mxu0 %v277
    %1105 = vmatprep.subr.mxu0 %v284
    %1106 = vmatpush1.msra.mxu0 %v283
    %1107 = vmatprep.subr.mxu0 %v290
    %1108 = vmatpush1.msra.mxu0 %v289
    %1109 = vmatprep.subr.mxu0 %v296
    %1110 = vmatpush1.msra.mxu0 %v295
    %1111 = vmatprep.subr.mxu0 %v302
    %1112 = vmatpush1.msra.mxu0 %v301
    %1113 = vmatprep.subr.mxu0 %v308
    %1114 = vmatpush1.msra.mxu0 %v307
    %1115 = vmatprep.subr.mxu0 %v314
    %1116 = vmatpush1.msra.mxu0 %v313
    %1117 = vmatprep.subr.mxu0 %v320
    %1118 = vmatpush1.msra.mxu0 %v319
    %1119 = vmatprep.subr.mxu0 %v326
    %1120 = vmatpush1.msra.mxu0 %v325
    %1121 = vmatprep.subr.mxu0 %v332
    %1122 = vmatpush1.msra.mxu0 %v331
    %1123 = vmatprep.subr.mxu0 %v338
    %1124 = vmatpush1.msra.mxu0 %v337
    %1125 = vmatprep.subr.mxu0 %v344
    %1126 = vmatpush1.msra.mxu0 %v343
    %1127 = vmatprep.subr.mxu0 %v350
    %1128 = vmatpush1.msra.mxu0 %v349
    %1129 = vmatprep.subr.mxu0 %v356
    %1130 = vmatpush1.msra.mxu0 %v355
    %1131 = vmatprep.subr.mxu0 %v362
    %1132 = vmatpush1.msra.mxu0 %v361
    %1133 = vmatprep.subr.mxu0 %v368
    %1134 = vmatpush1.msra.mxu0 %v367
    %1135 = vmatprep.mubr.f32.mxu0 %v916
    %1136 = vmatmul.mubr.f32.gmra.mrb[0].mxu0 %v912
    %v1137 = vpop.f32.mrb[0].mxu0
    %v1138 = vadd.f32 0.0, %v1137
    %v1139 = vpop.f32.mrb[0].mxu0
    %v1140 = vadd.f32 0.0, %v1139
    %1141 = vdwg.mxu0
    %v1142 = vadd.f32 %v922, %v996
    %v1143 = vxor.u32 %v1142, 2147483648
    %v1144 = vmul.f32 %v1143, 1.442695
    %v1145 = vpow.pop %v1144
    %v1146 = vadd.f32 %v1145, 1.0
    %v1147 = vrcp.pop %v1146
    %v1148 = vmul.f32 1.0, %v1147
    %v1149 = vadd.f32 %v923, %v998
    %v1150 = vxor.u32 %v1149, 2147483648
    %v1151 = vmul.f32 %v1150, 1.442695
    %v1152 = vpow.pop %v1151
    %v1153 = vadd.f32 %v1152, 1.0
    %v1154 = vrcp.pop %v1153
    %v1155 = vmul.f32 1.0, %v1154
    %v1156 = vadd.f32 %v1067, %v611
    %v1157 = vmul.f32 %v1148, %v1156
    %v1158 = vadd.f32 %v924, %v1157
    %v1159 = vtanh.pop %v1158
    %v1160 = vadd.f32 %v926, %v1069
    %v1161 = vxor.u32 %v1160, 2147483648
    %v1162 = vmul.f32 %v1161, 1.442695
    %v1163 = vpow.pop %v1162
    %v1164 = vadd.f32 %v1163, 1.0
    %v1165 = vrcp.pop %v1164
    %v1166 = vmul.f32 1.0, %v1165
    %v1167 = vadd.f32 %v927, %v1138
    %v1168 = vxor.u32 %v1167, 2147483648
    %v1169 = vmul.f32 %v1168, 1.442695
    %v1170 = vpow.pop %v1169
    %v1171 = vadd.f32 %v1170, 1.0
    %v1172 = vrcp.pop %v1171
    %v1173 = vmul.f32 1.0, %v1172
    %v1174 = vadd.f32 %v1140, %v635
    %v1175 = vmul.f32 %v1166, %v1174
    %v1176 = vadd.f32 %v928, %v1175
    %v1177 = vtanh.pop %v1176
    %v1178 = vsub.f32 1.0, %v1155
    %v1179 = vmul.f32 %v1178, %v1159
    %v1180 = vmul.f32 %v1155, %v912
    %v1181 = vadd.f32 %v1179, %v1180
    %v1182 = vsub.f32 1.0, %v1173
    %v1183 = vmul.f32 %v1182, %v1177
    %v1184 = vmul.f32 %v1173, %v916
    %v1185 = vadd.f32 %v1183, %v1184
    %s1186 = scalar_lea.vmem %s4, 16
    %1187 = vst [vmem:[%s1186] sm:$0xff] %v1181
    %s1188 = scalar_lea.vmem %s168, 40
    %1189 = vst [vmem:[%s1188] sm:$0xff] %v1185
    %s1190 = scalar_lea.vmem [#allocation3], 72
    %v1191 = vld [vmem:[%s1190] sm:$0xff]
    %v1192 = vld [vmem:[%s1190 + $0x8] sm:$0xff]
    %v1193 = vld [vmem:[%s1190 + $0x10] sm:$0xff]
    %s1194 = scalar_lea.vmem [#allocation4], 96
    %v1195 = vld [vmem:[%s1194] sm:$0xff]
    %v1196 = vld [vmem:[%s1194 + $0x8] sm:$0xff]
    %v1197 = vld [vmem:[%s1194 + $0x10] sm:$0xff]
    %1198 = vmatprep.subr.mxu0 %v178
    %1199 = vmatpush1.msra.mxu0 %v177
    %1200 = vmatprep.subr.mxu0 %v184
    %1201 = vmatpush1.msra.mxu0 %v183
    %1202 = vmatprep.subr.mxu0 %v190
    %1203 = vmatpush1.msra.mxu0 %v189
    %1204 = vmatprep.subr.mxu0 %v196
    %1205 = vmatpush1.msra.mxu0 %v195
    %1206 = vmatprep.subr.mxu0 %v202
    %1207 = vmatpush1.msra.mxu0 %v201
    %1208 = vmatprep.subr.mxu0 %v208
    %1209 = vmatpush1.msra.mxu0 %v207
    %1210 = vmatprep.subr.mxu0 %v214
    %1211 = vmatpush1.msra.mxu0 %v213
    %1212 = vmatprep.subr.mxu0 %v220
    %1213 = vmatpush1.msra.mxu0 %v219
    %1214 = vmatprep.subr.mxu0 %v226
    %1215 = vmatpush1.msra.mxu0 %v225
    %1216 = vmatprep.subr.mxu0 %v232
    %1217 = vmatpush1.msra.mxu0 %v231
    %1218 = vmatprep.subr.mxu0 %v238
    %1219 = vmatpush1.msra.mxu0 %v237
    %1220 = vmatprep.subr.mxu0 %v244
    %1221 = vmatpush1.msra.mxu0 %v243
    %1222 = vmatprep.subr.mxu0 %v250
    %1223 = vmatpush1.msra.mxu0 %v249
    %1224 = vmatprep.subr.mxu0 %v256
    %1225 = vmatpush1.msra.mxu0 %v255
    %1226 = vmatprep.subr.mxu0 %v262
    %1227 = vmatpush1.msra.mxu0 %v261
    %1228 = vmatprep.subr.mxu0 %v268
    %1229 = vmatpush1.msra.mxu0 %v267
    %1230 = vmatprep.subr.mxu0 %v274
    %1231 = vmatpush1.msra.mxu0 %v273
    %1232 = vmatprep.subr.mxu0 %v280
    %1233 = vmatpush1.msra.mxu0 %v279
    %1234 = vmatprep.subr.mxu0 %v286
    %1235 = vmatpush1.msra.mxu0 %v285
    %1236 = vmatprep.subr.mxu0 %v292
    %1237 = vmatpush1.msra.mxu0 %v291
    %1238 = vmatprep.subr.mxu0 %v298
    %1239 = vmatpush1.msra.mxu0 %v297
    %1240 = vmatprep.subr.mxu0 %v304
    %1241 = vmatpush1.msra.mxu0 %v303
    %1242 = vmatprep.subr.mxu0 %v310
    %1243 = vmatpush1.msra.mxu0 %v309
    %1244 = vmatprep.subr.mxu0 %v316
    %1245 = vmatpush1.msra.mxu0 %v315
    %1246 = vmatprep.subr.mxu0 %v322
    %1247 = vmatpush1.msra.mxu0 %v321
    %1248 = vmatprep.subr.mxu0 %v328
    %1249 = vmatpush1.msra.mxu0 %v327
    %1250 = vmatprep.subr.mxu0 %v334
    %1251 = vmatpush1.msra.mxu0 %v333
    %1252 = vmatprep.subr.mxu0 %v340
    %1253 = vmatpush1.msra.mxu0 %v339
    %1254 = vmatprep.subr.mxu0 %v346
    %1255 = vmatpush1.msra.mxu0 %v345
    %1256 = vmatprep.subr.mxu0 %v352
    %1257 = vmatpush1.msra.mxu0 %v351
    %1258 = vmatprep.subr.mxu0 %v358
    %1259 = vmatpush1.msra.mxu0 %v357
    %1260 = vmatprep.subr.mxu0 %v364
    %1261 = vmatpush1.msra.mxu0 %v363
    %1262 = vmatprep.mubr.f32.mxu0 %v1185
    %1263 = vmatmul.mubr.f32.gmra.mrb[0].mxu0 %v1181
    %v1264 = vpop.f32.mrb[0].mxu0
    %v1265 = vadd.f32 0.0, %v1264
    %v1266 = vpop.f32.mrb[0].mxu0
    %v1267 = vadd.f32 0.0, %v1266
    %1268 = vdwg.mxu0
    %1269 = vmatprep.subr.mxu0 %v180
    %1270 = vmatpush1.msra.mxu0 %v179
    %1271 = vmatprep.subr.mxu0 %v186
    %1272 = vmatpush1.msra.mxu0 %v185
    %1273 = vmatprep.subr.mxu0 %v192
    %1274 = vmatpush1.msra.mxu0 %v191
    %1275 = vmatprep.subr.mxu0 %v198
    %1276 = vmatpush1.msra.mxu0 %v197
    %1277 = vmatprep.subr.mxu0 %v204
    %1278 = vmatpush1.msra.mxu0 %v203
    %1279 = vmatprep.subr.mxu0 %v210
    %1280 = vmatpush1.msra.mxu0 %v209
    %1281 = vmatprep.subr.mxu0 %v216
    %1282 = vmatpush1.msra.mxu0 %v215
    %1283 = vmatprep.subr.mxu0 %v222
    %1284 = vmatpush1.msra.mxu0 %v221
    %1285 = vmatprep.subr.mxu0 %v228
    %1286 = vmatpush1.msra.mxu0 %v227
    %1287 = vmatprep.subr.mxu0 %v234
    %1288 = vmatpush1.msra.mxu0 %v233
    %1289 = vmatprep.subr.mxu0 %v240
    %1290 = vmatpush1.msra.mxu0 %v239
    %1291 = vmatprep.subr.mxu0 %v246
    %1292 = vmatpush1.msra.mxu0 %v245
    %1293 = vmatprep.subr.mxu0 %v252
    %1294 = vmatpush1.msra.mxu0 %v251
    %1295 = vmatprep.subr.mxu0 %v258
    %1296 = vmatpush1.msra.mxu0 %v257
    %1297 = vmatprep.subr.mxu0 %v264
    %1298 = vmatpush1.msra.mxu0 %v263
    %1299 = vmatprep.subr.mxu0 %v270
    %1300 = vmatpush1.msra.mxu0 %v269
    %1301 = vmatprep.subr.mxu0 %v276
    %1302 = vmatpush1.msra.mxu0 %v275
    %1303 = vmatprep.subr.mxu0 %v282
    %1304 = vmatpush1.msra.mxu0 %v281
    %1305 = vmatprep.subr.mxu0 %v288
    %1306 = vmatpush1.msra.mxu0 %v287
    %1307 = vmatprep.subr.mxu0 %v294
    %1308 = vmatpush1.msra.mxu0 %v293
    %1309 = vmatprep.subr.mxu0 %v300
    %1310 = vmatpush1.msra.mxu0 %v299
    %1311 = vmatprep.subr.mxu0 %v306
    %1312 = vmatpush1.msra.mxu0 %v305
    %1313 = vmatprep.subr.mxu0 %v312
    %1314 = vmatpush1.msra.mxu0 %v311
    %1315 = vmatprep.subr.mxu0 %v318
    %1316 = vmatpush1.msra.mxu0 %v317
    %1317 = vmatprep.subr.mxu0 %v324
    %1318 = vmatpush1.msra.mxu0 %v323
    %1319 = vmatprep.subr.mxu0 %v330
    %1320 = vmatpush1.msra.mxu0 %v329
    %1321 = vmatprep.subr.mxu0 %v336
    %1322 = vmatpush1.msra.mxu0 %v335
    %1323 = vmatprep.subr.mxu0 %v342
    %1324 = vmatpush1.msra.mxu0 %v341
    %1325 = vmatprep.subr.mxu0 %v348
    %1326 = vmatpush1.msra.mxu0 %v347
    %1327 = vmatprep.subr.mxu0 %v354
    %1328 = vmatpush1.msra.mxu0 %v353
    %1329 = vmatprep.subr.mxu0 %v360
    %1330 = vmatpush1.msra.mxu0 %v359
    %1331 = vmatprep.subr.mxu0 %v366
    %1332 = vmatpush1.msra.mxu0 %v365
    %1333 = vmatprep.mubr.f32.mxu0 %v1185
    %1334 = vmatmul.mubr.f32.gmra.mrb[0].mxu0 %v1181
    %v1335 = vpop.f32.mrb[0].mxu0
    %v1336 = vadd.f32 0.0, %v1335
    %v1337 = vpop.f32.mrb[0].mxu0
    %v1338 = vadd.f32 0.0, %v1337
    %1339 = vdwg.mxu0
    %1340 = vmatprep.subr.mxu0 %v182
    %1341 = vmatpush1.msra.mxu0 %v181
    %1342 = vmatprep.subr.mxu0 %v188
    %1343 = vmatpush1.msra.mxu0 %v187
    %1344 = vmatprep.subr.mxu0 %v194
    %1345 = vmatpush1.msra.mxu0 %v193
    %1346 = vmatprep.subr.mxu0 %v200
    %1347 = vmatpush1.msra.mxu0 %v199
    %1348 = vmatprep.subr.mxu0 %v206
    %1349 = vmatpush1.msra.mxu0 %v205
    %1350 = vmatprep.subr.mxu0 %v212
    %1351 = vmatpush1.msra.mxu0 %v211
    %1352 = vmatprep.subr.mxu0 %v218
    %1353 = vmatpush1.msra.mxu0 %v217
    %1354 = vmatprep.subr.mxu0 %v224
    %1355 = vmatpush1.msra.mxu0 %v223
    %1356 = vmatprep.subr.mxu0 %v230
    %1357 = vmatpush1.msra.mxu0 %v229
    %1358 = vmatprep.subr.mxu0 %v236
    %1359 = vmatpush1.msra.mxu0 %v235
    %1360 = vmatprep.subr.mxu0 %v242
    %1361 = vmatpush1.msra.mxu0 %v241
    %1362 = vmatprep.subr.mxu0 %v248
    %1363 = vmatpush1.msra.mxu0 %v247
    %1364 = vmatprep.subr.mxu0 %v254
    %1365 = vmatpush1.msra.mxu0 %v253
    %1366 = vmatprep.subr.mxu0 %v260
    %1367 = vmatpush1.msra.mxu0 %v259
    %1368 = vmatprep.subr.mxu0 %v266
    %1369 = vmatpush1.msra.mxu0 %v265
    %1370 = vmatprep.subr.mxu0 %v272
    %1371 = vmatpush1.msra.mxu0 %v271
    %1372 = vmatprep.subr.mxu0 %v278
    %1373 = vmatpush1.msra.mxu0 %v277
    %1374 = vmatprep.subr.mxu0 %v284
    %1375 = vmatpush1.msra.mxu0 %v283
    %1376 = vmatprep.subr.mxu0 %v290
    %1377 = vmatpush1.msra.mxu0 %v289
    %1378 = vmatprep.subr.mxu0 %v296
    %1379 = vmatpush1.msra.mxu0 %v295
    %1380 = vmatprep.subr.mxu0 %v302
    %1381 = vmatpush1.msra.mxu0 %v301
    %1382 = vmatprep.subr.mxu0 %v308
    %1383 = vmatpush1.msra.mxu0 %v307
    %1384 = vmatprep.subr.mxu0 %v314
    %1385 = vmatpush1.msra.mxu0 %v313
    %1386 = vmatprep.subr.mxu0 %v320
    %1387 = vmatpush1.msra.mxu0 %v319
    %1388 = vmatprep.subr.mxu0 %v326
    %1389 = vmatpush1.msra.mxu0 %v325
    %1390 = vmatprep.subr.mxu0 %v332
    %1391 = vmatpush1.msra.mxu0 %v331
    %1392 = vmatprep.subr.mxu0 %v338
    %1393 = vmatpush1.msra.mxu0 %v337
    %1394 = vmatprep.subr.mxu0 %v344
    %1395 = vmatpush1.msra.mxu0 %v343
    %1396 = vmatprep.subr.mxu0 %v350
    %1397 = vmatpush1.msra.mxu0 %v349
    %1398 = vmatprep.subr.mxu0 %v356
    %1399 = vmatpush1.msra.mxu0 %v355
    %1400 = vmatprep.subr.mxu0 %v362
    %1401 = vmatpush1.msra.mxu0 %v361
    %1402 = vmatprep.subr.mxu0 %v368
    %1403 = vmatpush1.msra.mxu0 %v367
    %1404 = vmatprep.mubr.f32.mxu0 %v1185
    %1405 = vmatmul.mubr.f32.gmra.mrb[0].mxu0 %v1181
    %v1406 = vpop.f32.mrb[0].mxu0
    %v1407 = vadd.f32 0.0, %v1406
    %v1408 = vpop.f32.mrb[0].mxu0
    %v1409 = vadd.f32 0.0, %v1408
    %1410 = vdwg.mxu0
    %v1411 = vadd.f32 %v1191, %v1265
    %v1412 = vxor.u32 %v1411, 2147483648
    %v1413 = vmul.f32 %v1412, 1.442695
    %v1414 = vpow.pop %v1413
    %v1415 = vadd.f32 %v1414, 1.0
    %v1416 = vrcp.pop %v1415
    %v1417 = vmul.f32 1.0, %v1416
    %v1418 = vadd.f32 %v1192, %v1267
    %v1419 = vxor.u32 %v1418, 2147483648
    %v1420 = vmul.f32 %v1419, 1.442695
    %v1421 = vpow.pop %v1420
    %v1422 = vadd.f32 %v1421, 1.0
    %v1423 = vrcp.pop %v1422
    %v1424 = vmul.f32 1.0, %v1423
    %v1425 = vadd.f32 %v1336, %v611
    %v1426 = vmul.f32 %v1417, %v1425
    %v1427 = vadd.f32 %v1193, %v1426
    %v1428 = vtanh.pop %v1427
    %v1429 = vadd.f32 %v1195, %v1338
    %v1430 = vxor.u32 %v1429, 2147483648
    %v1431 = vmul.f32 %v1430, 1.442695
    %v1432 = vpow.pop %v1431
    %v1433 = vadd.f32 %v1432, 1.0
    %v1434 = vrcp.pop %v1433
    %v1435 = vmul.f32 1.0, %v1434
    %v1436 = vadd.f32 %v1196, %v1407
    %v1437 = vxor.u32 %v1436, 2147483648
    %v1438 = vmul.f32 %v1437, 1.442695
    %v1439 = vpow.pop %v1438
    %v1440 = vadd.f32 %v1439, 1.0
    %v1441 = vrcp.pop %v1440
    %v1442 = vmul.f32 1.0, %v1441
    %v1443 = vadd.f32 %v1409, %v635
    %v1444 = vmul.f32 %v1435, %v1443
    %v1445 = vadd.f32 %v1197, %v1444
    %v1446 = vtanh.pop %v1445
    %v1447 = vsub.f32 1.0, %v1424
    %v1448 = vmul.f32 %v1447, %v1428
    %v1449 = vmul.f32 %v1424, %v1181
    %v1450 = vadd.f32 %v1448, %v1449
    %v1451 = vsub.f32 1.0, %v1442
    %v1452 = vmul.f32 %v1451, %v1446
    %v1453 = vmul.f32 %v1442, %v1185
    %v1454 = vadd.f32 %v1452, %v1453
    %s1455 = scalar_lea.vmem %s4, 24
    %1456 = vst [vmem:[%s1455] sm:$0xff] %v1450
    %s1457 = scalar_lea.vmem %s168, 32
    %1458 = vst [vmem:[%s1457] sm:$0xff] %v1454
    %s1459 = scalar_lea.vmem [#allocation3], 96
    %v1460 = vld [vmem:[%s1459] sm:$0xff]
    %v1461 = vld [vmem:[%s1459 + $0x8] sm:$0xff]
    %v1462 = vld [vmem:[%s1459 + $0x10] sm:$0xff]
    %s1463 = scalar_lea.vmem [#allocation4], 72
    %v1464 = vld [vmem:[%s1463] sm:$0xff]
    %v1465 = vld [vmem:[%s1463 + $0x8] sm:$0xff]
    %v1466 = vld [vmem:[%s1463 + $0x10] sm:$0xff]
    %1467 = vmatprep.subr.mxu0 %v178
    %1468 = vmatpush1.msra.mxu0 %v177
    %1469 = vmatprep.subr.mxu0 %v184
    %1470 = vmatpush1.msra.mxu0 %v183
    %1471 = vmatprep.subr.mxu0 %v190
    %1472 = vmatpush1.msra.mxu0 %v189
    %1473 = vmatprep.subr.mxu0 %v196
    %1474 = vmatpush1.msra.mxu0 %v195
    %1475 = vmatprep.subr.mxu0 %v202
    %1476 = vmatpush1.msra.mxu0 %v201
    %1477 = vmatprep.subr.mxu0 %v208
    %1478 = vmatpush1.msra.mxu0 %v207
    %1479 = vmatprep.subr.mxu0 %v214
    %1480 = vmatpush1.msra.mxu0 %v213
    %1481 = vmatprep.subr.mxu0 %v220
    %1482 = vmatpush1.msra.mxu0 %v219
    %1483 = vmatprep.subr.mxu0 %v226
    %1484 = vmatpush1.msra.mxu0 %v225
    %1485 = vmatprep.subr.mxu0 %v232
    %1486 = vmatpush1.msra.mxu0 %v231
    %1487 = vmatprep.subr.mxu0 %v238
    %1488 = vmatpush1.msra.mxu0 %v237
    %1489 = vmatprep.subr.mxu0 %v244
    %1490 = vmatpush1.msra.mxu0 %v243
    %1491 = vmatprep.subr.mxu0 %v250
    %1492 = vmatpush1.msra.mxu0 %v249
    %1493 = vmatprep.subr.mxu0 %v256
    %1494 = vmatpush1.msra.mxu0 %v255
    %1495 = vmatprep.subr.mxu0 %v262
    %1496 = vmatpush1.msra.mxu0 %v261
    %1497 = vmatprep.subr.mxu0 %v268
    %1498 = vmatpush1.msra.mxu0 %v267
    %1499 = vmatprep.subr.mxu0 %v274
    %1500 = vmatpush1.msra.mxu0 %v273
    %1501 = vmatprep.subr.mxu0 %v280
    %1502 = vmatpush1.msra.mxu0 %v279
    %1503 = vmatprep.subr.mxu0 %v286
    %1504 = vmatpush1.msra.mxu0 %v285
    %1505 = vmatprep.subr.mxu0 %v292
    %1506 = vmatpush1.msra.mxu0 %v291
    %1507 = vmatprep.subr.mxu0 %v298
    %1508 = vmatpush1.msra.mxu0 %v297
    %1509 = vmatprep.subr.mxu0 %v304
    %1510 = vmatpush1.msra.mxu0 %v303
    %1511 = vmatprep.subr.mxu0 %v310
    %1512 = vmatpush1.msra.mxu0 %v309
    %1513 = vmatprep.subr.mxu0 %v316
    %1514 = vmatpush1.msra.mxu0 %v315
    %1515 = vmatprep.subr.mxu0 %v322
    %1516 = vmatpush1.msra.mxu0 %v321
    %1517 = vmatprep.subr.mxu0 %v328
    %1518 = vmatpush1.msra.mxu0 %v327
    %1519 = vmatprep.subr.mxu0 %v334
    %1520 = vmatpush1.msra.mxu0 %v333
    %1521 = vmatprep.subr.mxu0 %v340
    %1522 = vmatpush1.msra.mxu0 %v339
    %1523 = vmatprep.subr.mxu0 %v346
    %1524 = vmatpush1.msra.mxu0 %v345
    %1525 = vmatprep.subr.mxu0 %v352
    %1526 = vmatpush1.msra.mxu0 %v351
    %1527 = vmatprep.subr.mxu0 %v358
    %1528 = vmatpush1.msra.mxu0 %v357
    %1529 = vmatprep.subr.mxu0 %v364
    %1530 = vmatpush1.msra.mxu0 %v363
    %1531 = vmatprep.mubr.f32.mxu0 %v1454
    %1532 = vmatmul.mubr.f32.gmra.mrb[0].mxu0 %v1450
    %v1533 = vpop.f32.mrb[0].mxu0
    %v1534 = vadd.f32 0.0, %v1533
    %v1535 = vpop.f32.mrb[0].mxu0
    %v1536 = vadd.f32 0.0, %v1535
    %1537 = vdwg.mxu0
    %1538 = vmatprep.subr.mxu0 %v180
    %1539 = vmatpush1.msra.mxu0 %v179
    %1540 = vmatprep.subr.mxu0 %v186
    %1541 = vmatpush1.msra.mxu0 %v185
    %1542 = vmatprep.subr.mxu0 %v192
    %1543 = vmatpush1.msra.mxu0 %v191
    %1544 = vmatprep.subr.mxu0 %v198
    %1545 = vmatpush1.msra.mxu0 %v197
    %1546 = vmatprep.subr.mxu0 %v204
    %1547 = vmatpush1.msra.mxu0 %v203
    %1548 = vmatprep.subr.mxu0 %v210
    %1549 = vmatpush1.msra.mxu0 %v209
    %1550 = vmatprep.subr.mxu0 %v216
    %1551 = vmatpush1.msra.mxu0 %v215
    %1552 = vmatprep.subr.mxu0 %v222
    %1553 = vmatpush1.msra.mxu0 %v221
    %1554 = vmatprep.subr.mxu0 %v228
    %1555 = vmatpush1.msra.mxu0 %v227
    %1556 = vmatprep.subr.mxu0 %v234
    %1557 = vmatpush1.msra.mxu0 %v233
    %1558 = vmatprep.subr.mxu0 %v240
    %1559 = vmatpush1.msra.mxu0 %v239
    %1560 = vmatprep.subr.mxu0 %v246
    %1561 = vmatpush1.msra.mxu0 %v245
    %1562 = vmatprep.subr.mxu0 %v252
    %1563 = vmatpush1.msra.mxu0 %v251
    %1564 = vmatprep.subr.mxu0 %v258
    %1565 = vmatpush1.msra.mxu0 %v257
    %1566 = vmatprep.subr.mxu0 %v264
    %1567 = vmatpush1.msra.mxu0 %v263
    %1568 = vmatprep.subr.mxu0 %v270
    %1569 = vmatpush1.msra.mxu0 %v269
    %1570 = vmatprep.subr.mxu0 %v276
    %1571 = vmatpush1.msra.mxu0 %v275
    %1572 = vmatprep.subr.mxu0 %v282
    %1573 = vmatpush1.msra.mxu0 %v281
    %1574 = vmatprep.subr.mxu0 %v288
    %1575 = vmatpush1.msra.mxu0 %v287
    %1576 = vmatprep.subr.mxu0 %v294
    %1577 = vmatpush1.msra.mxu0 %v293
    %1578 = vmatprep.subr.mxu0 %v300
    %1579 = vmatpush1.msra.mxu0 %v299
    %1580 = vmatprep.subr.mxu0 %v306
    %1581 = vmatpush1.msra.mxu0 %v305
    %1582 = vmatprep.subr.mxu0 %v312
    %1583 = vmatpush1.msra.mxu0 %v311
    %1584 = vmatprep.subr.mxu0 %v318
    %1585 = vmatpush1.msra.mxu0 %v317
    %1586 = vmatprep.subr.mxu0 %v324
    %1587 = vmatpush1.msra.mxu0 %v323
    %1588 = vmatprep.subr.mxu0 %v330
    %1589 = vmatpush1.msra.mxu0 %v329
    %1590 = vmatprep.subr.mxu0 %v336
    %1591 = vmatpush1.msra.mxu0 %v335
    %1592 = vmatprep.subr.mxu0 %v342
    %1593 = vmatpush1.msra.mxu0 %v341
    %1594 = vmatprep.subr.mxu0 %v348
    %1595 = vmatpush1.msra.mxu0 %v347
    %1596 = vmatprep.subr.mxu0 %v354
    %1597 = vmatpush1.msra.mxu0 %v353
    %1598 = vmatprep.subr.mxu0 %v360
    %1599 = vmatpush1.msra.mxu0 %v359
    %1600 = vmatprep.subr.mxu0 %v366
    %1601 = vmatpush1.msra.mxu0 %v365
    %1602 = vmatprep.mubr.f32.mxu0 %v1454
    %1603 = vmatmul.mubr.f32.gmra.mrb[0].mxu0 %v1450
    %v1604 = vpop.f32.mrb[0].mxu0
    %v1605 = vadd.f32 0.0, %v1604
    %v1606 = vpop.f32.mrb[0].mxu0
    %v1607 = vadd.f32 0.0, %v1606
    %1608 = vdwg.mxu0
    %1609 = vmatprep.subr.mxu0 %v182
    %1610 = vmatpush1.msra.mxu0 %v181
    %1611 = vmatprep.subr.mxu0 %v188
    %1612 = vmatpush1.msra.mxu0 %v187
    %1613 = vmatprep.subr.mxu0 %v194
    %1614 = vmatpush1.msra.mxu0 %v193
    %1615 = vmatprep.subr.mxu0 %v200
    %1616 = vmatpush1.msra.mxu0 %v199
    %1617 = vmatprep.subr.mxu0 %v206
    %1618 = vmatpush1.msra.mxu0 %v205
    %1619 = vmatprep.subr.mxu0 %v212
    %1620 = vmatpush1.msra.mxu0 %v211
    %1621 = vmatprep.subr.mxu0 %v218
    %1622 = vmatpush1.msra.mxu0 %v217
    %1623 = vmatprep.subr.mxu0 %v224
    %1624 = vmatpush1.msra.mxu0 %v223
    %1625 = vmatprep.subr.mxu0 %v230
    %1626 = vmatpush1.msra.mxu0 %v229
    %1627 = vmatprep.subr.mxu0 %v236
    %1628 = vmatpush1.msra.mxu0 %v235
    %1629 = vmatprep.subr.mxu0 %v242
    %1630 = vmatpush1.msra.mxu0 %v241
    %1631 = vmatprep.subr.mxu0 %v248
    %1632 = vmatpush1.msra.mxu0 %v247
    %1633 = vmatprep.subr.mxu0 %v254
    %1634 = vmatpush1.msra.mxu0 %v253
    %1635 = vmatprep.subr.mxu0 %v260
    %1636 = vmatpush1.msra.mxu0 %v259
    %1637 = vmatprep.subr.mxu0 %v266
    %1638 = vmatpush1.msra.mxu0 %v265
    %1639 = vmatprep.subr.mxu0 %v272
    %1640 = vmatpush1.msra.mxu0 %v271
    %1641 = vmatprep.subr.mxu0 %v278
    %1642 = vmatpush1.msra.mxu0 %v277
    %1643 = vmatprep.subr.mxu0 %v284
    %1644 = vmatpush1.msra.mxu0 %v283
    %1645 = vmatprep.subr.mxu0 %v290
    %1646 = vmatpush1.msra.mxu0 %v289
    %1647 = vmatprep.subr.mxu0 %v296
    %1648 = vmatpush1.msra.mxu0 %v295
    %1649 = vmatprep.subr.mxu0 %v302
    %1650 = vmatpush1.msra.mxu0 %v301
    %1651 = vmatprep.subr.mxu0 %v308
    %1652 = vmatpush1.msra.mxu0 %v307
    %1653 = vmatprep.subr.mxu0 %v314
    %1654 = vmatpush1.msra.mxu0 %v313
    %1655 = vmatprep.subr.mxu0 %v320
    %1656 = vmatpush1.msra.mxu0 %v319
    %1657 = vmatprep.subr.mxu0 %v326
    %1658 = vmatpush1.msra.mxu0 %v325
    %1659 = vmatprep.subr.mxu0 %v332
    %1660 = vmatpush1.msra.mxu0 %v331
    %1661 = vmatprep.subr.mxu0 %v338
    %1662 = vmatpush1.msra.mxu0 %v337
    %1663 = vmatprep.subr.mxu0 %v344
    %1664 = vmatpush1.msra.mxu0 %v343
    %1665 = vmatprep.subr.mxu0 %v350
    %1666 = vmatpush1.msra.mxu0 %v349
    %1667 = vmatprep.subr.mxu0 %v356
    %1668 = vmatpush1.msra.mxu0 %v355
    %1669 = vmatprep.subr.mxu0 %v362
    %1670 = vmatpush1.msra.mxu0 %v361
    %1671 = vmatprep.subr.mxu0 %v368
    %1672 = vmatpush1.msra.mxu0 %v367
    %1673 = vmatprep.mubr.f32.mxu0 %v1454
    %1674 = vmatmul.mubr.f32.gmra.mrb[0].mxu0 %v1450
    %v1675 = vpop.f32.mrb[0].mxu0
    %v1676 = vadd.f32 0.0, %v1675
    %v1677 = vpop.f32.mrb[0].mxu0
    %v1678 = vadd.f32 0.0, %v1677
    %1679 = vdwg.mxu0
    %v1680 = vadd.f32 %v1460, %v1534
    %v1681 = vxor.u32 %v1680, 2147483648
    %v1682 = vmul.f32 %v1681, 1.442695
    %v1683 = vpow.pop %v1682
    %v1684 = vadd.f32 %v1683, 1.0
    %v1685 = vrcp.pop %v1684
    %v1686 = vmul.f32 1.0, %v1685
    %v1687 = vadd.f32 %v1461, %v1536
    %v1688 = vxor.u32 %v1687, 2147483648
    %v1689 = vmul.f32 %v1688, 1.442695
    %v1690 = vpow.pop %v1689
    %v1691 = vadd.f32 %v1690, 1.0
    %v1692 = vrcp.pop %v1691
    %v1693 = vmul.f32 1.0, %v1692
    %v1694 = vadd.f32 %v1605, %v611
    %v1695 = vmul.f32 %v1686, %v1694
    %v1696 = vadd.f32 %v1462, %v1695
    %v1697 = vtanh.pop %v1696
    %v1698 = vadd.f32 %v1464, %v1607
    %v1699 = vxor.u32 %v1698, 2147483648
    %v1700 = vmul.f32 %v1699, 1.442695
    %v1701 = vpow.pop %v1700
    %v1702 = vadd.f32 %v1701, 1.0
    %v1703 = vrcp.pop %v1702
    %v1704 = vmul.f32 1.0, %v1703
    %v1705 = vadd.f32 %v1465, %v1676
    %v1706 = vxor.u32 %v1705, 2147483648
    %v1707 = vmul.f32 %v1706, 1.442695
    %v1708 = vpow.pop %v1707
    %v1709 = vadd.f32 %v1708, 1.0
    %v1710 = vrcp.pop %v1709
    %v1711 = vmul.f32 1.0, %v1710
    %v1712 = vadd.f32 %v1678, %v635
    %v1713 = vmul.f32 %v1704, %v1712
    %v1714 = vadd.f32 %v1466, %v1713
    %v1715 = vtanh.pop %v1714
    %v1716 = vsub.f32 1.0, %v1693
    %v1717 = vmul.f32 %v1716, %v1697
    %v1718 = vmul.f32 %v1693, %v1450
    %v1719 = vadd.f32 %v1717, %v1718
    %v1720 = vsub.f32 1.0, %v1711
    %v1721 = vmul.f32 %v1720, %v1715
    %v1722 = vmul.f32 %v1711, %v1454
    %v1723 = vadd.f32 %v1721, %v1722
    %s1724 = scalar_lea.vmem %s4, 32
    %1725 = vst [vmem:[%s1724] sm:$0xff] %v1719
    %s1726 = scalar_lea.vmem %s168, 24
    %1727 = vst [vmem:[%s1726] sm:$0xff] %v1723
    %s1728 = scalar_lea.vmem [#allocation3], 120
    %v1729 = vld [vmem:[%s1728] sm:$0xff]
    %v1730 = vld [vmem:[%s1728 + $0x8] sm:$0xff]
    %v1731 = vld [vmem:[%s1728 + $0x10] sm:$0xff]
    %s1732 = scalar_lea.vmem [#allocation4], 48
    %v1733 = vld [vmem:[%s1732] sm:$0xff]
    %v1734 = vld [vmem:[%s1732 + $0x8] sm:$0xff]
    %v1735 = vld [vmem:[%s1732 + $0x10] sm:$0xff]
    %1736 = vmatprep.subr.mxu0 %v178
    %1737 = vmatpush1.msra.mxu0 %v177
    %1738 = vmatprep.subr.mxu0 %v184
    %1739 = vmatpush1.msra.mxu0 %v183
    %1740 = vmatprep.subr.mxu0 %v190
    %1741 = vmatpush1.msra.mxu0 %v189
    %1742 = vmatprep.subr.mxu0 %v196
    %1743 = vmatpush1.msra.mxu0 %v195
    %1744 = vmatprep.subr.mxu0 %v202
    %1745 = vmatpush1.msra.mxu0 %v201
    %1746 = vmatprep.subr.mxu0 %v208
    %1747 = vmatpush1.msra.mxu0 %v207
    %1748 = vmatprep.subr.mxu0 %v214
    %1749 = vmatpush1.msra.mxu0 %v213
    %1750 = vmatprep.subr.mxu0 %v220
    %1751 = vmatpush1.msra.mxu0 %v219
    %1752 = vmatprep.subr.mxu0 %v226
    %1753 = vmatpush1.msra.mxu0 %v225
    %1754 = vmatprep.subr.mxu0 %v232
    %1755 = vmatpush1.msra.mxu0 %v231
    %1756 = vmatprep.subr.mxu0 %v238
    %1757 = vmatpush1.msra.mxu0 %v237
    %1758 = vmatprep.subr.mxu0 %v244
    %1759 = vmatpush1.msra.mxu0 %v243
    %1760 = vmatprep.subr.mxu0 %v250
    %1761 = vmatpush1.msra.mxu0 %v249
    %1762 = vmatprep.subr.mxu0 %v256
    %1763 = vmatpush1.msra.mxu0 %v255
    %1764 = vmatprep.subr.mxu0 %v262
    %1765 = vmatpush1.msra.mxu0 %v261
    %1766 = vmatprep.subr.mxu0 %v268
    %1767 = vmatpush1.msra.mxu0 %v267
    %1768 = vmatprep.subr.mxu0 %v274
    %1769 = vmatpush1.msra.mxu0 %v273
    %1770 = vmatprep.subr.mxu0 %v280
    %1771 = vmatpush1.msra.mxu0 %v279
    %1772 = vmatprep.subr.mxu0 %v286
    %1773 = vmatpush1.msra.mxu0 %v285
    %1774 = vmatprep.subr.mxu0 %v292
    %1775 = vmatpush1.msra.mxu0 %v291
    %1776 = vmatprep.subr.mxu0 %v298
    %1777 = vmatpush1.msra.mxu0 %v297
    %1778 = vmatprep.subr.mxu0 %v304
    %1779 = vmatpush1.msra.mxu0 %v303
    %1780 = vmatprep.subr.mxu0 %v310
    %1781 = vmatpush1.msra.mxu0 %v309
    %1782 = vmatprep.subr.mxu0 %v316
    %1783 = vmatpush1.msra.mxu0 %v315
    %1784 = vmatprep.subr.mxu0 %v322
    %1785 = vmatpush1.msra.mxu0 %v321
    %1786 = vmatprep.subr.mxu0 %v328
    %1787 = vmatpush1.msra.mxu0 %v327
    %1788 = vmatprep.subr.mxu0 %v334
    %1789 = vmatpush1.msra.mxu0 %v333
    %1790 = vmatprep.subr.mxu0 %v340
    %1791 = vmatpush1.msra.mxu0 %v339
    %1792 = vmatprep.subr.mxu0 %v346
    %1793 = vmatpush1.msra.mxu0 %v345
    %1794 = vmatprep.subr.mxu0 %v352
    %1795 = vmatpush1.msra.mxu0 %v351
    %1796 = vmatprep.subr.mxu0 %v358
    %1797 = vmatpush1.msra.mxu0 %v357
    %1798 = vmatprep.subr.mxu0 %v364
    %1799 = vmatpush1.msra.mxu0 %v363
    %1800 = vmatprep.mubr.f32.mxu0 %v1723
    %1801 = vmatmul.mubr.f32.gmra.mrb[0].mxu0 %v1719
    %v1802 = vpop.f32.mrb[0].mxu0
    %v1803 = vadd.f32 0.0, %v1802
    %v1804 = vpop.f32.mrb[0].mxu0
    %v1805 = vadd.f32 0.0, %v1804
    %1806 = vdwg.mxu0
    %1807 = vmatprep.subr.mxu0 %v180
    %1808 = vmatpush1.msra.mxu0 %v179
    %1809 = vmatprep.subr.mxu0 %v186
    %1810 = vmatpush1.msra.mxu0 %v185
    %1811 = vmatprep.subr.mxu0 %v192
    %1812 = vmatpush1.msra.mxu0 %v191
    %1813 = vmatprep.subr.mxu0 %v198
    %1814 = vmatpush1.msra.mxu0 %v197
    %1815 = vmatprep.subr.mxu0 %v204
    %1816 = vmatpush1.msra.mxu0 %v203
    %1817 = vmatprep.subr.mxu0 %v210
    %1818 = vmatpush1.msra.mxu0 %v209
    %1819 = vmatprep.subr.mxu0 %v216
    %1820 = vmatpush1.msra.mxu0 %v215
    %1821 = vmatprep.subr.mxu0 %v222
    %1822 = vmatpush1.msra.mxu0 %v221
    %1823 = vmatprep.subr.mxu0 %v228
    %1824 = vmatpush1.msra.mxu0 %v227
    %1825 = vmatprep.subr.mxu0 %v234
    %1826 = vmatpush1.msra.mxu0 %v233
    %1827 = vmatprep.subr.mxu0 %v240
    %1828 = vmatpush1.msra.mxu0 %v239
    %1829 = vmatprep.subr.mxu0 %v246
    %1830 = vmatpush1.msra.mxu0 %v245
    %1831 = vmatprep.subr.mxu0 %v252
    %1832 = vmatpush1.msra.mxu0 %v251
    %1833 = vmatprep.subr.mxu0 %v258
    %1834 = vmatpush1.msra.mxu0 %v257
    %1835 = vmatprep.subr.mxu0 %v264
    %1836 = vmatpush1.msra.mxu0 %v263
    %1837 = vmatprep.subr.mxu0 %v270
    %1838 = vmatpush1.msra.mxu0 %v269
    %1839 = vmatprep.subr.mxu0 %v276
    %1840 = vmatpush1.msra.mxu0 %v275
    %1841 = vmatprep.subr.mxu0 %v282
    %1842 = vmatpush1.msra.mxu0 %v281
    %1843 = vmatprep.subr.mxu0 %v288
    %1844 = vmatpush1.msra.mxu0 %v287
    %1845 = vmatprep.subr.mxu0 %v294
    %1846 = vmatpush1.msra.mxu0 %v293
    %1847 = vmatprep.subr.mxu0 %v300
    %1848 = vmatpush1.msra.mxu0 %v299
    %1849 = vmatprep.subr.mxu0 %v306
    %1850 = vmatpush1.msra.mxu0 %v305
    %1851 = vmatprep.subr.mxu0 %v312
    %1852 = vmatpush1.msra.mxu0 %v311
    %1853 = vmatprep.subr.mxu0 %v318
    %1854 = vmatpush1.msra.mxu0 %v317
    %1855 = vmatprep.subr.mxu0 %v324
    %1856 = vmatpush1.msra.mxu0 %v323
    %1857 = vmatprep.subr.mxu0 %v330
    %1858 = vmatpush1.msra.mxu0 %v329
    %1859 = vmatprep.subr.mxu0 %v336
    %1860 = vmatpush1.msra.mxu0 %v335
    %1861 = vmatprep.subr.mxu0 %v342
    %1862 = vmatpush1.msra.mxu0 %v341
    %1863 = vmatprep.subr.mxu0 %v348
    %1864 = vmatpush1.msra.mxu0 %v347
    %1865 = vmatprep.subr.mxu0 %v354
    %1866 = vmatpush1.msra.mxu0 %v353
    %1867 = vmatprep.subr.mxu0 %v360
    %1868 = vmatpush1.msra.mxu0 %v359
    %1869 = vmatprep.subr.mxu0 %v366
    %1870 = vmatpush1.msra.mxu0 %v365
    %1871 = vmatprep.mubr.f32.mxu0 %v1723
    %1872 = vmatmul.mubr.f32.gmra.mrb[0].mxu0 %v1719
    %v1873 = vpop.f32.mrb[0].mxu0
    %v1874 = vadd.f32 0.0, %v1873
    %v1875 = vpop.f32.mrb[0].mxu0
    %v1876 = vadd.f32 0.0, %v1875
    %1877 = vdwg.mxu0
    %1878 = vmatprep.subr.mxu0 %v182
    %1879 = vmatpush1.msra.mxu0 %v181
    %1880 = vmatprep.subr.mxu0 %v188
    %1881 = vmatpush1.msra.mxu0 %v187
    %1882 = vmatprep.subr.mxu0 %v194
    %1883 = vmatpush1.msra.mxu0 %v193
    %1884 = vmatprep.subr.mxu0 %v200
    %1885 = vmatpush1.msra.mxu0 %v199
    %1886 = vmatprep.subr.mxu0 %v206
    %1887 = vmatpush1.msra.mxu0 %v205
    %1888 = vmatprep.subr.mxu0 %v212
    %1889 = vmatpush1.msra.mxu0 %v211
    %1890 = vmatprep.subr.mxu0 %v218
    %1891 = vmatpush1.msra.mxu0 %v217
    %1892 = vmatprep.subr.mxu0 %v224
    %1893 = vmatpush1.msra.mxu0 %v223
    %1894 = vmatprep.subr.mxu0 %v230
    %1895 = vmatpush1.msra.mxu0 %v229
    %1896 = vmatprep.subr.mxu0 %v236
    %1897 = vmatpush1.msra.mxu0 %v235
    %1898 = vmatprep.subr.mxu0 %v242
    %1899 = vmatpush1.msra.mxu0 %v241
    %1900 = vmatprep.subr.mxu0 %v248
    %1901 = vmatpush1.msra.mxu0 %v247
    %1902 = vmatprep.subr.mxu0 %v254
    %1903 = vmatpush1.msra.mxu0 %v253
    %1904 = vmatprep.subr.mxu0 %v260
    %1905 = vmatpush1.msra.mxu0 %v259
    %1906 = vmatprep.subr.mxu0 %v266
    %1907 = vmatpush1.msra.mxu0 %v265
    %1908 = vmatprep.subr.mxu0 %v272
    %1909 = vmatpush1.msra.mxu0 %v271
    %1910 = vmatprep.subr.mxu0 %v278
    %1911 = vmatpush1.msra.mxu0 %v277
    %1912 = vmatprep.subr.mxu0 %v284
    %1913 = vmatpush1.msra.mxu0 %v283
    %1914 = vmatprep.subr.mxu0 %v290
    %1915 = vmatpush1.msra.mxu0 %v289
    %1916 = vmatprep.subr.mxu0 %v296
    %1917 = vmatpush1.msra.mxu0 %v295
    %1918 = vmatprep.subr.mxu0 %v302
    %1919 = vmatpush1.msra.mxu0 %v301
    %1920 = vmatprep.subr.mxu0 %v308
    %1921 = vmatpush1.msra.mxu0 %v307
    %1922 = vmatprep.subr.mxu0 %v314
    %1923 = vmatpush1.msra.mxu0 %v313
    %1924 = vmatprep.subr.mxu0 %v320
    %1925 = vmatpush1.msra.mxu0 %v319
    %1926 = vmatprep.subr.mxu0 %v326
    %1927 = vmatpush1.msra.mxu0 %v325
    %1928 = vmatprep.subr.mxu0 %v332
    %1929 = vmatpush1.msra.mxu0 %v331
    %1930 = vmatprep.subr.mxu0 %v338
    %1931 = vmatpush1.msra.mxu0 %v337
    %1932 = vmatprep.subr.mxu0 %v344
    %1933 = vmatpush1.msra.mxu0 %v343
    %1934 = vmatprep.subr.mxu0 %v350
    %1935 = vmatpush1.msra.mxu0 %v349
    %1936 = vmatprep.subr.mxu0 %v356
    %1937 = vmatpush1.msra.mxu0 %v355
    %1938 = vmatprep.subr.mxu0 %v362
    %1939 = vmatpush1.msra.mxu0 %v361
    %1940 = vmatprep.subr.mxu0 %v368
    %1941 = vmatpush1.msra.mxu0 %v367
    %1942 = vmatprep.mubr.f32.mxu0 %v1723
    %1943 = vmatmul.mubr.f32.gmra.mrb[0].mxu0 %v1719
    %v1944 = vpop.f32.mrb[0].mxu0
    %v1945 = vadd.f32 0.0, %v1944
    %v1946 = vpop.f32.mrb[0].mxu0
    %v1947 = vadd.f32 0.0, %v1946
    %1948 = vdwg.mxu0
    %v1949 = vadd.f32 %v1729, %v1803
    %v1950 = vxor.u32 %v1949, 2147483648
    %v1951 = vmul.f32 %v1950, 1.442695
    %v1952 = vpow.pop %v1951
    %v1953 = vadd.f32 %v1952, 1.0
    %v1954 = vrcp.pop %v1953
    %v1955 = vmul.f32 1.0, %v1954
    %v1956 = vadd.f32 %v1730, %v1805
    %v1957 = vxor.u32 %v1956, 2147483648
    %v1958 = vmul.f32 %v1957, 1.442695
    %v1959 = vpow.pop %v1958
    %v1960 = vadd.f32 %v1959, 1.0
    %v1961 = vrcp.pop %v1960
    %v1962 = vmul.f32 1.0, %v1961
    %v1963 = vadd.f32 %v1874, %v611
    %v1964 = vmul.f32 %v1955, %v1963
    %v1965 = vadd.f32 %v1731, %v1964
    %v1966 = vtanh.pop %v1965
    %v1967 = vadd.f32 %v1733, %v1876
    %v1968 = vxor.u32 %v1967, 2147483648
    %v1969 = vmul.f32 %v1968, 1.442695
    %v1970 = vpow.pop %v1969
    %v1971 = vadd.f32 %v1970, 1.0
    %v1972 = vrcp.pop %v1971
    %v1973 = vmul.f32 1.0, %v1972
    %v1974 = vadd.f32 %v1734, %v1945
    %v1975 = vxor.u32 %v1974, 2147483648
    %v1976 = vmul.f32 %v1975, 1.442695
    %v1977 = vpow.pop %v1976
    %v1978 = vadd.f32 %v1977, 1.0
    %v1979 = vrcp.pop %v1978
    %v1980 = vmul.f32 1.0, %v1979
    %v1981 = vadd.f32 %v1947, %v635
    %v1982 = vmul.f32 %v1973, %v1981
    %v1983 = vadd.f32 %v1735, %v1982
    %v1984 = vtanh.pop %v1983
    %v1985 = vsub.f32 1.0, %v1962
    %v1986 = vmul.f32 %v1985, %v1966
    %v1987 = vmul.f32 %v1962, %v1719
    %v1988 = vadd.f32 %v1986, %v1987
    %v1989 = vsub.f32 1.0, %v1980
    %v1990 = vmul.f32 %v1989, %v1984
    %v1991 = vmul.f32 %v1980, %v1723
    %v1992 = vadd.f32 %v1990, %v1991
    %s1993 = scalar_lea.vmem %s4, 40
    %1994 = vst [vmem:[%s1993] sm:$0xff] %v1988
    %s1995 = scalar_lea.vmem %s168, 16
    %1996 = vst [vmem:[%s1995] sm:$0xff] %v1992
    %s1997 = scalar_lea.vmem [#allocation3], 144
    %v1998 = vld [vmem:[%s1997] sm:$0xff]
    %v1999 = vld [vmem:[%s1997 + $0x8] sm:$0xff]
    %v2000 = vld [vmem:[%s1997 + $0x10] sm:$0xff]
    %s2001 = scalar_lea.vmem [#allocation4], 24
    %v2002 = vld [vmem:[%s2001] sm:$0xff]
    %v2003 = vld [vmem:[%s2001 + $0x8] sm:$0xff]
    %v2004 = vld [vmem:[%s2001 + $0x10] sm:$0xff]
    %2005 = vmatprep.subr.mxu0 %v178
    %2006 = vmatpush1.msra.mxu0 %v177
    %2007 = vmatprep.subr.mxu0 %v184
    %2008 = vmatpush1.msra.mxu0 %v183
    %2009 = vmatprep.subr.mxu0 %v190
    %2010 = vmatpush1.msra.mxu0 %v189
    %2011 = vmatprep.subr.mxu0 %v196
    %2012 = vmatpush1.msra.mxu0 %v195
    %2013 = vmatprep.subr.mxu0 %v202
    %2014 = vmatpush1.msra.mxu0 %v201
    %2015 = vmatprep.subr.mxu0 %v208
    %2016 = vmatpush1.msra.mxu0 %v207
    %2017 = vmatprep.subr.mxu0 %v214
    %2018 = vmatpush1.msra.mxu0 %v213
    %2019 = vmatprep.subr.mxu0 %v220
    %2020 = vmatpush1.msra.mxu0 %v219
    %2021 = vmatprep.subr.mxu0 %v226
    %2022 = vmatpush1.msra.mxu0 %v225
    %2023 = vmatprep.subr.mxu0 %v232
    %2024 = vmatpush1.msra.mxu0 %v231
    %2025 = vmatprep.subr.mxu0 %v238
    %2026 = vmatpush1.msra.mxu0 %v237
    %2027 = vmatprep.subr.mxu0 %v244
    %2028 = vmatpush1.msra.mxu0 %v243
    %2029 = vmatprep.subr.mxu0 %v250
    %2030 = vmatpush1.msra.mxu0 %v249
    %2031 = vmatprep.subr.mxu0 %v256
    %2032 = vmatpush1.msra.mxu0 %v255
    %2033 = vmatprep.subr.mxu0 %v262
    %2034 = vmatpush1.msra.mxu0 %v261
    %2035 = vmatprep.subr.mxu0 %v268
    %2036 = vmatpush1.msra.mxu0 %v267
    %2037 = vmatprep.subr.mxu0 %v274
    %2038 = vmatpush1.msra.mxu0 %v273
    %2039 = vmatprep.subr.mxu0 %v280
    %2040 = vmatpush1.msra.mxu0 %v279
    %2041 = vmatprep.subr.mxu0 %v286
    %2042 = vmatpush1.msra.mxu0 %v285
    %2043 = vmatprep.subr.mxu0 %v292
    %2044 = vmatpush1.msra.mxu0 %v291
    %2045 = vmatprep.subr.mxu0 %v298
    %2046 = vmatpush1.msra.mxu0 %v297
    %2047 = vmatprep.subr.mxu0 %v304
    %2048 = vmatpush1.msra.mxu0 %v303
    %2049 = vmatprep.subr.mxu0 %v310
    %2050 = vmatpush1.msra.mxu0 %v309
    %2051 = vmatprep.subr.mxu0 %v316
    %2052 = vmatpush1.msra.mxu0 %v315
    %2053 = vmatprep.subr.mxu0 %v322
    %2054 = vmatpush1.msra.mxu0 %v321
    %2055 = vmatprep.subr.mxu0 %v328
    %2056 = vmatpush1.msra.mxu0 %v327
    %2057 = vmatprep.subr.mxu0 %v334
    %2058 = vmatpush1.msra.mxu0 %v333
    %2059 = vmatprep.subr.mxu0 %v340
    %2060 = vmatpush1.msra.mxu0 %v339
    %2061 = vmatprep.subr.mxu0 %v346
    %2062 = vmatpush1.msra.mxu0 %v345
    %2063 = vmatprep.subr.mxu0 %v352
    %2064 = vmatpush1.msra.mxu0 %v351
    %2065 = vmatprep.subr.mxu0 %v358
    %2066 = vmatpush1.msra.mxu0 %v357
    %2067 = vmatprep.subr.mxu0 %v364
    %2068 = vmatpush1.msra.mxu0 %v363
    %2069 = vmatprep.mubr.f32.mxu0 %v1992
    %2070 = vmatmul.mubr.f32.gmra.mrb[0].mxu0 %v1988
    %v2071 = vpop.f32.mrb[0].mxu0
    %v2072 = vadd.f32 0.0, %v2071
    %v2073 = vpop.f32.mrb[0].mxu0
    %v2074 = vadd.f32 0.0, %v2073
    %2075 = vdwg.mxu0
    %2076 = vmatprep.subr.mxu0 %v180
    %2077 = vmatpush1.msra.mxu0 %v179
    %2078 = vmatprep.subr.mxu0 %v186
    %2079 = vmatpush1.msra.mxu0 %v185
    %2080 = vmatprep.subr.mxu0 %v192
    %2081 = vmatpush1.msra.mxu0 %v191
    %2082 = vmatprep.subr.mxu0 %v198
    %2083 = vmatpush1.msra.mxu0 %v197
    %2084 = vmatprep.subr.mxu0 %v204
    %2085 = vmatpush1.msra.mxu0 %v203
    %2086 = vmatprep.subr.mxu0 %v210
    %2087 = vmatpush1.msra.mxu0 %v209
    %2088 = vmatprep.subr.mxu0 %v216
    %2089 = vmatpush1.msra.mxu0 %v215
    %2090 = vmatprep.subr.mxu0 %v222
    %2091 = vmatpush1.msra.mxu0 %v221
    %2092 = vmatprep.subr.mxu0 %v228
    %2093 = vmatpush1.msra.mxu0 %v227
    %2094 = vmatprep.subr.mxu0 %v234
    %2095 = vmatpush1.msra.mxu0 %v233
    %2096 = vmatprep.subr.mxu0 %v240
    %2097 = vmatpush1.msra.mxu0 %v239
    %2098 = vmatprep.subr.mxu0 %v246
    %2099 = vmatpush1.msra.mxu0 %v245
    %2100 = vmatprep.subr.mxu0 %v252
    %2101 = vmatpush1.msra.mxu0 %v251
    %2102 = vmatprep.subr.mxu0 %v258
    %2103 = vmatpush1.msra.mxu0 %v257
    %2104 = vmatprep.subr.mxu0 %v264
    %2105 = vmatpush1.msra.mxu0 %v263
    %2106 = vmatprep.subr.mxu0 %v270
    %2107 = vmatpush1.msra.mxu0 %v269
    %2108 = vmatprep.subr.mxu0 %v276
    %2109 = vmatpush1.msra.mxu0 %v275
    %2110 = vmatprep.subr.mxu0 %v282
    %2111 = vmatpush1.msra.mxu0 %v281
    %2112 = vmatprep.subr.mxu0 %v288
    %2113 = vmatpush1.msra.mxu0 %v287
    %2114 = vmatprep.subr.mxu0 %v294
    %2115 = vmatpush1.msra.mxu0 %v293
    %2116 = vmatprep.subr.mxu0 %v300
    %2117 = vmatpush1.msra.mxu0 %v299
    %2118 = vmatprep.subr.mxu0 %v306
    %2119 = vmatpush1.msra.mxu0 %v305
    %2120 = vmatprep.subr.mxu0 %v312
    %2121 = vmatpush1.msra.mxu0 %v311
    %2122 = vmatprep.subr.mxu0 %v318
    %2123 = vmatpush1.msra.mxu0 %v317
    %2124 = vmatprep.subr.mxu0 %v324
    %2125 = vmatpush1.msra.mxu0 %v323
    %2126 = vmatprep.subr.mxu0 %v330
    %2127 = vmatpush1.msra.mxu0 %v329
    %2128 = vmatprep.subr.mxu0 %v336
    %2129 = vmatpush1.msra.mxu0 %v335
    %2130 = vmatprep.subr.mxu0 %v342
    %2131 = vmatpush1.msra.mxu0 %v341
    %2132 = vmatprep.subr.mxu0 %v348
    %2133 = vmatpush1.msra.mxu0 %v347
    %2134 = vmatprep.subr.mxu0 %v354
    %2135 = vmatpush1.msra.mxu0 %v353
    %2136 = vmatprep.subr.mxu0 %v360
    %2137 = vmatpush1.msra.mxu0 %v359
    %2138 = vmatprep.subr.mxu0 %v366
    %2139 = vmatpush1.msra.mxu0 %v365
    %2140 = vmatprep.mubr.f32.mxu0 %v1992
    %2141 = vmatmul.mubr.f32.gmra.mrb[0].mxu0 %v1988
    %v2142 = vpop.f32.mrb[0].mxu0
    %v2143 = vadd.f32 0.0, %v2142
    %v2144 = vpop.f32.mrb[0].mxu0
    %v2145 = vadd.f32 0.0, %v2144
    %2146 = vdwg.mxu0
    %2147 = vmatprep.subr.mxu0 %v182
    %2148 = vmatpush1.msra.mxu0 %v181
    %2149 = vmatprep.subr.mxu0 %v188
    %2150 = vmatpush1.msra.mxu0 %v187
    %2151 = vmatprep.subr.mxu0 %v194
    %2152 = vmatpush1.msra.mxu0 %v193
    %2153 = vmatprep.subr.mxu0 %v200
    %2154 = vmatpush1.msra.mxu0 %v199
    %2155 = vmatprep.subr.mxu0 %v206
    %2156 = vmatpush1.msra.mxu0 %v205
    %2157 = vmatprep.subr.mxu0 %v212
    %2158 = vmatpush1.msra.mxu0 %v211
    %2159 = vmatprep.subr.mxu0 %v218
    %2160 = vmatpush1.msra.mxu0 %v217
    %2161 = vmatprep.subr.mxu0 %v224
    %2162 = vmatpush1.msra.mxu0 %v223
    %2163 = vmatprep.subr.mxu0 %v230
    %2164 = vmatpush1.msra.mxu0 %v229
    %2165 = vmatprep.subr.mxu0 %v236
    %2166 = vmatpush1.msra.mxu0 %v235
    %2167 = vmatprep.subr.mxu0 %v242
    %2168 = vmatpush1.msra.mxu0 %v241
    %2169 = vmatprep.subr.mxu0 %v248
    %2170 = vmatpush1.msra.mxu0 %v247
    %2171 = vmatprep.subr.mxu0 %v254
    %2172 = vmatpush1.msra.mxu0 %v253
    %2173 = vmatprep.subr.mxu0 %v260
    %2174 = vmatpush1.msra.mxu0 %v259
    %2175 = vmatprep.subr.mxu0 %v266
    %2176 = vmatpush1.msra.mxu0 %v265
    %2177 = vmatprep.subr.mxu0 %v272
    %2178 = vmatpush1.msra.mxu0 %v271
    %2179 = vmatprep.subr.mxu0 %v278
    %2180 = vmatpush1.msra.mxu0 %v277
    %2181 = vmatprep.subr.mxu0 %v284
    %2182 = vmatpush1.msra.mxu0 %v283
    %2183 = vmatprep.subr.mxu0 %v290
    %2184 = vmatpush1.msra.mxu0 %v289
    %2185 = vmatprep.subr.mxu0 %v296
    %2186 = vmatpush1.msra.mxu0 %v295
    %2187 = vmatprep.subr.mxu0 %v302
    %2188 = vmatpush1.msra.mxu0 %v301
    %2189 = vmatprep.subr.mxu0 %v308
    %2190 = vmatpush1.msra.mxu0 %v307
    %2191 = vmatprep.subr.mxu0 %v314
    %2192 = vmatpush1.msra.mxu0 %v313
    %2193 = vmatprep.subr.mxu0 %v320
    %2194 = vmatpush1.msra.mxu0 %v319
    %2195 = vmatprep.subr.mxu0 %v326
    %2196 = vmatpush1.msra.mxu0 %v325
    %2197 = vmatprep.subr.mxu0 %v332
    %2198 = vmatpush1.msra.mxu0 %v331
    %2199 = vmatprep.subr.mxu0 %v338
    %2200 = vmatpush1.msra.mxu0 %v337
    %2201 = vmatprep.subr.mxu0 %v344
    %2202 = vmatpush1.msra.mxu0 %v343
    %2203 = vmatprep.subr.mxu0 %v350
    %2204 = vmatpush1.msra.mxu0 %v349
    %2205 = vmatprep.subr.mxu0 %v356
    %2206 = vmatpush1.msra.mxu0 %v355
    %2207 = vmatprep.subr.mxu0 %v362
    %2208 = vmatpush1.msra.mxu0 %v361
    %2209 = vmatprep.subr.mxu0 %v368
    %2210 = vmatpush1.msra.mxu0 %v367
    %2211 = vmatprep.mubr.f32.mxu0 %v1992
    %2212 = vmatmul.mubr.f32.gmra.mrb[0].mxu0 %v1988
    %v2213 = vpop.f32.mrb[0].mxu0
    %v2214 = vadd.f32 0.0, %v2213
    %v2215 = vpop.f32.mrb[0].mxu0
    %v2216 = vadd.f32 0.0, %v2215
    %2217 = vdwg.mxu0
    %v2218 = vadd.f32 %v1998, %v2072
    %v2219 = vxor.u32 %v2218, 2147483648
    %v2220 = vmul.f32 %v2219, 1.442695
    %v2221 = vpow.pop %v2220
    %v2222 = vadd.f32 %v2221, 1.0
    %v2223 = vrcp.pop %v2222
    %v2224 = vmul.f32 1.0, %v2223
    %v2225 = vadd.f32 %v1999, %v2074
    %v2226 = vxor.u32 %v2225, 2147483648
    %v2227 = vmul.f32 %v2226, 1.442695
    %v2228 = vpow.pop %v2227
    %v2229 = vadd.f32 %v2228, 1.0
    %v2230 = vrcp.pop %v2229
    %v2231 = vmul.f32 1.0, %v2230
    %v2232 = vadd.f32 %v2143, %v611
    %v2233 = vmul.f32 %v2224, %v2232
    %v2234 = vadd.f32 %v2000, %v2233
    %v2235 = vtanh.pop %v2234
    %v2236 = vadd.f32 %v2002, %v2145
    %v2237 = vxor.u32 %v2236, 2147483648
    %v2238 = vmul.f32 %v2237, 1.442695
    %v2239 = vpow.pop %v2238
    %v2240 = vadd.f32 %v2239, 1.0
    %v2241 = vrcp.pop %v2240
    %v2242 = vmul.f32 1.0, %v2241
    %v2243 = vadd.f32 %v2003, %v2214
    %v2244 = vxor.u32 %v2243, 2147483648
    %v2245 = vmul.f32 %v2244, 1.442695
    %v2246 = vpow.pop %v2245
    %v2247 = vadd.f32 %v2246, 1.0
    %v2248 = vrcp.pop %v2247
    %v2249 = vmul.f32 1.0, %v2248
    %v2250 = vadd.f32 %v2216, %v635
    %v2251 = vmul.f32 %v2242, %v2250
    %v2252 = vadd.f32 %v2004, %v2251
    %v2253 = vtanh.pop %v2252
    %v2254 = vsub.f32 1.0, %v2231
    %v2255 = vmul.f32 %v2254, %v2235
    %v2256 = vmul.f32 %v2231, %v1988
    %v2257 = vadd.f32 %v2255, %v2256
    %v2258 = vsub.f32 1.0, %v2249
    %v2259 = vmul.f32 %v2258, %v2253
    %v2260 = vmul.f32 %v2249, %v1992
    %v2261 = vadd.f32 %v2259, %v2260
    %s2262 = scalar_lea.vmem %s4, 48
    %2263 = vst [vmem:[%s2262] sm:$0xff] %v2257
    %s2264 = scalar_lea.vmem %s168, 8
    %2265 = vst [vmem:[%s2264] sm:$0xff] %v2261
    %s2266 = scalar_lea.vmem [#allocation3], 168
    %v2267 = vld [vmem:[%s2266] sm:$0xff]
    %v2268 = vld [vmem:[%s2266 + $0x8] sm:$0xff]
    %v2269 = vld [vmem:[%s2266 + $0x10] sm:$0xff]
    %v2270 = vld [vmem:[#allocation4] sm:$0xff]
    %v2271 = vld [vmem:[#allocation4 + $0x8] sm:$0xff]
    %v2272 = vld [vmem:[#allocation4 + $0x10] sm:$0xff]
    %2273 = vmatprep.subr.mxu0 %v178
    %2274 = vmatpush1.msra.mxu0 %v177
    %2275 = vmatprep.subr.mxu0 %v184
    %2276 = vmatpush1.msra.mxu0 %v183
    %2277 = vmatprep.subr.mxu0 %v190
    %2278 = vmatpush1.msra.mxu0 %v189
    %2279 = vmatprep.subr.mxu0 %v196
    %2280 = vmatpush1.msra.mxu0 %v195
    %2281 = vmatprep.subr.mxu0 %v202
    %2282 = vmatpush1.msra.mxu0 %v201
    %2283 = vmatprep.subr.mxu0 %v208
    %2284 = vmatpush1.msra.mxu0 %v207
    %2285 = vmatprep.subr.mxu0 %v214
    %2286 = vmatpush1.msra.mxu0 %v213
    %2287 = vmatprep.subr.mxu0 %v220
    %2288 = vmatpush1.msra.mxu0 %v219
    %2289 = vmatprep.subr.mxu0 %v226
    %2290 = vmatpush1.msra.mxu0 %v225
    %2291 = vmatprep.subr.mxu0 %v232
    %2292 = vmatpush1.msra.mxu0 %v231
    %2293 = vmatprep.subr.mxu0 %v238
    %2294 = vmatpush1.msra.mxu0 %v237
    %2295 = vmatprep.subr.mxu0 %v244
    %2296 = vmatpush1.msra.mxu0 %v243
    %2297 = vmatprep.subr.mxu0 %v250
    %2298 = vmatpush1.msra.mxu0 %v249
    %2299 = vmatprep.subr.mxu0 %v256
    %2300 = vmatpush1.msra.mxu0 %v255
    %2301 = vmatprep.subr.mxu0 %v262
    %2302 = vmatpush1.msra.mxu0 %v261
    %2303 = vmatprep.subr.mxu0 %v268
    %2304 = vmatpush1.msra.mxu0 %v267
    %2305 = vmatprep.subr.mxu0 %v274
    %2306 = vmatpush1.msra.mxu0 %v273
    %2307 = vmatprep.subr.mxu0 %v280
    %2308 = vmatpush1.msra.mxu0 %v279
    %2309 = vmatprep.subr.mxu0 %v286
    %2310 = vmatpush1.msra.mxu0 %v285
    %2311 = vmatprep.subr.mxu0 %v292
    %2312 = vmatpush1.msra.mxu0 %v291
    %2313 = vmatprep.subr.mxu0 %v298
    %2314 = vmatpush1.msra.mxu0 %v297
    %2315 = vmatprep.subr.mxu0 %v304
    %2316 = vmatpush1.msra.mxu0 %v303
    %2317 = vmatprep.subr.mxu0 %v310
    %2318 = vmatpush1.msra.mxu0 %v309
    %2319 = vmatprep.subr.mxu0 %v316
    %2320 = vmatpush1.msra.mxu0 %v315
    %2321 = vmatprep.subr.mxu0 %v322
    %2322 = vmatpush1.msra.mxu0 %v321
    %2323 = vmatprep.subr.mxu0 %v328
    %2324 = vmatpush1.msra.mxu0 %v327
    %2325 = vmatprep.subr.mxu0 %v334
    %2326 = vmatpush1.msra.mxu0 %v333
    %2327 = vmatprep.subr.mxu0 %v340
    %2328 = vmatpush1.msra.mxu0 %v339
    %2329 = vmatprep.subr.mxu0 %v346
    %2330 = vmatpush1.msra.mxu0 %v345
    %2331 = vmatprep.subr.mxu0 %v352
    %2332 = vmatpush1.msra.mxu0 %v351
    %2333 = vmatprep.subr.mxu0 %v358
    %2334 = vmatpush1.msra.mxu0 %v357
    %2335 = vmatprep.subr.mxu0 %v364
    %2336 = vmatpush1.msra.mxu0 %v363
    %2337 = vmatprep.mubr.f32.mxu0 %v2261
    %2338 = vmatmul.mubr.f32.gmra.mrb[0].mxu0 %v2257
    %v2339 = vpop.f32.mrb[0].mxu0
    %v2340 = vadd.f32 0.0, %v2339
    %v2341 = vpop.f32.mrb[0].mxu0
    %v2342 = vadd.f32 0.0, %v2341
    %2343 = vdwg.mxu0
    %2344 = vmatprep.subr.mxu0 %v180
    %2345 = vmatpush1.msra.mxu0 %v179
    %2346 = vmatprep.subr.mxu0 %v186
    %2347 = vmatpush1.msra.mxu0 %v185
    %2348 = vmatprep.subr.mxu0 %v192
    %2349 = vmatpush1.msra.mxu0 %v191
    %2350 = vmatprep.subr.mxu0 %v198
    %2351 = vmatpush1.msra.mxu0 %v197
    %2352 = vmatprep.subr.mxu0 %v204
    %2353 = vmatpush1.msra.mxu0 %v203
    %2354 = vmatprep.subr.mxu0 %v210
    %2355 = vmatpush1.msra.mxu0 %v209
    %2356 = vmatprep.subr.mxu0 %v216
    %2357 = vmatpush1.msra.mxu0 %v215
    %2358 = vmatprep.subr.mxu0 %v222
    %2359 = vmatpush1.msra.mxu0 %v221
    %2360 = vmatprep.subr.mxu0 %v228
    %2361 = vmatpush1.msra.mxu0 %v227
    %2362 = vmatprep.subr.mxu0 %v234
    %2363 = vmatpush1.msra.mxu0 %v233
    %2364 = vmatprep.subr.mxu0 %v240
    %2365 = vmatpush1.msra.mxu0 %v239
    %2366 = vmatprep.subr.mxu0 %v246
    %2367 = vmatpush1.msra.mxu0 %v245
    %2368 = vmatprep.subr.mxu0 %v252
    %2369 = vmatpush1.msra.mxu0 %v251
    %2370 = vmatprep.subr.mxu0 %v258
    %2371 = vmatpush1.msra.mxu0 %v257
    %2372 = vmatprep.subr.mxu0 %v264
    %2373 = vmatpush1.msra.mxu0 %v263
    %2374 = vmatprep.subr.mxu0 %v270
    %2375 = vmatpush1.msra.mxu0 %v269
    %2376 = vmatprep.subr.mxu0 %v276
    %2377 = vmatpush1.msra.mxu0 %v275
    %2378 = vmatprep.subr.mxu0 %v282
    %2379 = vmatpush1.msra.mxu0 %v281
    %2380 = vmatprep.subr.mxu0 %v288
    %2381 = vmatpush1.msra.mxu0 %v287
    %2382 = vmatprep.subr.mxu0 %v294
    %2383 = vmatpush1.msra.mxu0 %v293
    %2384 = vmatprep.subr.mxu0 %v300
    %2385 = vmatpush1.msra.mxu0 %v299
    %2386 = vmatprep.subr.mxu0 %v306
    %2387 = vmatpush1.msra.mxu0 %v305
    %2388 = vmatprep.subr.mxu0 %v312
    %2389 = vmatpush1.msra.mxu0 %v311
    %2390 = vmatprep.subr.mxu0 %v318
    %2391 = vmatpush1.msra.mxu0 %v317
    %2392 = vmatprep.subr.mxu0 %v324
    %2393 = vmatpush1.msra.mxu0 %v323
    %2394 = vmatprep.subr.mxu0 %v330
    %2395 = vmatpush1.msra.mxu0 %v329
    %2396 = vmatprep.subr.mxu0 %v336
    %2397 = vmatpush1.msra.mxu0 %v335
    %2398 = vmatprep.subr.mxu0 %v342
    %2399 = vmatpush1.msra.mxu0 %v341
    %2400 = vmatprep.subr.mxu0 %v348
    %2401 = vmatpush1.msra.mxu0 %v347
    %2402 = vmatprep.subr.mxu0 %v354
    %2403 = vmatpush1.msra.mxu0 %v353
    %2404 = vmatprep.subr.mxu0 %v360
    %2405 = vmatpush1.msra.mxu0 %v359
    %2406 = vmatprep.subr.mxu0 %v366
    %2407 = vmatpush1.msra.mxu0 %v365
    %2408 = vmatprep.mubr.f32.mxu0 %v2261
    %2409 = vmatmul.mubr.f32.gmra.mrb[0].mxu0 %v2257
    %v2410 = vpop.f32.mrb[0].mxu0
    %v2411 = vadd.f32 0.0, %v2410
    %v2412 = vpop.f32.mrb[0].mxu0
    %v2413 = vadd.f32 0.0, %v2412
    %2414 = vdwg.mxu0
    %2415 = vmatprep.subr.mxu0 %v182
    %2416 = vmatpush1.msra.mxu0 %v181
    %2417 = vmatprep.subr.mxu0 %v188
    %2418 = vmatpush1.msra.mxu0 %v187
    %2419 = vmatprep.subr.mxu0 %v194
    %2420 = vmatpush1.msra.mxu0 %v193
    %2421 = vmatprep.subr.mxu0 %v200
    %2422 = vmatpush1.msra.mxu0 %v199
    %2423 = vmatprep.subr.mxu0 %v206
    %2424 = vmatpush1.msra.mxu0 %v205
    %2425 = vmatprep.subr.mxu0 %v212
    %2426 = vmatpush1.msra.mxu0 %v211
    %2427 = vmatprep.subr.mxu0 %v218
    %2428 = vmatpush1.msra.mxu0 %v217
    %2429 = vmatprep.subr.mxu0 %v224
    %2430 = vmatpush1.msra.mxu0 %v223
    %2431 = vmatprep.subr.mxu0 %v230
    %2432 = vmatpush1.msra.mxu0 %v229
    %2433 = vmatprep.subr.mxu0 %v236
    %2434 = vmatpush1.msra.mxu0 %v235
    %2435 = vmatprep.subr.mxu0 %v242
    %2436 = vmatpush1.msra.mxu0 %v241
    %2437 = vmatprep.subr.mxu0 %v248
    %2438 = vmatpush1.msra.mxu0 %v247
    %2439 = vmatprep.subr.mxu0 %v254
    %2440 = vmatpush1.msra.mxu0 %v253
    %2441 = vmatprep.subr.mxu0 %v260
    %2442 = vmatpush1.msra.mxu0 %v259
    %2443 = vmatprep.subr.mxu0 %v266
    %2444 = vmatpush1.msra.mxu0 %v265
    %2445 = vmatprep.subr.mxu0 %v272
    %2446 = vmatpush1.msra.mxu0 %v271
    %2447 = vmatprep.subr.mxu0 %v278
    %2448 = vmatpush1.msra.mxu0 %v277
    %2449 = vmatprep.subr.mxu0 %v284
    %2450 = vmatpush1.msra.mxu0 %v283
    %2451 = vmatprep.subr.mxu0 %v290
    %2452 = vmatpush1.msra.mxu0 %v289
    %2453 = vmatprep.subr.mxu0 %v296
    %2454 = vmatpush1.msra.mxu0 %v295
    %2455 = vmatprep.subr.mxu0 %v302
    %2456 = vmatpush1.msra.mxu0 %v301
    %2457 = vmatprep.subr.mxu0 %v308
    %2458 = vmatpush1.msra.mxu0 %v307
    %2459 = vmatprep.subr.mxu0 %v314
    %2460 = vmatpush1.msra.mxu0 %v313
    %2461 = vmatprep.subr.mxu0 %v320
    %2462 = vmatpush1.msra.mxu0 %v319
    %2463 = vmatprep.subr.mxu0 %v326
    %2464 = vmatpush1.msra.mxu0 %v325
    %2465 = vmatprep.subr.mxu0 %v332
    %2466 = vmatpush1.msra.mxu0 %v331
    %2467 = vmatprep.subr.mxu0 %v338
    %2468 = vmatpush1.msra.mxu0 %v337
    %2469 = vmatprep.subr.mxu0 %v344
    %2470 = vmatpush1.msra.mxu0 %v343
    %2471 = vmatprep.subr.mxu0 %v350
    %2472 = vmatpush1.msra.mxu0 %v349
    %2473 = vmatprep.subr.mxu0 %v356
    %2474 = vmatpush1.msra.mxu0 %v355
    %2475 = vmatprep.subr.mxu0 %v362
    %2476 = vmatpush1.msra.mxu0 %v361
    %2477 = vmatprep.subr.mxu0 %v368
    %2478 = vmatpush1.msra.mxu0 %v367
    %2479 = vmatprep.mubr.f32.mxu0 %v2261
    %2480 = vmatmul.mubr.f32.gmra.mrb[0].mxu0 %v2257
    %v2481 = vpop.f32.mrb[0].mxu0
    %v2482 = vadd.f32 0.0, %v2481
    %v2483 = vpop.f32.mrb[0].mxu0
    %v2484 = vadd.f32 0.0, %v2483
    %2485 = vdwg.mxu0
    %v2486 = vadd.f32 %v2267, %v2340
    %v2487 = vxor.u32 %v2486, 2147483648
    %v2488 = vmul.f32 %v2487, 1.442695
    %v2489 = vpow.pop %v2488
    %v2490 = vadd.f32 %v2489, 1.0
    %v2491 = vrcp.pop %v2490
    %v2492 = vmul.f32 1.0, %v2491
    %v2493 = vadd.f32 %v2268, %v2342
    %v2494 = vxor.u32 %v2493, 2147483648
    %v2495 = vmul.f32 %v2494, 1.442695
    %v2496 = vpow.pop %v2495
    %v2497 = vadd.f32 %v2496, 1.0
    %v2498 = vrcp.pop %v2497
    %v2499 = vmul.f32 1.0, %v2498
    %v2500 = vadd.f32 %v2411, %v611
    %v2501 = vmul.f32 %v2492, %v2500
    %v2502 = vadd.f32 %v2269, %v2501
    %v2503 = vtanh.pop %v2502
    %v2504 = vadd.f32 %v2270, %v2413
    %v2505 = vxor.u32 %v2504, 2147483648
    %v2506 = vmul.f32 %v2505, 1.442695
    %v2507 = vpow.pop %v2506
    %v2508 = vadd.f32 %v2507, 1.0
    %v2509 = vrcp.pop %v2508
    %v2510 = vmul.f32 1.0, %v2509
    %v2511 = vadd.f32 %v2271, %v2482
    %v2512 = vxor.u32 %v2511, 2147483648
    %v2513 = vmul.f32 %v2512, 1.442695
    %v2514 = vpow.pop %v2513
    %v2515 = vadd.f32 %v2514, 1.0
    %v2516 = vrcp.pop %v2515
    %v2517 = vmul.f32 1.0, %v2516
    %v2518 = vadd.f32 %v2484, %v635
    %v2519 = vmul.f32 %v2510, %v2518
    %v2520 = vadd.f32 %v2272, %v2519
    %v2521 = vtanh.pop %v2520
    %v2522 = vsub.f32 1.0, %v2499
    %v2523 = vmul.f32 %v2522, %v2503
    %v2524 = vmul.f32 %v2499, %v2257
    %v2525 = vadd.f32 %v2523, %v2524
    %v2526 = vsub.f32 1.0, %v2517
    %v2527 = vmul.f32 %v2526, %v2521
    %v2528 = vmul.f32 %v2517, %v2261
    %v2529 = vadd.f32 %v2527, %v2528
    %s2530 = scalar_lea.vmem %s4, 56
    %2531 = vst [vmem:[%s2530] sm:$0xff] %v2525
    %2532 = vst [vmem:[%s168] sm:$0xff] %v2529
    %2533 = vst [vmem:[#allocation2] sm:$0xff] %v2525
    %2534 = vst [vmem:[#allocation2 + $0x8] sm:$0xff] %v2529
    %s2535 = ssub.s32 0, 0
    %s2536 = smul.u32 8, %s2535
    %p2537 = scmp.lt.s32.totalorder %s2536, 7
    %s2538 = scalar_select %p2537, %s2536, 7
    %s2539 = smul.addr %s2538, 8
    %s2540 = scalar_lea.vmem %s5, %s2539
    // Predicated region
    $region68: #{bidirectional_gru_2_forward.8} parent=1 // pred_check
      _
    $region69: #{bidirectional_gru_2_forward.8} parent=1 // pred_check_branch
      %2542 = sbr.rel (0) target = $region71
    $region70: #{bidirectional_gru_2_forward.8} parent=1 // pred_region
      _
    $region71: #{bidirectional_gru_2_forward.8} parent=1 // pred_fallthru
      _
    // Predicated region
    $region72: #{bidirectional_gru_2_forward.8} parent=1 // pred_check
      _
    $region73: #{bidirectional_gru_2_forward.8} parent=1 // pred_check_branch
      %2544 = sbr.rel (0) target = $region75
    $region74: #{bidirectional_gru_2_forward.8} parent=1 // pred_region
      %s2545 = ssub.s32 0, 0
      %s2546 = smul.u32 8, %s2545
    $region75: #{bidirectional_gru_2_forward.8} parent=1 // pred_fallthru
      _
    // Predicated region
    $region76: #{bidirectional_gru_2_forward.8} parent=1 // pred_check
      _
    $region77: #{bidirectional_gru_2_forward.8} parent=1 // pred_check_branch
      %2548 = sbr.rel (0) target = $region79
    $region78: #{bidirectional_gru_2_forward.8} parent=1 // pred_region
      _
    $region79: #{bidirectional_gru_2_forward.8} parent=1 // pred_fallthru
      _
    // Predicated region
    $region80: #{bidirectional_gru_2_forward.8} parent=1 // pred_check
      _
    $region81: #{bidirectional_gru_2_forward.8} parent=1 // pred_check_branch
      %2550 = sbr.rel (0) target = $region83
    $region82: #{bidirectional_gru_2_forward.8} parent=1 // pred_region
      %s2551 = ssub.s32 0, 0
      %s2552 = smul.u32 8, %s2551
      %p2553 = scmp.lt.s32.totalorder %s2552, 7
      %s2554 = scalar_select %p2553, %s2552, 7
      %s2555 = smul.addr %s2554, 8
      %s2556 = scalar_lea.vmem %s5, %s2555
    $region83: #{bidirectional_gru_2_forward.8} parent=1 // pred_fallthru
      _

</llo_original>
